<compile_context>
chip_gen: v7x
topology: tpu7x:2x2x1
jax: 0.10.0
libtpu: 0.0.40
codegen_flags: <defaults>
</compile_context>

<pallas_src>
import math
from functools import partial

import jax
import jax.numpy as jnp
from jax import lax
from jax.experimental import pallas as pl
from jax.experimental.pallas import tpu as pltpu


_VMEM_LIMIT = 48 * 1024 * 1024  # comfortably under v7x's 64 MiB / TensorCore


# ---------------------------------------------------------------------------
# Kernel 1: fused 3x3x3 "valid" conv over a pre-padded volume
#           + folded BatchNorm affine + LeakyReLU(0.2).
#
# The padded volume is stored with H,W flattened: (Dp, Hp*Wp + 2, Cin).
# For tap (kd, kh, kw) the rows needed by every output voxel of depth-slice d
# form ONE contiguous run starting at kh*Wp + kw, so each tap is a plain
# 2-D slice + a single (Ho*Wp, Cin) @ (Cin, Cout) MXU matmul — no in-kernel
# gathers and no layout-changing reshapes.  The Wp-W=2 garbage columns per row
# are stripped by a cheap wrapper slice.
# ---------------------------------------------------------------------------
def _conv3d_kernel(xf_ref, w_ref, scale_ref, shift_ref, o_ref, *, wp, apply_act):
    # xf_ref   : (Dp, Hp*Wp + 2, Cin)   padded input volume (one batch element)
    # w_ref    : (27, Cin, Cout)        kernel taps
    # scale_ref: (1, Cout)              folded BN scale
    # shift_ref: (1, Cout)              folded BN shift (+ conv bias)
    # o_ref    : (M, Cout)              M = Ho * Wp   output depth-slice
    d = pl.program_id(1)
    M, Cout = o_ref.shape
    Cin = xf_ref.shape[-1]

    acc = jnp.zeros((M, Cout), dtype=jnp.float32)
    for kd in range(3):
        for kh in range(3):
            for kw in range(3):
                start = kh * wp + kw
                seg = xf_ref[d + kd, start:start + M, :]        # (M, Cin)
                tap = w_ref[kd * 9 + kh * 3 + kw]               # (Cin, Cout)
                if Cin == 1:
                    # Degenerate K=1 contraction -> plain broadcast on the VPU.
                    acc = acc + seg * tap
                else:
                    acc = acc + jnp.dot(seg, tap,
                                        preferred_element_type=jnp.float32)

    y = acc * scale_ref[...] + shift_ref[...]
    if apply_act:
        y = jnp.where(y >= 0.0, y, 0.2 * y)                     # LeakyReLU(0.2)
    o_ref[...] = y.astype(o_ref.dtype)


def _conv3d_core(xpad, w, scale, shift, out_spatial, apply_act):
    """Valid 3x3x3 conv of a spatially pre-padded NDHWC volume + BN + act."""
    N, Dp, Hp, Wp, Cin = xpad.shape
    Do, Ho, Wo = out_spatial
    assert (Dp, Hp, Wp) == (Do + 2, Ho + 2, Wo + 2)
    Cout = w.shape[-1]
    M = Ho * Wp

    # Flatten (H, W) -> one long sublane axis; +2 tail rows so the worst tap's
    # contiguous read stays in bounds (they only feed stripped garbage rows).
    xflat = xpad.reshape(N, Dp, Hp * Wp, Cin)
    xflat = jnp.pad(xflat, ((0, 0), (0, 0), (0, 2), (0, 0)))
    w27 = w.reshape(27, Cin, Cout)
    scale2 = scale.reshape(1, Cout).astype(jnp.float32)
    shift2 = shift.reshape(1, Cout).astype(jnp.float32)

    kern = partial(_conv3d_kernel, wp=Wp, apply_act=apply_act)
    flops = 2 * N * Do * M * 27 * Cin * Cout
    bytes_accessed = 4 * (xflat.size + w27.size + N * Do * M * Cout + 2 * Cout)

    out_flat = pl.pallas_call(
        kern,
        out_shape=jax.ShapeDtypeStruct((N, Do, M, Cout), xpad.dtype),
        grid_spec=pltpu.PrefetchScalarGridSpec(
            num_scalar_prefetch=0,
            grid=(N, Do),
            in_specs=[
                # Whole padded volume of batch n: block index constant across
                # the depth axis -> fetched from HBM once per batch element.
                pl.BlockSpec((None, Dp, Hp * Wp + 2, Cin),
                             lambda n, d: (n, 0, 0, 0)),
                pl.BlockSpec((27, Cin, Cout), lambda n, d: (0, 0, 0)),
                pl.BlockSpec((1, Cout), lambda n, d: (0, 0)),
                pl.BlockSpec((1, Cout), lambda n, d: (0, 0)),
            ],
            out_specs=pl.BlockSpec((None, None, M, Cout),
                                   lambda n, d: (n, d, 0, 0)),
        ),
        compiler_params=pltpu.CompilerParams(
            dimension_semantics=("parallel", "parallel"),
            vmem_limit_bytes=_VMEM_LIMIT),
        cost_estimate=pl.CostEstimate(flops=int(flops), transcendentals=0,
                                      bytes_accessed=int(bytes_accessed)),
    )(xflat, w27, scale2, shift2)

    # Strip the Wp-Wo garbage columns (pure layout plumbing in the wrapper).
    out = out_flat.reshape(N, Do, Ho, Wp, Cout)[:, :, :, :Wo, :]
    return out


def conv3x3x3_bn_act_pallas(x_cl, w, scale, shift, apply_act=True):
    """Conv3d(k=3, s=1, p=1) + folded BN + LeakyReLU, channels-last input."""
    N, D, H, W, _ = x_cl.shape
    xpad = jnp.pad(x_cl, ((0, 0), (1, 1), (1, 1), (1, 1), (0, 0)))
    return _conv3d_core(xpad, w, scale, shift, (D, H, W), apply_act)


def conv_transpose3x3x3_bn_act_pallas(x_cl, w, scale, shift):
    """ConvTranspose3d(k=3, s=2, p=1, output_padding=1) + BN + LeakyReLU.

    Expressed as: dilate input by 2 (zeros between voxels), pad (1, 2) per
    spatial dim, then the same valid 3x3x3 conv kernel.
    """
    N, D, H, W, _ = x_cl.shape
    zero = jnp.zeros((), x_cl.dtype)
    xdil = lax.pad(x_cl, zero,
                   ((0, 0, 0), (1, 2, 1), (1, 2, 1), (1, 2, 1), (0, 0, 0)))
    return _conv3d_core(xdil, w, scale, shift, (2 * D, 2 * H, 2 * W), True)


# ---------------------------------------------------------------------------
# Kernel 2: MaxPool3d(kernel=2, stride=2).
# Wrapper folds the W-pair into the lane axis ((W, C) -> (W/2, 2C), a free
# reshape), so the kernel is pure VPU maxima + a leading-dim-only reshape.
# ---------------------------------------------------------------------------
def _maxpool_kernel(x_ref, o_ref):
    # x_ref: (2, H, Wo, 2C)     o_ref: (Ho, Wo, C)
    Ho, Wo, C = o_ref.shape
    m = jnp.maximum(x_ref[0], x_ref[1])          # depth pair      (H, Wo, 2C)
    m = m.reshape(Ho, 2, Wo, 2 * C)              # leading-dim split only
    m = jnp.maximum(m[:, 0], m[:, 1])            # height pair     (Ho, Wo, 2C)
    o_ref[...] = jnp.maximum(m[..., :C], m[..., C:])   # width pair (lanes)


def maxpool3d_2x_pallas(x_cl):
    N, D, H, W, C = x_cl.shape
    Do, Ho, Wo = D // 2, H // 2, W // 2
    xr = x_cl.reshape(N, D, H, Wo, 2 * C)        # free, contiguous reshape
    return pl.pallas_call(
        _maxpool_kernel,
        out_shape=jax.ShapeDtypeStruct((N, Do, Ho, Wo, C), x_cl.dtype),
        grid_spec=pltpu.PrefetchScalarGridSpec(
            num_scalar_prefetch=0,
            grid=(N, Do),
            in_specs=[pl.BlockSpec((None, 2, H, Wo, 2 * C),
                                   lambda n, d: (n, d, 0, 0, 0))],
            out_specs=pl.BlockSpec((None, None, Ho, Wo, C),
                                   lambda n, d: (n, d, 0, 0, 0)),
        ),
        compiler_params=pltpu.CompilerParams(
            dimension_semantics=("parallel", "parallel"),
            vmem_limit_bytes=_VMEM_LIMIT),
        cost_estimate=pl.CostEstimate(
            flops=0, transcendentals=0,
            bytes_accessed=int(4 * (x_cl.size + N * Do * Ho * Wo * C))),
    )(xr)


# ---------------------------------------------------------------------------
# Building blocks (Pallas path + pure-JAX reference path with identical math)
# ---------------------------------------------------------------------------
def _conv_bn_act(x_cl, p, apply_act, use_pallas):
    if use_pallas:
        return conv3x3x3_bn_act_pallas(x_cl, p['w'], p['scale'], p['shift'],
                                       apply_act)
    y = lax.conv_general_dilated(
        x_cl, p['w'], (1, 1, 1), ((1, 1), (1, 1), (1, 1)),
        dimension_numbers=('NDHWC', 'DHWIO', 'NDHWC'),
        precision=lax.Precision.HIGHEST)
    y = y * p['scale'] + p['shift']
    return jnp.where(y >= 0.0, y, 0.2 * y) if apply_act else y


def _conv_trans_bn_act(x_cl, p, use_pallas):
    if use_pallas:
        return conv_transpose3x3x3_bn_act_pallas(x_cl, p['w'], p['scale'],
                                                 p['shift'])
    y = lax.conv_general_dilated(
        x_cl, p['w'], (1, 1, 1), ((1, 2), (1, 2), (1, 2)),
        lhs_dilation=(2, 2, 2),
        dimension_numbers=('NDHWC', 'DHWIO', 'NDHWC'),
        precision=lax.Precision.HIGHEST)
    y = y * p['scale'] + p['shift']
    return jnp.where(y >= 0.0, y, 0.2 * y)


def _max_pool(x_cl, use_pallas):
    if use_pallas:
        return maxpool3d_2x_pallas(x_cl)
    return lax.reduce_window(x_cl, -jnp.inf, lax.max,
                             (1, 2, 2, 2, 1), (1, 2, 2, 2, 1), 'VALID')


# ---------------------------------------------------------------------------
# Dual_UNet forward (same graph as the PyTorch module) + parameter init
# ---------------------------------------------------------------------------
def dual_unet_forward(params, x_ncdhw, use_pallas=True):
    x = jnp.transpose(x_ncdhw, (0, 2, 3, 4, 1))          # NCDHW -> NDHWC

    def block2(name, t):
        t = _conv_bn_act(t, params[name + '_a'], True, use_pallas)
        t = _conv_bn_act(t, params[name + '_b'], True, use_pallas)
        return t

    down_1 = block2('down_1', x)
    t = _max_pool(down_1, use_pallas)
    down_2 = block2('down_2', t)
    t = _max_pool(down_2, use_pallas)
    down_3 = block2('down_3', t)
    sx = _max_pool(down_3, use_pallas)

    def decoder(sfx):
        t = block2('bridge' + sfx, sx)
        t = _conv_trans_bn_act(t, params['trans_1' + sfx], use_pallas)
        t = jnp.concatenate([t, down_3], axis=-1)
        t = block2('up_1' + sfx, t)
        t = _conv_trans_bn_act(t, params['trans_2' + sfx], use_pallas)
        t = jnp.concatenate([t, down_2], axis=-1)
        t = block2('up_2' + sfx, t)
        t = _conv_trans_bn_act(t, params['trans_3' + sfx], use_pallas)
        t = jnp.concatenate([t, down_1], axis=-1)
        t = block2('up_3' + sfx, t)
        return _conv_bn_act(t, params['out' + sfx], False, use_pallas)

    out1 = decoder('')
    out2 = decoder('2')
    return (jnp.transpose(out1, (0, 4, 1, 2, 3)),          # back to NCDHW
            jnp.transpose(out2, (0, 4, 1, 2, 3)))


def init_params(key, in_dim, out_dim, nf):
    params = {}
    kit = iter(jax.random.split(key, 40))

    def cbr(cin, cout):
        k = jax.random.split(next(kit), 6)
        std = 1.4 / math.sqrt(27.0 * cin)
        w = std * jax.random.normal(k[0], (3, 3, 3, cin, cout), jnp.float32)
        b = 0.1 * jax.random.normal(k[1], (cout,), jnp.float32)
        gamma = 1.0 + 0.1 * jax.random.normal(k[2], (cout,), jnp.float32)
        beta = 0.1 * jax.random.normal(k[3], (cout,), jnp.float32)
        mean = 0.1 * jax.random.normal(k[4], (cout,), jnp.float32)
        var = 1.0 + 0.2 * jax.random.uniform(k[5], (cout,), jnp.float32)
        scale = gamma * lax.rsqrt(var + 1e-5)
        shift = beta + scale * (b - mean)
        return {'w': w, 'scale': scale, 'shift': shift}

    def out_conv(cin, cout):
        k = jax.random.split(next(kit), 2)
        std = 1.0 / math.sqrt(27.0 * cin)
        w = std * jax.random.normal(k[0], (3, 3, 3, cin, cout), jnp.float32)
        b = 0.1 * jax.random.normal(k[1], (cout,), jnp.float32)
        return {'w': w, 'scale': jnp.ones((cout,), jnp.float32), 'shift': b}

    def en(name, cin, cout):                    # conv_block_2_3d_en
        mid = cout // 2
        params[name + '_a'] = cbr(cin, mid)
        params[name + '_b'] = cbr(mid, cout)

    def de(name, cin, cout):                    # conv_block_2_3d_de
        params[name + '_a'] = cbr(cin, cout)
        params[name + '_b'] = cbr(cout, cout)

    en('down_1', in_dim, nf)
    en('down_2', nf, nf * 2)
    en('down_3', nf * 2, nf * 4)
    for sfx in ('', '2'):
        en('bridge' + sfx, nf * 4, nf * 8)
        params['trans_1' + sfx] = cbr(nf * 8, nf * 8)
        de('up_1' + sfx, nf * 12, nf * 4)
        params['trans_2' + sfx] = cbr(nf * 4, nf * 4)
        de('up_2' + sfx, nf * 6, nf * 2)
        params['trans_3' + sfx] = cbr(nf * 2, nf * 2)
        de('up_3' + sfx, nf * 3, nf)
        params['out' + sfx] = out_conv(nf, out_dim)
    return params


class DualUNetPallas:
    """JAX/Pallas equivalent of the PyTorch Dual_UNet module (forward only)."""

    def __init__(self, in_dim, out_dim, num_filters=8, key=None):
        key = jax.random.PRNGKey(0) if key is None else key
        self.params = init_params(key, in_dim, out_dim, num_filters)

    def __call__(self, x, use_pallas=True):
        return dual_unet_forward(self.params, x, use_pallas=use_pallas)


# ---------------------------------------------------------------------------
if __name__ == "__main__":
    root = jax.random.PRNGKey(0)
    kp, kx = jax.random.split(root)

    N, in_dim, out_dim, nf = 2, 1, 2, 8
    D = H = W = 16                               # three 2x pools -> 2^3 bridge

    model = DualUNetPallas(in_dim, out_dim, num_filters=nf, key=kp)
    x = jax.random.normal(kx, (N, in_dim, D, H, W), jnp.float32)

    out1, out2 = model(x, use_pallas=True)
    (out1, out2) = jax.block_until_ready((out1, out2))

    ref1, ref2 = model(x, use_pallas=False)      # pure-JAX (XLA conv) reference
    (ref1, ref2) = jax.block_until_ready((ref1, ref2))

    assert out1.shape == (N, out_dim, D, H, W), out1.shape
    assert out2.shape == (N, out_dim, D, H, W), out2.shape

    def rel_err(a, b):
        return float(jnp.max(jnp.abs(a - b)) / (jnp.max(jnp.abs(b)) + 1e-8))

    e1, e2 = rel_err(out1, ref1), rel_err(out2, ref2)
    assert e1 < 5e-2 and e2 < 5e-2, ("mismatch vs reference", e1, e2)
    print("KERNEL_OK")
</pallas_src>

<mosaic_0001>
module attributes {stable_mosaic.version = 11 : i64} {
  func.func @_conv3d_kernel(%arg0: i32, %arg1: i32, %arg2: memref<1x18x326x1xf32, #tpu.memory_space<vmem>>, %arg3: memref<27x1x4xf32, #tpu.memory_space<vmem>>, %arg4: memref<1x4xf32, #tpu.memory_space<vmem>>, %arg5: memref<1x4xf32, #tpu.memory_space<vmem>>, %arg6: memref<1x1x288x4xf32, #tpu.memory_space<vmem>>) attributes {dimension_semantics = [#tpu.dimension_semantics<parallel>, #tpu.dimension_semantics<parallel>], iteration_bounds = array<i64: 2, 16>, scalar_prefetch = 0 : i64, scratch_operands = 0 : i64, tpu.core_type = #tpu.core_type<tc>, window_params = [{transform_indices = @transform_0, window_bounds = array<i64: 1, 18, 326, 1>}, {pipeline_mode = #tpu.pipeline_mode<synchronous>, transform_indices = @transform_1, window_bounds = array<i64: 27, 1, 4>}, {pipeline_mode = #tpu.pipeline_mode<synchronous>, transform_indices = @transform_2, window_bounds = array<i64: 1, 4>}, {pipeline_mode = #tpu.pipeline_mode<synchronous>, transform_indices = @transform_3, window_bounds = array<i64: 1, 4>}, {transform_indices = @transform_4, window_bounds = array<i64: 1, 1, 288, 4>}]} {
    %cst = arith.constant 0.000000e+00 : f32
    %0 = vector.broadcast %cst : f32 to vector<288x4xf32>
    %c0_i32 = arith.constant 0 : i32
    %1 = arith.addi %arg1, %c0_i32 : i32
    %c0 = arith.constant 0 : index
    %2 = arith.index_cast %1 : i32 to index
    %c0_0 = arith.constant 0 : index
    %c0_1 = arith.constant 0 : index
    %3 = vector.load %arg2[%c0, %2, %c0_0, %c0_1] : memref<1x18x326x1xf32, #tpu.memory_space<vmem>>, vector<1x1x288x1xf32>
    %4 = vector.shape_cast %3 : vector<1x1x288x1xf32> to vector<288x1xf32>
    %c0_2 = arith.constant 0 : index
    %c0_3 = arith.constant 0 : index
    %c0_4 = arith.constant 0 : index
    %5 = vector.load %arg3[%c0_2, %c0_3, %c0_4] : memref<27x1x4xf32, #tpu.memory_space<vmem>>, vector<1x1x4xf32>
    %6 = vector.shape_cast %5 : vector<1x1x4xf32> to vector<1x4xf32>
    %7 = vector.broadcast %4 : vector<288x1xf32> to vector<288x4xf32>
    %8 = vector.broadcast %6 : vector<1x4xf32> to vector<288x4xf32>
    %9 = arith.mulf %7, %8 : vector<288x4xf32>
    %10 = arith.addf %0, %9 : vector<288x4xf32>
    %c0_i32_5 = arith.constant 0 : i32
    %11 = arith.addi %arg1, %c0_i32_5 : i32
    %c0_6 = arith.constant 0 : index
    %12 = arith.index_cast %11 : i32 to index
    %c1 = arith.constant 1 : index
    %c0_7 = arith.constant 0 : index
    %13 = vector.load %arg2[%c0_6, %12, %c1, %c0_7] : memref<1x18x326x1xf32, #tpu.memory_space<vmem>>, vector<1x1x288x1xf32>
    %14 = vector.shape_cast %13 : vector<1x1x288x1xf32> to vector<288x1xf32>
    %c1_8 = arith.constant 1 : index
    %c0_9 = arith.constant 0 : index
    %c0_10 = arith.constant 0 : index
    %15 = vector.load %arg3[%c1_8, %c0_9, %c0_10] : memref<27x1x4xf32, #tpu.memory_space<vmem>>, vector<1x1x4xf32>
    %16 = vector.shape_cast %15 : vector<1x1x4xf32> to vector<1x4xf32>
    %17 = vector.broadcast %14 : vector<288x1xf32> to vector<288x4xf32>
    %18 = vector.broadcast %16 : vector<1x4xf32> to vector<288x4xf32>
    %19 = arith.mulf %17, %18 : vector<288x4xf32>
    %20 = arith.addf %10, %19 : vector<288x4xf32>
    %c0_i32_11 = arith.constant 0 : i32
    %21 = arith.addi %arg1, %c0_i32_11 : i32
    %c0_12 = arith.constant 0 : index
    %22 = arith.index_cast %21 : i32 to index
    %c2 = arith.constant 2 : index
    %c0_13 = arith.constant 0 : index
    %23 = vector.load %arg2[%c0_12, %22, %c2, %c0_13] : memref<1x18x326x1xf32, #tpu.memory_space<vmem>>, vector<1x1x288x1xf32>
    %24 = vector.shape_cast %23 : vector<1x1x288x1xf32> to vector<288x1xf32>
    %c2_14 = arith.constant 2 : index
    %c0_15 = arith.constant 0 : index
    %c0_16 = arith.constant 0 : index
    %25 = vector.load %arg3[%c2_14, %c0_15, %c0_16] : memref<27x1x4xf32, #tpu.memory_space<vmem>>, vector<1x1x4xf32>
    %26 = vector.shape_cast %25 : vector<1x1x4xf32> to vector<1x4xf32>
    %27 = vector.broadcast %24 : vector<288x1xf32> to vector<288x4xf32>
    %28 = vector.broadcast %26 : vector<1x4xf32> to vector<288x4xf32>
    %29 = arith.mulf %27, %28 : vector<288x4xf32>
    %30 = arith.addf %20, %29 : vector<288x4xf32>
    %c0_i32_17 = arith.constant 0 : i32
    %31 = arith.addi %arg1, %c0_i32_17 : i32
    %c0_18 = arith.constant 0 : index
    %32 = arith.index_cast %31 : i32 to index
    %c18 = arith.constant 18 : index
    %c0_19 = arith.constant 0 : index
    %33 = vector.load %arg2[%c0_18, %32, %c18, %c0_19] : memref<1x18x326x1xf32, #tpu.memory_space<vmem>>, vector<1x1x288x1xf32>
    %34 = vector.shape_cast %33 : vector<1x1x288x1xf32> to vector<288x1xf32>
    %c3 = arith.constant 3 : index
    %c0_20 = arith.constant 0 : index
    %c0_21 = arith.constant 0 : index
    %35 = vector.load %arg3[%c3, %c0_20, %c0_21] : memref<27x1x4xf32, #tpu.memory_space<vmem>>, vector<1x1x4xf32>
    %36 = vector.shape_cast %35 : vector<1x1x4xf32> to vector<1x4xf32>
    %37 = vector.broadcast %34 : vector<288x1xf32> to vector<288x4xf32>
    %38 = vector.broadcast %36 : vector<1x4xf32> to vector<288x4xf32>
    %39 = arith.mulf %37, %38 : vector<288x4xf32>
    %40 = arith.addf %30, %39 : vector<288x4xf32>
    %c0_i32_22 = arith.constant 0 : i32
    %41 = arith.addi %arg1, %c0_i32_22 : i32
    %c0_23 = arith.constant 0 : index
    %42 = arith.index_cast %41 : i32 to index
    %c19 = arith.constant 19 : index
    %c0_24 = arith.constant 0 : index
    %43 = vector.load %arg2[%c0_23, %42, %c19, %c0_24] : memref<1x18x326x1xf32, #tpu.memory_space<vmem>>, vector<1x1x288x1xf32>
    %44 = vector.shape_cast %43 : vector<1x1x288x1xf32> to vector<288x1xf32>
    %c4 = arith.constant 4 : index
    %c0_25 = arith.constant 0 : index
    %c0_26 = arith.constant 0 : index
    %45 = vector.load %arg3[%c4, %c0_25, %c0_26] : memref<27x1x4xf32, #tpu.memory_space<vmem>>, vector<1x1x4xf32>
    %46 = vector.shape_cast %45 : vector<1x1x4xf32> to vector<1x4xf32>
    %47 = vector.broadcast %44 : vector<288x1xf32> to vector<288x4xf32>
    %48 = vector.broadcast %46 : vector<1x4xf32> to vector<288x4xf32>
    %49 = arith.mulf %47, %48 : vector<288x4xf32>
    %50 = arith.addf %40, %49 : vector<288x4xf32>
    %c0_i32_27 = arith.constant 0 : i32
    %51 = arith.addi %arg1, %c0_i32_27 : i32
    %c0_28 = arith.constant 0 : index
    %52 = arith.index_cast %51 : i32 to index
    %c20 = arith.constant 20 : index
    %c0_29 = arith.constant 0 : index
    %53 = vector.load %arg2[%c0_28, %52, %c20, %c0_29] : memref<1x18x326x1xf32, #tpu.memory_space<vmem>>, vector<1x1x288x1xf32>
    %54 = vector.shape_cast %53 : vector<1x1x288x1xf32> to vector<288x1xf32>
    %c5 = arith.constant 5 : index
    %c0_30 = arith.constant 0 : index
    %c0_31 = arith.constant 0 : index
    %55 = vector.load %arg3[%c5, %c0_30, %c0_31] : memref<27x1x4xf32, #tpu.memory_space<vmem>>, vector<1x1x4xf32>
    %56 = vector.shape_cast %55 : vector<1x1x4xf32> to vector<1x4xf32>
    %57 = vector.broadcast %54 : vector<288x1xf32> to vector<288x4xf32>
    %58 = vector.broadcast %56 : vector<1x4xf32> to vector<288x4xf32>
    %59 = arith.mulf %57, %58 : vector<288x4xf32>
    %60 = arith.addf %50, %59 : vector<288x4xf32>
    %c0_i32_32 = arith.constant 0 : i32
    %61 = arith.addi %arg1, %c0_i32_32 : i32
    %c0_33 = arith.constant 0 : index
    %62 = arith.index_cast %61 : i32 to index
    %c36 = arith.constant 36 : index
    %c0_34 = arith.constant 0 : index
    %63 = vector.load %arg2[%c0_33, %62, %c36, %c0_34] : memref<1x18x326x1xf32, #tpu.memory_space<vmem>>, vector<1x1x288x1xf32>
    %64 = vector.shape_cast %63 : vector<1x1x288x1xf32> to vector<288x1xf32>
    %c6 = arith.constant 6 : index
    %c0_35 = arith.constant 0 : index
    %c0_36 = arith.constant 0 : index
    %65 = vector.load %arg3[%c6, %c0_35, %c0_36] : memref<27x1x4xf32, #tpu.memory_space<vmem>>, vector<1x1x4xf32>
    %66 = vector.shape_cast %65 : vector<1x1x4xf32> to vector<1x4xf32>
    %67 = vector.broadcast %64 : vector<288x1xf32> to vector<288x4xf32>
    %68 = vector.broadcast %66 : vector<1x4xf32> to vector<288x4xf32>
    %69 = arith.mulf %67, %68 : vector<288x4xf32>
    %70 = arith.addf %60, %69 : vector<288x4xf32>
    %c0_i32_37 = arith.constant 0 : i32
    %71 = arith.addi %arg1, %c0_i32_37 : i32
    %c0_38 = arith.constant 0 : index
    %72 = arith.index_cast %71 : i32 to index
    %c37 = arith.constant 37 : index
    %c0_39 = arith.constant 0 : index
    %73 = vector.load %arg2[%c0_38, %72, %c37, %c0_39] : memref<1x18x326x1xf32, #tpu.memory_space<vmem>>, vector<1x1x288x1xf32>
    %74 = vector.shape_cast %73 : vector<1x1x288x1xf32> to vector<288x1xf32>
    %c7 = arith.constant 7 : index
    %c0_40 = arith.constant 0 : index
    %c0_41 = arith.constant 0 : index
    %75 = vector.load %arg3[%c7, %c0_40, %c0_41] : memref<27x1x4xf32, #tpu.memory_space<vmem>>, vector<1x1x4xf32>
    %76 = vector.shape_cast %75 : vector<1x1x4xf32> to vector<1x4xf32>
    %77 = vector.broadcast %74 : vector<288x1xf32> to vector<288x4xf32>
    %78 = vector.broadcast %76 : vector<1x4xf32> to vector<288x4xf32>
    %79 = arith.mulf %77, %78 : vector<288x4xf32>
    %80 = arith.addf %70, %79 : vector<288x4xf32>
    %c0_i32_42 = arith.constant 0 : i32
    %81 = arith.addi %arg1, %c0_i32_42 : i32
    %c0_43 = arith.constant 0 : index
    %82 = arith.index_cast %81 : i32 to index
    %c38 = arith.constant 38 : index
    %c0_44 = arith.constant 0 : index
    %83 = vector.load %arg2[%c0_43, %82, %c38, %c0_44] : memref<1x18x326x1xf32, #tpu.memory_space<vmem>>, vector<1x1x288x1xf32>
    %84 = vector.shape_cast %83 : vector<1x1x288x1xf32> to vector<288x1xf32>
    %c8 = arith.constant 8 : index
    %c0_45 = arith.constant 0 : index
    %c0_46 = arith.constant 0 : index
    %85 = vector.load %arg3[%c8, %c0_45, %c0_46] : memref<27x1x4xf32, #tpu.memory_space<vmem>>, vector<1x1x4xf32>
    %86 = vector.shape_cast %85 : vector<1x1x4xf32> to vector<1x4xf32>
    %87 = vector.broadcast %84 : vector<288x1xf32> to vector<288x4xf32>
    %88 = vector.broadcast %86 : vector<1x4xf32> to vector<288x4xf32>
    %89 = arith.mulf %87, %88 : vector<288x4xf32>
    %90 = arith.addf %80, %89 : vector<288x4xf32>
    %c1_i32 = arith.constant 1 : i32
    %91 = arith.addi %arg1, %c1_i32 : i32
    %c0_47 = arith.constant 0 : index
    %92 = arith.index_cast %91 : i32 to index
    %c0_48 = arith.constant 0 : index
    %c0_49 = arith.constant 0 : index
    %93 = vector.load %arg2[%c0_47, %92, %c0_48, %c0_49] : memref<1x18x326x1xf32, #tpu.memory_space<vmem>>, vector<1x1x288x1xf32>
    %94 = vector.shape_cast %93 : vector<1x1x288x1xf32> to vector<288x1xf32>
    %c9 = arith.constant 9 : index
    %c0_50 = arith.constant 0 : index
    %c0_51 = arith.constant 0 : index
    %95 = vector.load %arg3[%c9, %c0_50, %c0_51] : memref<27x1x4xf32, #tpu.memory_space<vmem>>, vector<1x1x4xf32>
    %96 = vector.shape_cast %95 : vector<1x1x4xf32> to vector<1x4xf32>
    %97 = vector.broadcast %94 : vector<288x1xf32> to vector<288x4xf32>
    %98 = vector.broadcast %96 : vector<1x4xf32> to vector<288x4xf32>
    %99 = arith.mulf %97, %98 : vector<288x4xf32>
    %100 = arith.addf %90, %99 : vector<288x4xf32>
    %c1_i32_52 = arith.constant 1 : i32
    %101 = arith.addi %arg1, %c1_i32_52 : i32
    %c0_53 = arith.constant 0 : index
    %102 = arith.index_cast %101 : i32 to index
    %c1_54 = arith.constant 1 : index
    %c0_55 = arith.constant 0 : index
    %103 = vector.load %arg2[%c0_53, %102, %c1_54, %c0_55] : memref<1x18x326x1xf32, #tpu.memory_space<vmem>>, vector<1x1x288x1xf32>
    %104 = vector.shape_cast %103 : vector<1x1x288x1xf32> to vector<288x1xf32>
    %c10 = arith.constant 10 : index
    %c0_56 = arith.constant 0 : index
    %c0_57 = arith.constant 0 : index
    %105 = vector.load %arg3[%c10, %c0_56, %c0_57] : memref<27x1x4xf32, #tpu.memory_space<vmem>>, vector<1x1x4xf32>
    %106 = vector.shape_cast %105 : vector<1x1x4xf32> to vector<1x4xf32>
    %107 = vector.broadcast %104 : vector<288x1xf32> to vector<288x4xf32>
    %108 = vector.broadcast %106 : vector<1x4xf32> to vector<288x4xf32>
    %109 = arith.mulf %107, %108 : vector<288x4xf32>
    %110 = arith.addf %100, %109 : vector<288x4xf32>
    %c1_i32_58 = arith.constant 1 : i32
    %111 = arith.addi %arg1, %c1_i32_58 : i32
    %c0_59 = arith.constant 0 : index
    %112 = arith.index_cast %111 : i32 to index
    %c2_60 = arith.constant 2 : index
    %c0_61 = arith.constant 0 : index
    %113 = vector.load %arg2[%c0_59, %112, %c2_60, %c0_61] : memref<1x18x326x1xf32, #tpu.memory_space<vmem>>, vector<1x1x288x1xf32>
    %114 = vector.shape_cast %113 : vector<1x1x288x1xf32> to vector<288x1xf32>
    %c11 = arith.constant 11 : index
    %c0_62 = arith.constant 0 : index
    %c0_63 = arith.constant 0 : index
    %115 = vector.load %arg3[%c11, %c0_62, %c0_63] : memref<27x1x4xf32, #tpu.memory_space<vmem>>, vector<1x1x4xf32>
    %116 = vector.shape_cast %115 : vector<1x1x4xf32> to vector<1x4xf32>
    %117 = vector.broadcast %114 : vector<288x1xf32> to vector<288x4xf32>
    %118 = vector.broadcast %116 : vector<1x4xf32> to vector<288x4xf32>
    %119 = arith.mulf %117, %118 : vector<288x4xf32>
    %120 = arith.addf %110, %119 : vector<288x4xf32>
    %c1_i32_64 = arith.constant 1 : i32
    %121 = arith.addi %arg1, %c1_i32_64 : i32
    %c0_65 = arith.constant 0 : index
    %122 = arith.index_cast %121 : i32 to index
    %c18_66 = arith.constant 18 : index
    %c0_67 = arith.constant 0 : index
    %123 = vector.load %arg2[%c0_65, %122, %c18_66, %c0_67] : memref<1x18x326x1xf32, #tpu.memory_space<vmem>>, vector<1x1x288x1xf32>
    %124 = vector.shape_cast %123 : vector<1x1x288x1xf32> to vector<288x1xf32>
    %c12 = arith.constant 12 : index
    %c0_68 = arith.constant 0 : index
    %c0_69 = arith.constant 0 : index
    %125 = vector.load %arg3[%c12, %c0_68, %c0_69] : memref<27x1x4xf32, #tpu.memory_space<vmem>>, vector<1x1x4xf32>
    %126 = vector.shape_cast %125 : vector<1x1x4xf32> to vector<1x4xf32>
    %127 = vector.broadcast %124 : vector<288x1xf32> to vector<288x4xf32>
    %128 = vector.broadcast %126 : vector<1x4xf32> to vector<288x4xf32>
    %129 = arith.mulf %127, %128 : vector<288x4xf32>
    %130 = arith.addf %120, %129 : vector<288x4xf32>
    %c1_i32_70 = arith.constant 1 : i32
    %131 = arith.addi %arg1, %c1_i32_70 : i32
    %c0_71 = arith.constant 0 : index
    %132 = arith.index_cast %131 : i32 to index
    %c19_72 = arith.constant 19 : index
    %c0_73 = arith.constant 0 : index
    %133 = vector.load %arg2[%c0_71, %132, %c19_72, %c0_73] : memref<1x18x326x1xf32, #tpu.memory_space<vmem>>, vector<1x1x288x1xf32>
    %134 = vector.shape_cast %133 : vector<1x1x288x1xf32> to vector<288x1xf32>
    %c13 = arith.constant 13 : index
    %c0_74 = arith.constant 0 : index
    %c0_75 = arith.constant 0 : index
    %135 = vector.load %arg3[%c13, %c0_74, %c0_75] : memref<27x1x4xf32, #tpu.memory_space<vmem>>, vector<1x1x4xf32>
    %136 = vector.shape_cast %135 : vector<1x1x4xf32> to vector<1x4xf32>
    %137 = vector.broadcast %134 : vector<288x1xf32> to vector<288x4xf32>
    %138 = vector.broadcast %136 : vector<1x4xf32> to vector<288x4xf32>
    %139 = arith.mulf %137, %138 : vector<288x4xf32>
    %140 = arith.addf %130, %139 : vector<288x4xf32>
    %c1_i32_76 = arith.constant 1 : i32
    %141 = arith.addi %arg1, %c1_i32_76 : i32
    %c0_77 = arith.constant 0 : index
    %142 = arith.index_cast %141 : i32 to index
    %c20_78 = arith.constant 20 : index
    %c0_79 = arith.constant 0 : index
    %143 = vector.load %arg2[%c0_77, %142, %c20_78, %c0_79] : memref<1x18x326x1xf32, #tpu.memory_space<vmem>>, vector<1x1x288x1xf32>
    %144 = vector.shape_cast %143 : vector<1x1x288x1xf32> to vector<288x1xf32>
    %c14 = arith.constant 14 : index
    %c0_80 = arith.constant 0 : index
    %c0_81 = arith.constant 0 : index
    %145 = vector.load %arg3[%c14, %c0_80, %c0_81] : memref<27x1x4xf32, #tpu.memory_space<vmem>>, vector<1x1x4xf32>
    %146 = vector.shape_cast %145 : vector<1x1x4xf32> to vector<1x4xf32>
    %147 = vector.broadcast %144 : vector<288x1xf32> to vector<288x4xf32>
    %148 = vector.broadcast %146 : vector<1x4xf32> to vector<288x4xf32>
    %149 = arith.mulf %147, %148 : vector<288x4xf32>
    %150 = arith.addf %140, %149 : vector<288x4xf32>
    %c1_i32_82 = arith.constant 1 : i32
    %151 = arith.addi %arg1, %c1_i32_82 : i32
    %c0_83 = arith.constant 0 : index
    %152 = arith.index_cast %151 : i32 to index
    %c36_84 = arith.constant 36 : index
    %c0_85 = arith.constant 0 : index
    %153 = vector.load %arg2[%c0_83, %152, %c36_84, %c0_85] : memref<1x18x326x1xf32, #tpu.memory_space<vmem>>, vector<1x1x288x1xf32>
    %154 = vector.shape_cast %153 : vector<1x1x288x1xf32> to vector<288x1xf32>
    %c15 = arith.constant 15 : index
    %c0_86 = arith.constant 0 : index
    %c0_87 = arith.constant 0 : index
    %155 = vector.load %arg3[%c15, %c0_86, %c0_87] : memref<27x1x4xf32, #tpu.memory_space<vmem>>, vector<1x1x4xf32>
    %156 = vector.shape_cast %155 : vector<1x1x4xf32> to vector<1x4xf32>
    %157 = vector.broadcast %154 : vector<288x1xf32> to vector<288x4xf32>
    %158 = vector.broadcast %156 : vector<1x4xf32> to vector<288x4xf32>
    %159 = arith.mulf %157, %158 : vector<288x4xf32>
    %160 = arith.addf %150, %159 : vector<288x4xf32>
    %c1_i32_88 = arith.constant 1 : i32
    %161 = arith.addi %arg1, %c1_i32_88 : i32
    %c0_89 = arith.constant 0 : index
    %162 = arith.index_cast %161 : i32 to index
    %c37_90 = arith.constant 37 : index
    %c0_91 = arith.constant 0 : index
    %163 = vector.load %arg2[%c0_89, %162, %c37_90, %c0_91] : memref<1x18x326x1xf32, #tpu.memory_space<vmem>>, vector<1x1x288x1xf32>
    %164 = vector.shape_cast %163 : vector<1x1x288x1xf32> to vector<288x1xf32>
    %c16 = arith.constant 16 : index
    %c0_92 = arith.constant 0 : index
    %c0_93 = arith.constant 0 : index
    %165 = vector.load %arg3[%c16, %c0_92, %c0_93] : memref<27x1x4xf32, #tpu.memory_space<vmem>>, vector<1x1x4xf32>
    %166 = vector.shape_cast %165 : vector<1x1x4xf32> to vector<1x4xf32>
    %167 = vector.broadcast %164 : vector<288x1xf32> to vector<288x4xf32>
    %168 = vector.broadcast %166 : vector<1x4xf32> to vector<288x4xf32>
    %169 = arith.mulf %167, %168 : vector<288x4xf32>
    %170 = arith.addf %160, %169 : vector<288x4xf32>
    %c1_i32_94 = arith.constant 1 : i32
    %171 = arith.addi %arg1, %c1_i32_94 : i32
    %c0_95 = arith.constant 0 : index
    %172 = arith.index_cast %171 : i32 to index
    %c38_96 = arith.constant 38 : index
    %c0_97 = arith.constant 0 : index
    %173 = vector.load %arg2[%c0_95, %172, %c38_96, %c0_97] : memref<1x18x326x1xf32, #tpu.memory_space<vmem>>, vector<1x1x288x1xf32>
    %174 = vector.shape_cast %173 : vector<1x1x288x1xf32> to vector<288x1xf32>
    %c17 = arith.constant 17 : index
    %c0_98 = arith.constant 0 : index
    %c0_99 = arith.constant 0 : index
    %175 = vector.load %arg3[%c17, %c0_98, %c0_99] : memref<27x1x4xf32, #tpu.memory_space<vmem>>, vector<1x1x4xf32>
    %176 = vector.shape_cast %175 : vector<1x1x4xf32> to vector<1x4xf32>
    %177 = vector.broadcast %174 : vector<288x1xf32> to vector<288x4xf32>
    %178 = vector.broadcast %176 : vector<1x4xf32> to vector<288x4xf32>
    %179 = arith.mulf %177, %178 : vector<288x4xf32>
    %180 = arith.addf %170, %179 : vector<288x4xf32>
    %c2_i32 = arith.constant 2 : i32
    %181 = arith.addi %arg1, %c2_i32 : i32
    %c0_100 = arith.constant 0 : index
    %182 = arith.index_cast %181 : i32 to index
    %c0_101 = arith.constant 0 : index
    %c0_102 = arith.constant 0 : index
    %183 = vector.load %arg2[%c0_100, %182, %c0_101, %c0_102] : memref<1x18x326x1xf32, #tpu.memory_space<vmem>>, vector<1x1x288x1xf32>
    %184 = vector.shape_cast %183 : vector<1x1x288x1xf32> to vector<288x1xf32>
    %c18_103 = arith.constant 18 : index
    %c0_104 = arith.constant 0 : index
    %c0_105 = arith.constant 0 : index
    %185 = vector.load %arg3[%c18_103, %c0_104, %c0_105] : memref<27x1x4xf32, #tpu.memory_space<vmem>>, vector<1x1x4xf32>
    %186 = vector.shape_cast %185 : vector<1x1x4xf32> to vector<1x4xf32>
    %187 = vector.broadcast %184 : vector<288x1xf32> to vector<288x4xf32>
    %188 = vector.broadcast %186 : vector<1x4xf32> to vector<288x4xf32>
    %189 = arith.mulf %187, %188 : vector<288x4xf32>
    %190 = arith.addf %180, %189 : vector<288x4xf32>
    %c2_i32_106 = arith.constant 2 : i32
    %191 = arith.addi %arg1, %c2_i32_106 : i32
    %c0_107 = arith.constant 0 : index
    %192 = arith.index_cast %191 : i32 to index
    %c1_108 = arith.constant 1 : index
    %c0_109 = arith.constant 0 : index
    %193 = vector.load %arg2[%c0_107, %192, %c1_108, %c0_109] : memref<1x18x326x1xf32, #tpu.memory_space<vmem>>, vector<1x1x288x1xf32>
    %194 = vector.shape_cast %193 : vector<1x1x288x1xf32> to vector<288x1xf32>
    %c19_110 = arith.constant 19 : index
    %c0_111 = arith.constant 0 : index
    %c0_112 = arith.constant 0 : index
    %195 = vector.load %arg3[%c19_110, %c0_111, %c0_112] : memref<27x1x4xf32, #tpu.memory_space<vmem>>, vector<1x1x4xf32>
    %196 = vector.shape_cast %195 : vector<1x1x4xf32> to vector<1x4xf32>
    %197 = vector.broadcast %194 : vector<288x1xf32> to vector<288x4xf32>
    %198 = vector.broadcast %196 : vector<1x4xf32> to vector<288x4xf32>
    %199 = arith.mulf %197, %198 : vector<288x4xf32>
    %200 = arith.addf %190, %199 : vector<288x4xf32>
    %c2_i32_113 = arith.constant 2 : i32
    %201 = arith.addi %arg1, %c2_i32_113 : i32
    %c0_114 = arith.constant 0 : index
    %202 = arith.index_cast %201 : i32 to index
    %c2_115 = arith.constant 2 : index
    %c0_116 = arith.constant 0 : index
    %203 = vector.load %arg2[%c0_114, %202, %c2_115, %c0_116] : memref<1x18x326x1xf32, #tpu.memory_space<vmem>>, vector<1x1x288x1xf32>
    %204 = vector.shape_cast %203 : vector<1x1x288x1xf32> to vector<288x1xf32>
    %c20_117 = arith.constant 20 : index
    %c0_118 = arith.constant 0 : index
    %c0_119 = arith.constant 0 : index
    %205 = vector.load %arg3[%c20_117, %c0_118, %c0_119] : memref<27x1x4xf32, #tpu.memory_space<vmem>>, vector<1x1x4xf32>
    %206 = vector.shape_cast %205 : vector<1x1x4xf32> to vector<1x4xf32>
    %207 = vector.broadcast %204 : vector<288x1xf32> to vector<288x4xf32>
    %208 = vector.broadcast %206 : vector<1x4xf32> to vector<288x4xf32>
    %209 = arith.mulf %207, %208 : vector<288x4xf32>
    %210 = arith.addf %200, %209 : vector<288x4xf32>
    %c2_i32_120 = arith.constant 2 : i32
    %211 = arith.addi %arg1, %c2_i32_120 : i32
    %c0_121 = arith.constant 0 : index
    %212 = arith.index_cast %211 : i32 to index
    %c18_122 = arith.constant 18 : index
    %c0_123 = arith.constant 0 : index
    %213 = vector.load %arg2[%c0_121, %212, %c18_122, %c0_123] : memref<1x18x326x1xf32, #tpu.memory_space<vmem>>, vector<1x1x288x1xf32>
    %214 = vector.shape_cast %213 : vector<1x1x288x1xf32> to vector<288x1xf32>
    %c21 = arith.constant 21 : index
    %c0_124 = arith.constant 0 : index
    %c0_125 = arith.constant 0 : index
    %215 = vector.load %arg3[%c21, %c0_124, %c0_125] : memref<27x1x4xf32, #tpu.memory_space<vmem>>, vector<1x1x4xf32>
    %216 = vector.shape_cast %215 : vector<1x1x4xf32> to vector<1x4xf32>
    %217 = vector.broadcast %214 : vector<288x1xf32> to vector<288x4xf32>
    %218 = vector.broadcast %216 : vector<1x4xf32> to vector<288x4xf32>
    %219 = arith.mulf %217, %218 : vector<288x4xf32>
    %220 = arith.addf %210, %219 : vector<288x4xf32>
    %c2_i32_126 = arith.constant 2 : i32
    %221 = arith.addi %arg1, %c2_i32_126 : i32
    %c0_127 = arith.constant 0 : index
    %222 = arith.index_cast %221 : i32 to index
    %c19_128 = arith.constant 19 : index
    %c0_129 = arith.constant 0 : index
    %223 = vector.load %arg2[%c0_127, %222, %c19_128, %c0_129] : memref<1x18x326x1xf32, #tpu.memory_space<vmem>>, vector<1x1x288x1xf32>
    %224 = vector.shape_cast %223 : vector<1x1x288x1xf32> to vector<288x1xf32>
    %c22 = arith.constant 22 : index
    %c0_130 = arith.constant 0 : index
    %c0_131 = arith.constant 0 : index
    %225 = vector.load %arg3[%c22, %c0_130, %c0_131] : memref<27x1x4xf32, #tpu.memory_space<vmem>>, vector<1x1x4xf32>
    %226 = vector.shape_cast %225 : vector<1x1x4xf32> to vector<1x4xf32>
    %227 = vector.broadcast %224 : vector<288x1xf32> to vector<288x4xf32>
    %228 = vector.broadcast %226 : vector<1x4xf32> to vector<288x4xf32>
    %229 = arith.mulf %227, %228 : vector<288x4xf32>
    %230 = arith.addf %220, %229 : vector<288x4xf32>
    %c2_i32_132 = arith.constant 2 : i32
    %231 = arith.addi %arg1, %c2_i32_132 : i32
    %c0_133 = arith.constant 0 : index
    %232 = arith.index_cast %231 : i32 to index
    %c20_134 = arith.constant 20 : index
    %c0_135 = arith.constant 0 : index
    %233 = vector.load %arg2[%c0_133, %232, %c20_134, %c0_135] : memref<1x18x326x1xf32, #tpu.memory_space<vmem>>, vector<1x1x288x1xf32>
    %234 = vector.shape_cast %233 : vector<1x1x288x1xf32> to vector<288x1xf32>
    %c23 = arith.constant 23 : index
    %c0_136 = arith.constant 0 : index
    %c0_137 = arith.constant 0 : index
    %235 = vector.load %arg3[%c23, %c0_136, %c0_137] : memref<27x1x4xf32, #tpu.memory_space<vmem>>, vector<1x1x4xf32>
    %236 = vector.shape_cast %235 : vector<1x1x4xf32> to vector<1x4xf32>
    %237 = vector.broadcast %234 : vector<288x1xf32> to vector<288x4xf32>
    %238 = vector.broadcast %236 : vector<1x4xf32> to vector<288x4xf32>
    %239 = arith.mulf %237, %238 : vector<288x4xf32>
    %240 = arith.addf %230, %239 : vector<288x4xf32>
    %c2_i32_138 = arith.constant 2 : i32
    %241 = arith.addi %arg1, %c2_i32_138 : i32
    %c0_139 = arith.constant 0 : index
    %242 = arith.index_cast %241 : i32 to index
    %c36_140 = arith.constant 36 : index
    %c0_141 = arith.constant 0 : index
    %243 = vector.load %arg2[%c0_139, %242, %c36_140, %c0_141] : memref<1x18x326x1xf32, #tpu.memory_space<vmem>>, vector<1x1x288x1xf32>
    %244 = vector.shape_cast %243 : vector<1x1x288x1xf32> to vector<288x1xf32>
    %c24 = arith.constant 24 : index
    %c0_142 = arith.constant 0 : index
    %c0_143 = arith.constant 0 : index
    %245 = vector.load %arg3[%c24, %c0_142, %c0_143] : memref<27x1x4xf32, #tpu.memory_space<vmem>>, vector<1x1x4xf32>
    %246 = vector.shape_cast %245 : vector<1x1x4xf32> to vector<1x4xf32>
    %247 = vector.broadcast %244 : vector<288x1xf32> to vector<288x4xf32>
    %248 = vector.broadcast %246 : vector<1x4xf32> to vector<288x4xf32>
    %249 = arith.mulf %247, %248 : vector<288x4xf32>
    %250 = arith.addf %240, %249 : vector<288x4xf32>
    %c2_i32_144 = arith.constant 2 : i32
    %251 = arith.addi %arg1, %c2_i32_144 : i32
    %c0_145 = arith.constant 0 : index
    %252 = arith.index_cast %251 : i32 to index
    %c37_146 = arith.constant 37 : index
    %c0_147 = arith.constant 0 : index
    %253 = vector.load %arg2[%c0_145, %252, %c37_146, %c0_147] : memref<1x18x326x1xf32, #tpu.memory_space<vmem>>, vector<1x1x288x1xf32>
    %254 = vector.shape_cast %253 : vector<1x1x288x1xf32> to vector<288x1xf32>
    %c25 = arith.constant 25 : index
    %c0_148 = arith.constant 0 : index
    %c0_149 = arith.constant 0 : index
    %255 = vector.load %arg3[%c25, %c0_148, %c0_149] : memref<27x1x4xf32, #tpu.memory_space<vmem>>, vector<1x1x4xf32>
    %256 = vector.shape_cast %255 : vector<1x1x4xf32> to vector<1x4xf32>
    %257 = vector.broadcast %254 : vector<288x1xf32> to vector<288x4xf32>
    %258 = vector.broadcast %256 : vector<1x4xf32> to vector<288x4xf32>
    %259 = arith.mulf %257, %258 : vector<288x4xf32>
    %260 = arith.addf %250, %259 : vector<288x4xf32>
    %c2_i32_150 = arith.constant 2 : i32
    %261 = arith.addi %arg1, %c2_i32_150 : i32
    %c0_151 = arith.constant 0 : index
    %262 = arith.index_cast %261 : i32 to index
    %c38_152 = arith.constant 38 : index
    %c0_153 = arith.constant 0 : index
    %263 = vector.load %arg2[%c0_151, %262, %c38_152, %c0_153] : memref<1x18x326x1xf32, #tpu.memory_space<vmem>>, vector<1x1x288x1xf32>
    %264 = vector.shape_cast %263 : vector<1x1x288x1xf32> to vector<288x1xf32>
    %c26 = arith.constant 26 : index
    %c0_154 = arith.constant 0 : index
    %c0_155 = arith.constant 0 : index
    %265 = vector.load %arg3[%c26, %c0_154, %c0_155] : memref<27x1x4xf32, #tpu.memory_space<vmem>>, vector<1x1x4xf32>
    %266 = vector.shape_cast %265 : vector<1x1x4xf32> to vector<1x4xf32>
    %267 = vector.broadcast %264 : vector<288x1xf32> to vector<288x4xf32>
    %268 = vector.broadcast %266 : vector<1x4xf32> to vector<288x4xf32>
    %269 = arith.mulf %267, %268 : vector<288x4xf32>
    %270 = arith.addf %260, %269 : vector<288x4xf32>
    %c0_156 = arith.constant 0 : index
    %c0_157 = arith.constant 0 : index
    %271 = vector.load %arg4[%c0_156, %c0_157] : memref<1x4xf32, #tpu.memory_space<vmem>>, vector<1x4xf32>
    %272 = vector.broadcast %271 : vector<1x4xf32> to vector<288x4xf32>
    %273 = arith.mulf %270, %272 : vector<288x4xf32>
    %c0_158 = arith.constant 0 : index
    %c0_159 = arith.constant 0 : index
    %274 = vector.load %arg5[%c0_158, %c0_159] : memref<1x4xf32, #tpu.memory_space<vmem>>, vector<1x4xf32>
    %275 = vector.broadcast %274 : vector<1x4xf32> to vector<288x4xf32>
    %276 = arith.addf %273, %275 : vector<288x4xf32>
    %cst_160 = arith.constant 0.000000e+00 : f32
    %277 = vector.broadcast %cst_160 : f32 to vector<288x4xf32>
    %278 = arith.cmpf oge, %276, %277 : vector<288x4xf32>
    %cst_161 = arith.constant 2.000000e-01 : f32
    %279 = vector.broadcast %cst_161 : f32 to vector<288x4xf32>
    %280 = arith.mulf %279, %276 : vector<288x4xf32>
    %281 = arith.select %278, %276, %280 : vector<288x4xi1>, vector<288x4xf32>
    %c0_162 = arith.constant 0 : index
    %c0_163 = arith.constant 0 : index
    %c0_164 = arith.constant 0 : index
    %c0_165 = arith.constant 0 : index
    %282 = vector.load %arg6[%c0_162, %c0_163, %c0_164, %c0_165] : memref<1x1x288x4xf32, #tpu.memory_space<vmem>>, vector<1x1x288x4xf32>
    %283 = vector.shape_cast %282 : vector<1x1x288x4xf32> to vector<288x4xf32>
    %284 = vector.shape_cast %281 : vector<288x4xf32> to vector<1x1x288x4xf32>
    tpu.vector_store %arg6[%c0_162, %c0_163, %c0_164, %c0_165], %284 {strides = array<i32>} : memref<1x1x288x4xf32, #tpu.memory_space<vmem>>, vector<1x1x288x4xf32>,
    return
  }
  func.func @transform_0(%arg0: i32, %arg1: i32) -> (i32, i32, i32, i32) {
    %c0_i32 = arith.constant 0 : i32
    %c0_i32_0 = arith.constant 0 : i32
    %c0_i32_1 = arith.constant 0 : i32
    %c0_i32_2 = arith.constant 0 : i32
    return %arg0, %c0_i32, %c0_i32_0, %c0_i32_1 : i32, i32, i32, i32
  }
  func.func @transform_1(%arg0: i32, %arg1: i32) -> (i32, i32, i32) {
    %c0_i32 = arith.constant 0 : i32
    %c0_i32_0 = arith.constant 0 : i32
    %c0_i32_1 = arith.constant 0 : i32
    %c0_i32_2 = arith.constant 0 : i32
    return %c0_i32, %c0_i32_0, %c0_i32_1 : i32, i32, i32
  }
  func.func @transform_2(%arg0: i32, %arg1: i32) -> (i32, i32) {
    %c0_i32 = arith.constant 0 : i32
    %c0_i32_0 = arith.constant 0 : i32
    %c0_i32_1 = arith.constant 0 : i32
    return %c0_i32, %c0_i32_0 : i32, i32
  }
  func.func @transform_3(%arg0: i32, %arg1: i32) -> (i32, i32) {
    %c0_i32 = arith.constant 0 : i32
    %c0_i32_0 = arith.constant 0 : i32
    %c0_i32_1 = arith.constant 0 : i32
    return %c0_i32, %c0_i32_0 : i32, i32
  }
  func.func @transform_4(%arg0: i32, %arg1: i32) -> (i32, i32, i32, i32) {
    %c0_i32 = arith.constant 0 : i32
    %c0_i32_0 = arith.constant 0 : i32
    %c0_i32_1 = arith.constant 0 : i32
    return %arg0, %arg1, %c0_i32, %c0_i32_0 : i32, i32, i32, i32
  }
}

</mosaic_0001>

<llo_original>
// kernel: tpu_custom_call.1
$region0: #{tpu_custom_call.1}
  #allocation0 [shape = 'u32[]', space=smem, size = 0x4, offset = 0x4, fixed_abs, tag = 'smem constant byte address 0x4 - core index']
  #allocation1 [shape = 'u32[144,128]{1,0:T(1,128)}', space=vmem, size = 0x12000, scoped, tag = 'internal scratch']
  %s0 = inlined_call_operand.vmem [shape: f32[2,18,326,1], index: 0, kind: input, shape index: {}]
  %s1 = inlined_call_operand.vmem [shape: f32[27,1,4], index: 1, kind: input, shape index: {}]
  %s2 = inlined_call_operand.vmem [shape: f32[1,4], index: 2, kind: input, shape index: {}]
  %s3 = inlined_call_operand.vmem [shape: f32[1,4], index: 3, kind: input, shape index: {}]
  %s4 = inlined_call_operand.vmem [shape: f32[2,16,288,4], index: 4, kind: output, shape index: {}]
  %s5 = sld [smem:[#allocation0]]
  $region49: #{tpu_custom_call.1} parent=0
    _
  %s7 = ssub.s32 1, %s5
  %s8 = scalar_select 0, %s7, %s5
  loop: start=0, step=1, limit=34
  $region2: #{tpu_custom_call.1} parent=0 // loop_pre_header
    _
  $region3: #{tpu_custom_call.1} parent=0 // loop_header
    %s10 = sphi 0, %s14
    %p11 = scmp.ge.s32.totalorder %s10, 34
    %s17 = sphi 0, %s29
    %s18 = sphi 0, %s25
    %s19 = sphi 0, %s17
    %s20 = sphi 0, %s18
    %s21 = sphi 0, %s19
    %s22 = sphi 0, %s20
    %s32 = sphi 0, %s34
    %s35 = sphi 0, %s32
    %s36 = sphi 0, %s35
    %s52 = sphi 0, %s36
    %s56 = sphi 0, %s56
    %s58 = sphi 0, %s56
    %s59 = sphi 0, %s58
    %s73 = sphi 0, %s59
    %s77 = sphi 0, %s77
    %s79 = sphi 0, %s77
    %s80 = sphi 0, %s79
    %s94 = sphi 0, %s80
    %s98 = sphi 0, %s98
    %s100 = sphi 0, %s98
    %s101 = sphi 0, %s100
    %s115 = sphi 0, %s101
    %s123 = sphi 0, %s125
    %s126 = sphi 0, %s123
    %s127 = sphi 0, %s126
    %s143 = sphi 0, %s127
  $region4: #{tpu_custom_call.1} parent=0 // loop_header_branch
    %13 = sbr.rel (%p11) target = $region8
  $region5: #{tpu_custom_call.1} parent=0 // loop_body
    %s15 = ssub.s32 %s10, 1
    %s16 = ssub.s32 %s10, 2
    %s23 = sadd.s32 1, %s18
    %p24 = scmp.ge.s32.totalorder %s23, 16
    %s25 = scalar_select %p24, 0, %s23
    %s26 = sadd.s32 1, %s17
    %s27 = scalar_select %p24, %s26, %s17
    %p28 = scmp.ge.s32.totalorder %s27, 2
    %s29 = scalar_select %p28, 0, %s27
    %s30 = ssub.s32 %s17, %s29
    %p31 = scmp.eq.s32.totalorder %s30, 0
    %s33 = sadd.s32 %s32, 1
    %s34 = scalar_select %p31, %s32, %s33
    %p37 = pneg %p31
    %p38 = scmp.eq.s32.totalorder %s10, 31
    %p39 = por %p37, %p38
    %p40 = scmp.ne.s32.totalorder %s32, %s35
    %p41 = scmp.eq.s32.totalorder %s10, 0
    %p42 = por %p40, %p41
    %p43 = scmp.ne.s32.totalorder %s32, %s35
    %p44 = scmp.eq.s32.totalorder %s15, 31
    %p45 = por %p43, %p44
    %p46 = scmp.ne.s32.totalorder %s35, %s36
    %p47 = scmp.eq.s32.totalorder %s15, 0
    %p48 = por %p46, %p47
    %p49 = scmp.ne.s32.totalorder %s35, %s36
    %p50 = scmp.eq.s32.totalorder %s16, 31
    %p51 = por %p49, %p50
    %p53 = scmp.ne.s32.totalorder %s36, %s52
    %p54 = scmp.eq.s32.totalorder %s16, 0
    %p55 = por %p53, %p54
    %s57 = sadd.s32 %s56, 1
    %p60 = scmp.eq.s32.totalorder %s10, 31
    %p61 = scmp.ne.s32.totalorder %s56, %s58
    %p62 = scmp.eq.s32.totalorder %s10, 0
    %p63 = por %p61, %p62
    %p64 = scmp.ne.s32.totalorder %s56, %s58
    %p65 = scmp.eq.s32.totalorder %s15, 31
    %p66 = por %p64, %p65
    %p67 = scmp.ne.s32.totalorder %s58, %s59
    %p68 = scmp.eq.s32.totalorder %s15, 0
    %p69 = por %p67, %p68
    %p70 = scmp.ne.s32.totalorder %s58, %s59
    %p71 = scmp.eq.s32.totalorder %s16, 31
    %p72 = por %p70, %p71
    %p74 = scmp.ne.s32.totalorder %s59, %s73
    %p75 = scmp.eq.s32.totalorder %s16, 0
    %p76 = por %p74, %p75
    %s78 = sadd.s32 %s77, 1
    %p81 = scmp.eq.s32.totalorder %s10, 31
    %p82 = scmp.ne.s32.totalorder %s77, %s79
    %p83 = scmp.eq.s32.totalorder %s10, 0
    %p84 = por %p82, %p83
    %p85 = scmp.ne.s32.totalorder %s77, %s79
    %p86 = scmp.eq.s32.totalorder %s15, 31
    %p87 = por %p85, %p86
    %p88 = scmp.ne.s32.totalorder %s79, %s80
    %p89 = scmp.eq.s32.totalorder %s15, 0
    %p90 = por %p88, %p89
    %p91 = scmp.ne.s32.totalorder %s79, %s80
    %p92 = scmp.eq.s32.totalorder %s16, 31
    %p93 = por %p91, %p92
    %p95 = scmp.ne.s32.totalorder %s80, %s94
    %p96 = scmp.eq.s32.totalorder %s16, 0
    %p97 = por %p95, %p96
    %s99 = sadd.s32 %s98, 1
    %p102 = scmp.eq.s32.totalorder %s10, 31
    %p103 = scmp.ne.s32.totalorder %s98, %s100
    %p104 = scmp.eq.s32.totalorder %s10, 0
    %p105 = por %p103, %p104
    %p106 = scmp.ne.s32.totalorder %s98, %s100
    %p107 = scmp.eq.s32.totalorder %s15, 31
    %p108 = por %p106, %p107
    %p109 = scmp.ne.s32.totalorder %s100, %s101
    %p110 = scmp.eq.s32.totalorder %s15, 0
    %p111 = por %p109, %p110
    %p112 = scmp.ne.s32.totalorder %s100, %s101
    %p113 = scmp.eq.s32.totalorder %s16, 31
    %p114 = por %p112, %p113
    %p116 = scmp.ne.s32.totalorder %s101, %s115
    %p117 = scmp.eq.s32.totalorder %s16, 0
    %p118 = por %p116, %p117
    %s119 = ssub.s32 %s17, %s29
    %s120 = ssub.s32 %s18, %s25
    %s121 = sor.u32 %s119, %s120
    %p122 = scmp.eq.s32.totalorder %s121, 0
    %s124 = sadd.s32 %s123, 1
    %s125 = scalar_select %p122, %s123, %s124
    %p128 = pneg %p122
    %p129 = scmp.eq.s32.totalorder %s10, 31
    %p130 = por %p128, %p129
    %p131 = scmp.ne.s32.totalorder %s123, %s126
    %p132 = scmp.eq.s32.totalorder %s10, 0
    %p133 = por %p131, %p132
    %p134 = scmp.ne.s32.totalorder %s123, %s126
    %p135 = scmp.eq.s32.totalorder %s15, 31
    %p136 = por %p134, %p135
    %p137 = scmp.ne.s32.totalorder %s126, %s127
    %p138 = scmp.eq.s32.totalorder %s15, 0
    %p139 = por %p137, %p138
    %p140 = scmp.ne.s32.totalorder %s126, %s127
    %p141 = scmp.eq.s32.totalorder %s16, 31
    %p142 = por %p140, %p141
    %p144 = scmp.ne.s32.totalorder %s127, %s143
    %p145 = scmp.eq.s32.totalorder %s16, 0
    %p146 = por %p144, %p145
    %p147 = scmp.le.s32.totalorder 1, %s10
    %p148 = scmp.lt.s32.totalorder %s10, 33
    %p149 = pnand %p147, %p148
    %p150 = pneg %p149
    // Predicated region
    $region9: #{tpu_custom_call.1} parent=5 // pred_check
      _
    $region10: #{tpu_custom_call.1} parent=5 // pred_check_branch
      %152 = sbr.rel (%p149) target = $region12
    $region11: #{tpu_custom_call.1} parent=5 // pred_region
      %s153 = ssub.s32 %s10, 1
      // Predicated region
      $region13: #{tpu_custom_call.1} parent=11 // pred_check
        %p154 = pneg %p69
      $region14: #{tpu_custom_call.1} parent=11 // pred_check_branch
        %156 = sbr.rel (%p154) target = $region16
      $region15: #{tpu_custom_call.1} parent=11 // pred_region
        _
      $region16: #{tpu_custom_call.1} parent=11 // pred_fallthru
        _
      // Predicated region
      $region17: #{tpu_custom_call.1} parent=11 // pred_check
        %p157 = pneg %p90
      $region18: #{tpu_custom_call.1} parent=11 // pred_check_branch
        %159 = sbr.rel (%p157) target = $region20
      $region19: #{tpu_custom_call.1} parent=11 // pred_region
        _
      $region20: #{tpu_custom_call.1} parent=11 // pred_fallthru
        _
      // Predicated region
      $region21: #{tpu_custom_call.1} parent=11 // pred_check
        %p160 = pneg %p111
      $region22: #{tpu_custom_call.1} parent=11 // pred_check_branch
        %162 = sbr.rel (%p160) target = $region24
      $region23: #{tpu_custom_call.1} parent=11 // pred_region
        _
      $region24: #{tpu_custom_call.1} parent=11 // pred_fallthru
        _
    $region12: #{tpu_custom_call.1} parent=5 // pred_fallthru
      _
    %p163 = scmp.lt.s32.totalorder %s10, 32
    // Predicated region
    $region25: #{tpu_custom_call.1} parent=5 // pred_check
      %p164 = pneg %p163
    $region26: #{tpu_custom_call.1} parent=5 // pred_check_branch
      %166 = sbr.rel (%p164) target = $region28
    $region27: #{tpu_custom_call.1} parent=5 // pred_region
      // Predicated region
      $region29: #{tpu_custom_call.1} parent=27 // pred_check
        %p167 = pneg %p42
      $region30: #{tpu_custom_call.1} parent=27 // pred_check_branch
        %169 = sbr.rel (%p167) target = $region32
      $region31: #{tpu_custom_call.1} parent=27 // pred_region
        %p170 = scmp.lt.s32.totalorder %s17, 1
        %s171 = scalar_select %p170, %s17, 1
        %s172 = smul.addr %s171, 738
        %s173 = smul.addr %s172, 8
        %s174 = scalar_lea.vmem %s0, %s173
      $region32: #{tpu_custom_call.1} parent=27 // pred_fallthru
        _
    $region28: #{tpu_custom_call.1} parent=5 // pred_fallthru
      _
    %p175 = scmp.le.s32.totalorder 1, %s10
    %p176 = scmp.lt.s32.totalorder %s10, 33
    %p177 = pnand %p175, %p176
    %p178 = pneg %p177
    // Predicated region
    $region33: #{tpu_custom_call.1} parent=5 // pred_check
      _
    $region34: #{tpu_custom_call.1} parent=5 // pred_check_branch
      %180 = sbr.rel (%p177) target = $region36
    $region35: #{tpu_custom_call.1} parent=5 // pred_region
      %s181 = ssub.s32 %s10, 1
      %p182 = scmp.lt.s32.totalorder %s19, 1
      %s183 = scalar_select %p182, %s19, 1
      %s184 = smul.addr %s183, 738
      %s185 = smul.addr %s184, 8
      %s186 = scalar_lea.vmem %s0, %s185
      %p187 = pneg %p48
      %p188 = pneg %p45
      %p189 = pneg %p69
      %p190 = pneg %p66
      %p191 = pneg %p90
      %p192 = pneg %p87
      %p193 = pneg %p111
      %p194 = pneg %p108
      %p195 = pneg %p139
      %p196 = pneg %p136
      %p197 = scmp.lt.s32.totalorder %s19, 1
      %s198 = scalar_select %p197, %s19, 1
      %p199 = scmp.lt.s32.totalorder %s20, 15
      %s200 = scalar_select %p199, %s20, 15
      %s201 = smul.addr %s200, 36
      %s202 = smul.addr %s198, 576
      %s203 = sadd.s32 %s201, %s202
      %s204 = smul.addr %s203, 8
      %s205 = scalar_lea.vmem %s4, %s204
      %p206 = scmp.lt.s32.totalorder %s19, 1
      %s207 = scalar_select %p206, %s19, 1
      %s208 = smul.addr %s207, 738
      %s209 = smul.addr %s208, 8
      %s210 = scalar_lea.vmem %s0, %s209
      %p211 = scmp.lt.s32.totalorder %s19, 1
      %s212 = scalar_select %p211, %s19, 1
      %p213 = scmp.lt.s32.totalorder %s20, 15
      %s214 = scalar_select %p213, %s20, 15
      %s215 = smul.addr %s214, 36
      %s216 = smul.addr %s212, 576
      %s217 = sadd.s32 %s215, %s216
      %s218 = smul.addr %s217, 8
      %s219 = scalar_lea.vmem %s4, %s218
      %s220 = smul.u32 %s20, 328
      %s221 = scalar_lea.vmem %s210, %s220
      %v222 = vld [vmem:[%s221] sm:$0xff]
      %v223 = vld [vmem:[%s221 + $0x8] sm:$0xff]
      %v224 = vld [vmem:[%s221 + $0x10] sm:$0xff]
      %v225 = vld [vmem:[%s221 + $0x18] sm:$0xff]
      %v226 = vld [vmem:[%s221 + $0x20] sm:$0xff]
      %v227 = vld [vmem:[%s221 + $0x28] sm:$0xff]
      %v228 = vld [vmem:[%s221 + $0x30] sm:$0xff]
      %v229 = vld [vmem:[%s221 + $0x38] sm:$0xff]
      %v230 = vld [vmem:[%s221 + $0x40] sm:$0xff]
      %v231 = vld [vmem:[%s221 + $0x48] sm:$0xff]
      %v232 = vld [vmem:[%s221 + $0x50] sm:$0xff]
      %v233 = vld [vmem:[%s221 + $0x58] sm:$0xff]
      %v234 = vld [vmem:[%s221 + $0x60] sm:$0xff]
      %v235 = vld [vmem:[%s221 + $0x68] sm:$0xff]
      %v236 = vld [vmem:[%s221 + $0x70] sm:$0xff]
      %v237 = vld [vmem:[%s221 + $0x78] sm:$0xff]
      %v238 = vld [vmem:[%s221 + $0x80] sm:$0xff]
      %v239 = vld [vmem:[%s221 + $0x88] sm:$0xff]
      %v240 = vld [vmem:[%s221 + $0x90] sm:$0xff]
      %v241 = vld [vmem:[%s221 + $0x98] sm:$0xff]
      %v242 = vld [vmem:[%s221 + $0xa0] sm:$0xff]
      %v243 = vld [vmem:[%s221 + $0xa8] sm:$0xff]
      %v244 = vld [vmem:[%s221 + $0xb0] sm:$0xff]
      %v245 = vld [vmem:[%s221 + $0xb8] sm:$0xff]
      %v246 = vld [vmem:[%s221 + $0xc0] sm:$0xff]
      %v247 = vld [vmem:[%s221 + $0xc8] sm:$0xff]
      %v248 = vld [vmem:[%s221 + $0xd0] sm:$0xff]
      %v249 = vld [vmem:[%s221 + $0xd8] sm:$0xff]
      %v250 = vld [vmem:[%s221 + $0xe0] sm:$0xff]
      %v251 = vld [vmem:[%s221 + $0xe8] sm:$0xff]
      %v252 = vld [vmem:[%s221 + $0xf0] sm:$0xff]
      %v253 = vld [vmem:[%s221 + $0xf8] sm:$0xff]
      %v254 = vld [vmem:[%s221 + $0x100] sm:$0xff]
      %v255 = vld [vmem:[%s221 + $0x108] sm:$0xff]
      %v256 = vld [vmem:[%s221 + $0x110] sm:$0xff]
      %v257 = vld [vmem:[%s221 + $0x118] sm:$0xff]
      %v258 = vld [vmem:[%s1] sm:$0x1]
      %260 = vset.pattern.permute.xlu0 0
      %261 = vperm.xlu0 %260, %v222
      %v262 = vpop.permute.xlu0 %261
      %265 = vset.pattern.permute.xlu0 0
      %266 = vperm.xlu0 %265, %v223
      %v267 = vpop.permute.xlu0 %266
      %270 = vset.pattern.permute.xlu0 0
      %271 = vperm.xlu0 %270, %v224
      %v272 = vpop.permute.xlu0 %271
      %275 = vset.pattern.permute.xlu0 0
      %276 = vperm.xlu0 %275, %v225
      %v277 = vpop.permute.xlu0 %276
      %280 = vset.pattern.permute.xlu0 0
      %281 = vperm.xlu0 %280, %v226
      %v282 = vpop.permute.xlu0 %281
      %285 = vset.pattern.permute.xlu0 0
      %286 = vperm.xlu0 %285, %v227
      %v287 = vpop.permute.xlu0 %286
      %290 = vset.pattern.permute.xlu0 0
      %291 = vperm.xlu0 %290, %v228
      %v292 = vpop.permute.xlu0 %291
      %295 = vset.pattern.permute.xlu0 0
      %296 = vperm.xlu0 %295, %v229
      %v297 = vpop.permute.xlu0 %296
      %300 = vset.pattern.permute.xlu0 0
      %301 = vperm.xlu0 %300, %v230
      %v302 = vpop.permute.xlu0 %301
      %305 = vset.pattern.permute.xlu0 0
      %306 = vperm.xlu0 %305, %v231
      %v307 = vpop.permute.xlu0 %306
      %310 = vset.pattern.permute.xlu0 0
      %311 = vperm.xlu0 %310, %v232
      %v312 = vpop.permute.xlu0 %311
      %315 = vset.pattern.permute.xlu0 0
      %316 = vperm.xlu0 %315, %v233
      %v317 = vpop.permute.xlu0 %316
      %320 = vset.pattern.permute.xlu0 0
      %321 = vperm.xlu0 %320, %v234
      %v322 = vpop.permute.xlu0 %321
      %325 = vset.pattern.permute.xlu0 0
      %326 = vperm.xlu0 %325, %v235
      %v327 = vpop.permute.xlu0 %326
      %330 = vset.pattern.permute.xlu0 0
      %331 = vperm.xlu0 %330, %v236
      %v332 = vpop.permute.xlu0 %331
      %335 = vset.pattern.permute.xlu0 0
      %336 = vperm.xlu0 %335, %v237
      %v337 = vpop.permute.xlu0 %336
      %340 = vset.pattern.permute.xlu0 0
      %341 = vperm.xlu0 %340, %v238
      %v342 = vpop.permute.xlu0 %341
      %345 = vset.pattern.permute.xlu0 0
      %346 = vperm.xlu0 %345, %v239
      %v347 = vpop.permute.xlu0 %346
      %350 = vset.pattern.permute.xlu0 0
      %351 = vperm.xlu0 %350, %v240
      %v352 = vpop.permute.xlu0 %351
      %355 = vset.pattern.permute.xlu0 0
      %356 = vperm.xlu0 %355, %v241
      %v357 = vpop.permute.xlu0 %356
      %360 = vset.pattern.permute.xlu0 0
      %361 = vperm.xlu0 %360, %v242
      %v362 = vpop.permute.xlu0 %361
      %365 = vset.pattern.permute.xlu0 0
      %366 = vperm.xlu0 %365, %v243
      %v367 = vpop.permute.xlu0 %366
      %370 = vset.pattern.permute.xlu0 0
      %371 = vperm.xlu0 %370, %v244
      %v372 = vpop.permute.xlu0 %371
      %375 = vset.pattern.permute.xlu0 0
      %376 = vperm.xlu0 %375, %v245
      %v377 = vpop.permute.xlu0 %376
      %380 = vset.pattern.permute.xlu0 0
      %381 = vperm.xlu0 %380, %v246
      %v382 = vpop.permute.xlu0 %381
      %385 = vset.pattern.permute.xlu0 0
      %386 = vperm.xlu0 %385, %v247
      %v387 = vpop.permute.xlu0 %386
      %390 = vset.pattern.permute.xlu0 0
      %391 = vperm.xlu0 %390, %v248
      %v392 = vpop.permute.xlu0 %391
      %395 = vset.pattern.permute.xlu0 0
      %396 = vperm.xlu0 %395, %v249
      %v397 = vpop.permute.xlu0 %396
      %400 = vset.pattern.permute.xlu0 0
      %401 = vperm.xlu0 %400, %v250
      %v402 = vpop.permute.xlu0 %401
      %405 = vset.pattern.permute.xlu0 0
      %406 = vperm.xlu0 %405, %v251
      %v407 = vpop.permute.xlu0 %406
      %410 = vset.pattern.permute.xlu0 0
      %411 = vperm.xlu0 %410, %v252
      %v412 = vpop.permute.xlu0 %411
      %415 = vset.pattern.permute.xlu0 0
      %416 = vperm.xlu0 %415, %v253
      %v417 = vpop.permute.xlu0 %416
      %420 = vset.pattern.permute.xlu0 0
      %421 = vperm.xlu0 %420, %v254
      %v422 = vpop.permute.xlu0 %421
      %425 = vset.pattern.permute.xlu0 0
      %426 = vperm.xlu0 %425, %v255
      %v427 = vpop.permute.xlu0 %426
      %430 = vset.pattern.permute.xlu0 0
      %431 = vperm.xlu0 %430, %v256
      %v432 = vpop.permute.xlu0 %431
      %435 = vset.pattern.permute.xlu0 0
      %436 = vperm.xlu0 %435, %v257
      %v437 = vpop.permute.xlu0 %436
      %v440 = vlaneseq
      %v441 = vshrl.u32 %v440, 7
      %v442 = vsub.s32 0, %v441
      %v443 = vrot.slane %v258, %v442
      %v445 = vmul.f32 %v262, %v443
      %v446 = vmul.f32 %v267, %v443
      %v447 = vmul.f32 %v272, %v443
      %v448 = vmul.f32 %v277, %v443
      %v449 = vmul.f32 %v282, %v443
      %v450 = vmul.f32 %v287, %v443
      %v451 = vmul.f32 %v292, %v443
      %v452 = vmul.f32 %v297, %v443
      %v453 = vmul.f32 %v302, %v443
      %v454 = vmul.f32 %v307, %v443
      %v455 = vmul.f32 %v312, %v443
      %v456 = vmul.f32 %v317, %v443
      %v457 = vmul.f32 %v322, %v443
      %v458 = vmul.f32 %v327, %v443
      %v459 = vmul.f32 %v332, %v443
      %v460 = vmul.f32 %v337, %v443
      %v461 = vmul.f32 %v342, %v443
      %v462 = vmul.f32 %v347, %v443
      %v463 = vmul.f32 %v352, %v443
      %v464 = vmul.f32 %v357, %v443
      %v465 = vmul.f32 %v362, %v443
      %v466 = vmul.f32 %v367, %v443
      %v467 = vmul.f32 %v372, %v443
      %v468 = vmul.f32 %v377, %v443
      %v469 = vmul.f32 %v382, %v443
      %v470 = vmul.f32 %v387, %v443
      %v471 = vmul.f32 %v392, %v443
      %v472 = vmul.f32 %v397, %v443
      %v473 = vmul.f32 %v402, %v443
      %v474 = vmul.f32 %v407, %v443
      %v475 = vmul.f32 %v412, %v443
      %v476 = vmul.f32 %v417, %v443
      %v477 = vmul.f32 %v422, %v443
      %v478 = vmul.f32 %v427, %v443
      %v479 = vmul.f32 %v432, %v443
      %v480 = vmul.f32 %v437, %v443
      %v481 = vadd.f32 %v445, 0.0
      %v482 = vadd.f32 %v446, 0.0
      %v483 = vadd.f32 %v447, 0.0
      %v484 = vadd.f32 %v448, 0.0
      %v485 = vadd.f32 %v449, 0.0
      %v486 = vadd.f32 %v450, 0.0
      %v487 = vadd.f32 %v451, 0.0
      %v488 = vadd.f32 %v452, 0.0
      %v489 = vadd.f32 %v453, 0.0
      %v490 = vadd.f32 %v454, 0.0
      %v491 = vadd.f32 %v455, 0.0
      %v492 = vadd.f32 %v456, 0.0
      %v493 = vadd.f32 %v457, 0.0
      %v494 = vadd.f32 %v458, 0.0
      %v495 = vadd.f32 %v459, 0.0
      %v496 = vadd.f32 %v460, 0.0
      %v497 = vadd.f32 %v461, 0.0
      %v498 = vadd.f32 %v462, 0.0
      %v499 = vadd.f32 %v463, 0.0
      %v500 = vadd.f32 %v464, 0.0
      %v501 = vadd.f32 %v465, 0.0
      %v502 = vadd.f32 %v466, 0.0
      %v503 = vadd.f32 %v467, 0.0
      %v504 = vadd.f32 %v468, 0.0
      %v505 = vadd.f32 %v469, 0.0
      %v506 = vadd.f32 %v470, 0.0
      %v507 = vadd.f32 %v471, 0.0
      %v508 = vadd.f32 %v472, 0.0
      %v509 = vadd.f32 %v473, 0.0
      %v510 = vadd.f32 %v474, 0.0
      %v511 = vadd.f32 %v475, 0.0
      %v512 = vadd.f32 %v476, 0.0
      %v513 = vadd.f32 %v477, 0.0
      %v514 = vadd.f32 %v478, 0.0
      %v515 = vadd.f32 %v479, 0.0
      %v516 = vadd.f32 %v480, 0.0
      %v517 = vld [vmem:[%s221 + $0x1] sm:$0xff]
      %v518 = vld [vmem:[%s221 + $0x9] sm:$0xff]
      %v519 = vld [vmem:[%s221 + $0x11] sm:$0xff]
      %v520 = vld [vmem:[%s221 + $0x19] sm:$0xff]
      %v521 = vld [vmem:[%s221 + $0x21] sm:$0xff]
      %v522 = vld [vmem:[%s221 + $0x29] sm:$0xff]
      %v523 = vld [vmem:[%s221 + $0x31] sm:$0xff]
      %v524 = vld [vmem:[%s221 + $0x39] sm:$0xff]
      %v525 = vld [vmem:[%s221 + $0x41] sm:$0xff]
      %v526 = vld [vmem:[%s221 + $0x49] sm:$0xff]
      %v527 = vld [vmem:[%s221 + $0x51] sm:$0xff]
      %v528 = vld [vmem:[%s221 + $0x59] sm:$0xff]
      %v529 = vld [vmem:[%s221 + $0x61] sm:$0xff]
      %v530 = vld [vmem:[%s221 + $0x69] sm:$0xff]
      %v531 = vld [vmem:[%s221 + $0x71] sm:$0xff]
      %v532 = vld [vmem:[%s221 + $0x79] sm:$0xff]
      %v533 = vld [vmem:[%s221 + $0x81] sm:$0xff]
      %v534 = vld [vmem:[%s221 + $0x89] sm:$0xff]
      %v535 = vld [vmem:[%s221 + $0x91] sm:$0xff]
      %v536 = vld [vmem:[%s221 + $0x99] sm:$0xff]
      %v537 = vld [vmem:[%s221 + $0xa1] sm:$0xff]
      %v538 = vld [vmem:[%s221 + $0xa9] sm:$0xff]
      %v539 = vld [vmem:[%s221 + $0xb1] sm:$0xff]
      %v540 = vld [vmem:[%s221 + $0xb9] sm:$0xff]
      %v541 = vld [vmem:[%s221 + $0xc1] sm:$0xff]
      %v542 = vld [vmem:[%s221 + $0xc9] sm:$0xff]
      %v543 = vld [vmem:[%s221 + $0xd1] sm:$0xff]
      %v544 = vld [vmem:[%s221 + $0xd9] sm:$0xff]
      %v545 = vld [vmem:[%s221 + $0xe1] sm:$0xff]
      %v546 = vld [vmem:[%s221 + $0xe9] sm:$0xff]
      %v547 = vld [vmem:[%s221 + $0xf1] sm:$0xff]
      %v548 = vld [vmem:[%s221 + $0xf9] sm:$0xff]
      %v549 = vld [vmem:[%s221 + $0x101] sm:$0xff]
      %v550 = vld [vmem:[%s221 + $0x109] sm:$0xff]
      %v551 = vld [vmem:[%s221 + $0x111] sm:$0xff]
      %v552 = vld [vmem:[%s221 + $0x119] sm:$0xff]
      %s553 = scalar_lea.vmem %s1, 1
      %v554 = vld [vmem:[%s553] sm:$0x1]
      %556 = vset.pattern.permute.xlu0 0
      %557 = vperm.xlu0 %556, %v517
      %v558 = vpop.permute.xlu0 %557
      %561 = vset.pattern.permute.xlu0 0
      %562 = vperm.xlu0 %561, %v518
      %v563 = vpop.permute.xlu0 %562
      %566 = vset.pattern.permute.xlu0 0
      %567 = vperm.xlu0 %566, %v519
      %v568 = vpop.permute.xlu0 %567
      %571 = vset.pattern.permute.xlu0 0
      %572 = vperm.xlu0 %571, %v520
      %v573 = vpop.permute.xlu0 %572
      %576 = vset.pattern.permute.xlu0 0
      %577 = vperm.xlu0 %576, %v521
      %v578 = vpop.permute.xlu0 %577
      %581 = vset.pattern.permute.xlu0 0
      %582 = vperm.xlu0 %581, %v522
      %v583 = vpop.permute.xlu0 %582
      %586 = vset.pattern.permute.xlu0 0
      %587 = vperm.xlu0 %586, %v523
      %v588 = vpop.permute.xlu0 %587
      %591 = vset.pattern.permute.xlu0 0
      %592 = vperm.xlu0 %591, %v524
      %v593 = vpop.permute.xlu0 %592
      %596 = vset.pattern.permute.xlu0 0
      %597 = vperm.xlu0 %596, %v525
      %v598 = vpop.permute.xlu0 %597
      %601 = vset.pattern.permute.xlu0 0
      %602 = vperm.xlu0 %601, %v526
      %v603 = vpop.permute.xlu0 %602
      %606 = vset.pattern.permute.xlu0 0
      %607 = vperm.xlu0 %606, %v527
      %v608 = vpop.permute.xlu0 %607
      %611 = vset.pattern.permute.xlu0 0
      %612 = vperm.xlu0 %611, %v528
      %v613 = vpop.permute.xlu0 %612
      %616 = vset.pattern.permute.xlu0 0
      %617 = vperm.xlu0 %616, %v529
      %v618 = vpop.permute.xlu0 %617
      %621 = vset.pattern.permute.xlu0 0
      %622 = vperm.xlu0 %621, %v530
      %v623 = vpop.permute.xlu0 %622
      %626 = vset.pattern.permute.xlu0 0
      %627 = vperm.xlu0 %626, %v531
      %v628 = vpop.permute.xlu0 %627
      %631 = vset.pattern.permute.xlu0 0
      %632 = vperm.xlu0 %631, %v532
      %v633 = vpop.permute.xlu0 %632
      %636 = vset.pattern.permute.xlu0 0
      %637 = vperm.xlu0 %636, %v533
      %v638 = vpop.permute.xlu0 %637
      %641 = vset.pattern.permute.xlu0 0
      %642 = vperm.xlu0 %641, %v534
      %v643 = vpop.permute.xlu0 %642
      %646 = vset.pattern.permute.xlu0 0
      %647 = vperm.xlu0 %646, %v535
      %v648 = vpop.permute.xlu0 %647
      %651 = vset.pattern.permute.xlu0 0
      %652 = vperm.xlu0 %651, %v536
      %v653 = vpop.permute.xlu0 %652
      %656 = vset.pattern.permute.xlu0 0
      %657 = vperm.xlu0 %656, %v537
      %v658 = vpop.permute.xlu0 %657
      %661 = vset.pattern.permute.xlu0 0
      %662 = vperm.xlu0 %661, %v538
      %v663 = vpop.permute.xlu0 %662
      %666 = vset.pattern.permute.xlu0 0
      %667 = vperm.xlu0 %666, %v539
      %v668 = vpop.permute.xlu0 %667
      %671 = vset.pattern.permute.xlu0 0
      %672 = vperm.xlu0 %671, %v540
      %v673 = vpop.permute.xlu0 %672
      %676 = vset.pattern.permute.xlu0 0
      %677 = vperm.xlu0 %676, %v541
      %v678 = vpop.permute.xlu0 %677
      %681 = vset.pattern.permute.xlu0 0
      %682 = vperm.xlu0 %681, %v542
      %v683 = vpop.permute.xlu0 %682
      %686 = vset.pattern.permute.xlu0 0
      %687 = vperm.xlu0 %686, %v543
      %v688 = vpop.permute.xlu0 %687
      %691 = vset.pattern.permute.xlu0 0
      %692 = vperm.xlu0 %691, %v544
      %v693 = vpop.permute.xlu0 %692
      %696 = vset.pattern.permute.xlu0 0
      %697 = vperm.xlu0 %696, %v545
      %v698 = vpop.permute.xlu0 %697
      %701 = vset.pattern.permute.xlu0 0
      %702 = vperm.xlu0 %701, %v546
      %v703 = vpop.permute.xlu0 %702
      %706 = vset.pattern.permute.xlu0 0
      %707 = vperm.xlu0 %706, %v547
      %v708 = vpop.permute.xlu0 %707
      %711 = vset.pattern.permute.xlu0 0
      %712 = vperm.xlu0 %711, %v548
      %v713 = vpop.permute.xlu0 %712
      %716 = vset.pattern.permute.xlu0 0
      %717 = vperm.xlu0 %716, %v549
      %v718 = vpop.permute.xlu0 %717
      %721 = vset.pattern.permute.xlu0 0
      %722 = vperm.xlu0 %721, %v550
      %v723 = vpop.permute.xlu0 %722
      %726 = vset.pattern.permute.xlu0 0
      %727 = vperm.xlu0 %726, %v551
      %v728 = vpop.permute.xlu0 %727
      %731 = vset.pattern.permute.xlu0 0
      %732 = vperm.xlu0 %731, %v552
      %v733 = vpop.permute.xlu0 %732
      %v736 = vlaneseq
      %v737 = vshrl.u32 %v736, 7
      %v738 = vsub.s32 0, %v737
      %v739 = vrot.slane %v554, %v738
      %v741 = vmul.f32 %v558, %v739
      %v742 = vmul.f32 %v563, %v739
      %v743 = vmul.f32 %v568, %v739
      %v744 = vmul.f32 %v573, %v739
      %v745 = vmul.f32 %v578, %v739
      %v746 = vmul.f32 %v583, %v739
      %v747 = vmul.f32 %v588, %v739
      %v748 = vmul.f32 %v593, %v739
      %v749 = vmul.f32 %v598, %v739
      %v750 = vmul.f32 %v603, %v739
      %v751 = vmul.f32 %v608, %v739
      %v752 = vmul.f32 %v613, %v739
      %v753 = vmul.f32 %v618, %v739
      %v754 = vmul.f32 %v623, %v739
      %v755 = vmul.f32 %v628, %v739
      %v756 = vmul.f32 %v633, %v739
      %v757 = vmul.f32 %v638, %v739
      %v758 = vmul.f32 %v643, %v739
      %v759 = vmul.f32 %v648, %v739
      %v760 = vmul.f32 %v653, %v739
      %v761 = vmul.f32 %v658, %v739
      %v762 = vmul.f32 %v663, %v739
      %v763 = vmul.f32 %v668, %v739
      %v764 = vmul.f32 %v673, %v739
      %v765 = vmul.f32 %v678, %v739
      %v766 = vmul.f32 %v683, %v739
      %v767 = vmul.f32 %v688, %v739
      %v768 = vmul.f32 %v693, %v739
      %v769 = vmul.f32 %v698, %v739
      %v770 = vmul.f32 %v703, %v739
      %v771 = vmul.f32 %v708, %v739
      %v772 = vmul.f32 %v713, %v739
      %v773 = vmul.f32 %v718, %v739
      %v774 = vmul.f32 %v723, %v739
      %v775 = vmul.f32 %v728, %v739
      %v776 = vmul.f32 %v733, %v739
      %v777 = vadd.f32 %v481, %v741
      %v778 = vadd.f32 %v482, %v742
      %v779 = vadd.f32 %v483, %v743
      %v780 = vadd.f32 %v484, %v744
      %v781 = vadd.f32 %v485, %v745
      %v782 = vadd.f32 %v486, %v746
      %v783 = vadd.f32 %v487, %v747
      %v784 = vadd.f32 %v488, %v748
      %v785 = vadd.f32 %v489, %v749
      %v786 = vadd.f32 %v490, %v750
      %v787 = vadd.f32 %v491, %v751
      %v788 = vadd.f32 %v492, %v752
      %v789 = vadd.f32 %v493, %v753
      %v790 = vadd.f32 %v494, %v754
      %v791 = vadd.f32 %v495, %v755
      %v792 = vadd.f32 %v496, %v756
      %v793 = vadd.f32 %v497, %v757
      %v794 = vadd.f32 %v498, %v758
      %v795 = vadd.f32 %v499, %v759
      %v796 = vadd.f32 %v500, %v760
      %v797 = vadd.f32 %v501, %v761
      %v798 = vadd.f32 %v502, %v762
      %v799 = vadd.f32 %v503, %v763
      %v800 = vadd.f32 %v504, %v764
      %v801 = vadd.f32 %v505, %v765
      %v802 = vadd.f32 %v506, %v766
      %v803 = vadd.f32 %v507, %v767
      %v804 = vadd.f32 %v508, %v768
      %v805 = vadd.f32 %v509, %v769
      %v806 = vadd.f32 %v510, %v770
      %v807 = vadd.f32 %v511, %v771
      %v808 = vadd.f32 %v512, %v772
      %v809 = vadd.f32 %v513, %v773
      %v810 = vadd.f32 %v514, %v774
      %v811 = vadd.f32 %v515, %v775
      %v812 = vadd.f32 %v516, %v776
      %v813 = vld [vmem:[%s221 + $0x2] sm:$0xff]
      %v814 = vld [vmem:[%s221 + $0xa] sm:$0xff]
      %v815 = vld [vmem:[%s221 + $0x12] sm:$0xff]
      %v816 = vld [vmem:[%s221 + $0x1a] sm:$0xff]
      %v817 = vld [vmem:[%s221 + $0x22] sm:$0xff]
      %v818 = vld [vmem:[%s221 + $0x2a] sm:$0xff]
      %v819 = vld [vmem:[%s221 + $0x32] sm:$0xff]
      %v820 = vld [vmem:[%s221 + $0x3a] sm:$0xff]
      %v821 = vld [vmem:[%s221 + $0x42] sm:$0xff]
      %v822 = vld [vmem:[%s221 + $0x4a] sm:$0xff]
      %v823 = vld [vmem:[%s221 + $0x52] sm:$0xff]
      %v824 = vld [vmem:[%s221 + $0x5a] sm:$0xff]
      %v825 = vld [vmem:[%s221 + $0x62] sm:$0xff]
      %v826 = vld [vmem:[%s221 + $0x6a] sm:$0xff]
      %v827 = vld [vmem:[%s221 + $0x72] sm:$0xff]
      %v828 = vld [vmem:[%s221 + $0x7a] sm:$0xff]
      %v829 = vld [vmem:[%s221 + $0x82] sm:$0xff]
      %v830 = vld [vmem:[%s221 + $0x8a] sm:$0xff]
      %v831 = vld [vmem:[%s221 + $0x92] sm:$0xff]
      %v832 = vld [vmem:[%s221 + $0x9a] sm:$0xff]
      %v833 = vld [vmem:[%s221 + $0xa2] sm:$0xff]
      %v834 = vld [vmem:[%s221 + $0xaa] sm:$0xff]
      %v835 = vld [vmem:[%s221 + $0xb2] sm:$0xff]
      %v836 = vld [vmem:[%s221 + $0xba] sm:$0xff]
      %v837 = vld [vmem:[%s221 + $0xc2] sm:$0xff]
      %v838 = vld [vmem:[%s221 + $0xca] sm:$0xff]
      %v839 = vld [vmem:[%s221 + $0xd2] sm:$0xff]
      %v840 = vld [vmem:[%s221 + $0xda] sm:$0xff]
      %v841 = vld [vmem:[%s221 + $0xe2] sm:$0xff]
      %v842 = vld [vmem:[%s221 + $0xea] sm:$0xff]
      %v843 = vld [vmem:[%s221 + $0xf2] sm:$0xff]
      %v844 = vld [vmem:[%s221 + $0xfa] sm:$0xff]
      %v845 = vld [vmem:[%s221 + $0x102] sm:$0xff]
      %v846 = vld [vmem:[%s221 + $0x10a] sm:$0xff]
      %v847 = vld [vmem:[%s221 + $0x112] sm:$0xff]
      %v848 = vld [vmem:[%s221 + $0x11a] sm:$0xff]
      %s849 = scalar_lea.vmem %s1, 2
      %v850 = vld [vmem:[%s849] sm:$0x1]
      %852 = vset.pattern.permute.xlu0 0
      %853 = vperm.xlu0 %852, %v813
      %v854 = vpop.permute.xlu0 %853
      %857 = vset.pattern.permute.xlu0 0
      %858 = vperm.xlu0 %857, %v814
      %v859 = vpop.permute.xlu0 %858
      %862 = vset.pattern.permute.xlu0 0
      %863 = vperm.xlu0 %862, %v815
      %v864 = vpop.permute.xlu0 %863
      %867 = vset.pattern.permute.xlu0 0
      %868 = vperm.xlu0 %867, %v816
      %v869 = vpop.permute.xlu0 %868
      %872 = vset.pattern.permute.xlu0 0
      %873 = vperm.xlu0 %872, %v817
      %v874 = vpop.permute.xlu0 %873
      %877 = vset.pattern.permute.xlu0 0
      %878 = vperm.xlu0 %877, %v818
      %v879 = vpop.permute.xlu0 %878
      %882 = vset.pattern.permute.xlu0 0
      %883 = vperm.xlu0 %882, %v819
      %v884 = vpop.permute.xlu0 %883
      %887 = vset.pattern.permute.xlu0 0
      %888 = vperm.xlu0 %887, %v820
      %v889 = vpop.permute.xlu0 %888
      %892 = vset.pattern.permute.xlu0 0
      %893 = vperm.xlu0 %892, %v821
      %v894 = vpop.permute.xlu0 %893
      %897 = vset.pattern.permute.xlu0 0
      %898 = vperm.xlu0 %897, %v822
      %v899 = vpop.permute.xlu0 %898
      %902 = vset.pattern.permute.xlu0 0
      %903 = vperm.xlu0 %902, %v823
      %v904 = vpop.permute.xlu0 %903
      %907 = vset.pattern.permute.xlu0 0
      %908 = vperm.xlu0 %907, %v824
      %v909 = vpop.permute.xlu0 %908
      %912 = vset.pattern.permute.xlu0 0
      %913 = vperm.xlu0 %912, %v825
      %v914 = vpop.permute.xlu0 %913
      %917 = vset.pattern.permute.xlu0 0
      %918 = vperm.xlu0 %917, %v826
      %v919 = vpop.permute.xlu0 %918
      %922 = vset.pattern.permute.xlu0 0
      %923 = vperm.xlu0 %922, %v827
      %v924 = vpop.permute.xlu0 %923
      %927 = vset.pattern.permute.xlu0 0
      %928 = vperm.xlu0 %927, %v828
      %v929 = vpop.permute.xlu0 %928
      %932 = vset.pattern.permute.xlu0 0
      %933 = vperm.xlu0 %932, %v829
      %v934 = vpop.permute.xlu0 %933
      %937 = vset.pattern.permute.xlu0 0
      %938 = vperm.xlu0 %937, %v830
      %v939 = vpop.permute.xlu0 %938
      %942 = vset.pattern.permute.xlu0 0
      %943 = vperm.xlu0 %942, %v831
      %v944 = vpop.permute.xlu0 %943
      %947 = vset.pattern.permute.xlu0 0
      %948 = vperm.xlu0 %947, %v832
      %v949 = vpop.permute.xlu0 %948
      %952 = vset.pattern.permute.xlu0 0
      %953 = vperm.xlu0 %952, %v833
      %v954 = vpop.permute.xlu0 %953
      %957 = vset.pattern.permute.xlu0 0
      %958 = vperm.xlu0 %957, %v834
      %v959 = vpop.permute.xlu0 %958
      %962 = vset.pattern.permute.xlu0 0
      %963 = vperm.xlu0 %962, %v835
      %v964 = vpop.permute.xlu0 %963
      %967 = vset.pattern.permute.xlu0 0
      %968 = vperm.xlu0 %967, %v836
      %v969 = vpop.permute.xlu0 %968
      %972 = vset.pattern.permute.xlu0 0
      %973 = vperm.xlu0 %972, %v837
      %v974 = vpop.permute.xlu0 %973
      %977 = vset.pattern.permute.xlu0 0
      %978 = vperm.xlu0 %977, %v838
      %v979 = vpop.permute.xlu0 %978
      %982 = vset.pattern.permute.xlu0 0
      %983 = vperm.xlu0 %982, %v839
      %v984 = vpop.permute.xlu0 %983
      %987 = vset.pattern.permute.xlu0 0
      %988 = vperm.xlu0 %987, %v840
      %v989 = vpop.permute.xlu0 %988
      %992 = vset.pattern.permute.xlu0 0
      %993 = vperm.xlu0 %992, %v841
      %v994 = vpop.permute.xlu0 %993
      %997 = vset.pattern.permute.xlu0 0
      %998 = vperm.xlu0 %997, %v842
      %v999 = vpop.permute.xlu0 %998
      %1002 = vset.pattern.permute.xlu0 0
      %1003 = vperm.xlu0 %1002, %v843
      %v1004 = vpop.permute.xlu0 %1003
      %1007 = vset.pattern.permute.xlu0 0
      %1008 = vperm.xlu0 %1007, %v844
      %v1009 = vpop.permute.xlu0 %1008
      %1012 = vset.pattern.permute.xlu0 0
      %1013 = vperm.xlu0 %1012, %v845
      %v1014 = vpop.permute.xlu0 %1013
      %1017 = vset.pattern.permute.xlu0 0
      %1018 = vperm.xlu0 %1017, %v846
      %v1019 = vpop.permute.xlu0 %1018
      %1022 = vset.pattern.permute.xlu0 0
      %1023 = vperm.xlu0 %1022, %v847
      %v1024 = vpop.permute.xlu0 %1023
      %1027 = vset.pattern.permute.xlu0 0
      %1028 = vperm.xlu0 %1027, %v848
      %v1029 = vpop.permute.xlu0 %1028
      %v1032 = vlaneseq
      %v1033 = vshrl.u32 %v1032, 7
      %v1034 = vsub.s32 0, %v1033
      %v1035 = vrot.slane %v850, %v1034
      %v1037 = vmul.f32 %v854, %v1035
      %v1038 = vmul.f32 %v859, %v1035
      %v1039 = vmul.f32 %v864, %v1035
      %v1040 = vmul.f32 %v869, %v1035
      %v1041 = vmul.f32 %v874, %v1035
      %v1042 = vmul.f32 %v879, %v1035
      %v1043 = vmul.f32 %v884, %v1035
      %v1044 = vmul.f32 %v889, %v1035
      %v1045 = vmul.f32 %v894, %v1035
      %v1046 = vmul.f32 %v899, %v1035
      %v1047 = vmul.f32 %v904, %v1035
      %v1048 = vmul.f32 %v909, %v1035
      %v1049 = vmul.f32 %v914, %v1035
      %v1050 = vmul.f32 %v919, %v1035
      %v1051 = vmul.f32 %v924, %v1035
      %v1052 = vmul.f32 %v929, %v1035
      %v1053 = vmul.f32 %v934, %v1035
      %v1054 = vmul.f32 %v939, %v1035
      %v1055 = vmul.f32 %v944, %v1035
      %v1056 = vmul.f32 %v949, %v1035
      %v1057 = vmul.f32 %v954, %v1035
      %v1058 = vmul.f32 %v959, %v1035
      %v1059 = vmul.f32 %v964, %v1035
      %v1060 = vmul.f32 %v969, %v1035
      %v1061 = vmul.f32 %v974, %v1035
      %v1062 = vmul.f32 %v979, %v1035
      %v1063 = vmul.f32 %v984, %v1035
      %v1064 = vmul.f32 %v989, %v1035
      %v1065 = vmul.f32 %v994, %v1035
      %v1066 = vmul.f32 %v999, %v1035
      %v1067 = vmul.f32 %v1004, %v1035
      %v1068 = vmul.f32 %v1009, %v1035
      %v1069 = vmul.f32 %v1014, %v1035
      %v1070 = vmul.f32 %v1019, %v1035
      %v1071 = vmul.f32 %v1024, %v1035
      %v1072 = vmul.f32 %v1029, %v1035
      %v1073 = vadd.f32 %v777, %v1037
      %v1074 = vadd.f32 %v778, %v1038
      %v1075 = vadd.f32 %v779, %v1039
      %v1076 = vadd.f32 %v780, %v1040
      %v1077 = vadd.f32 %v781, %v1041
      %v1078 = vadd.f32 %v782, %v1042
      %v1079 = vadd.f32 %v783, %v1043
      %v1080 = vadd.f32 %v784, %v1044
      %v1081 = vadd.f32 %v785, %v1045
      %v1082 = vadd.f32 %v786, %v1046
      %v1083 = vadd.f32 %v787, %v1047
      %v1084 = vadd.f32 %v788, %v1048
      %v1085 = vadd.f32 %v789, %v1049
      %v1086 = vadd.f32 %v790, %v1050
      %v1087 = vadd.f32 %v791, %v1051
      %v1088 = vadd.f32 %v792, %v1052
      %v1089 = vadd.f32 %v793, %v1053
      %v1090 = vadd.f32 %v794, %v1054
      %v1091 = vadd.f32 %v795, %v1055
      %v1092 = vadd.f32 %v796, %v1056
      %v1093 = vadd.f32 %v797, %v1057
      %v1094 = vadd.f32 %v798, %v1058
      %v1095 = vadd.f32 %v799, %v1059
      %v1096 = vadd.f32 %v800, %v1060
      %v1097 = vadd.f32 %v801, %v1061
      %v1098 = vadd.f32 %v802, %v1062
      %v1099 = vadd.f32 %v803, %v1063
      %v1100 = vadd.f32 %v804, %v1064
      %v1101 = vadd.f32 %v805, %v1065
      %v1102 = vadd.f32 %v806, %v1066
      %v1103 = vadd.f32 %v807, %v1067
      %v1104 = vadd.f32 %v808, %v1068
      %v1105 = vadd.f32 %v809, %v1069
      %v1106 = vadd.f32 %v810, %v1070
      %v1107 = vadd.f32 %v811, %v1071
      %v1108 = vadd.f32 %v812, %v1072
      %v1109 = vld [vmem:[%s221 + $0x12] sm:$0xff]
      %v1110 = vld [vmem:[%s221 + $0x1a] sm:$0xff]
      %v1111 = vld [vmem:[%s221 + $0x22] sm:$0xff]
      %v1112 = vld [vmem:[%s221 + $0x2a] sm:$0xff]
      %v1113 = vld [vmem:[%s221 + $0x32] sm:$0xff]
      %v1114 = vld [vmem:[%s221 + $0x3a] sm:$0xff]
      %v1115 = vld [vmem:[%s221 + $0x42] sm:$0xff]
      %v1116 = vld [vmem:[%s221 + $0x4a] sm:$0xff]
      %v1117 = vld [vmem:[%s221 + $0x52] sm:$0xff]
      %v1118 = vld [vmem:[%s221 + $0x5a] sm:$0xff]
      %v1119 = vld [vmem:[%s221 + $0x62] sm:$0xff]
      %v1120 = vld [vmem:[%s221 + $0x6a] sm:$0xff]
      %v1121 = vld [vmem:[%s221 + $0x72] sm:$0xff]
      %v1122 = vld [vmem:[%s221 + $0x7a] sm:$0xff]
      %v1123 = vld [vmem:[%s221 + $0x82] sm:$0xff]
      %v1124 = vld [vmem:[%s221 + $0x8a] sm:$0xff]
      %v1125 = vld [vmem:[%s221 + $0x92] sm:$0xff]
      %v1126 = vld [vmem:[%s221 + $0x9a] sm:$0xff]
      %v1127 = vld [vmem:[%s221 + $0xa2] sm:$0xff]
      %v1128 = vld [vmem:[%s221 + $0xaa] sm:$0xff]
      %v1129 = vld [vmem:[%s221 + $0xb2] sm:$0xff]
      %v1130 = vld [vmem:[%s221 + $0xba] sm:$0xff]
      %v1131 = vld [vmem:[%s221 + $0xc2] sm:$0xff]
      %v1132 = vld [vmem:[%s221 + $0xca] sm:$0xff]
      %v1133 = vld [vmem:[%s221 + $0xd2] sm:$0xff]
      %v1134 = vld [vmem:[%s221 + $0xda] sm:$0xff]
      %v1135 = vld [vmem:[%s221 + $0xe2] sm:$0xff]
      %v1136 = vld [vmem:[%s221 + $0xea] sm:$0xff]
      %v1137 = vld [vmem:[%s221 + $0xf2] sm:$0xff]
      %v1138 = vld [vmem:[%s221 + $0xfa] sm:$0xff]
      %v1139 = vld [vmem:[%s221 + $0x102] sm:$0xff]
      %v1140 = vld [vmem:[%s221 + $0x10a] sm:$0xff]
      %v1141 = vld [vmem:[%s221 + $0x112] sm:$0xff]
      %v1142 = vld [vmem:[%s221 + $0x11a] sm:$0xff]
      %v1143 = vld [vmem:[%s221 + $0x122] sm:$0xff]
      %v1144 = vld [vmem:[%s221 + $0x12a] sm:$0xff]
      %s1145 = scalar_lea.vmem %s1, 3
      %v1146 = vld [vmem:[%s1145] sm:$0x1]
      %1148 = vset.pattern.permute.xlu0 0
      %1149 = vperm.xlu0 %1148, %v1109
      %v1150 = vpop.permute.xlu0 %1149
      %1153 = vset.pattern.permute.xlu0 0
      %1154 = vperm.xlu0 %1153, %v1110
      %v1155 = vpop.permute.xlu0 %1154
      %1158 = vset.pattern.permute.xlu0 0
      %1159 = vperm.xlu0 %1158, %v1111
      %v1160 = vpop.permute.xlu0 %1159
      %1163 = vset.pattern.permute.xlu0 0
      %1164 = vperm.xlu0 %1163, %v1112
      %v1165 = vpop.permute.xlu0 %1164
      %1168 = vset.pattern.permute.xlu0 0
      %1169 = vperm.xlu0 %1168, %v1113
      %v1170 = vpop.permute.xlu0 %1169
      %1173 = vset.pattern.permute.xlu0 0
      %1174 = vperm.xlu0 %1173, %v1114
      %v1175 = vpop.permute.xlu0 %1174
      %1178 = vset.pattern.permute.xlu0 0
      %1179 = vperm.xlu0 %1178, %v1115
      %v1180 = vpop.permute.xlu0 %1179
      %1183 = vset.pattern.permute.xlu0 0
      %1184 = vperm.xlu0 %1183, %v1116
      %v1185 = vpop.permute.xlu0 %1184
      %1188 = vset.pattern.permute.xlu0 0
      %1189 = vperm.xlu0 %1188, %v1117
      %v1190 = vpop.permute.xlu0 %1189
      %1193 = vset.pattern.permute.xlu0 0
      %1194 = vperm.xlu0 %1193, %v1118
      %v1195 = vpop.permute.xlu0 %1194
      %1198 = vset.pattern.permute.xlu0 0
      %1199 = vperm.xlu0 %1198, %v1119
      %v1200 = vpop.permute.xlu0 %1199
      %1203 = vset.pattern.permute.xlu0 0
      %1204 = vperm.xlu0 %1203, %v1120
      %v1205 = vpop.permute.xlu0 %1204
      %1208 = vset.pattern.permute.xlu0 0
      %1209 = vperm.xlu0 %1208, %v1121
      %v1210 = vpop.permute.xlu0 %1209
      %1213 = vset.pattern.permute.xlu0 0
      %1214 = vperm.xlu0 %1213, %v1122
      %v1215 = vpop.permute.xlu0 %1214
      %1218 = vset.pattern.permute.xlu0 0
      %1219 = vperm.xlu0 %1218, %v1123
      %v1220 = vpop.permute.xlu0 %1219
      %1223 = vset.pattern.permute.xlu0 0
      %1224 = vperm.xlu0 %1223, %v1124
      %v1225 = vpop.permute.xlu0 %1224
      %1228 = vset.pattern.permute.xlu0 0
      %1229 = vperm.xlu0 %1228, %v1125
      %v1230 = vpop.permute.xlu0 %1229
      %1233 = vset.pattern.permute.xlu0 0
      %1234 = vperm.xlu0 %1233, %v1126
      %v1235 = vpop.permute.xlu0 %1234
      %1238 = vset.pattern.permute.xlu0 0
      %1239 = vperm.xlu0 %1238, %v1127
      %v1240 = vpop.permute.xlu0 %1239
      %1243 = vset.pattern.permute.xlu0 0
      %1244 = vperm.xlu0 %1243, %v1128
      %v1245 = vpop.permute.xlu0 %1244
      %1248 = vset.pattern.permute.xlu0 0
      %1249 = vperm.xlu0 %1248, %v1129
      %v1250 = vpop.permute.xlu0 %1249
      %1253 = vset.pattern.permute.xlu0 0
      %1254 = vperm.xlu0 %1253, %v1130
      %v1255 = vpop.permute.xlu0 %1254
      %1258 = vset.pattern.permute.xlu0 0
      %1259 = vperm.xlu0 %1258, %v1131
      %v1260 = vpop.permute.xlu0 %1259
      %1263 = vset.pattern.permute.xlu0 0
      %1264 = vperm.xlu0 %1263, %v1132
      %v1265 = vpop.permute.xlu0 %1264
      %1268 = vset.pattern.permute.xlu0 0
      %1269 = vperm.xlu0 %1268, %v1133
      %v1270 = vpop.permute.xlu0 %1269
      %1273 = vset.pattern.permute.xlu0 0
      %1274 = vperm.xlu0 %1273, %v1134
      %v1275 = vpop.permute.xlu0 %1274
      %1278 = vset.pattern.permute.xlu0 0
      %1279 = vperm.xlu0 %1278, %v1135
      %v1280 = vpop.permute.xlu0 %1279
      %1283 = vset.pattern.permute.xlu0 0
      %1284 = vperm.xlu0 %1283, %v1136
      %v1285 = vpop.permute.xlu0 %1284
      %1288 = vset.pattern.permute.xlu0 0
      %1289 = vperm.xlu0 %1288, %v1137
      %v1290 = vpop.permute.xlu0 %1289
      %1293 = vset.pattern.permute.xlu0 0
      %1294 = vperm.xlu0 %1293, %v1138
      %v1295 = vpop.permute.xlu0 %1294
      %1298 = vset.pattern.permute.xlu0 0
      %1299 = vperm.xlu0 %1298, %v1139
      %v1300 = vpop.permute.xlu0 %1299
      %1303 = vset.pattern.permute.xlu0 0
      %1304 = vperm.xlu0 %1303, %v1140
      %v1305 = vpop.permute.xlu0 %1304
      %1308 = vset.pattern.permute.xlu0 0
      %1309 = vperm.xlu0 %1308, %v1141
      %v1310 = vpop.permute.xlu0 %1309
      %1313 = vset.pattern.permute.xlu0 0
      %1314 = vperm.xlu0 %1313, %v1142
      %v1315 = vpop.permute.xlu0 %1314
      %1318 = vset.pattern.permute.xlu0 0
      %1319 = vperm.xlu0 %1318, %v1143
      %v1320 = vpop.permute.xlu0 %1319
      %1323 = vset.pattern.permute.xlu0 0
      %1324 = vperm.xlu0 %1323, %v1144
      %v1325 = vpop.permute.xlu0 %1324
      %v1328 = vlaneseq
      %v1329 = vshrl.u32 %v1328, 7
      %v1330 = vsub.s32 0, %v1329
      %v1331 = vrot.slane %v1146, %v1330
      %v1333 = vmul.f32 %v1150, %v1331
      %v1334 = vmul.f32 %v1155, %v1331
      %v1335 = vmul.f32 %v1160, %v1331
      %v1336 = vmul.f32 %v1165, %v1331
      %v1337 = vmul.f32 %v1170, %v1331
      %v1338 = vmul.f32 %v1175, %v1331
      %v1339 = vmul.f32 %v1180, %v1331
      %v1340 = vmul.f32 %v1185, %v1331
      %v1341 = vmul.f32 %v1190, %v1331
      %v1342 = vmul.f32 %v1195, %v1331
      %v1343 = vmul.f32 %v1200, %v1331
      %v1344 = vmul.f32 %v1205, %v1331
      %v1345 = vmul.f32 %v1210, %v1331
      %v1346 = vmul.f32 %v1215, %v1331
      %v1347 = vmul.f32 %v1220, %v1331
      %v1348 = vmul.f32 %v1225, %v1331
      %v1349 = vmul.f32 %v1230, %v1331
      %v1350 = vmul.f32 %v1235, %v1331
      %v1351 = vmul.f32 %v1240, %v1331
      %v1352 = vmul.f32 %v1245, %v1331
      %v1353 = vmul.f32 %v1250, %v1331
      %v1354 = vmul.f32 %v1255, %v1331
      %v1355 = vmul.f32 %v1260, %v1331
      %v1356 = vmul.f32 %v1265, %v1331
      %v1357 = vmul.f32 %v1270, %v1331
      %v1358 = vmul.f32 %v1275, %v1331
      %v1359 = vmul.f32 %v1280, %v1331
      %v1360 = vmul.f32 %v1285, %v1331
      %v1361 = vmul.f32 %v1290, %v1331
      %v1362 = vmul.f32 %v1295, %v1331
      %v1363 = vmul.f32 %v1300, %v1331
      %v1364 = vmul.f32 %v1305, %v1331
      %v1365 = vmul.f32 %v1310, %v1331
      %v1366 = vmul.f32 %v1315, %v1331
      %v1367 = vmul.f32 %v1320, %v1331
      %v1368 = vmul.f32 %v1325, %v1331
      %v1369 = vadd.f32 %v1073, %v1333
      %v1370 = vadd.f32 %v1074, %v1334
      %v1371 = vadd.f32 %v1075, %v1335
      %v1372 = vadd.f32 %v1076, %v1336
      %v1373 = vadd.f32 %v1077, %v1337
      %v1374 = vadd.f32 %v1078, %v1338
      %v1375 = vadd.f32 %v1079, %v1339
      %v1376 = vadd.f32 %v1080, %v1340
      %v1377 = vadd.f32 %v1081, %v1341
      %v1378 = vadd.f32 %v1082, %v1342
      %v1379 = vadd.f32 %v1083, %v1343
      %v1380 = vadd.f32 %v1084, %v1344
      %v1381 = vadd.f32 %v1085, %v1345
      %v1382 = vadd.f32 %v1086, %v1346
      %v1383 = vadd.f32 %v1087, %v1347
      %v1384 = vadd.f32 %v1088, %v1348
      %v1385 = vadd.f32 %v1089, %v1349
      %v1386 = vadd.f32 %v1090, %v1350
      %v1387 = vadd.f32 %v1091, %v1351
      %v1388 = vadd.f32 %v1092, %v1352
      %v1389 = vadd.f32 %v1093, %v1353
      %v1390 = vadd.f32 %v1094, %v1354
      %v1391 = vadd.f32 %v1095, %v1355
      %v1392 = vadd.f32 %v1096, %v1356
      %v1393 = vadd.f32 %v1097, %v1357
      %v1394 = vadd.f32 %v1098, %v1358
      %v1395 = vadd.f32 %v1099, %v1359
      %v1396 = vadd.f32 %v1100, %v1360
      %v1397 = vadd.f32 %v1101, %v1361
      %v1398 = vadd.f32 %v1102, %v1362
      %v1399 = vadd.f32 %v1103, %v1363
      %v1400 = vadd.f32 %v1104, %v1364
      %v1401 = vadd.f32 %v1105, %v1365
      %v1402 = vadd.f32 %v1106, %v1366
      %v1403 = vadd.f32 %v1107, %v1367
      %v1404 = vadd.f32 %v1108, %v1368
      %v1405 = vld [vmem:[%s221 + $0x13] sm:$0xff]
      %v1406 = vld [vmem:[%s221 + $0x1b] sm:$0xff]
      %v1407 = vld [vmem:[%s221 + $0x23] sm:$0xff]
      %v1408 = vld [vmem:[%s221 + $0x2b] sm:$0xff]
      %v1409 = vld [vmem:[%s221 + $0x33] sm:$0xff]
      %v1410 = vld [vmem:[%s221 + $0x3b] sm:$0xff]
      %v1411 = vld [vmem:[%s221 + $0x43] sm:$0xff]
      %v1412 = vld [vmem:[%s221 + $0x4b] sm:$0xff]
      %v1413 = vld [vmem:[%s221 + $0x53] sm:$0xff]
      %v1414 = vld [vmem:[%s221 + $0x5b] sm:$0xff]
      %v1415 = vld [vmem:[%s221 + $0x63] sm:$0xff]
      %v1416 = vld [vmem:[%s221 + $0x6b] sm:$0xff]
      %v1417 = vld [vmem:[%s221 + $0x73] sm:$0xff]
      %v1418 = vld [vmem:[%s221 + $0x7b] sm:$0xff]
      %v1419 = vld [vmem:[%s221 + $0x83] sm:$0xff]
      %v1420 = vld [vmem:[%s221 + $0x8b] sm:$0xff]
      %v1421 = vld [vmem:[%s221 + $0x93] sm:$0xff]
      %v1422 = vld [vmem:[%s221 + $0x9b] sm:$0xff]
      %v1423 = vld [vmem:[%s221 + $0xa3] sm:$0xff]
      %v1424 = vld [vmem:[%s221 + $0xab] sm:$0xff]
      %v1425 = vld [vmem:[%s221 + $0xb3] sm:$0xff]
      %v1426 = vld [vmem:[%s221 + $0xbb] sm:$0xff]
      %v1427 = vld [vmem:[%s221 + $0xc3] sm:$0xff]
      %v1428 = vld [vmem:[%s221 + $0xcb] sm:$0xff]
      %v1429 = vld [vmem:[%s221 + $0xd3] sm:$0xff]
      %v1430 = vld [vmem:[%s221 + $0xdb] sm:$0xff]
      %v1431 = vld [vmem:[%s221 + $0xe3] sm:$0xff]
      %v1432 = vld [vmem:[%s221 + $0xeb] sm:$0xff]
      %v1433 = vld [vmem:[%s221 + $0xf3] sm:$0xff]
      %v1434 = vld [vmem:[%s221 + $0xfb] sm:$0xff]
      %v1435 = vld [vmem:[%s221 + $0x103] sm:$0xff]
      %v1436 = vld [vmem:[%s221 + $0x10b] sm:$0xff]
      %v1437 = vld [vmem:[%s221 + $0x113] sm:$0xff]
      %v1438 = vld [vmem:[%s221 + $0x11b] sm:$0xff]
      %v1439 = vld [vmem:[%s221 + $0x123] sm:$0xff]
      %v1440 = vld [vmem:[%s221 + $0x12b] sm:$0xff]
      %s1441 = scalar_lea.vmem %s1, 4
      %v1442 = vld [vmem:[%s1441] sm:$0x1]
      %1444 = vset.pattern.permute.xlu0 0
      %1445 = vperm.xlu0 %1444, %v1405
      %v1446 = vpop.permute.xlu0 %1445
      %1449 = vset.pattern.permute.xlu0 0
      %1450 = vperm.xlu0 %1449, %v1406
      %v1451 = vpop.permute.xlu0 %1450
      %1454 = vset.pattern.permute.xlu0 0
      %1455 = vperm.xlu0 %1454, %v1407
      %v1456 = vpop.permute.xlu0 %1455
      %1459 = vset.pattern.permute.xlu0 0
      %1460 = vperm.xlu0 %1459, %v1408
      %v1461 = vpop.permute.xlu0 %1460
      %1464 = vset.pattern.permute.xlu0 0
      %1465 = vperm.xlu0 %1464, %v1409
      %v1466 = vpop.permute.xlu0 %1465
      %1469 = vset.pattern.permute.xlu0 0
      %1470 = vperm.xlu0 %1469, %v1410
      %v1471 = vpop.permute.xlu0 %1470
      %1474 = vset.pattern.permute.xlu0 0
      %1475 = vperm.xlu0 %1474, %v1411
      %v1476 = vpop.permute.xlu0 %1475
      %1479 = vset.pattern.permute.xlu0 0
      %1480 = vperm.xlu0 %1479, %v1412
      %v1481 = vpop.permute.xlu0 %1480
      %1484 = vset.pattern.permute.xlu0 0
      %1485 = vperm.xlu0 %1484, %v1413
      %v1486 = vpop.permute.xlu0 %1485
      %1489 = vset.pattern.permute.xlu0 0
      %1490 = vperm.xlu0 %1489, %v1414
      %v1491 = vpop.permute.xlu0 %1490
      %1494 = vset.pattern.permute.xlu0 0
      %1495 = vperm.xlu0 %1494, %v1415
      %v1496 = vpop.permute.xlu0 %1495
      %1499 = vset.pattern.permute.xlu0 0
      %1500 = vperm.xlu0 %1499, %v1416
      %v1501 = vpop.permute.xlu0 %1500
      %1504 = vset.pattern.permute.xlu0 0
      %1505 = vperm.xlu0 %1504, %v1417
      %v1506 = vpop.permute.xlu0 %1505
      %1509 = vset.pattern.permute.xlu0 0
      %1510 = vperm.xlu0 %1509, %v1418
      %v1511 = vpop.permute.xlu0 %1510
      %1514 = vset.pattern.permute.xlu0 0
      %1515 = vperm.xlu0 %1514, %v1419
      %v1516 = vpop.permute.xlu0 %1515
      %1519 = vset.pattern.permute.xlu0 0
      %1520 = vperm.xlu0 %1519, %v1420
      %v1521 = vpop.permute.xlu0 %1520
      %1524 = vset.pattern.permute.xlu0 0
      %1525 = vperm.xlu0 %1524, %v1421
      %v1526 = vpop.permute.xlu0 %1525
      %1529 = vset.pattern.permute.xlu0 0
      %1530 = vperm.xlu0 %1529, %v1422
      %v1531 = vpop.permute.xlu0 %1530
      %1534 = vset.pattern.permute.xlu0 0
      %1535 = vperm.xlu0 %1534, %v1423
      %v1536 = vpop.permute.xlu0 %1535
      %1539 = vset.pattern.permute.xlu0 0
      %1540 = vperm.xlu0 %1539, %v1424
      %v1541 = vpop.permute.xlu0 %1540
      %1544 = vset.pattern.permute.xlu0 0
      %1545 = vperm.xlu0 %1544, %v1425
      %v1546 = vpop.permute.xlu0 %1545
      %1549 = vset.pattern.permute.xlu0 0
      %1550 = vperm.xlu0 %1549, %v1426
      %v1551 = vpop.permute.xlu0 %1550
      %1554 = vset.pattern.permute.xlu0 0
      %1555 = vperm.xlu0 %1554, %v1427
      %v1556 = vpop.permute.xlu0 %1555
      %1559 = vset.pattern.permute.xlu0 0
      %1560 = vperm.xlu0 %1559, %v1428
      %v1561 = vpop.permute.xlu0 %1560
      %1564 = vset.pattern.permute.xlu0 0
      %1565 = vperm.xlu0 %1564, %v1429
      %v1566 = vpop.permute.xlu0 %1565
      %1569 = vset.pattern.permute.xlu0 0
      %1570 = vperm.xlu0 %1569, %v1430
      %v1571 = vpop.permute.xlu0 %1570
      %1574 = vset.pattern.permute.xlu0 0
      %1575 = vperm.xlu0 %1574, %v1431
      %v1576 = vpop.permute.xlu0 %1575
      %1579 = vset.pattern.permute.xlu0 0
      %1580 = vperm.xlu0 %1579, %v1432
      %v1581 = vpop.permute.xlu0 %1580
      %1584 = vset.pattern.permute.xlu0 0
      %1585 = vperm.xlu0 %1584, %v1433
      %v1586 = vpop.permute.xlu0 %1585
      %1589 = vset.pattern.permute.xlu0 0
      %1590 = vperm.xlu0 %1589, %v1434
      %v1591 = vpop.permute.xlu0 %1590
      %1594 = vset.pattern.permute.xlu0 0
      %1595 = vperm.xlu0 %1594, %v1435
      %v1596 = vpop.permute.xlu0 %1595
      %1599 = vset.pattern.permute.xlu0 0
      %1600 = vperm.xlu0 %1599, %v1436
      %v1601 = vpop.permute.xlu0 %1600
      %1604 = vset.pattern.permute.xlu0 0
      %1605 = vperm.xlu0 %1604, %v1437
      %v1606 = vpop.permute.xlu0 %1605
      %1609 = vset.pattern.permute.xlu0 0
      %1610 = vperm.xlu0 %1609, %v1438
      %v1611 = vpop.permute.xlu0 %1610
      %1614 = vset.pattern.permute.xlu0 0
      %1615 = vperm.xlu0 %1614, %v1439
      %v1616 = vpop.permute.xlu0 %1615
      %1619 = vset.pattern.permute.xlu0 0
      %1620 = vperm.xlu0 %1619, %v1440
      %v1621 = vpop.permute.xlu0 %1620
      %v1624 = vlaneseq
      %v1625 = vshrl.u32 %v1624, 7
      %v1626 = vsub.s32 0, %v1625
      %v1627 = vrot.slane %v1442, %v1626
      %v1629 = vmul.f32 %v1446, %v1627
      %v1630 = vmul.f32 %v1451, %v1627
      %v1631 = vmul.f32 %v1456, %v1627
      %v1632 = vmul.f32 %v1461, %v1627
      %v1633 = vmul.f32 %v1466, %v1627
      %v1634 = vmul.f32 %v1471, %v1627
      %v1635 = vmul.f32 %v1476, %v1627
      %v1636 = vmul.f32 %v1481, %v1627
      %v1637 = vmul.f32 %v1486, %v1627
      %v1638 = vmul.f32 %v1491, %v1627
      %v1639 = vmul.f32 %v1496, %v1627
      %v1640 = vmul.f32 %v1501, %v1627
      %v1641 = vmul.f32 %v1506, %v1627
      %v1642 = vmul.f32 %v1511, %v1627
      %v1643 = vmul.f32 %v1516, %v1627
      %v1644 = vmul.f32 %v1521, %v1627
      %v1645 = vmul.f32 %v1526, %v1627
      %v1646 = vmul.f32 %v1531, %v1627
      %v1647 = vmul.f32 %v1536, %v1627
      %v1648 = vmul.f32 %v1541, %v1627
      %v1649 = vmul.f32 %v1546, %v1627
      %v1650 = vmul.f32 %v1551, %v1627
      %v1651 = vmul.f32 %v1556, %v1627
      %v1652 = vmul.f32 %v1561, %v1627
      %v1653 = vmul.f32 %v1566, %v1627
      %v1654 = vmul.f32 %v1571, %v1627
      %v1655 = vmul.f32 %v1576, %v1627
      %v1656 = vmul.f32 %v1581, %v1627
      %v1657 = vmul.f32 %v1586, %v1627
      %v1658 = vmul.f32 %v1591, %v1627
      %v1659 = vmul.f32 %v1596, %v1627
      %v1660 = vmul.f32 %v1601, %v1627
      %v1661 = vmul.f32 %v1606, %v1627
      %v1662 = vmul.f32 %v1611, %v1627
      %v1663 = vmul.f32 %v1616, %v1627
      %v1664 = vmul.f32 %v1621, %v1627
      %v1665 = vadd.f32 %v1369, %v1629
      %v1666 = vadd.f32 %v1370, %v1630
      %v1667 = vadd.f32 %v1371, %v1631
      %v1668 = vadd.f32 %v1372, %v1632
      %v1669 = vadd.f32 %v1373, %v1633
      %v1670 = vadd.f32 %v1374, %v1634
      %v1671 = vadd.f32 %v1375, %v1635
      %v1672 = vadd.f32 %v1376, %v1636
      %v1673 = vadd.f32 %v1377, %v1637
      %v1674 = vadd.f32 %v1378, %v1638
      %v1675 = vadd.f32 %v1379, %v1639
      %v1676 = vadd.f32 %v1380, %v1640
      %v1677 = vadd.f32 %v1381, %v1641
      %v1678 = vadd.f32 %v1382, %v1642
      %v1679 = vadd.f32 %v1383, %v1643
      %v1680 = vadd.f32 %v1384, %v1644
      %v1681 = vadd.f32 %v1385, %v1645
      %v1682 = vadd.f32 %v1386, %v1646
      %v1683 = vadd.f32 %v1387, %v1647
      %v1684 = vadd.f32 %v1388, %v1648
      %v1685 = vadd.f32 %v1389, %v1649
      %v1686 = vadd.f32 %v1390, %v1650
      %v1687 = vadd.f32 %v1391, %v1651
      %v1688 = vadd.f32 %v1392, %v1652
      %v1689 = vadd.f32 %v1393, %v1653
      %v1690 = vadd.f32 %v1394, %v1654
      %v1691 = vadd.f32 %v1395, %v1655
      %v1692 = vadd.f32 %v1396, %v1656
      %v1693 = vadd.f32 %v1397, %v1657
      %v1694 = vadd.f32 %v1398, %v1658
      %v1695 = vadd.f32 %v1399, %v1659
      %v1696 = vadd.f32 %v1400, %v1660
      %v1697 = vadd.f32 %v1401, %v1661
      %v1698 = vadd.f32 %v1402, %v1662
      %v1699 = vadd.f32 %v1403, %v1663
      %v1700 = vadd.f32 %v1404, %v1664
      %v1701 = vld [vmem:[%s221 + $0x14] sm:$0xff]
      %v1702 = vld [vmem:[%s221 + $0x1c] sm:$0xff]
      %v1703 = vld [vmem:[%s221 + $0x24] sm:$0xff]
      %v1704 = vld [vmem:[%s221 + $0x2c] sm:$0xff]
      %v1705 = vld [vmem:[%s221 + $0x34] sm:$0xff]
      %v1706 = vld [vmem:[%s221 + $0x3c] sm:$0xff]
      %v1707 = vld [vmem:[%s221 + $0x44] sm:$0xff]
      %v1708 = vld [vmem:[%s221 + $0x4c] sm:$0xff]
      %v1709 = vld [vmem:[%s221 + $0x54] sm:$0xff]
      %v1710 = vld [vmem:[%s221 + $0x5c] sm:$0xff]
      %v1711 = vld [vmem:[%s221 + $0x64] sm:$0xff]
      %v1712 = vld [vmem:[%s221 + $0x6c] sm:$0xff]
      %v1713 = vld [vmem:[%s221 + $0x74] sm:$0xff]
      %v1714 = vld [vmem:[%s221 + $0x7c] sm:$0xff]
      %v1715 = vld [vmem:[%s221 + $0x84] sm:$0xff]
      %v1716 = vld [vmem:[%s221 + $0x8c] sm:$0xff]
      %v1717 = vld [vmem:[%s221 + $0x94] sm:$0xff]
      %v1718 = vld [vmem:[%s221 + $0x9c] sm:$0xff]
      %v1719 = vld [vmem:[%s221 + $0xa4] sm:$0xff]
      %v1720 = vld [vmem:[%s221 + $0xac] sm:$0xff]
      %v1721 = vld [vmem:[%s221 + $0xb4] sm:$0xff]
      %v1722 = vld [vmem:[%s221 + $0xbc] sm:$0xff]
      %v1723 = vld [vmem:[%s221 + $0xc4] sm:$0xff]
      %v1724 = vld [vmem:[%s221 + $0xcc] sm:$0xff]
      %v1725 = vld [vmem:[%s221 + $0xd4] sm:$0xff]
      %v1726 = vld [vmem:[%s221 + $0xdc] sm:$0xff]
      %v1727 = vld [vmem:[%s221 + $0xe4] sm:$0xff]
      %v1728 = vld [vmem:[%s221 + $0xec] sm:$0xff]
      %v1729 = vld [vmem:[%s221 + $0xf4] sm:$0xff]
      %v1730 = vld [vmem:[%s221 + $0xfc] sm:$0xff]
      %v1731 = vld [vmem:[%s221 + $0x104] sm:$0xff]
      %v1732 = vld [vmem:[%s221 + $0x10c] sm:$0xff]
      %v1733 = vld [vmem:[%s221 + $0x114] sm:$0xff]
      %v1734 = vld [vmem:[%s221 + $0x11c] sm:$0xff]
      %v1735 = vld [vmem:[%s221 + $0x124] sm:$0xff]
      %v1736 = vld [vmem:[%s221 + $0x12c] sm:$0xff]
      %s1737 = scalar_lea.vmem %s1, 5
      %v1738 = vld [vmem:[%s1737] sm:$0x1]
      %1740 = vset.pattern.permute.xlu0 0
      %1741 = vperm.xlu0 %1740, %v1701
      %v1742 = vpop.permute.xlu0 %1741
      %1745 = vset.pattern.permute.xlu0 0
      %1746 = vperm.xlu0 %1745, %v1702
      %v1747 = vpop.permute.xlu0 %1746
      %1750 = vset.pattern.permute.xlu0 0
      %1751 = vperm.xlu0 %1750, %v1703
      %v1752 = vpop.permute.xlu0 %1751
      %1755 = vset.pattern.permute.xlu0 0
      %1756 = vperm.xlu0 %1755, %v1704
      %v1757 = vpop.permute.xlu0 %1756
      %1760 = vset.pattern.permute.xlu0 0
      %1761 = vperm.xlu0 %1760, %v1705
      %v1762 = vpop.permute.xlu0 %1761
      %1765 = vset.pattern.permute.xlu0 0
      %1766 = vperm.xlu0 %1765, %v1706
      %v1767 = vpop.permute.xlu0 %1766
      %1770 = vset.pattern.permute.xlu0 0
      %1771 = vperm.xlu0 %1770, %v1707
      %v1772 = vpop.permute.xlu0 %1771
      %1775 = vset.pattern.permute.xlu0 0
      %1776 = vperm.xlu0 %1775, %v1708
      %v1777 = vpop.permute.xlu0 %1776
      %1780 = vset.pattern.permute.xlu0 0
      %1781 = vperm.xlu0 %1780, %v1709
      %v1782 = vpop.permute.xlu0 %1781
      %1785 = vset.pattern.permute.xlu0 0
      %1786 = vperm.xlu0 %1785, %v1710
      %v1787 = vpop.permute.xlu0 %1786
      %1790 = vset.pattern.permute.xlu0 0
      %1791 = vperm.xlu0 %1790, %v1711
      %v1792 = vpop.permute.xlu0 %1791
      %1795 = vset.pattern.permute.xlu0 0
      %1796 = vperm.xlu0 %1795, %v1712
      %v1797 = vpop.permute.xlu0 %1796
      %1800 = vset.pattern.permute.xlu0 0
      %1801 = vperm.xlu0 %1800, %v1713
      %v1802 = vpop.permute.xlu0 %1801
      %1805 = vset.pattern.permute.xlu0 0
      %1806 = vperm.xlu0 %1805, %v1714
      %v1807 = vpop.permute.xlu0 %1806
      %1810 = vset.pattern.permute.xlu0 0
      %1811 = vperm.xlu0 %1810, %v1715
      %v1812 = vpop.permute.xlu0 %1811
      %1815 = vset.pattern.permute.xlu0 0
      %1816 = vperm.xlu0 %1815, %v1716
      %v1817 = vpop.permute.xlu0 %1816
      %1820 = vset.pattern.permute.xlu0 0
      %1821 = vperm.xlu0 %1820, %v1717
      %v1822 = vpop.permute.xlu0 %1821
      %1825 = vset.pattern.permute.xlu0 0
      %1826 = vperm.xlu0 %1825, %v1718
      %v1827 = vpop.permute.xlu0 %1826
      %1830 = vset.pattern.permute.xlu0 0
      %1831 = vperm.xlu0 %1830, %v1719
      %v1832 = vpop.permute.xlu0 %1831
      %1835 = vset.pattern.permute.xlu0 0
      %1836 = vperm.xlu0 %1835, %v1720
      %v1837 = vpop.permute.xlu0 %1836
      %1840 = vset.pattern.permute.xlu0 0
      %1841 = vperm.xlu0 %1840, %v1721
      %v1842 = vpop.permute.xlu0 %1841
      %1845 = vset.pattern.permute.xlu0 0
      %1846 = vperm.xlu0 %1845, %v1722
      %v1847 = vpop.permute.xlu0 %1846
      %1850 = vset.pattern.permute.xlu0 0
      %1851 = vperm.xlu0 %1850, %v1723
      %v1852 = vpop.permute.xlu0 %1851
      %1855 = vset.pattern.permute.xlu0 0
      %1856 = vperm.xlu0 %1855, %v1724
      %v1857 = vpop.permute.xlu0 %1856
      %1860 = vset.pattern.permute.xlu0 0
      %1861 = vperm.xlu0 %1860, %v1725
      %v1862 = vpop.permute.xlu0 %1861
      %1865 = vset.pattern.permute.xlu0 0
      %1866 = vperm.xlu0 %1865, %v1726
      %v1867 = vpop.permute.xlu0 %1866
      %1870 = vset.pattern.permute.xlu0 0
      %1871 = vperm.xlu0 %1870, %v1727
      %v1872 = vpop.permute.xlu0 %1871
      %1875 = vset.pattern.permute.xlu0 0
      %1876 = vperm.xlu0 %1875, %v1728
      %v1877 = vpop.permute.xlu0 %1876
      %1880 = vset.pattern.permute.xlu0 0
      %1881 = vperm.xlu0 %1880, %v1729
      %v1882 = vpop.permute.xlu0 %1881
      %1885 = vset.pattern.permute.xlu0 0
      %1886 = vperm.xlu0 %1885, %v1730
      %v1887 = vpop.permute.xlu0 %1886
      %1890 = vset.pattern.permute.xlu0 0
      %1891 = vperm.xlu0 %1890, %v1731
      %v1892 = vpop.permute.xlu0 %1891
      %1895 = vset.pattern.permute.xlu0 0
      %1896 = vperm.xlu0 %1895, %v1732
      %v1897 = vpop.permute.xlu0 %1896
      %1900 = vset.pattern.permute.xlu0 0
      %1901 = vperm.xlu0 %1900, %v1733
      %v1902 = vpop.permute.xlu0 %1901
      %1905 = vset.pattern.permute.xlu0 0
      %1906 = vperm.xlu0 %1905, %v1734
      %v1907 = vpop.permute.xlu0 %1906
      %1910 = vset.pattern.permute.xlu0 0
      %1911 = vperm.xlu0 %1910, %v1735
      %v1912 = vpop.permute.xlu0 %1911
      %1915 = vset.pattern.permute.xlu0 0
      %1916 = vperm.xlu0 %1915, %v1736
      %v1917 = vpop.permute.xlu0 %1916
      %v1920 = vlaneseq
      %v1921 = vshrl.u32 %v1920, 7
      %v1922 = vsub.s32 0, %v1921
      %v1923 = vrot.slane %v1738, %v1922
      %v1925 = vmul.f32 %v1742, %v1923
      %v1926 = vmul.f32 %v1747, %v1923
      %v1927 = vmul.f32 %v1752, %v1923
      %v1928 = vmul.f32 %v1757, %v1923
      %v1929 = vmul.f32 %v1762, %v1923
      %v1930 = vmul.f32 %v1767, %v1923
      %v1931 = vmul.f32 %v1772, %v1923
      %v1932 = vmul.f32 %v1777, %v1923
      %v1933 = vmul.f32 %v1782, %v1923
      %v1934 = vmul.f32 %v1787, %v1923
      %v1935 = vmul.f32 %v1792, %v1923
      %v1936 = vmul.f32 %v1797, %v1923
      %v1937 = vmul.f32 %v1802, %v1923
      %v1938 = vmul.f32 %v1807, %v1923
      %v1939 = vmul.f32 %v1812, %v1923
      %v1940 = vmul.f32 %v1817, %v1923
      %v1941 = vmul.f32 %v1822, %v1923
      %v1942 = vmul.f32 %v1827, %v1923
      %v1943 = vmul.f32 %v1832, %v1923
      %v1944 = vmul.f32 %v1837, %v1923
      %v1945 = vmul.f32 %v1842, %v1923
      %v1946 = vmul.f32 %v1847, %v1923
      %v1947 = vmul.f32 %v1852, %v1923
      %v1948 = vmul.f32 %v1857, %v1923
      %v1949 = vmul.f32 %v1862, %v1923
      %v1950 = vmul.f32 %v1867, %v1923
      %v1951 = vmul.f32 %v1872, %v1923
      %v1952 = vmul.f32 %v1877, %v1923
      %v1953 = vmul.f32 %v1882, %v1923
      %v1954 = vmul.f32 %v1887, %v1923
      %v1955 = vmul.f32 %v1892, %v1923
      %v1956 = vmul.f32 %v1897, %v1923
      %v1957 = vmul.f32 %v1902, %v1923
      %v1958 = vmul.f32 %v1907, %v1923
      %v1959 = vmul.f32 %v1912, %v1923
      %v1960 = vmul.f32 %v1917, %v1923
      %v1961 = vadd.f32 %v1665, %v1925
      %v1962 = vadd.f32 %v1666, %v1926
      %v1963 = vadd.f32 %v1667, %v1927
      %v1964 = vadd.f32 %v1668, %v1928
      %v1965 = vadd.f32 %v1669, %v1929
      %v1966 = vadd.f32 %v1670, %v1930
      %v1967 = vadd.f32 %v1671, %v1931
      %v1968 = vadd.f32 %v1672, %v1932
      %v1969 = vadd.f32 %v1673, %v1933
      %v1970 = vadd.f32 %v1674, %v1934
      %v1971 = vadd.f32 %v1675, %v1935
      %v1972 = vadd.f32 %v1676, %v1936
      %v1973 = vadd.f32 %v1677, %v1937
      %v1974 = vadd.f32 %v1678, %v1938
      %v1975 = vadd.f32 %v1679, %v1939
      %v1976 = vadd.f32 %v1680, %v1940
      %v1977 = vadd.f32 %v1681, %v1941
      %v1978 = vadd.f32 %v1682, %v1942
      %v1979 = vadd.f32 %v1683, %v1943
      %v1980 = vadd.f32 %v1684, %v1944
      %v1981 = vadd.f32 %v1685, %v1945
      %v1982 = vadd.f32 %v1686, %v1946
      %v1983 = vadd.f32 %v1687, %v1947
      %v1984 = vadd.f32 %v1688, %v1948
      %v1985 = vadd.f32 %v1689, %v1949
      %v1986 = vadd.f32 %v1690, %v1950
      %v1987 = vadd.f32 %v1691, %v1951
      %v1988 = vadd.f32 %v1692, %v1952
      %v1989 = vadd.f32 %v1693, %v1953
      %v1990 = vadd.f32 %v1694, %v1954
      %v1991 = vadd.f32 %v1695, %v1955
      %v1992 = vadd.f32 %v1696, %v1956
      %v1993 = vadd.f32 %v1697, %v1957
      %v1994 = vadd.f32 %v1698, %v1958
      %v1995 = vadd.f32 %v1699, %v1959
      %v1996 = vadd.f32 %v1700, %v1960
      %v1997 = vld [vmem:[%s221 + $0x24] sm:$0xff]
      %v1998 = vld [vmem:[%s221 + $0x2c] sm:$0xff]
      %v1999 = vld [vmem:[%s221 + $0x34] sm:$0xff]
      %v2000 = vld [vmem:[%s221 + $0x3c] sm:$0xff]
      %v2001 = vld [vmem:[%s221 + $0x44] sm:$0xff]
      %v2002 = vld [vmem:[%s221 + $0x4c] sm:$0xff]
      %v2003 = vld [vmem:[%s221 + $0x54] sm:$0xff]
      %v2004 = vld [vmem:[%s221 + $0x5c] sm:$0xff]
      %v2005 = vld [vmem:[%s221 + $0x64] sm:$0xff]
      %v2006 = vld [vmem:[%s221 + $0x6c] sm:$0xff]
      %v2007 = vld [vmem:[%s221 + $0x74] sm:$0xff]
      %v2008 = vld [vmem:[%s221 + $0x7c] sm:$0xff]
      %v2009 = vld [vmem:[%s221 + $0x84] sm:$0xff]
      %v2010 = vld [vmem:[%s221 + $0x8c] sm:$0xff]
      %v2011 = vld [vmem:[%s221 + $0x94] sm:$0xff]
      %v2012 = vld [vmem:[%s221 + $0x9c] sm:$0xff]
      %v2013 = vld [vmem:[%s221 + $0xa4] sm:$0xff]
      %v2014 = vld [vmem:[%s221 + $0xac] sm:$0xff]
      %v2015 = vld [vmem:[%s221 + $0xb4] sm:$0xff]
      %v2016 = vld [vmem:[%s221 + $0xbc] sm:$0xff]
      %v2017 = vld [vmem:[%s221 + $0xc4] sm:$0xff]
      %v2018 = vld [vmem:[%s221 + $0xcc] sm:$0xff]
      %v2019 = vld [vmem:[%s221 + $0xd4] sm:$0xff]
      %v2020 = vld [vmem:[%s221 + $0xdc] sm:$0xff]
      %v2021 = vld [vmem:[%s221 + $0xe4] sm:$0xff]
      %v2022 = vld [vmem:[%s221 + $0xec] sm:$0xff]
      %v2023 = vld [vmem:[%s221 + $0xf4] sm:$0xff]
      %v2024 = vld [vmem:[%s221 + $0xfc] sm:$0xff]
      %v2025 = vld [vmem:[%s221 + $0x104] sm:$0xff]
      %v2026 = vld [vmem:[%s221 + $0x10c] sm:$0xff]
      %v2027 = vld [vmem:[%s221 + $0x114] sm:$0xff]
      %v2028 = vld [vmem:[%s221 + $0x11c] sm:$0xff]
      %v2029 = vld [vmem:[%s221 + $0x124] sm:$0xff]
      %v2030 = vld [vmem:[%s221 + $0x12c] sm:$0xff]
      %v2031 = vld [vmem:[%s221 + $0x134] sm:$0xff]
      %v2032 = vld [vmem:[%s221 + $0x13c] sm:$0xff]
      %s2033 = scalar_lea.vmem %s1, 6
      %v2034 = vld [vmem:[%s2033] sm:$0x1]
      %2036 = vset.pattern.permute.xlu0 0
      %2037 = vperm.xlu0 %2036, %v1997
      %v2038 = vpop.permute.xlu0 %2037
      %2041 = vset.pattern.permute.xlu0 0
      %2042 = vperm.xlu0 %2041, %v1998
      %v2043 = vpop.permute.xlu0 %2042
      %2046 = vset.pattern.permute.xlu0 0
      %2047 = vperm.xlu0 %2046, %v1999
      %v2048 = vpop.permute.xlu0 %2047
      %2051 = vset.pattern.permute.xlu0 0
      %2052 = vperm.xlu0 %2051, %v2000
      %v2053 = vpop.permute.xlu0 %2052
      %2056 = vset.pattern.permute.xlu0 0
      %2057 = vperm.xlu0 %2056, %v2001
      %v2058 = vpop.permute.xlu0 %2057
      %2061 = vset.pattern.permute.xlu0 0
      %2062 = vperm.xlu0 %2061, %v2002
      %v2063 = vpop.permute.xlu0 %2062
      %2066 = vset.pattern.permute.xlu0 0
      %2067 = vperm.xlu0 %2066, %v2003
      %v2068 = vpop.permute.xlu0 %2067
      %2071 = vset.pattern.permute.xlu0 0
      %2072 = vperm.xlu0 %2071, %v2004
      %v2073 = vpop.permute.xlu0 %2072
      %2076 = vset.pattern.permute.xlu0 0
      %2077 = vperm.xlu0 %2076, %v2005
      %v2078 = vpop.permute.xlu0 %2077
      %2081 = vset.pattern.permute.xlu0 0
      %2082 = vperm.xlu0 %2081, %v2006
      %v2083 = vpop.permute.xlu0 %2082
      %2086 = vset.pattern.permute.xlu0 0
      %2087 = vperm.xlu0 %2086, %v2007
      %v2088 = vpop.permute.xlu0 %2087
      %2091 = vset.pattern.permute.xlu0 0
      %2092 = vperm.xlu0 %2091, %v2008
      %v2093 = vpop.permute.xlu0 %2092
      %2096 = vset.pattern.permute.xlu0 0
      %2097 = vperm.xlu0 %2096, %v2009
      %v2098 = vpop.permute.xlu0 %2097
      %2101 = vset.pattern.permute.xlu0 0
      %2102 = vperm.xlu0 %2101, %v2010
      %v2103 = vpop.permute.xlu0 %2102
      %2106 = vset.pattern.permute.xlu0 0
      %2107 = vperm.xlu0 %2106, %v2011
      %v2108 = vpop.permute.xlu0 %2107
      %2111 = vset.pattern.permute.xlu0 0
      %2112 = vperm.xlu0 %2111, %v2012
      %v2113 = vpop.permute.xlu0 %2112
      %2116 = vset.pattern.permute.xlu0 0
      %2117 = vperm.xlu0 %2116, %v2013
      %v2118 = vpop.permute.xlu0 %2117
      %2121 = vset.pattern.permute.xlu0 0
      %2122 = vperm.xlu0 %2121, %v2014
      %v2123 = vpop.permute.xlu0 %2122
      %2126 = vset.pattern.permute.xlu0 0
      %2127 = vperm.xlu0 %2126, %v2015
      %v2128 = vpop.permute.xlu0 %2127
      %2131 = vset.pattern.permute.xlu0 0
      %2132 = vperm.xlu0 %2131, %v2016
      %v2133 = vpop.permute.xlu0 %2132
      %2136 = vset.pattern.permute.xlu0 0
      %2137 = vperm.xlu0 %2136, %v2017
      %v2138 = vpop.permute.xlu0 %2137
      %2141 = vset.pattern.permute.xlu0 0
      %2142 = vperm.xlu0 %2141, %v2018
      %v2143 = vpop.permute.xlu0 %2142
      %2146 = vset.pattern.permute.xlu0 0
      %2147 = vperm.xlu0 %2146, %v2019
      %v2148 = vpop.permute.xlu0 %2147
      %2151 = vset.pattern.permute.xlu0 0
      %2152 = vperm.xlu0 %2151, %v2020
      %v2153 = vpop.permute.xlu0 %2152
      %2156 = vset.pattern.permute.xlu0 0
      %2157 = vperm.xlu0 %2156, %v2021
      %v2158 = vpop.permute.xlu0 %2157
      %2161 = vset.pattern.permute.xlu0 0
      %2162 = vperm.xlu0 %2161, %v2022
      %v2163 = vpop.permute.xlu0 %2162
      %2166 = vset.pattern.permute.xlu0 0
      %2167 = vperm.xlu0 %2166, %v2023
      %v2168 = vpop.permute.xlu0 %2167
      %2171 = vset.pattern.permute.xlu0 0
      %2172 = vperm.xlu0 %2171, %v2024
      %v2173 = vpop.permute.xlu0 %2172
      %2176 = vset.pattern.permute.xlu0 0
      %2177 = vperm.xlu0 %2176, %v2025
      %v2178 = vpop.permute.xlu0 %2177
      %2181 = vset.pattern.permute.xlu0 0
      %2182 = vperm.xlu0 %2181, %v2026
      %v2183 = vpop.permute.xlu0 %2182
      %2186 = vset.pattern.permute.xlu0 0
      %2187 = vperm.xlu0 %2186, %v2027
      %v2188 = vpop.permute.xlu0 %2187
      %2191 = vset.pattern.permute.xlu0 0
      %2192 = vperm.xlu0 %2191, %v2028
      %v2193 = vpop.permute.xlu0 %2192
      %2196 = vset.pattern.permute.xlu0 0
      %2197 = vperm.xlu0 %2196, %v2029
      %v2198 = vpop.permute.xlu0 %2197
      %2201 = vset.pattern.permute.xlu0 0
      %2202 = vperm.xlu0 %2201, %v2030
      %v2203 = vpop.permute.xlu0 %2202
      %2206 = vset.pattern.permute.xlu0 0
      %2207 = vperm.xlu0 %2206, %v2031
      %v2208 = vpop.permute.xlu0 %2207
      %2211 = vset.pattern.permute.xlu0 0
      %2212 = vperm.xlu0 %2211, %v2032
      %v2213 = vpop.permute.xlu0 %2212
      %v2216 = vlaneseq
      %v2217 = vshrl.u32 %v2216, 7
      %v2218 = vsub.s32 0, %v2217
      %v2219 = vrot.slane %v2034, %v2218
      %v2221 = vmul.f32 %v2038, %v2219
      %v2222 = vmul.f32 %v2043, %v2219
      %v2223 = vmul.f32 %v2048, %v2219
      %v2224 = vmul.f32 %v2053, %v2219
      %v2225 = vmul.f32 %v2058, %v2219
      %v2226 = vmul.f32 %v2063, %v2219
      %v2227 = vmul.f32 %v2068, %v2219
      %v2228 = vmul.f32 %v2073, %v2219
      %v2229 = vmul.f32 %v2078, %v2219
      %v2230 = vmul.f32 %v2083, %v2219
      %v2231 = vmul.f32 %v2088, %v2219
      %v2232 = vmul.f32 %v2093, %v2219
      %v2233 = vmul.f32 %v2098, %v2219
      %v2234 = vmul.f32 %v2103, %v2219
      %v2235 = vmul.f32 %v2108, %v2219
      %v2236 = vmul.f32 %v2113, %v2219
      %v2237 = vmul.f32 %v2118, %v2219
      %v2238 = vmul.f32 %v2123, %v2219
      %v2239 = vmul.f32 %v2128, %v2219
      %v2240 = vmul.f32 %v2133, %v2219
      %v2241 = vmul.f32 %v2138, %v2219
      %v2242 = vmul.f32 %v2143, %v2219
      %v2243 = vmul.f32 %v2148, %v2219
      %v2244 = vmul.f32 %v2153, %v2219
      %v2245 = vmul.f32 %v2158, %v2219
      %v2246 = vmul.f32 %v2163, %v2219
      %v2247 = vmul.f32 %v2168, %v2219
      %v2248 = vmul.f32 %v2173, %v2219
      %v2249 = vmul.f32 %v2178, %v2219
      %v2250 = vmul.f32 %v2183, %v2219
      %v2251 = vmul.f32 %v2188, %v2219
      %v2252 = vmul.f32 %v2193, %v2219
      %v2253 = vmul.f32 %v2198, %v2219
      %v2254 = vmul.f32 %v2203, %v2219
      %v2255 = vmul.f32 %v2208, %v2219
      %v2256 = vmul.f32 %v2213, %v2219
      %v2257 = vadd.f32 %v1961, %v2221
      %v2258 = vadd.f32 %v1962, %v2222
      %v2259 = vadd.f32 %v1963, %v2223
      %v2260 = vadd.f32 %v1964, %v2224
      %v2261 = vadd.f32 %v1965, %v2225
      %v2262 = vadd.f32 %v1966, %v2226
      %v2263 = vadd.f32 %v1967, %v2227
      %v2264 = vadd.f32 %v1968, %v2228
      %v2265 = vadd.f32 %v1969, %v2229
      %v2266 = vadd.f32 %v1970, %v2230
      %v2267 = vadd.f32 %v1971, %v2231
      %v2268 = vadd.f32 %v1972, %v2232
      %v2269 = vadd.f32 %v1973, %v2233
      %v2270 = vadd.f32 %v1974, %v2234
      %v2271 = vadd.f32 %v1975, %v2235
      %v2272 = vadd.f32 %v1976, %v2236
      %v2273 = vadd.f32 %v1977, %v2237
      %v2274 = vadd.f32 %v1978, %v2238
      %v2275 = vadd.f32 %v1979, %v2239
      %v2276 = vadd.f32 %v1980, %v2240
      %v2277 = vadd.f32 %v1981, %v2241
      %v2278 = vadd.f32 %v1982, %v2242
      %v2279 = vadd.f32 %v1983, %v2243
      %v2280 = vadd.f32 %v1984, %v2244
      %v2281 = vadd.f32 %v1985, %v2245
      %v2282 = vadd.f32 %v1986, %v2246
      %v2283 = vadd.f32 %v1987, %v2247
      %v2284 = vadd.f32 %v1988, %v2248
      %v2285 = vadd.f32 %v1989, %v2249
      %v2286 = vadd.f32 %v1990, %v2250
      %v2287 = vadd.f32 %v1991, %v2251
      %v2288 = vadd.f32 %v1992, %v2252
      %v2289 = vadd.f32 %v1993, %v2253
      %v2290 = vadd.f32 %v1994, %v2254
      %v2291 = vadd.f32 %v1995, %v2255
      %v2292 = vadd.f32 %v1996, %v2256
      %v2293 = vld [vmem:[%s221 + $0x25] sm:$0xff]
      %v2294 = vld [vmem:[%s221 + $0x2d] sm:$0xff]
      %v2295 = vld [vmem:[%s221 + $0x35] sm:$0xff]
      %v2296 = vld [vmem:[%s221 + $0x3d] sm:$0xff]
      %v2297 = vld [vmem:[%s221 + $0x45] sm:$0xff]
      %v2298 = vld [vmem:[%s221 + $0x4d] sm:$0xff]
      %v2299 = vld [vmem:[%s221 + $0x55] sm:$0xff]
      %v2300 = vld [vmem:[%s221 + $0x5d] sm:$0xff]
      %v2301 = vld [vmem:[%s221 + $0x65] sm:$0xff]
      %v2302 = vld [vmem:[%s221 + $0x6d] sm:$0xff]
      %v2303 = vld [vmem:[%s221 + $0x75] sm:$0xff]
      %v2304 = vld [vmem:[%s221 + $0x7d] sm:$0xff]
      %v2305 = vld [vmem:[%s221 + $0x85] sm:$0xff]
      %v2306 = vld [vmem:[%s221 + $0x8d] sm:$0xff]
      %v2307 = vld [vmem:[%s221 + $0x95] sm:$0xff]
      %v2308 = vld [vmem:[%s221 + $0x9d] sm:$0xff]
      %v2309 = vld [vmem:[%s221 + $0xa5] sm:$0xff]
      %v2310 = vld [vmem:[%s221 + $0xad] sm:$0xff]
      %v2311 = vld [vmem:[%s221 + $0xb5] sm:$0xff]
      %v2312 = vld [vmem:[%s221 + $0xbd] sm:$0xff]
      %v2313 = vld [vmem:[%s221 + $0xc5] sm:$0xff]
      %v2314 = vld [vmem:[%s221 + $0xcd] sm:$0xff]
      %v2315 = vld [vmem:[%s221 + $0xd5] sm:$0xff]
      %v2316 = vld [vmem:[%s221 + $0xdd] sm:$0xff]
      %v2317 = vld [vmem:[%s221 + $0xe5] sm:$0xff]
      %v2318 = vld [vmem:[%s221 + $0xed] sm:$0xff]
      %v2319 = vld [vmem:[%s221 + $0xf5] sm:$0xff]
      %v2320 = vld [vmem:[%s221 + $0xfd] sm:$0xff]
      %v2321 = vld [vmem:[%s221 + $0x105] sm:$0xff]
      %v2322 = vld [vmem:[%s221 + $0x10d] sm:$0xff]
      %v2323 = vld [vmem:[%s221 + $0x115] sm:$0xff]
      %v2324 = vld [vmem:[%s221 + $0x11d] sm:$0xff]
      %v2325 = vld [vmem:[%s221 + $0x125] sm:$0xff]
      %v2326 = vld [vmem:[%s221 + $0x12d] sm:$0xff]
      %v2327 = vld [vmem:[%s221 + $0x135] sm:$0xff]
      %v2328 = vld [vmem:[%s221 + $0x13d] sm:$0xff]
      %s2329 = scalar_lea.vmem %s1, 7
      %v2330 = vld [vmem:[%s2329] sm:$0x1]
      %2332 = vset.pattern.permute.xlu0 0
      %2333 = vperm.xlu0 %2332, %v2293
      %v2334 = vpop.permute.xlu0 %2333
      %2337 = vset.pattern.permute.xlu0 0
      %2338 = vperm.xlu0 %2337, %v2294
      %v2339 = vpop.permute.xlu0 %2338
      %2342 = vset.pattern.permute.xlu0 0
      %2343 = vperm.xlu0 %2342, %v2295
      %v2344 = vpop.permute.xlu0 %2343
      %2347 = vset.pattern.permute.xlu0 0
      %2348 = vperm.xlu0 %2347, %v2296
      %v2349 = vpop.permute.xlu0 %2348
      %2352 = vset.pattern.permute.xlu0 0
      %2353 = vperm.xlu0 %2352, %v2297
      %v2354 = vpop.permute.xlu0 %2353
      %2357 = vset.pattern.permute.xlu0 0
      %2358 = vperm.xlu0 %2357, %v2298
      %v2359 = vpop.permute.xlu0 %2358
      %2362 = vset.pattern.permute.xlu0 0
      %2363 = vperm.xlu0 %2362, %v2299
      %v2364 = vpop.permute.xlu0 %2363
      %2367 = vset.pattern.permute.xlu0 0
      %2368 = vperm.xlu0 %2367, %v2300
      %v2369 = vpop.permute.xlu0 %2368
      %2372 = vset.pattern.permute.xlu0 0
      %2373 = vperm.xlu0 %2372, %v2301
      %v2374 = vpop.permute.xlu0 %2373
      %2377 = vset.pattern.permute.xlu0 0
      %2378 = vperm.xlu0 %2377, %v2302
      %v2379 = vpop.permute.xlu0 %2378
      %2382 = vset.pattern.permute.xlu0 0
      %2383 = vperm.xlu0 %2382, %v2303
      %v2384 = vpop.permute.xlu0 %2383
      %2387 = vset.pattern.permute.xlu0 0
      %2388 = vperm.xlu0 %2387, %v2304
      %v2389 = vpop.permute.xlu0 %2388
      %2392 = vset.pattern.permute.xlu0 0
      %2393 = vperm.xlu0 %2392, %v2305
      %v2394 = vpop.permute.xlu0 %2393
      %2397 = vset.pattern.permute.xlu0 0
      %2398 = vperm.xlu0 %2397, %v2306
      %v2399 = vpop.permute.xlu0 %2398
      %2402 = vset.pattern.permute.xlu0 0
      %2403 = vperm.xlu0 %2402, %v2307
      %v2404 = vpop.permute.xlu0 %2403
      %2407 = vset.pattern.permute.xlu0 0
      %2408 = vperm.xlu0 %2407, %v2308
      %v2409 = vpop.permute.xlu0 %2408
      %2412 = vset.pattern.permute.xlu0 0
      %2413 = vperm.xlu0 %2412, %v2309
      %v2414 = vpop.permute.xlu0 %2413
      %2417 = vset.pattern.permute.xlu0 0
      %2418 = vperm.xlu0 %2417, %v2310
      %v2419 = vpop.permute.xlu0 %2418
      %2422 = vset.pattern.permute.xlu0 0
      %2423 = vperm.xlu0 %2422, %v2311
      %v2424 = vpop.permute.xlu0 %2423
      %2427 = vset.pattern.permute.xlu0 0
      %2428 = vperm.xlu0 %2427, %v2312
      %v2429 = vpop.permute.xlu0 %2428
      %2432 = vset.pattern.permute.xlu0 0
      %2433 = vperm.xlu0 %2432, %v2313
      %v2434 = vpop.permute.xlu0 %2433
      %2437 = vset.pattern.permute.xlu0 0
      %2438 = vperm.xlu0 %2437, %v2314
      %v2439 = vpop.permute.xlu0 %2438
      %2442 = vset.pattern.permute.xlu0 0
      %2443 = vperm.xlu0 %2442, %v2315
      %v2444 = vpop.permute.xlu0 %2443
      %2447 = vset.pattern.permute.xlu0 0
      %2448 = vperm.xlu0 %2447, %v2316
      %v2449 = vpop.permute.xlu0 %2448
      %2452 = vset.pattern.permute.xlu0 0
      %2453 = vperm.xlu0 %2452, %v2317
      %v2454 = vpop.permute.xlu0 %2453
      %2457 = vset.pattern.permute.xlu0 0
      %2458 = vperm.xlu0 %2457, %v2318
      %v2459 = vpop.permute.xlu0 %2458
      %2462 = vset.pattern.permute.xlu0 0
      %2463 = vperm.xlu0 %2462, %v2319
      %v2464 = vpop.permute.xlu0 %2463
      %2467 = vset.pattern.permute.xlu0 0
      %2468 = vperm.xlu0 %2467, %v2320
      %v2469 = vpop.permute.xlu0 %2468
      %2472 = vset.pattern.permute.xlu0 0
      %2473 = vperm.xlu0 %2472, %v2321
      %v2474 = vpop.permute.xlu0 %2473
      %2477 = vset.pattern.permute.xlu0 0
      %2478 = vperm.xlu0 %2477, %v2322
      %v2479 = vpop.permute.xlu0 %2478
      %2482 = vset.pattern.permute.xlu0 0
      %2483 = vperm.xlu0 %2482, %v2323
      %v2484 = vpop.permute.xlu0 %2483
      %2487 = vset.pattern.permute.xlu0 0
      %2488 = vperm.xlu0 %2487, %v2324
      %v2489 = vpop.permute.xlu0 %2488
      %2492 = vset.pattern.permute.xlu0 0
      %2493 = vperm.xlu0 %2492, %v2325
      %v2494 = vpop.permute.xlu0 %2493
      %2497 = vset.pattern.permute.xlu0 0
      %2498 = vperm.xlu0 %2497, %v2326
      %v2499 = vpop.permute.xlu0 %2498
      %2502 = vset.pattern.permute.xlu0 0
      %2503 = vperm.xlu0 %2502, %v2327
      %v2504 = vpop.permute.xlu0 %2503
      %2507 = vset.pattern.permute.xlu0 0
      %2508 = vperm.xlu0 %2507, %v2328
      %v2509 = vpop.permute.xlu0 %2508
      %v2512 = vlaneseq
      %v2513 = vshrl.u32 %v2512, 7
      %v2514 = vsub.s32 0, %v2513
      %v2515 = vrot.slane %v2330, %v2514
      %v2517 = vmul.f32 %v2334, %v2515
      %v2518 = vmul.f32 %v2339, %v2515
      %v2519 = vmul.f32 %v2344, %v2515
      %v2520 = vmul.f32 %v2349, %v2515
      %v2521 = vmul.f32 %v2354, %v2515
      %v2522 = vmul.f32 %v2359, %v2515
      %v2523 = vmul.f32 %v2364, %v2515
      %v2524 = vmul.f32 %v2369, %v2515
      %v2525 = vmul.f32 %v2374, %v2515
      %v2526 = vmul.f32 %v2379, %v2515
      %v2527 = vmul.f32 %v2384, %v2515
      %v2528 = vmul.f32 %v2389, %v2515
      %v2529 = vmul.f32 %v2394, %v2515
      %v2530 = vmul.f32 %v2399, %v2515
      %v2531 = vmul.f32 %v2404, %v2515
      %v2532 = vmul.f32 %v2409, %v2515
      %v2533 = vmul.f32 %v2414, %v2515
      %v2534 = vmul.f32 %v2419, %v2515
      %v2535 = vmul.f32 %v2424, %v2515
      %v2536 = vmul.f32 %v2429, %v2515
      %v2537 = vmul.f32 %v2434, %v2515
      %v2538 = vmul.f32 %v2439, %v2515
      %v2539 = vmul.f32 %v2444, %v2515
      %v2540 = vmul.f32 %v2449, %v2515
      %v2541 = vmul.f32 %v2454, %v2515
      %v2542 = vmul.f32 %v2459, %v2515
      %v2543 = vmul.f32 %v2464, %v2515
      %v2544 = vmul.f32 %v2469, %v2515
      %v2545 = vmul.f32 %v2474, %v2515
      %v2546 = vmul.f32 %v2479, %v2515
      %v2547 = vmul.f32 %v2484, %v2515
      %v2548 = vmul.f32 %v2489, %v2515
      %v2549 = vmul.f32 %v2494, %v2515
      %v2550 = vmul.f32 %v2499, %v2515
      %v2551 = vmul.f32 %v2504, %v2515
      %v2552 = vmul.f32 %v2509, %v2515
      %v2553 = vadd.f32 %v2257, %v2517
      %v2554 = vadd.f32 %v2258, %v2518
      %v2555 = vadd.f32 %v2259, %v2519
      %v2556 = vadd.f32 %v2260, %v2520
      %v2557 = vadd.f32 %v2261, %v2521
      %v2558 = vadd.f32 %v2262, %v2522
      %v2559 = vadd.f32 %v2263, %v2523
      %v2560 = vadd.f32 %v2264, %v2524
      %v2561 = vadd.f32 %v2265, %v2525
      %v2562 = vadd.f32 %v2266, %v2526
      %v2563 = vadd.f32 %v2267, %v2527
      %v2564 = vadd.f32 %v2268, %v2528
      %v2565 = vadd.f32 %v2269, %v2529
      %v2566 = vadd.f32 %v2270, %v2530
      %v2567 = vadd.f32 %v2271, %v2531
      %v2568 = vadd.f32 %v2272, %v2532
      %v2569 = vadd.f32 %v2273, %v2533
      %v2570 = vadd.f32 %v2274, %v2534
      %v2571 = vadd.f32 %v2275, %v2535
      %v2572 = vadd.f32 %v2276, %v2536
      %v2573 = vadd.f32 %v2277, %v2537
      %v2574 = vadd.f32 %v2278, %v2538
      %v2575 = vadd.f32 %v2279, %v2539
      %v2576 = vadd.f32 %v2280, %v2540
      %v2577 = vadd.f32 %v2281, %v2541
      %v2578 = vadd.f32 %v2282, %v2542
      %v2579 = vadd.f32 %v2283, %v2543
      %v2580 = vadd.f32 %v2284, %v2544
      %v2581 = vadd.f32 %v2285, %v2545
      %v2582 = vadd.f32 %v2286, %v2546
      %v2583 = vadd.f32 %v2287, %v2547
      %v2584 = vadd.f32 %v2288, %v2548
      %v2585 = vadd.f32 %v2289, %v2549
      %v2586 = vadd.f32 %v2290, %v2550
      %v2587 = vadd.f32 %v2291, %v2551
      %v2588 = vadd.f32 %v2292, %v2552
      %v2589 = vld [vmem:[%s221 + $0x26] sm:$0xff]
      %v2590 = vld [vmem:[%s221 + $0x2e] sm:$0xff]
      %v2591 = vld [vmem:[%s221 + $0x36] sm:$0xff]
      %v2592 = vld [vmem:[%s221 + $0x3e] sm:$0xff]
      %v2593 = vld [vmem:[%s221 + $0x46] sm:$0xff]
      %v2594 = vld [vmem:[%s221 + $0x4e] sm:$0xff]
      %v2595 = vld [vmem:[%s221 + $0x56] sm:$0xff]
      %v2596 = vld [vmem:[%s221 + $0x5e] sm:$0xff]
      %v2597 = vld [vmem:[%s221 + $0x66] sm:$0xff]
      %v2598 = vld [vmem:[%s221 + $0x6e] sm:$0xff]
      %v2599 = vld [vmem:[%s221 + $0x76] sm:$0xff]
      %v2600 = vld [vmem:[%s221 + $0x7e] sm:$0xff]
      %v2601 = vld [vmem:[%s221 + $0x86] sm:$0xff]
      %v2602 = vld [vmem:[%s221 + $0x8e] sm:$0xff]
      %v2603 = vld [vmem:[%s221 + $0x96] sm:$0xff]
      %v2604 = vld [vmem:[%s221 + $0x9e] sm:$0xff]
      %v2605 = vld [vmem:[%s221 + $0xa6] sm:$0xff]
      %v2606 = vld [vmem:[%s221 + $0xae] sm:$0xff]
      %v2607 = vld [vmem:[%s221 + $0xb6] sm:$0xff]
      %v2608 = vld [vmem:[%s221 + $0xbe] sm:$0xff]
      %v2609 = vld [vmem:[%s221 + $0xc6] sm:$0xff]
      %v2610 = vld [vmem:[%s221 + $0xce] sm:$0xff]
      %v2611 = vld [vmem:[%s221 + $0xd6] sm:$0xff]
      %v2612 = vld [vmem:[%s221 + $0xde] sm:$0xff]
      %v2613 = vld [vmem:[%s221 + $0xe6] sm:$0xff]
      %v2614 = vld [vmem:[%s221 + $0xee] sm:$0xff]
      %v2615 = vld [vmem:[%s221 + $0xf6] sm:$0xff]
      %v2616 = vld [vmem:[%s221 + $0xfe] sm:$0xff]
      %v2617 = vld [vmem:[%s221 + $0x106] sm:$0xff]
      %v2618 = vld [vmem:[%s221 + $0x10e] sm:$0xff]
      %v2619 = vld [vmem:[%s221 + $0x116] sm:$0xff]
      %v2620 = vld [vmem:[%s221 + $0x11e] sm:$0xff]
      %v2621 = vld [vmem:[%s221 + $0x126] sm:$0xff]
      %v2622 = vld [vmem:[%s221 + $0x12e] sm:$0xff]
      %v2623 = vld [vmem:[%s221 + $0x136] sm:$0xff]
      %v2624 = vld [vmem:[%s221 + $0x13e] sm:$0xff]
      %s2625 = scalar_lea.vmem %s1, 8
      %v2626 = vld [vmem:[%s2625] sm:$0x1]
      %2628 = vset.pattern.permute.xlu0 0
      %2629 = vperm.xlu0 %2628, %v2589
      %v2630 = vpop.permute.xlu0 %2629
      %2633 = vset.pattern.permute.xlu0 0
      %2634 = vperm.xlu0 %2633, %v2590
      %v2635 = vpop.permute.xlu0 %2634
      %2638 = vset.pattern.permute.xlu0 0
      %2639 = vperm.xlu0 %2638, %v2591
      %v2640 = vpop.permute.xlu0 %2639
      %2643 = vset.pattern.permute.xlu0 0
      %2644 = vperm.xlu0 %2643, %v2592
      %v2645 = vpop.permute.xlu0 %2644
      %2648 = vset.pattern.permute.xlu0 0
      %2649 = vperm.xlu0 %2648, %v2593
      %v2650 = vpop.permute.xlu0 %2649
      %2653 = vset.pattern.permute.xlu0 0
      %2654 = vperm.xlu0 %2653, %v2594
      %v2655 = vpop.permute.xlu0 %2654
      %2658 = vset.pattern.permute.xlu0 0
      %2659 = vperm.xlu0 %2658, %v2595
      %v2660 = vpop.permute.xlu0 %2659
      %2663 = vset.pattern.permute.xlu0 0
      %2664 = vperm.xlu0 %2663, %v2596
      %v2665 = vpop.permute.xlu0 %2664
      %2668 = vset.pattern.permute.xlu0 0
      %2669 = vperm.xlu0 %2668, %v2597
      %v2670 = vpop.permute.xlu0 %2669
      %2673 = vset.pattern.permute.xlu0 0
      %2674 = vperm.xlu0 %2673, %v2598
      %v2675 = vpop.permute.xlu0 %2674
      %2678 = vset.pattern.permute.xlu0 0
      %2679 = vperm.xlu0 %2678, %v2599
      %v2680 = vpop.permute.xlu0 %2679
      %2683 = vset.pattern.permute.xlu0 0
      %2684 = vperm.xlu0 %2683, %v2600
      %v2685 = vpop.permute.xlu0 %2684
      %2688 = vset.pattern.permute.xlu0 0
      %2689 = vperm.xlu0 %2688, %v2601
      %v2690 = vpop.permute.xlu0 %2689
      %2693 = vset.pattern.permute.xlu0 0
      %2694 = vperm.xlu0 %2693, %v2602
      %v2695 = vpop.permute.xlu0 %2694
      %2698 = vset.pattern.permute.xlu0 0
      %2699 = vperm.xlu0 %2698, %v2603
      %v2700 = vpop.permute.xlu0 %2699
      %2703 = vset.pattern.permute.xlu0 0
      %2704 = vperm.xlu0 %2703, %v2604
      %v2705 = vpop.permute.xlu0 %2704
      %2708 = vset.pattern.permute.xlu0 0
      %2709 = vperm.xlu0 %2708, %v2605
      %v2710 = vpop.permute.xlu0 %2709
      %2713 = vset.pattern.permute.xlu0 0
      %2714 = vperm.xlu0 %2713, %v2606
      %v2715 = vpop.permute.xlu0 %2714
      %2718 = vset.pattern.permute.xlu0 0
      %2719 = vperm.xlu0 %2718, %v2607
      %v2720 = vpop.permute.xlu0 %2719
      %2723 = vset.pattern.permute.xlu0 0
      %2724 = vperm.xlu0 %2723, %v2608
      %v2725 = vpop.permute.xlu0 %2724
      %2728 = vset.pattern.permute.xlu0 0
      %2729 = vperm.xlu0 %2728, %v2609
      %v2730 = vpop.permute.xlu0 %2729
      %2733 = vset.pattern.permute.xlu0 0
      %2734 = vperm.xlu0 %2733, %v2610
      %v2735 = vpop.permute.xlu0 %2734
      %2738 = vset.pattern.permute.xlu0 0
      %2739 = vperm.xlu0 %2738, %v2611
      %v2740 = vpop.permute.xlu0 %2739
      %2743 = vset.pattern.permute.xlu0 0
      %2744 = vperm.xlu0 %2743, %v2612
      %v2745 = vpop.permute.xlu0 %2744
      %2748 = vset.pattern.permute.xlu0 0
      %2749 = vperm.xlu0 %2748, %v2613
      %v2750 = vpop.permute.xlu0 %2749
      %2753 = vset.pattern.permute.xlu0 0
      %2754 = vperm.xlu0 %2753, %v2614
      %v2755 = vpop.permute.xlu0 %2754
      %2758 = vset.pattern.permute.xlu0 0
      %2759 = vperm.xlu0 %2758, %v2615
      %v2760 = vpop.permute.xlu0 %2759
      %2763 = vset.pattern.permute.xlu0 0
      %2764 = vperm.xlu0 %2763, %v2616
      %v2765 = vpop.permute.xlu0 %2764
      %2768 = vset.pattern.permute.xlu0 0
      %2769 = vperm.xlu0 %2768, %v2617
      %v2770 = vpop.permute.xlu0 %2769
      %2773 = vset.pattern.permute.xlu0 0
      %2774 = vperm.xlu0 %2773, %v2618
      %v2775 = vpop.permute.xlu0 %2774
      %2778 = vset.pattern.permute.xlu0 0
      %2779 = vperm.xlu0 %2778, %v2619
      %v2780 = vpop.permute.xlu0 %2779
      %2783 = vset.pattern.permute.xlu0 0
      %2784 = vperm.xlu0 %2783, %v2620
      %v2785 = vpop.permute.xlu0 %2784
      %2788 = vset.pattern.permute.xlu0 0
      %2789 = vperm.xlu0 %2788, %v2621
      %v2790 = vpop.permute.xlu0 %2789
      %2793 = vset.pattern.permute.xlu0 0
      %2794 = vperm.xlu0 %2793, %v2622
      %v2795 = vpop.permute.xlu0 %2794
      %2798 = vset.pattern.permute.xlu0 0
      %2799 = vperm.xlu0 %2798, %v2623
      %v2800 = vpop.permute.xlu0 %2799
      %2803 = vset.pattern.permute.xlu0 0
      %2804 = vperm.xlu0 %2803, %v2624
      %v2805 = vpop.permute.xlu0 %2804
      %v2808 = vlaneseq
      %v2809 = vshrl.u32 %v2808, 7
      %v2810 = vsub.s32 0, %v2809
      %v2811 = vrot.slane %v2626, %v2810
      %v2813 = vmul.f32 %v2630, %v2811
      %v2814 = vmul.f32 %v2635, %v2811
      %v2815 = vmul.f32 %v2640, %v2811
      %v2816 = vmul.f32 %v2645, %v2811
      %v2817 = vmul.f32 %v2650, %v2811
      %v2818 = vmul.f32 %v2655, %v2811
      %v2819 = vmul.f32 %v2660, %v2811
      %v2820 = vmul.f32 %v2665, %v2811
      %v2821 = vmul.f32 %v2670, %v2811
      %v2822 = vmul.f32 %v2675, %v2811
      %v2823 = vmul.f32 %v2680, %v2811
      %v2824 = vmul.f32 %v2685, %v2811
      %v2825 = vmul.f32 %v2690, %v2811
      %v2826 = vmul.f32 %v2695, %v2811
      %v2827 = vmul.f32 %v2700, %v2811
      %v2828 = vmul.f32 %v2705, %v2811
      %v2829 = vmul.f32 %v2710, %v2811
      %v2830 = vmul.f32 %v2715, %v2811
      %v2831 = vmul.f32 %v2720, %v2811
      %v2832 = vmul.f32 %v2725, %v2811
      %v2833 = vmul.f32 %v2730, %v2811
      %v2834 = vmul.f32 %v2735, %v2811
      %v2835 = vmul.f32 %v2740, %v2811
      %v2836 = vmul.f32 %v2745, %v2811
      %v2837 = vmul.f32 %v2750, %v2811
      %v2838 = vmul.f32 %v2755, %v2811
      %v2839 = vmul.f32 %v2760, %v2811
      %v2840 = vmul.f32 %v2765, %v2811
      %v2841 = vmul.f32 %v2770, %v2811
      %v2842 = vmul.f32 %v2775, %v2811
      %v2843 = vmul.f32 %v2780, %v2811
      %v2844 = vmul.f32 %v2785, %v2811
      %v2845 = vmul.f32 %v2790, %v2811
      %v2846 = vmul.f32 %v2795, %v2811
      %v2847 = vmul.f32 %v2800, %v2811
      %v2848 = vmul.f32 %v2805, %v2811
      %v2849 = vadd.f32 %v2553, %v2813
      %v2850 = vadd.f32 %v2554, %v2814
      %v2851 = vadd.f32 %v2555, %v2815
      %v2852 = vadd.f32 %v2556, %v2816
      %v2853 = vadd.f32 %v2557, %v2817
      %v2854 = vadd.f32 %v2558, %v2818
      %v2855 = vadd.f32 %v2559, %v2819
      %v2856 = vadd.f32 %v2560, %v2820
      %v2857 = vadd.f32 %v2561, %v2821
      %v2858 = vadd.f32 %v2562, %v2822
      %v2859 = vadd.f32 %v2563, %v2823
      %v2860 = vadd.f32 %v2564, %v2824
      %v2861 = vadd.f32 %v2565, %v2825
      %v2862 = vadd.f32 %v2566, %v2826
      %v2863 = vadd.f32 %v2567, %v2827
      %v2864 = vadd.f32 %v2568, %v2828
      %v2865 = vadd.f32 %v2569, %v2829
      %v2866 = vadd.f32 %v2570, %v2830
      %v2867 = vadd.f32 %v2571, %v2831
      %v2868 = vadd.f32 %v2572, %v2832
      %v2869 = vadd.f32 %v2573, %v2833
      %v2870 = vadd.f32 %v2574, %v2834
      %v2871 = vadd.f32 %v2575, %v2835
      %v2872 = vadd.f32 %v2576, %v2836
      %v2873 = vadd.f32 %v2577, %v2837
      %v2874 = vadd.f32 %v2578, %v2838
      %v2875 = vadd.f32 %v2579, %v2839
      %v2876 = vadd.f32 %v2580, %v2840
      %v2877 = vadd.f32 %v2581, %v2841
      %v2878 = vadd.f32 %v2582, %v2842
      %v2879 = vadd.f32 %v2583, %v2843
      %v2880 = vadd.f32 %v2584, %v2844
      %v2881 = vadd.f32 %v2585, %v2845
      %v2882 = vadd.f32 %v2586, %v2846
      %v2883 = vadd.f32 %v2587, %v2847
      %v2884 = vadd.f32 %v2588, %v2848
      %s2885 = sadd.s32 %s20, 1
      %s2886 = smul.u32 %s2885, 328
      %s2887 = scalar_lea.vmem %s210, %s2886
      %v2888 = vld [vmem:[%s2887] sm:$0xff]
      %v2889 = vld [vmem:[%s2887 + $0x8] sm:$0xff]
      %v2890 = vld [vmem:[%s2887 + $0x10] sm:$0xff]
      %v2891 = vld [vmem:[%s2887 + $0x18] sm:$0xff]
      %v2892 = vld [vmem:[%s2887 + $0x20] sm:$0xff]
      %v2893 = vld [vmem:[%s2887 + $0x28] sm:$0xff]
      %v2894 = vld [vmem:[%s2887 + $0x30] sm:$0xff]
      %v2895 = vld [vmem:[%s2887 + $0x38] sm:$0xff]
      %v2896 = vld [vmem:[%s2887 + $0x40] sm:$0xff]
      %v2897 = vld [vmem:[%s2887 + $0x48] sm:$0xff]
      %v2898 = vld [vmem:[%s2887 + $0x50] sm:$0xff]
      %v2899 = vld [vmem:[%s2887 + $0x58] sm:$0xff]
      %v2900 = vld [vmem:[%s2887 + $0x60] sm:$0xff]
      %v2901 = vld [vmem:[%s2887 + $0x68] sm:$0xff]
      %v2902 = vld [vmem:[%s2887 + $0x70] sm:$0xff]
      %v2903 = vld [vmem:[%s2887 + $0x78] sm:$0xff]
      %v2904 = vld [vmem:[%s2887 + $0x80] sm:$0xff]
      %v2905 = vld [vmem:[%s2887 + $0x88] sm:$0xff]
      %v2906 = vld [vmem:[%s2887 + $0x90] sm:$0xff]
      %v2907 = vld [vmem:[%s2887 + $0x98] sm:$0xff]
      %v2908 = vld [vmem:[%s2887 + $0xa0] sm:$0xff]
      %v2909 = vld [vmem:[%s2887 + $0xa8] sm:$0xff]
      %v2910 = vld [vmem:[%s2887 + $0xb0] sm:$0xff]
      %v2911 = vld [vmem:[%s2887 + $0xb8] sm:$0xff]
      %v2912 = vld [vmem:[%s2887 + $0xc0] sm:$0xff]
      %v2913 = vld [vmem:[%s2887 + $0xc8] sm:$0xff]
      %v2914 = vld [vmem:[%s2887 + $0xd0] sm:$0xff]
      %v2915 = vld [vmem:[%s2887 + $0xd8] sm:$0xff]
      %v2916 = vld [vmem:[%s2887 + $0xe0] sm:$0xff]
      %v2917 = vld [vmem:[%s2887 + $0xe8] sm:$0xff]
      %v2918 = vld [vmem:[%s2887 + $0xf0] sm:$0xff]
      %v2919 = vld [vmem:[%s2887 + $0xf8] sm:$0xff]
      %v2920 = vld [vmem:[%s2887 + $0x100] sm:$0xff]
      %v2921 = vld [vmem:[%s2887 + $0x108] sm:$0xff]
      %v2922 = vld [vmem:[%s2887 + $0x110] sm:$0xff]
      %v2923 = vld [vmem:[%s2887 + $0x118] sm:$0xff]
      %s2924 = scalar_lea.vmem %s1, 9
      %v2925 = vld [vmem:[%s2924] sm:$0x1]
      %2927 = vset.pattern.permute.xlu0 0
      %2928 = vperm.xlu0 %2927, %v2888
      %v2929 = vpop.permute.xlu0 %2928
      %2932 = vset.pattern.permute.xlu0 0
      %2933 = vperm.xlu0 %2932, %v2889
      %v2934 = vpop.permute.xlu0 %2933
      %2937 = vset.pattern.permute.xlu0 0
      %2938 = vperm.xlu0 %2937, %v2890
      %v2939 = vpop.permute.xlu0 %2938
      %2942 = vset.pattern.permute.xlu0 0
      %2943 = vperm.xlu0 %2942, %v2891
      %v2944 = vpop.permute.xlu0 %2943
      %2947 = vset.pattern.permute.xlu0 0
      %2948 = vperm.xlu0 %2947, %v2892
      %v2949 = vpop.permute.xlu0 %2948
      %2952 = vset.pattern.permute.xlu0 0
      %2953 = vperm.xlu0 %2952, %v2893
      %v2954 = vpop.permute.xlu0 %2953
      %2957 = vset.pattern.permute.xlu0 0
      %2958 = vperm.xlu0 %2957, %v2894
      %v2959 = vpop.permute.xlu0 %2958
      %2962 = vset.pattern.permute.xlu0 0
      %2963 = vperm.xlu0 %2962, %v2895
      %v2964 = vpop.permute.xlu0 %2963
      %2967 = vset.pattern.permute.xlu0 0
      %2968 = vperm.xlu0 %2967, %v2896
      %v2969 = vpop.permute.xlu0 %2968
      %2972 = vset.pattern.permute.xlu0 0
      %2973 = vperm.xlu0 %2972, %v2897
      %v2974 = vpop.permute.xlu0 %2973
      %2977 = vset.pattern.permute.xlu0 0
      %2978 = vperm.xlu0 %2977, %v2898
      %v2979 = vpop.permute.xlu0 %2978
      %2982 = vset.pattern.permute.xlu0 0
      %2983 = vperm.xlu0 %2982, %v2899
      %v2984 = vpop.permute.xlu0 %2983
      %2987 = vset.pattern.permute.xlu0 0
      %2988 = vperm.xlu0 %2987, %v2900
      %v2989 = vpop.permute.xlu0 %2988
      %2992 = vset.pattern.permute.xlu0 0
      %2993 = vperm.xlu0 %2992, %v2901
      %v2994 = vpop.permute.xlu0 %2993
      %2997 = vset.pattern.permute.xlu0 0
      %2998 = vperm.xlu0 %2997, %v2902
      %v2999 = vpop.permute.xlu0 %2998
      %3002 = vset.pattern.permute.xlu0 0
      %3003 = vperm.xlu0 %3002, %v2903
      %v3004 = vpop.permute.xlu0 %3003
      %3007 = vset.pattern.permute.xlu0 0
      %3008 = vperm.xlu0 %3007, %v2904
      %v3009 = vpop.permute.xlu0 %3008
      %3012 = vset.pattern.permute.xlu0 0
      %3013 = vperm.xlu0 %3012, %v2905
      %v3014 = vpop.permute.xlu0 %3013
      %3017 = vset.pattern.permute.xlu0 0
      %3018 = vperm.xlu0 %3017, %v2906
      %v3019 = vpop.permute.xlu0 %3018
      %3022 = vset.pattern.permute.xlu0 0
      %3023 = vperm.xlu0 %3022, %v2907
      %v3024 = vpop.permute.xlu0 %3023
      %3027 = vset.pattern.permute.xlu0 0
      %3028 = vperm.xlu0 %3027, %v2908
      %v3029 = vpop.permute.xlu0 %3028
      %3032 = vset.pattern.permute.xlu0 0
      %3033 = vperm.xlu0 %3032, %v2909
      %v3034 = vpop.permute.xlu0 %3033
      %3037 = vset.pattern.permute.xlu0 0
      %3038 = vperm.xlu0 %3037, %v2910
      %v3039 = vpop.permute.xlu0 %3038
      %3042 = vset.pattern.permute.xlu0 0
      %3043 = vperm.xlu0 %3042, %v2911
      %v3044 = vpop.permute.xlu0 %3043
      %3047 = vset.pattern.permute.xlu0 0
      %3048 = vperm.xlu0 %3047, %v2912
      %v3049 = vpop.permute.xlu0 %3048
      %3052 = vset.pattern.permute.xlu0 0
      %3053 = vperm.xlu0 %3052, %v2913
      %v3054 = vpop.permute.xlu0 %3053
      %3057 = vset.pattern.permute.xlu0 0
      %3058 = vperm.xlu0 %3057, %v2914
      %v3059 = vpop.permute.xlu0 %3058
      %3062 = vset.pattern.permute.xlu0 0
      %3063 = vperm.xlu0 %3062, %v2915
      %v3064 = vpop.permute.xlu0 %3063
      %3067 = vset.pattern.permute.xlu0 0
      %3068 = vperm.xlu0 %3067, %v2916
      %v3069 = vpop.permute.xlu0 %3068
      %3072 = vset.pattern.permute.xlu0 0
      %3073 = vperm.xlu0 %3072, %v2917
      %v3074 = vpop.permute.xlu0 %3073
      %3077 = vset.pattern.permute.xlu0 0
      %3078 = vperm.xlu0 %3077, %v2918
      %v3079 = vpop.permute.xlu0 %3078
      %3082 = vset.pattern.permute.xlu0 0
      %3083 = vperm.xlu0 %3082, %v2919
      %v3084 = vpop.permute.xlu0 %3083
      %3087 = vset.pattern.permute.xlu0 0
      %3088 = vperm.xlu0 %3087, %v2920
      %v3089 = vpop.permute.xlu0 %3088
      %3092 = vset.pattern.permute.xlu0 0
      %3093 = vperm.xlu0 %3092, %v2921
      %v3094 = vpop.permute.xlu0 %3093
      %3097 = vset.pattern.permute.xlu0 0
      %3098 = vperm.xlu0 %3097, %v2922
      %v3099 = vpop.permute.xlu0 %3098
      %3102 = vset.pattern.permute.xlu0 0
      %3103 = vperm.xlu0 %3102, %v2923
      %v3104 = vpop.permute.xlu0 %3103
      %v3107 = vlaneseq
      %v3108 = vshrl.u32 %v3107, 7
      %v3109 = vsub.s32 0, %v3108
      %v3110 = vrot.slane %v2925, %v3109
      %v3112 = vmul.f32 %v2929, %v3110
      %v3113 = vmul.f32 %v2934, %v3110
      %v3114 = vmul.f32 %v2939, %v3110
      %v3115 = vmul.f32 %v2944, %v3110
      %v3116 = vmul.f32 %v2949, %v3110
      %v3117 = vmul.f32 %v2954, %v3110
      %v3118 = vmul.f32 %v2959, %v3110
      %v3119 = vmul.f32 %v2964, %v3110
      %v3120 = vmul.f32 %v2969, %v3110
      %v3121 = vmul.f32 %v2974, %v3110
      %v3122 = vmul.f32 %v2979, %v3110
      %v3123 = vmul.f32 %v2984, %v3110
      %v3124 = vmul.f32 %v2989, %v3110
      %v3125 = vmul.f32 %v2994, %v3110
      %v3126 = vmul.f32 %v2999, %v3110
      %v3127 = vmul.f32 %v3004, %v3110
      %v3128 = vmul.f32 %v3009, %v3110
      %v3129 = vmul.f32 %v3014, %v3110
      %v3130 = vmul.f32 %v3019, %v3110
      %v3131 = vmul.f32 %v3024, %v3110
      %v3132 = vmul.f32 %v3029, %v3110
      %v3133 = vmul.f32 %v3034, %v3110
      %v3134 = vmul.f32 %v3039, %v3110
      %v3135 = vmul.f32 %v3044, %v3110
      %v3136 = vmul.f32 %v3049, %v3110
      %v3137 = vmul.f32 %v3054, %v3110
      %v3138 = vmul.f32 %v3059, %v3110
      %v3139 = vmul.f32 %v3064, %v3110
      %v3140 = vmul.f32 %v3069, %v3110
      %v3141 = vmul.f32 %v3074, %v3110
      %v3142 = vmul.f32 %v3079, %v3110
      %v3143 = vmul.f32 %v3084, %v3110
      %v3144 = vmul.f32 %v3089, %v3110
      %v3145 = vmul.f32 %v3094, %v3110
      %v3146 = vmul.f32 %v3099, %v3110
      %v3147 = vmul.f32 %v3104, %v3110
      %v3148 = vadd.f32 %v2849, %v3112
      %v3149 = vadd.f32 %v2850, %v3113
      %v3150 = vadd.f32 %v2851, %v3114
      %v3151 = vadd.f32 %v2852, %v3115
      %v3152 = vadd.f32 %v2853, %v3116
      %v3153 = vadd.f32 %v2854, %v3117
      %v3154 = vadd.f32 %v2855, %v3118
      %v3155 = vadd.f32 %v2856, %v3119
      %v3156 = vadd.f32 %v2857, %v3120
      %v3157 = vadd.f32 %v2858, %v3121
      %v3158 = vadd.f32 %v2859, %v3122
      %v3159 = vadd.f32 %v2860, %v3123
      %v3160 = vadd.f32 %v2861, %v3124
      %v3161 = vadd.f32 %v2862, %v3125
      %v3162 = vadd.f32 %v2863, %v3126
      %v3163 = vadd.f32 %v2864, %v3127
      %v3164 = vadd.f32 %v2865, %v3128
      %v3165 = vadd.f32 %v2866, %v3129
      %v3166 = vadd.f32 %v2867, %v3130
      %v3167 = vadd.f32 %v2868, %v3131
      %v3168 = vadd.f32 %v2869, %v3132
      %v3169 = vadd.f32 %v2870, %v3133
      %v3170 = vadd.f32 %v2871, %v3134
      %v3171 = vadd.f32 %v2872, %v3135
      %v3172 = vadd.f32 %v2873, %v3136
      %v3173 = vadd.f32 %v2874, %v3137
      %v3174 = vadd.f32 %v2875, %v3138
      %v3175 = vadd.f32 %v2876, %v3139
      %v3176 = vadd.f32 %v2877, %v3140
      %v3177 = vadd.f32 %v2878, %v3141
      %v3178 = vadd.f32 %v2879, %v3142
      %v3179 = vadd.f32 %v2880, %v3143
      %v3180 = vadd.f32 %v2881, %v3144
      %v3181 = vadd.f32 %v2882, %v3145
      %v3182 = vadd.f32 %v2883, %v3146
      %v3183 = vadd.f32 %v2884, %v3147
      %v3184 = vld [vmem:[%s2887 + $0x1] sm:$0xff]
      %v3185 = vld [vmem:[%s2887 + $0x9] sm:$0xff]
      %v3186 = vld [vmem:[%s2887 + $0x11] sm:$0xff]
      %v3187 = vld [vmem:[%s2887 + $0x19] sm:$0xff]
      %v3188 = vld [vmem:[%s2887 + $0x21] sm:$0xff]
      %v3189 = vld [vmem:[%s2887 + $0x29] sm:$0xff]
      %v3190 = vld [vmem:[%s2887 + $0x31] sm:$0xff]
      %v3191 = vld [vmem:[%s2887 + $0x39] sm:$0xff]
      %v3192 = vld [vmem:[%s2887 + $0x41] sm:$0xff]
      %v3193 = vld [vmem:[%s2887 + $0x49] sm:$0xff]
      %v3194 = vld [vmem:[%s2887 + $0x51] sm:$0xff]
      %v3195 = vld [vmem:[%s2887 + $0x59] sm:$0xff]
      %v3196 = vld [vmem:[%s2887 + $0x61] sm:$0xff]
      %v3197 = vld [vmem:[%s2887 + $0x69] sm:$0xff]
      %v3198 = vld [vmem:[%s2887 + $0x71] sm:$0xff]
      %v3199 = vld [vmem:[%s2887 + $0x79] sm:$0xff]
      %v3200 = vld [vmem:[%s2887 + $0x81] sm:$0xff]
      %v3201 = vld [vmem:[%s2887 + $0x89] sm:$0xff]
      %v3202 = vld [vmem:[%s2887 + $0x91] sm:$0xff]
      %v3203 = vld [vmem:[%s2887 + $0x99] sm:$0xff]
      %v3204 = vld [vmem:[%s2887 + $0xa1] sm:$0xff]
      %v3205 = vld [vmem:[%s2887 + $0xa9] sm:$0xff]
      %v3206 = vld [vmem:[%s2887 + $0xb1] sm:$0xff]
      %v3207 = vld [vmem:[%s2887 + $0xb9] sm:$0xff]
      %v3208 = vld [vmem:[%s2887 + $0xc1] sm:$0xff]
      %v3209 = vld [vmem:[%s2887 + $0xc9] sm:$0xff]
      %v3210 = vld [vmem:[%s2887 + $0xd1] sm:$0xff]
      %v3211 = vld [vmem:[%s2887 + $0xd9] sm:$0xff]
      %v3212 = vld [vmem:[%s2887 + $0xe1] sm:$0xff]
      %v3213 = vld [vmem:[%s2887 + $0xe9] sm:$0xff]
      %v3214 = vld [vmem:[%s2887 + $0xf1] sm:$0xff]
      %v3215 = vld [vmem:[%s2887 + $0xf9] sm:$0xff]
      %v3216 = vld [vmem:[%s2887 + $0x101] sm:$0xff]
      %v3217 = vld [vmem:[%s2887 + $0x109] sm:$0xff]
      %v3218 = vld [vmem:[%s2887 + $0x111] sm:$0xff]
      %v3219 = vld [vmem:[%s2887 + $0x119] sm:$0xff]
      %s3220 = scalar_lea.vmem %s1, 10
      %v3221 = vld [vmem:[%s3220] sm:$0x1]
      %3223 = vset.pattern.permute.xlu0 0
      %3224 = vperm.xlu0 %3223, %v3184
      %v3225 = vpop.permute.xlu0 %3224
      %3228 = vset.pattern.permute.xlu0 0
      %3229 = vperm.xlu0 %3228, %v3185
      %v3230 = vpop.permute.xlu0 %3229
      %3233 = vset.pattern.permute.xlu0 0
      %3234 = vperm.xlu0 %3233, %v3186
      %v3235 = vpop.permute.xlu0 %3234
      %3238 = vset.pattern.permute.xlu0 0
      %3239 = vperm.xlu0 %3238, %v3187
      %v3240 = vpop.permute.xlu0 %3239
      %3243 = vset.pattern.permute.xlu0 0
      %3244 = vperm.xlu0 %3243, %v3188
      %v3245 = vpop.permute.xlu0 %3244
      %3248 = vset.pattern.permute.xlu0 0
      %3249 = vperm.xlu0 %3248, %v3189
      %v3250 = vpop.permute.xlu0 %3249
      %3253 = vset.pattern.permute.xlu0 0
      %3254 = vperm.xlu0 %3253, %v3190
      %v3255 = vpop.permute.xlu0 %3254
      %3258 = vset.pattern.permute.xlu0 0
      %3259 = vperm.xlu0 %3258, %v3191
      %v3260 = vpop.permute.xlu0 %3259
      %3263 = vset.pattern.permute.xlu0 0
      %3264 = vperm.xlu0 %3263, %v3192
      %v3265 = vpop.permute.xlu0 %3264
      %3268 = vset.pattern.permute.xlu0 0
      %3269 = vperm.xlu0 %3268, %v3193
      %v3270 = vpop.permute.xlu0 %3269
      %3273 = vset.pattern.permute.xlu0 0
      %3274 = vperm.xlu0 %3273, %v3194
      %v3275 = vpop.permute.xlu0 %3274
      %3278 = vset.pattern.permute.xlu0 0
      %3279 = vperm.xlu0 %3278, %v3195
      %v3280 = vpop.permute.xlu0 %3279
      %3283 = vset.pattern.permute.xlu0 0
      %3284 = vperm.xlu0 %3283, %v3196
      %v3285 = vpop.permute.xlu0 %3284
      %3288 = vset.pattern.permute.xlu0 0
      %3289 = vperm.xlu0 %3288, %v3197
      %v3290 = vpop.permute.xlu0 %3289
      %3293 = vset.pattern.permute.xlu0 0
      %3294 = vperm.xlu0 %3293, %v3198
      %v3295 = vpop.permute.xlu0 %3294
      %3298 = vset.pattern.permute.xlu0 0
      %3299 = vperm.xlu0 %3298, %v3199
      %v3300 = vpop.permute.xlu0 %3299
      %3303 = vset.pattern.permute.xlu0 0
      %3304 = vperm.xlu0 %3303, %v3200
      %v3305 = vpop.permute.xlu0 %3304
      %3308 = vset.pattern.permute.xlu0 0
      %3309 = vperm.xlu0 %3308, %v3201
      %v3310 = vpop.permute.xlu0 %3309
      %3313 = vset.pattern.permute.xlu0 0
      %3314 = vperm.xlu0 %3313, %v3202
      %v3315 = vpop.permute.xlu0 %3314
      %3318 = vset.pattern.permute.xlu0 0
      %3319 = vperm.xlu0 %3318, %v3203
      %v3320 = vpop.permute.xlu0 %3319
      %3323 = vset.pattern.permute.xlu0 0
      %3324 = vperm.xlu0 %3323, %v3204
      %v3325 = vpop.permute.xlu0 %3324
      %3328 = vset.pattern.permute.xlu0 0
      %3329 = vperm.xlu0 %3328, %v3205
      %v3330 = vpop.permute.xlu0 %3329
      %3333 = vset.pattern.permute.xlu0 0
      %3334 = vperm.xlu0 %3333, %v3206
      %v3335 = vpop.permute.xlu0 %3334
      %3338 = vset.pattern.permute.xlu0 0
      %3339 = vperm.xlu0 %3338, %v3207
      %v3340 = vpop.permute.xlu0 %3339
      %3343 = vset.pattern.permute.xlu0 0
      %3344 = vperm.xlu0 %3343, %v3208
      %v3345 = vpop.permute.xlu0 %3344
      %3348 = vset.pattern.permute.xlu0 0
      %3349 = vperm.xlu0 %3348, %v3209
      %v3350 = vpop.permute.xlu0 %3349
      %3353 = vset.pattern.permute.xlu0 0
      %3354 = vperm.xlu0 %3353, %v3210
      %v3355 = vpop.permute.xlu0 %3354
      %3358 = vset.pattern.permute.xlu0 0
      %3359 = vperm.xlu0 %3358, %v3211
      %v3360 = vpop.permute.xlu0 %3359
      %3363 = vset.pattern.permute.xlu0 0
      %3364 = vperm.xlu0 %3363, %v3212
      %v3365 = vpop.permute.xlu0 %3364
      %3368 = vset.pattern.permute.xlu0 0
      %3369 = vperm.xlu0 %3368, %v3213
      %v3370 = vpop.permute.xlu0 %3369
      %3373 = vset.pattern.permute.xlu0 0
      %3374 = vperm.xlu0 %3373, %v3214
      %v3375 = vpop.permute.xlu0 %3374
      %3378 = vset.pattern.permute.xlu0 0
      %3379 = vperm.xlu0 %3378, %v3215
      %v3380 = vpop.permute.xlu0 %3379
      %3383 = vset.pattern.permute.xlu0 0
      %3384 = vperm.xlu0 %3383, %v3216
      %v3385 = vpop.permute.xlu0 %3384
      %3388 = vset.pattern.permute.xlu0 0
      %3389 = vperm.xlu0 %3388, %v3217
      %v3390 = vpop.permute.xlu0 %3389
      %3393 = vset.pattern.permute.xlu0 0
      %3394 = vperm.xlu0 %3393, %v3218
      %v3395 = vpop.permute.xlu0 %3394
      %3398 = vset.pattern.permute.xlu0 0
      %3399 = vperm.xlu0 %3398, %v3219
      %v3400 = vpop.permute.xlu0 %3399
      %v3403 = vlaneseq
      %v3404 = vshrl.u32 %v3403, 7
      %v3405 = vsub.s32 0, %v3404
      %v3406 = vrot.slane %v3221, %v3405
      %v3408 = vmul.f32 %v3225, %v3406
      %v3409 = vmul.f32 %v3230, %v3406
      %v3410 = vmul.f32 %v3235, %v3406
      %v3411 = vmul.f32 %v3240, %v3406
      %v3412 = vmul.f32 %v3245, %v3406
      %v3413 = vmul.f32 %v3250, %v3406
      %v3414 = vmul.f32 %v3255, %v3406
      %v3415 = vmul.f32 %v3260, %v3406
      %v3416 = vmul.f32 %v3265, %v3406
      %v3417 = vmul.f32 %v3270, %v3406
      %v3418 = vmul.f32 %v3275, %v3406
      %v3419 = vmul.f32 %v3280, %v3406
      %v3420 = vmul.f32 %v3285, %v3406
      %v3421 = vmul.f32 %v3290, %v3406
      %v3422 = vmul.f32 %v3295, %v3406
      %v3423 = vmul.f32 %v3300, %v3406
      %v3424 = vmul.f32 %v3305, %v3406
      %v3425 = vmul.f32 %v3310, %v3406
      %v3426 = vmul.f32 %v3315, %v3406
      %v3427 = vmul.f32 %v3320, %v3406
      %v3428 = vmul.f32 %v3325, %v3406
      %v3429 = vmul.f32 %v3330, %v3406
      %v3430 = vmul.f32 %v3335, %v3406
      %v3431 = vmul.f32 %v3340, %v3406
      %v3432 = vmul.f32 %v3345, %v3406
      %v3433 = vmul.f32 %v3350, %v3406
      %v3434 = vmul.f32 %v3355, %v3406
      %v3435 = vmul.f32 %v3360, %v3406
      %v3436 = vmul.f32 %v3365, %v3406
      %v3437 = vmul.f32 %v3370, %v3406
      %v3438 = vmul.f32 %v3375, %v3406
      %v3439 = vmul.f32 %v3380, %v3406
      %v3440 = vmul.f32 %v3385, %v3406
      %v3441 = vmul.f32 %v3390, %v3406
      %v3442 = vmul.f32 %v3395, %v3406
      %v3443 = vmul.f32 %v3400, %v3406
      %v3444 = vadd.f32 %v3148, %v3408
      %v3445 = vadd.f32 %v3149, %v3409
      %v3446 = vadd.f32 %v3150, %v3410
      %v3447 = vadd.f32 %v3151, %v3411
      %v3448 = vadd.f32 %v3152, %v3412
      %v3449 = vadd.f32 %v3153, %v3413
      %v3450 = vadd.f32 %v3154, %v3414
      %v3451 = vadd.f32 %v3155, %v3415
      %v3452 = vadd.f32 %v3156, %v3416
      %v3453 = vadd.f32 %v3157, %v3417
      %v3454 = vadd.f32 %v3158, %v3418
      %v3455 = vadd.f32 %v3159, %v3419
      %v3456 = vadd.f32 %v3160, %v3420
      %v3457 = vadd.f32 %v3161, %v3421
      %v3458 = vadd.f32 %v3162, %v3422
      %v3459 = vadd.f32 %v3163, %v3423
      %v3460 = vadd.f32 %v3164, %v3424
      %v3461 = vadd.f32 %v3165, %v3425
      %v3462 = vadd.f32 %v3166, %v3426
      %v3463 = vadd.f32 %v3167, %v3427
      %v3464 = vadd.f32 %v3168, %v3428
      %v3465 = vadd.f32 %v3169, %v3429
      %v3466 = vadd.f32 %v3170, %v3430
      %v3467 = vadd.f32 %v3171, %v3431
      %v3468 = vadd.f32 %v3172, %v3432
      %v3469 = vadd.f32 %v3173, %v3433
      %v3470 = vadd.f32 %v3174, %v3434
      %v3471 = vadd.f32 %v3175, %v3435
      %v3472 = vadd.f32 %v3176, %v3436
      %v3473 = vadd.f32 %v3177, %v3437
      %v3474 = vadd.f32 %v3178, %v3438
      %v3475 = vadd.f32 %v3179, %v3439
      %v3476 = vadd.f32 %v3180, %v3440
      %v3477 = vadd.f32 %v3181, %v3441
      %v3478 = vadd.f32 %v3182, %v3442
      %v3479 = vadd.f32 %v3183, %v3443
      %v3480 = vld [vmem:[%s2887 + $0x2] sm:$0xff]
      %v3481 = vld [vmem:[%s2887 + $0xa] sm:$0xff]
      %v3482 = vld [vmem:[%s2887 + $0x12] sm:$0xff]
      %v3483 = vld [vmem:[%s2887 + $0x1a] sm:$0xff]
      %v3484 = vld [vmem:[%s2887 + $0x22] sm:$0xff]
      %v3485 = vld [vmem:[%s2887 + $0x2a] sm:$0xff]
      %v3486 = vld [vmem:[%s2887 + $0x32] sm:$0xff]
      %v3487 = vld [vmem:[%s2887 + $0x3a] sm:$0xff]
      %v3488 = vld [vmem:[%s2887 + $0x42] sm:$0xff]
      %v3489 = vld [vmem:[%s2887 + $0x4a] sm:$0xff]
      %v3490 = vld [vmem:[%s2887 + $0x52] sm:$0xff]
      %v3491 = vld [vmem:[%s2887 + $0x5a] sm:$0xff]
      %v3492 = vld [vmem:[%s2887 + $0x62] sm:$0xff]
      %v3493 = vld [vmem:[%s2887 + $0x6a] sm:$0xff]
      %v3494 = vld [vmem:[%s2887 + $0x72] sm:$0xff]
      %v3495 = vld [vmem:[%s2887 + $0x7a] sm:$0xff]
      %v3496 = vld [vmem:[%s2887 + $0x82] sm:$0xff]
      %v3497 = vld [vmem:[%s2887 + $0x8a] sm:$0xff]
      %v3498 = vld [vmem:[%s2887 + $0x92] sm:$0xff]
      %v3499 = vld [vmem:[%s2887 + $0x9a] sm:$0xff]
      %v3500 = vld [vmem:[%s2887 + $0xa2] sm:$0xff]
      %v3501 = vld [vmem:[%s2887 + $0xaa] sm:$0xff]
      %v3502 = vld [vmem:[%s2887 + $0xb2] sm:$0xff]
      %v3503 = vld [vmem:[%s2887 + $0xba] sm:$0xff]
      %v3504 = vld [vmem:[%s2887 + $0xc2] sm:$0xff]
      %v3505 = vld [vmem:[%s2887 + $0xca] sm:$0xff]
      %v3506 = vld [vmem:[%s2887 + $0xd2] sm:$0xff]
      %v3507 = vld [vmem:[%s2887 + $0xda] sm:$0xff]
      %v3508 = vld [vmem:[%s2887 + $0xe2] sm:$0xff]
      %v3509 = vld [vmem:[%s2887 + $0xea] sm:$0xff]
      %v3510 = vld [vmem:[%s2887 + $0xf2] sm:$0xff]
      %v3511 = vld [vmem:[%s2887 + $0xfa] sm:$0xff]
      %v3512 = vld [vmem:[%s2887 + $0x102] sm:$0xff]
      %v3513 = vld [vmem:[%s2887 + $0x10a] sm:$0xff]
      %v3514 = vld [vmem:[%s2887 + $0x112] sm:$0xff]
      %v3515 = vld [vmem:[%s2887 + $0x11a] sm:$0xff]
      %s3516 = scalar_lea.vmem %s1, 11
      %v3517 = vld [vmem:[%s3516] sm:$0x1]
      %3519 = vset.pattern.permute.xlu0 0
      %3520 = vperm.xlu0 %3519, %v3480
      %v3521 = vpop.permute.xlu0 %3520
      %3524 = vset.pattern.permute.xlu0 0
      %3525 = vperm.xlu0 %3524, %v3481
      %v3526 = vpop.permute.xlu0 %3525
      %3529 = vset.pattern.permute.xlu0 0
      %3530 = vperm.xlu0 %3529, %v3482
      %v3531 = vpop.permute.xlu0 %3530
      %3534 = vset.pattern.permute.xlu0 0
      %3535 = vperm.xlu0 %3534, %v3483
      %v3536 = vpop.permute.xlu0 %3535
      %3539 = vset.pattern.permute.xlu0 0
      %3540 = vperm.xlu0 %3539, %v3484
      %v3541 = vpop.permute.xlu0 %3540
      %3544 = vset.pattern.permute.xlu0 0
      %3545 = vperm.xlu0 %3544, %v3485
      %v3546 = vpop.permute.xlu0 %3545
      %3549 = vset.pattern.permute.xlu0 0
      %3550 = vperm.xlu0 %3549, %v3486
      %v3551 = vpop.permute.xlu0 %3550
      %3554 = vset.pattern.permute.xlu0 0
      %3555 = vperm.xlu0 %3554, %v3487
      %v3556 = vpop.permute.xlu0 %3555
      %3559 = vset.pattern.permute.xlu0 0
      %3560 = vperm.xlu0 %3559, %v3488
      %v3561 = vpop.permute.xlu0 %3560
      %3564 = vset.pattern.permute.xlu0 0
      %3565 = vperm.xlu0 %3564, %v3489
      %v3566 = vpop.permute.xlu0 %3565
      %3569 = vset.pattern.permute.xlu0 0
      %3570 = vperm.xlu0 %3569, %v3490
      %v3571 = vpop.permute.xlu0 %3570
      %3574 = vset.pattern.permute.xlu0 0
      %3575 = vperm.xlu0 %3574, %v3491
      %v3576 = vpop.permute.xlu0 %3575
      %3579 = vset.pattern.permute.xlu0 0
      %3580 = vperm.xlu0 %3579, %v3492
      %v3581 = vpop.permute.xlu0 %3580
      %3584 = vset.pattern.permute.xlu0 0
      %3585 = vperm.xlu0 %3584, %v3493
      %v3586 = vpop.permute.xlu0 %3585
      %3589 = vset.pattern.permute.xlu0 0
      %3590 = vperm.xlu0 %3589, %v3494
      %v3591 = vpop.permute.xlu0 %3590
      %3594 = vset.pattern.permute.xlu0 0
      %3595 = vperm.xlu0 %3594, %v3495
      %v3596 = vpop.permute.xlu0 %3595
      %3599 = vset.pattern.permute.xlu0 0
      %3600 = vperm.xlu0 %3599, %v3496
      %v3601 = vpop.permute.xlu0 %3600
      %3604 = vset.pattern.permute.xlu0 0
      %3605 = vperm.xlu0 %3604, %v3497
      %v3606 = vpop.permute.xlu0 %3605
      %3609 = vset.pattern.permute.xlu0 0
      %3610 = vperm.xlu0 %3609, %v3498
      %v3611 = vpop.permute.xlu0 %3610
      %3614 = vset.pattern.permute.xlu0 0
      %3615 = vperm.xlu0 %3614, %v3499
      %v3616 = vpop.permute.xlu0 %3615
      %3619 = vset.pattern.permute.xlu0 0
      %3620 = vperm.xlu0 %3619, %v3500
      %v3621 = vpop.permute.xlu0 %3620
      %3624 = vset.pattern.permute.xlu0 0
      %3625 = vperm.xlu0 %3624, %v3501
      %v3626 = vpop.permute.xlu0 %3625
      %3629 = vset.pattern.permute.xlu0 0
      %3630 = vperm.xlu0 %3629, %v3502
      %v3631 = vpop.permute.xlu0 %3630
      %3634 = vset.pattern.permute.xlu0 0
      %3635 = vperm.xlu0 %3634, %v3503
      %v3636 = vpop.permute.xlu0 %3635
      %3639 = vset.pattern.permute.xlu0 0
      %3640 = vperm.xlu0 %3639, %v3504
      %v3641 = vpop.permute.xlu0 %3640
      %3644 = vset.pattern.permute.xlu0 0
      %3645 = vperm.xlu0 %3644, %v3505
      %v3646 = vpop.permute.xlu0 %3645
      %3649 = vset.pattern.permute.xlu0 0
      %3650 = vperm.xlu0 %3649, %v3506
      %v3651 = vpop.permute.xlu0 %3650
      %3654 = vset.pattern.permute.xlu0 0
      %3655 = vperm.xlu0 %3654, %v3507
      %v3656 = vpop.permute.xlu0 %3655
      %3659 = vset.pattern.permute.xlu0 0
      %3660 = vperm.xlu0 %3659, %v3508
      %v3661 = vpop.permute.xlu0 %3660
      %3664 = vset.pattern.permute.xlu0 0
      %3665 = vperm.xlu0 %3664, %v3509
      %v3666 = vpop.permute.xlu0 %3665
      %3669 = vset.pattern.permute.xlu0 0
      %3670 = vperm.xlu0 %3669, %v3510
      %v3671 = vpop.permute.xlu0 %3670
      %3674 = vset.pattern.permute.xlu0 0
      %3675 = vperm.xlu0 %3674, %v3511
      %v3676 = vpop.permute.xlu0 %3675
      %3679 = vset.pattern.permute.xlu0 0
      %3680 = vperm.xlu0 %3679, %v3512
      %v3681 = vpop.permute.xlu0 %3680
      %3684 = vset.pattern.permute.xlu0 0
      %3685 = vperm.xlu0 %3684, %v3513
      %v3686 = vpop.permute.xlu0 %3685
      %3689 = vset.pattern.permute.xlu0 0
      %3690 = vperm.xlu0 %3689, %v3514
      %v3691 = vpop.permute.xlu0 %3690
      %3694 = vset.pattern.permute.xlu0 0
      %3695 = vperm.xlu0 %3694, %v3515
      %v3696 = vpop.permute.xlu0 %3695
      %v3699 = vlaneseq
      %v3700 = vshrl.u32 %v3699, 7
      %v3701 = vsub.s32 0, %v3700
      %v3702 = vrot.slane %v3517, %v3701
      %v3704 = vmul.f32 %v3521, %v3702
      %v3705 = vmul.f32 %v3526, %v3702
      %v3706 = vmul.f32 %v3531, %v3702
      %v3707 = vmul.f32 %v3536, %v3702
      %v3708 = vmul.f32 %v3541, %v3702
      %v3709 = vmul.f32 %v3546, %v3702
      %v3710 = vmul.f32 %v3551, %v3702
      %v3711 = vmul.f32 %v3556, %v3702
      %v3712 = vmul.f32 %v3561, %v3702
      %v3713 = vmul.f32 %v3566, %v3702
      %v3714 = vmul.f32 %v3571, %v3702
      %v3715 = vmul.f32 %v3576, %v3702
      %v3716 = vmul.f32 %v3581, %v3702
      %v3717 = vmul.f32 %v3586, %v3702
      %v3718 = vmul.f32 %v3591, %v3702
      %v3719 = vmul.f32 %v3596, %v3702
      %v3720 = vmul.f32 %v3601, %v3702
      %v3721 = vmul.f32 %v3606, %v3702
      %v3722 = vmul.f32 %v3611, %v3702
      %v3723 = vmul.f32 %v3616, %v3702
      %v3724 = vmul.f32 %v3621, %v3702
      %v3725 = vmul.f32 %v3626, %v3702
      %v3726 = vmul.f32 %v3631, %v3702
      %v3727 = vmul.f32 %v3636, %v3702
      %v3728 = vmul.f32 %v3641, %v3702
      %v3729 = vmul.f32 %v3646, %v3702
      %v3730 = vmul.f32 %v3651, %v3702
      %v3731 = vmul.f32 %v3656, %v3702
      %v3732 = vmul.f32 %v3661, %v3702
      %v3733 = vmul.f32 %v3666, %v3702
      %v3734 = vmul.f32 %v3671, %v3702
      %v3735 = vmul.f32 %v3676, %v3702
      %v3736 = vmul.f32 %v3681, %v3702
      %v3737 = vmul.f32 %v3686, %v3702
      %v3738 = vmul.f32 %v3691, %v3702
      %v3739 = vmul.f32 %v3696, %v3702
      %v3740 = vadd.f32 %v3444, %v3704
      %v3741 = vadd.f32 %v3445, %v3705
      %v3742 = vadd.f32 %v3446, %v3706
      %v3743 = vadd.f32 %v3447, %v3707
      %v3744 = vadd.f32 %v3448, %v3708
      %v3745 = vadd.f32 %v3449, %v3709
      %v3746 = vadd.f32 %v3450, %v3710
      %v3747 = vadd.f32 %v3451, %v3711
      %v3748 = vadd.f32 %v3452, %v3712
      %v3749 = vadd.f32 %v3453, %v3713
      %v3750 = vadd.f32 %v3454, %v3714
      %v3751 = vadd.f32 %v3455, %v3715
      %v3752 = vadd.f32 %v3456, %v3716
      %v3753 = vadd.f32 %v3457, %v3717
      %v3754 = vadd.f32 %v3458, %v3718
      %v3755 = vadd.f32 %v3459, %v3719
      %v3756 = vadd.f32 %v3460, %v3720
      %v3757 = vadd.f32 %v3461, %v3721
      %v3758 = vadd.f32 %v3462, %v3722
      %v3759 = vadd.f32 %v3463, %v3723
      %v3760 = vadd.f32 %v3464, %v3724
      %v3761 = vadd.f32 %v3465, %v3725
      %v3762 = vadd.f32 %v3466, %v3726
      %v3763 = vadd.f32 %v3467, %v3727
      %v3764 = vadd.f32 %v3468, %v3728
      %v3765 = vadd.f32 %v3469, %v3729
      %v3766 = vadd.f32 %v3470, %v3730
      %v3767 = vadd.f32 %v3471, %v3731
      %v3768 = vadd.f32 %v3472, %v3732
      %v3769 = vadd.f32 %v3473, %v3733
      %v3770 = vadd.f32 %v3474, %v3734
      %v3771 = vadd.f32 %v3475, %v3735
      %v3772 = vadd.f32 %v3476, %v3736
      %v3773 = vadd.f32 %v3477, %v3737
      %v3774 = vadd.f32 %v3478, %v3738
      %v3775 = vadd.f32 %v3479, %v3739
      %v3776 = vld [vmem:[%s2887 + $0x12] sm:$0xff]
      %v3777 = vld [vmem:[%s2887 + $0x1a] sm:$0xff]
      %v3778 = vld [vmem:[%s2887 + $0x22] sm:$0xff]
      %v3779 = vld [vmem:[%s2887 + $0x2a] sm:$0xff]
      %v3780 = vld [vmem:[%s2887 + $0x32] sm:$0xff]
      %v3781 = vld [vmem:[%s2887 + $0x3a] sm:$0xff]
      %v3782 = vld [vmem:[%s2887 + $0x42] sm:$0xff]
      %v3783 = vld [vmem:[%s2887 + $0x4a] sm:$0xff]
      %v3784 = vld [vmem:[%s2887 + $0x52] sm:$0xff]
      %v3785 = vld [vmem:[%s2887 + $0x5a] sm:$0xff]
      %v3786 = vld [vmem:[%s2887 + $0x62] sm:$0xff]
      %v3787 = vld [vmem:[%s2887 + $0x6a] sm:$0xff]
      %v3788 = vld [vmem:[%s2887 + $0x72] sm:$0xff]
      %v3789 = vld [vmem:[%s2887 + $0x7a] sm:$0xff]
      %v3790 = vld [vmem:[%s2887 + $0x82] sm:$0xff]
      %v3791 = vld [vmem:[%s2887 + $0x8a] sm:$0xff]
      %v3792 = vld [vmem:[%s2887 + $0x92] sm:$0xff]
      %v3793 = vld [vmem:[%s2887 + $0x9a] sm:$0xff]
      %v3794 = vld [vmem:[%s2887 + $0xa2] sm:$0xff]
      %v3795 = vld [vmem:[%s2887 + $0xaa] sm:$0xff]
      %v3796 = vld [vmem:[%s2887 + $0xb2] sm:$0xff]
      %v3797 = vld [vmem:[%s2887 + $0xba] sm:$0xff]
      %v3798 = vld [vmem:[%s2887 + $0xc2] sm:$0xff]
      %v3799 = vld [vmem:[%s2887 + $0xca] sm:$0xff]
      %v3800 = vld [vmem:[%s2887 + $0xd2] sm:$0xff]
      %v3801 = vld [vmem:[%s2887 + $0xda] sm:$0xff]
      %v3802 = vld [vmem:[%s2887 + $0xe2] sm:$0xff]
      %v3803 = vld [vmem:[%s2887 + $0xea] sm:$0xff]
      %v3804 = vld [vmem:[%s2887 + $0xf2] sm:$0xff]
      %v3805 = vld [vmem:[%s2887 + $0xfa] sm:$0xff]
      %v3806 = vld [vmem:[%s2887 + $0x102] sm:$0xff]
      %v3807 = vld [vmem:[%s2887 + $0x10a] sm:$0xff]
      %v3808 = vld [vmem:[%s2887 + $0x112] sm:$0xff]
      %v3809 = vld [vmem:[%s2887 + $0x11a] sm:$0xff]
      %v3810 = vld [vmem:[%s2887 + $0x122] sm:$0xff]
      %v3811 = vld [vmem:[%s2887 + $0x12a] sm:$0xff]
      %s3812 = scalar_lea.vmem %s1, 12
      %v3813 = vld [vmem:[%s3812] sm:$0x1]
      %3815 = vset.pattern.permute.xlu0 0
      %3816 = vperm.xlu0 %3815, %v3776
      %v3817 = vpop.permute.xlu0 %3816
      %3820 = vset.pattern.permute.xlu0 0
      %3821 = vperm.xlu0 %3820, %v3777
      %v3822 = vpop.permute.xlu0 %3821
      %3825 = vset.pattern.permute.xlu0 0
      %3826 = vperm.xlu0 %3825, %v3778
      %v3827 = vpop.permute.xlu0 %3826
      %3830 = vset.pattern.permute.xlu0 0
      %3831 = vperm.xlu0 %3830, %v3779
      %v3832 = vpop.permute.xlu0 %3831
      %3835 = vset.pattern.permute.xlu0 0
      %3836 = vperm.xlu0 %3835, %v3780
      %v3837 = vpop.permute.xlu0 %3836
      %3840 = vset.pattern.permute.xlu0 0
      %3841 = vperm.xlu0 %3840, %v3781
      %v3842 = vpop.permute.xlu0 %3841
      %3845 = vset.pattern.permute.xlu0 0
      %3846 = vperm.xlu0 %3845, %v3782
      %v3847 = vpop.permute.xlu0 %3846
      %3850 = vset.pattern.permute.xlu0 0
      %3851 = vperm.xlu0 %3850, %v3783
      %v3852 = vpop.permute.xlu0 %3851
      %3855 = vset.pattern.permute.xlu0 0
      %3856 = vperm.xlu0 %3855, %v3784
      %v3857 = vpop.permute.xlu0 %3856
      %3860 = vset.pattern.permute.xlu0 0
      %3861 = vperm.xlu0 %3860, %v3785
      %v3862 = vpop.permute.xlu0 %3861
      %3865 = vset.pattern.permute.xlu0 0
      %3866 = vperm.xlu0 %3865, %v3786
      %v3867 = vpop.permute.xlu0 %3866
      %3870 = vset.pattern.permute.xlu0 0
      %3871 = vperm.xlu0 %3870, %v3787
      %v3872 = vpop.permute.xlu0 %3871
      %3875 = vset.pattern.permute.xlu0 0
      %3876 = vperm.xlu0 %3875, %v3788
      %v3877 = vpop.permute.xlu0 %3876
      %3880 = vset.pattern.permute.xlu0 0
      %3881 = vperm.xlu0 %3880, %v3789
      %v3882 = vpop.permute.xlu0 %3881
      %3885 = vset.pattern.permute.xlu0 0
      %3886 = vperm.xlu0 %3885, %v3790
      %v3887 = vpop.permute.xlu0 %3886
      %3890 = vset.pattern.permute.xlu0 0
      %3891 = vperm.xlu0 %3890, %v3791
      %v3892 = vpop.permute.xlu0 %3891
      %3895 = vset.pattern.permute.xlu0 0
      %3896 = vperm.xlu0 %3895, %v3792
      %v3897 = vpop.permute.xlu0 %3896
      %3900 = vset.pattern.permute.xlu0 0
      %3901 = vperm.xlu0 %3900, %v3793
      %v3902 = vpop.permute.xlu0 %3901
      %3905 = vset.pattern.permute.xlu0 0
      %3906 = vperm.xlu0 %3905, %v3794
      %v3907 = vpop.permute.xlu0 %3906
      %3910 = vset.pattern.permute.xlu0 0
      %3911 = vperm.xlu0 %3910, %v3795
      %v3912 = vpop.permute.xlu0 %3911
      %3915 = vset.pattern.permute.xlu0 0
      %3916 = vperm.xlu0 %3915, %v3796
      %v3917 = vpop.permute.xlu0 %3916
      %3920 = vset.pattern.permute.xlu0 0
      %3921 = vperm.xlu0 %3920, %v3797
      %v3922 = vpop.permute.xlu0 %3921
      %3925 = vset.pattern.permute.xlu0 0
      %3926 = vperm.xlu0 %3925, %v3798
      %v3927 = vpop.permute.xlu0 %3926
      %3930 = vset.pattern.permute.xlu0 0
      %3931 = vperm.xlu0 %3930, %v3799
      %v3932 = vpop.permute.xlu0 %3931
      %3935 = vset.pattern.permute.xlu0 0
      %3936 = vperm.xlu0 %3935, %v3800
      %v3937 = vpop.permute.xlu0 %3936
      %3940 = vset.pattern.permute.xlu0 0
      %3941 = vperm.xlu0 %3940, %v3801
      %v3942 = vpop.permute.xlu0 %3941
      %3945 = vset.pattern.permute.xlu0 0
      %3946 = vperm.xlu0 %3945, %v3802
      %v3947 = vpop.permute.xlu0 %3946
      %3950 = vset.pattern.permute.xlu0 0
      %3951 = vperm.xlu0 %3950, %v3803
      %v3952 = vpop.permute.xlu0 %3951
      %3955 = vset.pattern.permute.xlu0 0
      %3956 = vperm.xlu0 %3955, %v3804
      %v3957 = vpop.permute.xlu0 %3956
      %3960 = vset.pattern.permute.xlu0 0
      %3961 = vperm.xlu0 %3960, %v3805
      %v3962 = vpop.permute.xlu0 %3961
      %3965 = vset.pattern.permute.xlu0 0
      %3966 = vperm.xlu0 %3965, %v3806
      %v3967 = vpop.permute.xlu0 %3966
      %3970 = vset.pattern.permute.xlu0 0
      %3971 = vperm.xlu0 %3970, %v3807
      %v3972 = vpop.permute.xlu0 %3971
      %3975 = vset.pattern.permute.xlu0 0
      %3976 = vperm.xlu0 %3975, %v3808
      %v3977 = vpop.permute.xlu0 %3976
      %3980 = vset.pattern.permute.xlu0 0
      %3981 = vperm.xlu0 %3980, %v3809
      %v3982 = vpop.permute.xlu0 %3981
      %3985 = vset.pattern.permute.xlu0 0
      %3986 = vperm.xlu0 %3985, %v3810
      %v3987 = vpop.permute.xlu0 %3986
      %3990 = vset.pattern.permute.xlu0 0
      %3991 = vperm.xlu0 %3990, %v3811
      %v3992 = vpop.permute.xlu0 %3991
      %v3995 = vlaneseq
      %v3996 = vshrl.u32 %v3995, 7
      %v3997 = vsub.s32 0, %v3996
      %v3998 = vrot.slane %v3813, %v3997
      %v4000 = vmul.f32 %v3817, %v3998
      %v4001 = vmul.f32 %v3822, %v3998
      %v4002 = vmul.f32 %v3827, %v3998
      %v4003 = vmul.f32 %v3832, %v3998
      %v4004 = vmul.f32 %v3837, %v3998
      %v4005 = vmul.f32 %v3842, %v3998
      %v4006 = vmul.f32 %v3847, %v3998
      %v4007 = vmul.f32 %v3852, %v3998
      %v4008 = vmul.f32 %v3857, %v3998
      %v4009 = vmul.f32 %v3862, %v3998
      %v4010 = vmul.f32 %v3867, %v3998
      %v4011 = vmul.f32 %v3872, %v3998
      %v4012 = vmul.f32 %v3877, %v3998
      %v4013 = vmul.f32 %v3882, %v3998
      %v4014 = vmul.f32 %v3887, %v3998
      %v4015 = vmul.f32 %v3892, %v3998
      %v4016 = vmul.f32 %v3897, %v3998
      %v4017 = vmul.f32 %v3902, %v3998
      %v4018 = vmul.f32 %v3907, %v3998
      %v4019 = vmul.f32 %v3912, %v3998
      %v4020 = vmul.f32 %v3917, %v3998
      %v4021 = vmul.f32 %v3922, %v3998
      %v4022 = vmul.f32 %v3927, %v3998
      %v4023 = vmul.f32 %v3932, %v3998
      %v4024 = vmul.f32 %v3937, %v3998
      %v4025 = vmul.f32 %v3942, %v3998
      %v4026 = vmul.f32 %v3947, %v3998
      %v4027 = vmul.f32 %v3952, %v3998
      %v4028 = vmul.f32 %v3957, %v3998
      %v4029 = vmul.f32 %v3962, %v3998
      %v4030 = vmul.f32 %v3967, %v3998
      %v4031 = vmul.f32 %v3972, %v3998
      %v4032 = vmul.f32 %v3977, %v3998
      %v4033 = vmul.f32 %v3982, %v3998
      %v4034 = vmul.f32 %v3987, %v3998
      %v4035 = vmul.f32 %v3992, %v3998
      %v4036 = vadd.f32 %v3740, %v4000
      %v4037 = vadd.f32 %v3741, %v4001
      %v4038 = vadd.f32 %v3742, %v4002
      %v4039 = vadd.f32 %v3743, %v4003
      %v4040 = vadd.f32 %v3744, %v4004
      %v4041 = vadd.f32 %v3745, %v4005
      %v4042 = vadd.f32 %v3746, %v4006
      %v4043 = vadd.f32 %v3747, %v4007
      %v4044 = vadd.f32 %v3748, %v4008
      %v4045 = vadd.f32 %v3749, %v4009
      %v4046 = vadd.f32 %v3750, %v4010
      %v4047 = vadd.f32 %v3751, %v4011
      %v4048 = vadd.f32 %v3752, %v4012
      %v4049 = vadd.f32 %v3753, %v4013
      %v4050 = vadd.f32 %v3754, %v4014
      %v4051 = vadd.f32 %v3755, %v4015
      %v4052 = vadd.f32 %v3756, %v4016
      %v4053 = vadd.f32 %v3757, %v4017
      %v4054 = vadd.f32 %v3758, %v4018
      %v4055 = vadd.f32 %v3759, %v4019
      %v4056 = vadd.f32 %v3760, %v4020
      %v4057 = vadd.f32 %v3761, %v4021
      %v4058 = vadd.f32 %v3762, %v4022
      %v4059 = vadd.f32 %v3763, %v4023
      %v4060 = vadd.f32 %v3764, %v4024
      %v4061 = vadd.f32 %v3765, %v4025
      %v4062 = vadd.f32 %v3766, %v4026
      %v4063 = vadd.f32 %v3767, %v4027
      %v4064 = vadd.f32 %v3768, %v4028
      %v4065 = vadd.f32 %v3769, %v4029
      %v4066 = vadd.f32 %v3770, %v4030
      %v4067 = vadd.f32 %v3771, %v4031
      %v4068 = vadd.f32 %v3772, %v4032
      %v4069 = vadd.f32 %v3773, %v4033
      %v4070 = vadd.f32 %v3774, %v4034
      %v4071 = vadd.f32 %v3775, %v4035
      %v4072 = vld [vmem:[%s2887 + $0x13] sm:$0xff]
      %v4073 = vld [vmem:[%s2887 + $0x1b] sm:$0xff]
      %v4074 = vld [vmem:[%s2887 + $0x23] sm:$0xff]
      %v4075 = vld [vmem:[%s2887 + $0x2b] sm:$0xff]
      %v4076 = vld [vmem:[%s2887 + $0x33] sm:$0xff]
      %v4077 = vld [vmem:[%s2887 + $0x3b] sm:$0xff]
      %v4078 = vld [vmem:[%s2887 + $0x43] sm:$0xff]
      %v4079 = vld [vmem:[%s2887 + $0x4b] sm:$0xff]
      %v4080 = vld [vmem:[%s2887 + $0x53] sm:$0xff]
      %v4081 = vld [vmem:[%s2887 + $0x5b] sm:$0xff]
      %v4082 = vld [vmem:[%s2887 + $0x63] sm:$0xff]
      %v4083 = vld [vmem:[%s2887 + $0x6b] sm:$0xff]
      %v4084 = vld [vmem:[%s2887 + $0x73] sm:$0xff]
      %v4085 = vld [vmem:[%s2887 + $0x7b] sm:$0xff]
      %v4086 = vld [vmem:[%s2887 + $0x83] sm:$0xff]
      %v4087 = vld [vmem:[%s2887 + $0x8b] sm:$0xff]
      %v4088 = vld [vmem:[%s2887 + $0x93] sm:$0xff]
      %v4089 = vld [vmem:[%s2887 + $0x9b] sm:$0xff]
      %v4090 = vld [vmem:[%s2887 + $0xa3] sm:$0xff]
      %v4091 = vld [vmem:[%s2887 + $0xab] sm:$0xff]
      %v4092 = vld [vmem:[%s2887 + $0xb3] sm:$0xff]
      %v4093 = vld [vmem:[%s2887 + $0xbb] sm:$0xff]
      %v4094 = vld [vmem:[%s2887 + $0xc3] sm:$0xff]
      %v4095 = vld [vmem:[%s2887 + $0xcb] sm:$0xff]
      %v4096 = vld [vmem:[%s2887 + $0xd3] sm:$0xff]
      %v4097 = vld [vmem:[%s2887 + $0xdb] sm:$0xff]
      %v4098 = vld [vmem:[%s2887 + $0xe3] sm:$0xff]
      %v4099 = vld [vmem:[%s2887 + $0xeb] sm:$0xff]
      %v4100 = vld [vmem:[%s2887 + $0xf3] sm:$0xff]
      %v4101 = vld [vmem:[%s2887 + $0xfb] sm:$0xff]
      %v4102 = vld [vmem:[%s2887 + $0x103] sm:$0xff]
      %v4103 = vld [vmem:[%s2887 + $0x10b] sm:$0xff]
      %v4104 = vld [vmem:[%s2887 + $0x113] sm:$0xff]
      %v4105 = vld [vmem:[%s2887 + $0x11b] sm:$0xff]
      %v4106 = vld [vmem:[%s2887 + $0x123] sm:$0xff]
      %v4107 = vld [vmem:[%s2887 + $0x12b] sm:$0xff]
      %s4108 = scalar_lea.vmem %s1, 13
      %v4109 = vld [vmem:[%s4108] sm:$0x1]
      %4111 = vset.pattern.permute.xlu0 0
      %4112 = vperm.xlu0 %4111, %v4072
      %v4113 = vpop.permute.xlu0 %4112
      %4116 = vset.pattern.permute.xlu0 0
      %4117 = vperm.xlu0 %4116, %v4073
      %v4118 = vpop.permute.xlu0 %4117
      %4121 = vset.pattern.permute.xlu0 0
      %4122 = vperm.xlu0 %4121, %v4074
      %v4123 = vpop.permute.xlu0 %4122
      %4126 = vset.pattern.permute.xlu0 0
      %4127 = vperm.xlu0 %4126, %v4075
      %v4128 = vpop.permute.xlu0 %4127
      %4131 = vset.pattern.permute.xlu0 0
      %4132 = vperm.xlu0 %4131, %v4076
      %v4133 = vpop.permute.xlu0 %4132
      %4136 = vset.pattern.permute.xlu0 0
      %4137 = vperm.xlu0 %4136, %v4077
      %v4138 = vpop.permute.xlu0 %4137
      %4141 = vset.pattern.permute.xlu0 0
      %4142 = vperm.xlu0 %4141, %v4078
      %v4143 = vpop.permute.xlu0 %4142
      %4146 = vset.pattern.permute.xlu0 0
      %4147 = vperm.xlu0 %4146, %v4079
      %v4148 = vpop.permute.xlu0 %4147
      %4151 = vset.pattern.permute.xlu0 0
      %4152 = vperm.xlu0 %4151, %v4080
      %v4153 = vpop.permute.xlu0 %4152
      %4156 = vset.pattern.permute.xlu0 0
      %4157 = vperm.xlu0 %4156, %v4081
      %v4158 = vpop.permute.xlu0 %4157
      %4161 = vset.pattern.permute.xlu0 0
      %4162 = vperm.xlu0 %4161, %v4082
      %v4163 = vpop.permute.xlu0 %4162
      %4166 = vset.pattern.permute.xlu0 0
      %4167 = vperm.xlu0 %4166, %v4083
      %v4168 = vpop.permute.xlu0 %4167
      %4171 = vset.pattern.permute.xlu0 0
      %4172 = vperm.xlu0 %4171, %v4084
      %v4173 = vpop.permute.xlu0 %4172
      %4176 = vset.pattern.permute.xlu0 0
      %4177 = vperm.xlu0 %4176, %v4085
      %v4178 = vpop.permute.xlu0 %4177
      %4181 = vset.pattern.permute.xlu0 0
      %4182 = vperm.xlu0 %4181, %v4086
      %v4183 = vpop.permute.xlu0 %4182
      %4186 = vset.pattern.permute.xlu0 0
      %4187 = vperm.xlu0 %4186, %v4087
      %v4188 = vpop.permute.xlu0 %4187
      %4191 = vset.pattern.permute.xlu0 0
      %4192 = vperm.xlu0 %4191, %v4088
      %v4193 = vpop.permute.xlu0 %4192
      %4196 = vset.pattern.permute.xlu0 0
      %4197 = vperm.xlu0 %4196, %v4089
      %v4198 = vpop.permute.xlu0 %4197
      %4201 = vset.pattern.permute.xlu0 0
      %4202 = vperm.xlu0 %4201, %v4090
      %v4203 = vpop.permute.xlu0 %4202
      %4206 = vset.pattern.permute.xlu0 0
      %4207 = vperm.xlu0 %4206, %v4091
      %v4208 = vpop.permute.xlu0 %4207
      %4211 = vset.pattern.permute.xlu0 0
      %4212 = vperm.xlu0 %4211, %v4092
      %v4213 = vpop.permute.xlu0 %4212
      %4216 = vset.pattern.permute.xlu0 0
      %4217 = vperm.xlu0 %4216, %v4093
      %v4218 = vpop.permute.xlu0 %4217
      %4221 = vset.pattern.permute.xlu0 0
      %4222 = vperm.xlu0 %4221, %v4094
      %v4223 = vpop.permute.xlu0 %4222
      %4226 = vset.pattern.permute.xlu0 0
      %4227 = vperm.xlu0 %4226, %v4095
      %v4228 = vpop.permute.xlu0 %4227
      %4231 = vset.pattern.permute.xlu0 0
      %4232 = vperm.xlu0 %4231, %v4096
      %v4233 = vpop.permute.xlu0 %4232
      %4236 = vset.pattern.permute.xlu0 0
      %4237 = vperm.xlu0 %4236, %v4097
      %v4238 = vpop.permute.xlu0 %4237
      %4241 = vset.pattern.permute.xlu0 0
      %4242 = vperm.xlu0 %4241, %v4098
      %v4243 = vpop.permute.xlu0 %4242
      %4246 = vset.pattern.permute.xlu0 0
      %4247 = vperm.xlu0 %4246, %v4099
      %v4248 = vpop.permute.xlu0 %4247
      %4251 = vset.pattern.permute.xlu0 0
      %4252 = vperm.xlu0 %4251, %v4100
      %v4253 = vpop.permute.xlu0 %4252
      %4256 = vset.pattern.permute.xlu0 0
      %4257 = vperm.xlu0 %4256, %v4101
      %v4258 = vpop.permute.xlu0 %4257
      %4261 = vset.pattern.permute.xlu0 0
      %4262 = vperm.xlu0 %4261, %v4102
      %v4263 = vpop.permute.xlu0 %4262
      %4266 = vset.pattern.permute.xlu0 0
      %4267 = vperm.xlu0 %4266, %v4103
      %v4268 = vpop.permute.xlu0 %4267
      %4271 = vset.pattern.permute.xlu0 0
      %4272 = vperm.xlu0 %4271, %v4104
      %v4273 = vpop.permute.xlu0 %4272
      %4276 = vset.pattern.permute.xlu0 0
      %4277 = vperm.xlu0 %4276, %v4105
      %v4278 = vpop.permute.xlu0 %4277
      %4281 = vset.pattern.permute.xlu0 0
      %4282 = vperm.xlu0 %4281, %v4106
      %v4283 = vpop.permute.xlu0 %4282
      %4286 = vset.pattern.permute.xlu0 0
      %4287 = vperm.xlu0 %4286, %v4107
      %v4288 = vpop.permute.xlu0 %4287
      %v4291 = vlaneseq
      %v4292 = vshrl.u32 %v4291, 7
      %v4293 = vsub.s32 0, %v4292
      %v4294 = vrot.slane %v4109, %v4293
      %v4296 = vmul.f32 %v4113, %v4294
      %v4297 = vmul.f32 %v4118, %v4294
      %v4298 = vmul.f32 %v4123, %v4294
      %v4299 = vmul.f32 %v4128, %v4294
      %v4300 = vmul.f32 %v4133, %v4294
      %v4301 = vmul.f32 %v4138, %v4294
      %v4302 = vmul.f32 %v4143, %v4294
      %v4303 = vmul.f32 %v4148, %v4294
      %v4304 = vmul.f32 %v4153, %v4294
      %v4305 = vmul.f32 %v4158, %v4294
      %v4306 = vmul.f32 %v4163, %v4294
      %v4307 = vmul.f32 %v4168, %v4294
      %v4308 = vmul.f32 %v4173, %v4294
      %v4309 = vmul.f32 %v4178, %v4294
      %v4310 = vmul.f32 %v4183, %v4294
      %v4311 = vmul.f32 %v4188, %v4294
      %v4312 = vmul.f32 %v4193, %v4294
      %v4313 = vmul.f32 %v4198, %v4294
      %v4314 = vmul.f32 %v4203, %v4294
      %v4315 = vmul.f32 %v4208, %v4294
      %v4316 = vmul.f32 %v4213, %v4294
      %v4317 = vmul.f32 %v4218, %v4294
      %v4318 = vmul.f32 %v4223, %v4294
      %v4319 = vmul.f32 %v4228, %v4294
      %v4320 = vmul.f32 %v4233, %v4294
      %v4321 = vmul.f32 %v4238, %v4294
      %v4322 = vmul.f32 %v4243, %v4294
      %v4323 = vmul.f32 %v4248, %v4294
      %v4324 = vmul.f32 %v4253, %v4294
      %v4325 = vmul.f32 %v4258, %v4294
      %v4326 = vmul.f32 %v4263, %v4294
      %v4327 = vmul.f32 %v4268, %v4294
      %v4328 = vmul.f32 %v4273, %v4294
      %v4329 = vmul.f32 %v4278, %v4294
      %v4330 = vmul.f32 %v4283, %v4294
      %v4331 = vmul.f32 %v4288, %v4294
      %v4332 = vadd.f32 %v4036, %v4296
      %v4333 = vadd.f32 %v4037, %v4297
      %v4334 = vadd.f32 %v4038, %v4298
      %v4335 = vadd.f32 %v4039, %v4299
      %v4336 = vadd.f32 %v4040, %v4300
      %v4337 = vadd.f32 %v4041, %v4301
      %v4338 = vadd.f32 %v4042, %v4302
      %v4339 = vadd.f32 %v4043, %v4303
      %v4340 = vadd.f32 %v4044, %v4304
      %v4341 = vadd.f32 %v4045, %v4305
      %v4342 = vadd.f32 %v4046, %v4306
      %v4343 = vadd.f32 %v4047, %v4307
      %v4344 = vadd.f32 %v4048, %v4308
      %v4345 = vadd.f32 %v4049, %v4309
      %v4346 = vadd.f32 %v4050, %v4310
      %v4347 = vadd.f32 %v4051, %v4311
      %v4348 = vadd.f32 %v4052, %v4312
      %v4349 = vadd.f32 %v4053, %v4313
      %v4350 = vadd.f32 %v4054, %v4314
      %v4351 = vadd.f32 %v4055, %v4315
      %v4352 = vadd.f32 %v4056, %v4316
      %v4353 = vadd.f32 %v4057, %v4317
      %v4354 = vadd.f32 %v4058, %v4318
      %v4355 = vadd.f32 %v4059, %v4319
      %v4356 = vadd.f32 %v4060, %v4320
      %v4357 = vadd.f32 %v4061, %v4321
      %v4358 = vadd.f32 %v4062, %v4322
      %v4359 = vadd.f32 %v4063, %v4323
      %v4360 = vadd.f32 %v4064, %v4324
      %v4361 = vadd.f32 %v4065, %v4325
      %v4362 = vadd.f32 %v4066, %v4326
      %v4363 = vadd.f32 %v4067, %v4327
      %v4364 = vadd.f32 %v4068, %v4328
      %v4365 = vadd.f32 %v4069, %v4329
      %v4366 = vadd.f32 %v4070, %v4330
      %v4367 = vadd.f32 %v4071, %v4331
      %v4368 = vld [vmem:[%s2887 + $0x14] sm:$0xff]
      %v4369 = vld [vmem:[%s2887 + $0x1c] sm:$0xff]
      %v4370 = vld [vmem:[%s2887 + $0x24] sm:$0xff]
      %v4371 = vld [vmem:[%s2887 + $0x2c] sm:$0xff]
      %v4372 = vld [vmem:[%s2887 + $0x34] sm:$0xff]
      %v4373 = vld [vmem:[%s2887 + $0x3c] sm:$0xff]
      %v4374 = vld [vmem:[%s2887 + $0x44] sm:$0xff]
      %v4375 = vld [vmem:[%s2887 + $0x4c] sm:$0xff]
      %v4376 = vld [vmem:[%s2887 + $0x54] sm:$0xff]
      %v4377 = vld [vmem:[%s2887 + $0x5c] sm:$0xff]
      %v4378 = vld [vmem:[%s2887 + $0x64] sm:$0xff]
      %v4379 = vld [vmem:[%s2887 + $0x6c] sm:$0xff]
      %v4380 = vld [vmem:[%s2887 + $0x74] sm:$0xff]
      %v4381 = vld [vmem:[%s2887 + $0x7c] sm:$0xff]
      %v4382 = vld [vmem:[%s2887 + $0x84] sm:$0xff]
      %v4383 = vld [vmem:[%s2887 + $0x8c] sm:$0xff]
      %v4384 = vld [vmem:[%s2887 + $0x94] sm:$0xff]
      %v4385 = vld [vmem:[%s2887 + $0x9c] sm:$0xff]
      %v4386 = vld [vmem:[%s2887 + $0xa4] sm:$0xff]
      %v4387 = vld [vmem:[%s2887 + $0xac] sm:$0xff]
      %v4388 = vld [vmem:[%s2887 + $0xb4] sm:$0xff]
      %v4389 = vld [vmem:[%s2887 + $0xbc] sm:$0xff]
      %v4390 = vld [vmem:[%s2887 + $0xc4] sm:$0xff]
      %v4391 = vld [vmem:[%s2887 + $0xcc] sm:$0xff]
      %v4392 = vld [vmem:[%s2887 + $0xd4] sm:$0xff]
      %v4393 = vld [vmem:[%s2887 + $0xdc] sm:$0xff]
      %v4394 = vld [vmem:[%s2887 + $0xe4] sm:$0xff]
      %v4395 = vld [vmem:[%s2887 + $0xec] sm:$0xff]
      %v4396 = vld [vmem:[%s2887 + $0xf4] sm:$0xff]
      %v4397 = vld [vmem:[%s2887 + $0xfc] sm:$0xff]
      %v4398 = vld [vmem:[%s2887 + $0x104] sm:$0xff]
      %v4399 = vld [vmem:[%s2887 + $0x10c] sm:$0xff]
      %v4400 = vld [vmem:[%s2887 + $0x114] sm:$0xff]
      %v4401 = vld [vmem:[%s2887 + $0x11c] sm:$0xff]
      %v4402 = vld [vmem:[%s2887 + $0x124] sm:$0xff]
      %v4403 = vld [vmem:[%s2887 + $0x12c] sm:$0xff]
      %s4404 = scalar_lea.vmem %s1, 14
      %v4405 = vld [vmem:[%s4404] sm:$0x1]
      %4407 = vset.pattern.permute.xlu0 0
      %4408 = vperm.xlu0 %4407, %v4368
      %v4409 = vpop.permute.xlu0 %4408
      %4412 = vset.pattern.permute.xlu0 0
      %4413 = vperm.xlu0 %4412, %v4369
      %v4414 = vpop.permute.xlu0 %4413
      %4417 = vset.pattern.permute.xlu0 0
      %4418 = vperm.xlu0 %4417, %v4370
      %v4419 = vpop.permute.xlu0 %4418
      %4422 = vset.pattern.permute.xlu0 0
      %4423 = vperm.xlu0 %4422, %v4371
      %v4424 = vpop.permute.xlu0 %4423
      %4427 = vset.pattern.permute.xlu0 0
      %4428 = vperm.xlu0 %4427, %v4372
      %v4429 = vpop.permute.xlu0 %4428
      %4432 = vset.pattern.permute.xlu0 0
      %4433 = vperm.xlu0 %4432, %v4373
      %v4434 = vpop.permute.xlu0 %4433
      %4437 = vset.pattern.permute.xlu0 0
      %4438 = vperm.xlu0 %4437, %v4374
      %v4439 = vpop.permute.xlu0 %4438
      %4442 = vset.pattern.permute.xlu0 0
      %4443 = vperm.xlu0 %4442, %v4375
      %v4444 = vpop.permute.xlu0 %4443
      %4447 = vset.pattern.permute.xlu0 0
      %4448 = vperm.xlu0 %4447, %v4376
      %v4449 = vpop.permute.xlu0 %4448
      %4452 = vset.pattern.permute.xlu0 0
      %4453 = vperm.xlu0 %4452, %v4377
      %v4454 = vpop.permute.xlu0 %4453
      %4457 = vset.pattern.permute.xlu0 0
      %4458 = vperm.xlu0 %4457, %v4378
      %v4459 = vpop.permute.xlu0 %4458
      %4462 = vset.pattern.permute.xlu0 0
      %4463 = vperm.xlu0 %4462, %v4379
      %v4464 = vpop.permute.xlu0 %4463
      %4467 = vset.pattern.permute.xlu0 0
      %4468 = vperm.xlu0 %4467, %v4380
      %v4469 = vpop.permute.xlu0 %4468
      %4472 = vset.pattern.permute.xlu0 0
      %4473 = vperm.xlu0 %4472, %v4381
      %v4474 = vpop.permute.xlu0 %4473
      %4477 = vset.pattern.permute.xlu0 0
      %4478 = vperm.xlu0 %4477, %v4382
      %v4479 = vpop.permute.xlu0 %4478
      %4482 = vset.pattern.permute.xlu0 0
      %4483 = vperm.xlu0 %4482, %v4383
      %v4484 = vpop.permute.xlu0 %4483
      %4487 = vset.pattern.permute.xlu0 0
      %4488 = vperm.xlu0 %4487, %v4384
      %v4489 = vpop.permute.xlu0 %4488
      %4492 = vset.pattern.permute.xlu0 0
      %4493 = vperm.xlu0 %4492, %v4385
      %v4494 = vpop.permute.xlu0 %4493
      %4497 = vset.pattern.permute.xlu0 0
      %4498 = vperm.xlu0 %4497, %v4386
      %v4499 = vpop.permute.xlu0 %4498
      %4502 = vset.pattern.permute.xlu0 0
      %4503 = vperm.xlu0 %4502, %v4387
      %v4504 = vpop.permute.xlu0 %4503
      %4507 = vset.pattern.permute.xlu0 0
      %4508 = vperm.xlu0 %4507, %v4388
      %v4509 = vpop.permute.xlu0 %4508
      %4512 = vset.pattern.permute.xlu0 0
      %4513 = vperm.xlu0 %4512, %v4389
      %v4514 = vpop.permute.xlu0 %4513
      %4517 = vset.pattern.permute.xlu0 0
      %4518 = vperm.xlu0 %4517, %v4390
      %v4519 = vpop.permute.xlu0 %4518
      %4522 = vset.pattern.permute.xlu0 0
      %4523 = vperm.xlu0 %4522, %v4391
      %v4524 = vpop.permute.xlu0 %4523
      %4527 = vset.pattern.permute.xlu0 0
      %4528 = vperm.xlu0 %4527, %v4392
      %v4529 = vpop.permute.xlu0 %4528
      %4532 = vset.pattern.permute.xlu0 0
      %4533 = vperm.xlu0 %4532, %v4393
      %v4534 = vpop.permute.xlu0 %4533
      %4537 = vset.pattern.permute.xlu0 0
      %4538 = vperm.xlu0 %4537, %v4394
      %v4539 = vpop.permute.xlu0 %4538
      %4542 = vset.pattern.permute.xlu0 0
      %4543 = vperm.xlu0 %4542, %v4395
      %v4544 = vpop.permute.xlu0 %4543
      %4547 = vset.pattern.permute.xlu0 0
      %4548 = vperm.xlu0 %4547, %v4396
      %v4549 = vpop.permute.xlu0 %4548
      %4552 = vset.pattern.permute.xlu0 0
      %4553 = vperm.xlu0 %4552, %v4397
      %v4554 = vpop.permute.xlu0 %4553
      %4557 = vset.pattern.permute.xlu0 0
      %4558 = vperm.xlu0 %4557, %v4398
      %v4559 = vpop.permute.xlu0 %4558
      %4562 = vset.pattern.permute.xlu0 0
      %4563 = vperm.xlu0 %4562, %v4399
      %v4564 = vpop.permute.xlu0 %4563
      %4567 = vset.pattern.permute.xlu0 0
      %4568 = vperm.xlu0 %4567, %v4400
      %v4569 = vpop.permute.xlu0 %4568
      %4572 = vset.pattern.permute.xlu0 0
      %4573 = vperm.xlu0 %4572, %v4401
      %v4574 = vpop.permute.xlu0 %4573
      %4577 = vset.pattern.permute.xlu0 0
      %4578 = vperm.xlu0 %4577, %v4402
      %v4579 = vpop.permute.xlu0 %4578
      %4582 = vset.pattern.permute.xlu0 0
      %4583 = vperm.xlu0 %4582, %v4403
      %v4584 = vpop.permute.xlu0 %4583
      %v4587 = vlaneseq
      %v4588 = vshrl.u32 %v4587, 7
      %v4589 = vsub.s32 0, %v4588
      %v4590 = vrot.slane %v4405, %v4589
      %v4592 = vmul.f32 %v4409, %v4590
      %v4593 = vmul.f32 %v4414, %v4590
      %v4594 = vmul.f32 %v4419, %v4590
      %v4595 = vmul.f32 %v4424, %v4590
      %v4596 = vmul.f32 %v4429, %v4590
      %v4597 = vmul.f32 %v4434, %v4590
      %v4598 = vmul.f32 %v4439, %v4590
      %v4599 = vmul.f32 %v4444, %v4590
      %v4600 = vmul.f32 %v4449, %v4590
      %v4601 = vmul.f32 %v4454, %v4590
      %v4602 = vmul.f32 %v4459, %v4590
      %v4603 = vmul.f32 %v4464, %v4590
      %v4604 = vmul.f32 %v4469, %v4590
      %v4605 = vmul.f32 %v4474, %v4590
      %v4606 = vmul.f32 %v4479, %v4590
      %v4607 = vmul.f32 %v4484, %v4590
      %v4608 = vmul.f32 %v4489, %v4590
      %v4609 = vmul.f32 %v4494, %v4590
      %v4610 = vmul.f32 %v4499, %v4590
      %v4611 = vmul.f32 %v4504, %v4590
      %v4612 = vmul.f32 %v4509, %v4590
      %v4613 = vmul.f32 %v4514, %v4590
      %v4614 = vmul.f32 %v4519, %v4590
      %v4615 = vmul.f32 %v4524, %v4590
      %v4616 = vmul.f32 %v4529, %v4590
      %v4617 = vmul.f32 %v4534, %v4590
      %v4618 = vmul.f32 %v4539, %v4590
      %v4619 = vmul.f32 %v4544, %v4590
      %v4620 = vmul.f32 %v4549, %v4590
      %v4621 = vmul.f32 %v4554, %v4590
      %v4622 = vmul.f32 %v4559, %v4590
      %v4623 = vmul.f32 %v4564, %v4590
      %v4624 = vmul.f32 %v4569, %v4590
      %v4625 = vmul.f32 %v4574, %v4590
      %v4626 = vmul.f32 %v4579, %v4590
      %v4627 = vmul.f32 %v4584, %v4590
      %v4628 = vadd.f32 %v4332, %v4592
      %v4629 = vadd.f32 %v4333, %v4593
      %v4630 = vadd.f32 %v4334, %v4594
      %v4631 = vadd.f32 %v4335, %v4595
      %v4632 = vadd.f32 %v4336, %v4596
      %v4633 = vadd.f32 %v4337, %v4597
      %v4634 = vadd.f32 %v4338, %v4598
      %v4635 = vadd.f32 %v4339, %v4599
      %v4636 = vadd.f32 %v4340, %v4600
      %v4637 = vadd.f32 %v4341, %v4601
      %v4638 = vadd.f32 %v4342, %v4602
      %v4639 = vadd.f32 %v4343, %v4603
      %v4640 = vadd.f32 %v4344, %v4604
      %v4641 = vadd.f32 %v4345, %v4605
      %v4642 = vadd.f32 %v4346, %v4606
      %v4643 = vadd.f32 %v4347, %v4607
      %v4644 = vadd.f32 %v4348, %v4608
      %v4645 = vadd.f32 %v4349, %v4609
      %v4646 = vadd.f32 %v4350, %v4610
      %v4647 = vadd.f32 %v4351, %v4611
      %v4648 = vadd.f32 %v4352, %v4612
      %v4649 = vadd.f32 %v4353, %v4613
      %v4650 = vadd.f32 %v4354, %v4614
      %v4651 = vadd.f32 %v4355, %v4615
      %v4652 = vadd.f32 %v4356, %v4616
      %v4653 = vadd.f32 %v4357, %v4617
      %v4654 = vadd.f32 %v4358, %v4618
      %v4655 = vadd.f32 %v4359, %v4619
      %v4656 = vadd.f32 %v4360, %v4620
      %v4657 = vadd.f32 %v4361, %v4621
      %v4658 = vadd.f32 %v4362, %v4622
      %v4659 = vadd.f32 %v4363, %v4623
      %v4660 = vadd.f32 %v4364, %v4624
      %v4661 = vadd.f32 %v4365, %v4625
      %v4662 = vadd.f32 %v4366, %v4626
      %v4663 = vadd.f32 %v4367, %v4627
      %v4664 = vld [vmem:[%s2887 + $0x24] sm:$0xff]
      %v4665 = vld [vmem:[%s2887 + $0x2c] sm:$0xff]
      %v4666 = vld [vmem:[%s2887 + $0x34] sm:$0xff]
      %v4667 = vld [vmem:[%s2887 + $0x3c] sm:$0xff]
      %v4668 = vld [vmem:[%s2887 + $0x44] sm:$0xff]
      %v4669 = vld [vmem:[%s2887 + $0x4c] sm:$0xff]
      %v4670 = vld [vmem:[%s2887 + $0x54] sm:$0xff]
      %v4671 = vld [vmem:[%s2887 + $0x5c] sm:$0xff]
      %v4672 = vld [vmem:[%s2887 + $0x64] sm:$0xff]
      %v4673 = vld [vmem:[%s2887 + $0x6c] sm:$0xff]
      %v4674 = vld [vmem:[%s2887 + $0x74] sm:$0xff]
      %v4675 = vld [vmem:[%s2887 + $0x7c] sm:$0xff]
      %v4676 = vld [vmem:[%s2887 + $0x84] sm:$0xff]
      %v4677 = vld [vmem:[%s2887 + $0x8c] sm:$0xff]
      %v4678 = vld [vmem:[%s2887 + $0x94] sm:$0xff]
      %v4679 = vld [vmem:[%s2887 + $0x9c] sm:$0xff]
      %v4680 = vld [vmem:[%s2887 + $0xa4] sm:$0xff]
      %v4681 = vld [vmem:[%s2887 + $0xac] sm:$0xff]
      %v4682 = vld [vmem:[%s2887 + $0xb4] sm:$0xff]
      %v4683 = vld [vmem:[%s2887 + $0xbc] sm:$0xff]
      %v4684 = vld [vmem:[%s2887 + $0xc4] sm:$0xff]
      %v4685 = vld [vmem:[%s2887 + $0xcc] sm:$0xff]
      %v4686 = vld [vmem:[%s2887 + $0xd4] sm:$0xff]
      %v4687 = vld [vmem:[%s2887 + $0xdc] sm:$0xff]
      %v4688 = vld [vmem:[%s2887 + $0xe4] sm:$0xff]
      %v4689 = vld [vmem:[%s2887 + $0xec] sm:$0xff]
      %v4690 = vld [vmem:[%s2887 + $0xf4] sm:$0xff]
      %v4691 = vld [vmem:[%s2887 + $0xfc] sm:$0xff]
      %v4692 = vld [vmem:[%s2887 + $0x104] sm:$0xff]
      %v4693 = vld [vmem:[%s2887 + $0x10c] sm:$0xff]
      %v4694 = vld [vmem:[%s2887 + $0x114] sm:$0xff]
      %v4695 = vld [vmem:[%s2887 + $0x11c] sm:$0xff]
      %v4696 = vld [vmem:[%s2887 + $0x124] sm:$0xff]
      %v4697 = vld [vmem:[%s2887 + $0x12c] sm:$0xff]
      %v4698 = vld [vmem:[%s2887 + $0x134] sm:$0xff]
      %v4699 = vld [vmem:[%s2887 + $0x13c] sm:$0xff]
      %s4700 = scalar_lea.vmem %s1, 15
      %v4701 = vld [vmem:[%s4700] sm:$0x1]
      %4703 = vset.pattern.permute.xlu0 0
      %4704 = vperm.xlu0 %4703, %v4664
      %v4705 = vpop.permute.xlu0 %4704
      %4708 = vset.pattern.permute.xlu0 0
      %4709 = vperm.xlu0 %4708, %v4665
      %v4710 = vpop.permute.xlu0 %4709
      %4713 = vset.pattern.permute.xlu0 0
      %4714 = vperm.xlu0 %4713, %v4666
      %v4715 = vpop.permute.xlu0 %4714
      %4718 = vset.pattern.permute.xlu0 0
      %4719 = vperm.xlu0 %4718, %v4667
      %v4720 = vpop.permute.xlu0 %4719
      %4723 = vset.pattern.permute.xlu0 0
      %4724 = vperm.xlu0 %4723, %v4668
      %v4725 = vpop.permute.xlu0 %4724
      %4728 = vset.pattern.permute.xlu0 0
      %4729 = vperm.xlu0 %4728, %v4669
      %v4730 = vpop.permute.xlu0 %4729
      %4733 = vset.pattern.permute.xlu0 0
      %4734 = vperm.xlu0 %4733, %v4670
      %v4735 = vpop.permute.xlu0 %4734
      %4738 = vset.pattern.permute.xlu0 0
      %4739 = vperm.xlu0 %4738, %v4671
      %v4740 = vpop.permute.xlu0 %4739
      %4743 = vset.pattern.permute.xlu0 0
      %4744 = vperm.xlu0 %4743, %v4672
      %v4745 = vpop.permute.xlu0 %4744
      %4748 = vset.pattern.permute.xlu0 0
      %4749 = vperm.xlu0 %4748, %v4673
      %v4750 = vpop.permute.xlu0 %4749
      %4753 = vset.pattern.permute.xlu0 0
      %4754 = vperm.xlu0 %4753, %v4674
      %v4755 = vpop.permute.xlu0 %4754
      %4758 = vset.pattern.permute.xlu0 0
      %4759 = vperm.xlu0 %4758, %v4675
      %v4760 = vpop.permute.xlu0 %4759
      %4763 = vset.pattern.permute.xlu0 0
      %4764 = vperm.xlu0 %4763, %v4676
      %v4765 = vpop.permute.xlu0 %4764
      %4768 = vset.pattern.permute.xlu0 0
      %4769 = vperm.xlu0 %4768, %v4677
      %v4770 = vpop.permute.xlu0 %4769
      %4773 = vset.pattern.permute.xlu0 0
      %4774 = vperm.xlu0 %4773, %v4678
      %v4775 = vpop.permute.xlu0 %4774
      %4778 = vset.pattern.permute.xlu0 0
      %4779 = vperm.xlu0 %4778, %v4679
      %v4780 = vpop.permute.xlu0 %4779
      %4783 = vset.pattern.permute.xlu0 0
      %4784 = vperm.xlu0 %4783, %v4680
      %v4785 = vpop.permute.xlu0 %4784
      %4788 = vset.pattern.permute.xlu0 0
      %4789 = vperm.xlu0 %4788, %v4681
      %v4790 = vpop.permute.xlu0 %4789
      %4793 = vset.pattern.permute.xlu0 0
      %4794 = vperm.xlu0 %4793, %v4682
      %v4795 = vpop.permute.xlu0 %4794
      %4798 = vset.pattern.permute.xlu0 0
      %4799 = vperm.xlu0 %4798, %v4683
      %v4800 = vpop.permute.xlu0 %4799
      %4803 = vset.pattern.permute.xlu0 0
      %4804 = vperm.xlu0 %4803, %v4684
      %v4805 = vpop.permute.xlu0 %4804
      %4808 = vset.pattern.permute.xlu0 0
      %4809 = vperm.xlu0 %4808, %v4685
      %v4810 = vpop.permute.xlu0 %4809
      %4813 = vset.pattern.permute.xlu0 0
      %4814 = vperm.xlu0 %4813, %v4686
      %v4815 = vpop.permute.xlu0 %4814
      %4818 = vset.pattern.permute.xlu0 0
      %4819 = vperm.xlu0 %4818, %v4687
      %v4820 = vpop.permute.xlu0 %4819
      %4823 = vset.pattern.permute.xlu0 0
      %4824 = vperm.xlu0 %4823, %v4688
      %v4825 = vpop.permute.xlu0 %4824
      %4828 = vset.pattern.permute.xlu0 0
      %4829 = vperm.xlu0 %4828, %v4689
      %v4830 = vpop.permute.xlu0 %4829
      %4833 = vset.pattern.permute.xlu0 0
      %4834 = vperm.xlu0 %4833, %v4690
      %v4835 = vpop.permute.xlu0 %4834
      %4838 = vset.pattern.permute.xlu0 0
      %4839 = vperm.xlu0 %4838, %v4691
      %v4840 = vpop.permute.xlu0 %4839
      %4843 = vset.pattern.permute.xlu0 0
      %4844 = vperm.xlu0 %4843, %v4692
      %v4845 = vpop.permute.xlu0 %4844
      %4848 = vset.pattern.permute.xlu0 0
      %4849 = vperm.xlu0 %4848, %v4693
      %v4850 = vpop.permute.xlu0 %4849
      %4853 = vset.pattern.permute.xlu0 0
      %4854 = vperm.xlu0 %4853, %v4694
      %v4855 = vpop.permute.xlu0 %4854
      %4858 = vset.pattern.permute.xlu0 0
      %4859 = vperm.xlu0 %4858, %v4695
      %v4860 = vpop.permute.xlu0 %4859
      %4863 = vset.pattern.permute.xlu0 0
      %4864 = vperm.xlu0 %4863, %v4696
      %v4865 = vpop.permute.xlu0 %4864
      %4868 = vset.pattern.permute.xlu0 0
      %4869 = vperm.xlu0 %4868, %v4697
      %v4870 = vpop.permute.xlu0 %4869
      %4873 = vset.pattern.permute.xlu0 0
      %4874 = vperm.xlu0 %4873, %v4698
      %v4875 = vpop.permute.xlu0 %4874
      %4878 = vset.pattern.permute.xlu0 0
      %4879 = vperm.xlu0 %4878, %v4699
      %v4880 = vpop.permute.xlu0 %4879
      %v4883 = vlaneseq
      %v4884 = vshrl.u32 %v4883, 7
      %v4885 = vsub.s32 0, %v4884
      %v4886 = vrot.slane %v4701, %v4885
      %v4888 = vmul.f32 %v4705, %v4886
      %v4889 = vmul.f32 %v4710, %v4886
      %v4890 = vmul.f32 %v4715, %v4886
      %v4891 = vmul.f32 %v4720, %v4886
      %v4892 = vmul.f32 %v4725, %v4886
      %v4893 = vmul.f32 %v4730, %v4886
      %v4894 = vmul.f32 %v4735, %v4886
      %v4895 = vmul.f32 %v4740, %v4886
      %v4896 = vmul.f32 %v4745, %v4886
      %v4897 = vmul.f32 %v4750, %v4886
      %v4898 = vmul.f32 %v4755, %v4886
      %v4899 = vmul.f32 %v4760, %v4886
      %v4900 = vmul.f32 %v4765, %v4886
      %v4901 = vmul.f32 %v4770, %v4886
      %v4902 = vmul.f32 %v4775, %v4886
      %v4903 = vmul.f32 %v4780, %v4886
      %v4904 = vmul.f32 %v4785, %v4886
      %v4905 = vmul.f32 %v4790, %v4886
      %v4906 = vmul.f32 %v4795, %v4886
      %v4907 = vmul.f32 %v4800, %v4886
      %v4908 = vmul.f32 %v4805, %v4886
      %v4909 = vmul.f32 %v4810, %v4886
      %v4910 = vmul.f32 %v4815, %v4886
      %v4911 = vmul.f32 %v4820, %v4886
      %v4912 = vmul.f32 %v4825, %v4886
      %v4913 = vmul.f32 %v4830, %v4886
      %v4914 = vmul.f32 %v4835, %v4886
      %v4915 = vmul.f32 %v4840, %v4886
      %v4916 = vmul.f32 %v4845, %v4886
      %v4917 = vmul.f32 %v4850, %v4886
      %v4918 = vmul.f32 %v4855, %v4886
      %v4919 = vmul.f32 %v4860, %v4886
      %v4920 = vmul.f32 %v4865, %v4886
      %v4921 = vmul.f32 %v4870, %v4886
      %v4922 = vmul.f32 %v4875, %v4886
      %v4923 = vmul.f32 %v4880, %v4886
      %v4924 = vadd.f32 %v4628, %v4888
      %v4925 = vadd.f32 %v4629, %v4889
      %v4926 = vadd.f32 %v4630, %v4890
      %v4927 = vadd.f32 %v4631, %v4891
      %v4928 = vadd.f32 %v4632, %v4892
      %v4929 = vadd.f32 %v4633, %v4893
      %v4930 = vadd.f32 %v4634, %v4894
      %v4931 = vadd.f32 %v4635, %v4895
      %v4932 = vadd.f32 %v4636, %v4896
      %v4933 = vadd.f32 %v4637, %v4897
      %v4934 = vadd.f32 %v4638, %v4898
      %v4935 = vadd.f32 %v4639, %v4899
      %v4936 = vadd.f32 %v4640, %v4900
      %v4937 = vadd.f32 %v4641, %v4901
      %v4938 = vadd.f32 %v4642, %v4902
      %v4939 = vadd.f32 %v4643, %v4903
      %v4940 = vadd.f32 %v4644, %v4904
      %v4941 = vadd.f32 %v4645, %v4905
      %v4942 = vadd.f32 %v4646, %v4906
      %v4943 = vadd.f32 %v4647, %v4907
      %v4944 = vadd.f32 %v4648, %v4908
      %v4945 = vadd.f32 %v4649, %v4909
      %v4946 = vadd.f32 %v4650, %v4910
      %v4947 = vadd.f32 %v4651, %v4911
      %v4948 = vadd.f32 %v4652, %v4912
      %v4949 = vadd.f32 %v4653, %v4913
      %v4950 = vadd.f32 %v4654, %v4914
      %v4951 = vadd.f32 %v4655, %v4915
      %v4952 = vadd.f32 %v4656, %v4916
      %v4953 = vadd.f32 %v4657, %v4917
      %v4954 = vadd.f32 %v4658, %v4918
      %v4955 = vadd.f32 %v4659, %v4919
      %v4956 = vadd.f32 %v4660, %v4920
      %v4957 = vadd.f32 %v4661, %v4921
      %v4958 = vadd.f32 %v4662, %v4922
      %v4959 = vadd.f32 %v4663, %v4923
      %v4960 = vld [vmem:[%s2887 + $0x25] sm:$0xff]
      %v4961 = vld [vmem:[%s2887 + $0x2d] sm:$0xff]
      %v4962 = vld [vmem:[%s2887 + $0x35] sm:$0xff]
      %v4963 = vld [vmem:[%s2887 + $0x3d] sm:$0xff]
      %v4964 = vld [vmem:[%s2887 + $0x45] sm:$0xff]
      %v4965 = vld [vmem:[%s2887 + $0x4d] sm:$0xff]
      %v4966 = vld [vmem:[%s2887 + $0x55] sm:$0xff]
      %v4967 = vld [vmem:[%s2887 + $0x5d] sm:$0xff]
      %v4968 = vld [vmem:[%s2887 + $0x65] sm:$0xff]
      %v4969 = vld [vmem:[%s2887 + $0x6d] sm:$0xff]
      %v4970 = vld [vmem:[%s2887 + $0x75] sm:$0xff]
      %v4971 = vld [vmem:[%s2887 + $0x7d] sm:$0xff]
      %v4972 = vld [vmem:[%s2887 + $0x85] sm:$0xff]
      %v4973 = vld [vmem:[%s2887 + $0x8d] sm:$0xff]
      %v4974 = vld [vmem:[%s2887 + $0x95] sm:$0xff]
      %v4975 = vld [vmem:[%s2887 + $0x9d] sm:$0xff]
      %v4976 = vld [vmem:[%s2887 + $0xa5] sm:$0xff]
      %v4977 = vld [vmem:[%s2887 + $0xad] sm:$0xff]
      %v4978 = vld [vmem:[%s2887 + $0xb5] sm:$0xff]
      %v4979 = vld [vmem:[%s2887 + $0xbd] sm:$0xff]
      %v4980 = vld [vmem:[%s2887 + $0xc5] sm:$0xff]
      %v4981 = vld [vmem:[%s2887 + $0xcd] sm:$0xff]
      %v4982 = vld [vmem:[%s2887 + $0xd5] sm:$0xff]
      %v4983 = vld [vmem:[%s2887 + $0xdd] sm:$0xff]
      %v4984 = vld [vmem:[%s2887 + $0xe5] sm:$0xff]
      %v4985 = vld [vmem:[%s2887 + $0xed] sm:$0xff]
      %v4986 = vld [vmem:[%s2887 + $0xf5] sm:$0xff]
      %v4987 = vld [vmem:[%s2887 + $0xfd] sm:$0xff]
      %v4988 = vld [vmem:[%s2887 + $0x105] sm:$0xff]
      %v4989 = vld [vmem:[%s2887 + $0x10d] sm:$0xff]
      %v4990 = vld [vmem:[%s2887 + $0x115] sm:$0xff]
      %v4991 = vld [vmem:[%s2887 + $0x11d] sm:$0xff]
      %v4992 = vld [vmem:[%s2887 + $0x125] sm:$0xff]
      %v4993 = vld [vmem:[%s2887 + $0x12d] sm:$0xff]
      %v4994 = vld [vmem:[%s2887 + $0x135] sm:$0xff]
      %v4995 = vld [vmem:[%s2887 + $0x13d] sm:$0xff]
      %s4996 = scalar_lea.vmem %s1, 16
      %v4997 = vld [vmem:[%s4996] sm:$0x1]
      %4999 = vset.pattern.permute.xlu0 0
      %5000 = vperm.xlu0 %4999, %v4960
      %v5001 = vpop.permute.xlu0 %5000
      %5004 = vset.pattern.permute.xlu0 0
      %5005 = vperm.xlu0 %5004, %v4961
      %v5006 = vpop.permute.xlu0 %5005
      %5009 = vset.pattern.permute.xlu0 0
      %5010 = vperm.xlu0 %5009, %v4962
      %v5011 = vpop.permute.xlu0 %5010
      %5014 = vset.pattern.permute.xlu0 0
      %5015 = vperm.xlu0 %5014, %v4963
      %v5016 = vpop.permute.xlu0 %5015
      %5019 = vset.pattern.permute.xlu0 0
      %5020 = vperm.xlu0 %5019, %v4964
      %v5021 = vpop.permute.xlu0 %5020
      %5024 = vset.pattern.permute.xlu0 0
      %5025 = vperm.xlu0 %5024, %v4965
      %v5026 = vpop.permute.xlu0 %5025
      %5029 = vset.pattern.permute.xlu0 0
      %5030 = vperm.xlu0 %5029, %v4966
      %v5031 = vpop.permute.xlu0 %5030
      %5034 = vset.pattern.permute.xlu0 0
      %5035 = vperm.xlu0 %5034, %v4967
      %v5036 = vpop.permute.xlu0 %5035
      %5039 = vset.pattern.permute.xlu0 0
      %5040 = vperm.xlu0 %5039, %v4968
      %v5041 = vpop.permute.xlu0 %5040
      %5044 = vset.pattern.permute.xlu0 0
      %5045 = vperm.xlu0 %5044, %v4969
      %v5046 = vpop.permute.xlu0 %5045
      %5049 = vset.pattern.permute.xlu0 0
      %5050 = vperm.xlu0 %5049, %v4970
      %v5051 = vpop.permute.xlu0 %5050
      %5054 = vset.pattern.permute.xlu0 0
      %5055 = vperm.xlu0 %5054, %v4971
      %v5056 = vpop.permute.xlu0 %5055
      %5059 = vset.pattern.permute.xlu0 0
      %5060 = vperm.xlu0 %5059, %v4972
      %v5061 = vpop.permute.xlu0 %5060
      %5064 = vset.pattern.permute.xlu0 0
      %5065 = vperm.xlu0 %5064, %v4973
      %v5066 = vpop.permute.xlu0 %5065
      %5069 = vset.pattern.permute.xlu0 0
      %5070 = vperm.xlu0 %5069, %v4974
      %v5071 = vpop.permute.xlu0 %5070
      %5074 = vset.pattern.permute.xlu0 0
      %5075 = vperm.xlu0 %5074, %v4975
      %v5076 = vpop.permute.xlu0 %5075
      %5079 = vset.pattern.permute.xlu0 0
      %5080 = vperm.xlu0 %5079, %v4976
      %v5081 = vpop.permute.xlu0 %5080
      %5084 = vset.pattern.permute.xlu0 0
      %5085 = vperm.xlu0 %5084, %v4977
      %v5086 = vpop.permute.xlu0 %5085
      %5089 = vset.pattern.permute.xlu0 0
      %5090 = vperm.xlu0 %5089, %v4978
      %v5091 = vpop.permute.xlu0 %5090
      %5094 = vset.pattern.permute.xlu0 0
      %5095 = vperm.xlu0 %5094, %v4979
      %v5096 = vpop.permute.xlu0 %5095
      %5099 = vset.pattern.permute.xlu0 0
      %5100 = vperm.xlu0 %5099, %v4980
      %v5101 = vpop.permute.xlu0 %5100
      %5104 = vset.pattern.permute.xlu0 0
      %5105 = vperm.xlu0 %5104, %v4981
      %v5106 = vpop.permute.xlu0 %5105
      %5109 = vset.pattern.permute.xlu0 0
      %5110 = vperm.xlu0 %5109, %v4982
      %v5111 = vpop.permute.xlu0 %5110
      %5114 = vset.pattern.permute.xlu0 0
      %5115 = vperm.xlu0 %5114, %v4983
      %v5116 = vpop.permute.xlu0 %5115
      %5119 = vset.pattern.permute.xlu0 0
      %5120 = vperm.xlu0 %5119, %v4984
      %v5121 = vpop.permute.xlu0 %5120
      %5124 = vset.pattern.permute.xlu0 0
      %5125 = vperm.xlu0 %5124, %v4985
      %v5126 = vpop.permute.xlu0 %5125
      %5129 = vset.pattern.permute.xlu0 0
      %5130 = vperm.xlu0 %5129, %v4986
      %v5131 = vpop.permute.xlu0 %5130
      %5134 = vset.pattern.permute.xlu0 0
      %5135 = vperm.xlu0 %5134, %v4987
      %v5136 = vpop.permute.xlu0 %5135
      %5139 = vset.pattern.permute.xlu0 0
      %5140 = vperm.xlu0 %5139, %v4988
      %v5141 = vpop.permute.xlu0 %5140
      %5144 = vset.pattern.permute.xlu0 0
      %5145 = vperm.xlu0 %5144, %v4989
      %v5146 = vpop.permute.xlu0 %5145
      %5149 = vset.pattern.permute.xlu0 0
      %5150 = vperm.xlu0 %5149, %v4990
      %v5151 = vpop.permute.xlu0 %5150
      %5154 = vset.pattern.permute.xlu0 0
      %5155 = vperm.xlu0 %5154, %v4991
      %v5156 = vpop.permute.xlu0 %5155
      %5159 = vset.pattern.permute.xlu0 0
      %5160 = vperm.xlu0 %5159, %v4992
      %v5161 = vpop.permute.xlu0 %5160
      %5164 = vset.pattern.permute.xlu0 0
      %5165 = vperm.xlu0 %5164, %v4993
      %v5166 = vpop.permute.xlu0 %5165
      %5169 = vset.pattern.permute.xlu0 0
      %5170 = vperm.xlu0 %5169, %v4994
      %v5171 = vpop.permute.xlu0 %5170
      %5174 = vset.pattern.permute.xlu0 0
      %5175 = vperm.xlu0 %5174, %v4995
      %v5176 = vpop.permute.xlu0 %5175
      %v5179 = vlaneseq
      %v5180 = vshrl.u32 %v5179, 7
      %v5181 = vsub.s32 0, %v5180
      %v5182 = vrot.slane %v4997, %v5181
      %v5184 = vmul.f32 %v5001, %v5182
      %v5185 = vmul.f32 %v5006, %v5182
      %v5186 = vmul.f32 %v5011, %v5182
      %v5187 = vmul.f32 %v5016, %v5182
      %v5188 = vmul.f32 %v5021, %v5182
      %v5189 = vmul.f32 %v5026, %v5182
      %v5190 = vmul.f32 %v5031, %v5182
      %v5191 = vmul.f32 %v5036, %v5182
      %v5192 = vmul.f32 %v5041, %v5182
      %v5193 = vmul.f32 %v5046, %v5182
      %v5194 = vmul.f32 %v5051, %v5182
      %v5195 = vmul.f32 %v5056, %v5182
      %v5196 = vmul.f32 %v5061, %v5182
      %v5197 = vmul.f32 %v5066, %v5182
      %v5198 = vmul.f32 %v5071, %v5182
      %v5199 = vmul.f32 %v5076, %v5182
      %v5200 = vmul.f32 %v5081, %v5182
      %v5201 = vmul.f32 %v5086, %v5182
      %v5202 = vmul.f32 %v5091, %v5182
      %v5203 = vmul.f32 %v5096, %v5182
      %v5204 = vmul.f32 %v5101, %v5182
      %v5205 = vmul.f32 %v5106, %v5182
      %v5206 = vmul.f32 %v5111, %v5182
      %v5207 = vmul.f32 %v5116, %v5182
      %v5208 = vmul.f32 %v5121, %v5182
      %v5209 = vmul.f32 %v5126, %v5182
      %v5210 = vmul.f32 %v5131, %v5182
      %v5211 = vmul.f32 %v5136, %v5182
      %v5212 = vmul.f32 %v5141, %v5182
      %v5213 = vmul.f32 %v5146, %v5182
      %v5214 = vmul.f32 %v5151, %v5182
      %v5215 = vmul.f32 %v5156, %v5182
      %v5216 = vmul.f32 %v5161, %v5182
      %v5217 = vmul.f32 %v5166, %v5182
      %v5218 = vmul.f32 %v5171, %v5182
      %v5219 = vmul.f32 %v5176, %v5182
      %v5220 = vadd.f32 %v4924, %v5184
      %v5221 = vadd.f32 %v4925, %v5185
      %v5222 = vadd.f32 %v4926, %v5186
      %v5223 = vadd.f32 %v4927, %v5187
      %v5224 = vadd.f32 %v4928, %v5188
      %v5225 = vadd.f32 %v4929, %v5189
      %v5226 = vadd.f32 %v4930, %v5190
      %v5227 = vadd.f32 %v4931, %v5191
      %v5228 = vadd.f32 %v4932, %v5192
      %v5229 = vadd.f32 %v4933, %v5193
      %v5230 = vadd.f32 %v4934, %v5194
      %v5231 = vadd.f32 %v4935, %v5195
      %v5232 = vadd.f32 %v4936, %v5196
      %v5233 = vadd.f32 %v4937, %v5197
      %v5234 = vadd.f32 %v4938, %v5198
      %v5235 = vadd.f32 %v4939, %v5199
      %v5236 = vadd.f32 %v4940, %v5200
      %v5237 = vadd.f32 %v4941, %v5201
      %v5238 = vadd.f32 %v4942, %v5202
      %v5239 = vadd.f32 %v4943, %v5203
      %v5240 = vadd.f32 %v4944, %v5204
      %v5241 = vadd.f32 %v4945, %v5205
      %v5242 = vadd.f32 %v4946, %v5206
      %v5243 = vadd.f32 %v4947, %v5207
      %v5244 = vadd.f32 %v4948, %v5208
      %v5245 = vadd.f32 %v4949, %v5209
      %v5246 = vadd.f32 %v4950, %v5210
      %v5247 = vadd.f32 %v4951, %v5211
      %v5248 = vadd.f32 %v4952, %v5212
      %v5249 = vadd.f32 %v4953, %v5213
      %v5250 = vadd.f32 %v4954, %v5214
      %v5251 = vadd.f32 %v4955, %v5215
      %v5252 = vadd.f32 %v4956, %v5216
      %v5253 = vadd.f32 %v4957, %v5217
      %v5254 = vadd.f32 %v4958, %v5218
      %v5255 = vadd.f32 %v4959, %v5219
      %v5256 = vld [vmem:[%s2887 + $0x26] sm:$0xff]
      %v5257 = vld [vmem:[%s2887 + $0x2e] sm:$0xff]
      %v5258 = vld [vmem:[%s2887 + $0x36] sm:$0xff]
      %v5259 = vld [vmem:[%s2887 + $0x3e] sm:$0xff]
      %v5260 = vld [vmem:[%s2887 + $0x46] sm:$0xff]
      %v5261 = vld [vmem:[%s2887 + $0x4e] sm:$0xff]
      %v5262 = vld [vmem:[%s2887 + $0x56] sm:$0xff]
      %v5263 = vld [vmem:[%s2887 + $0x5e] sm:$0xff]
      %v5264 = vld [vmem:[%s2887 + $0x66] sm:$0xff]
      %v5265 = vld [vmem:[%s2887 + $0x6e] sm:$0xff]
      %v5266 = vld [vmem:[%s2887 + $0x76] sm:$0xff]
      %v5267 = vld [vmem:[%s2887 + $0x7e] sm:$0xff]
      %v5268 = vld [vmem:[%s2887 + $0x86] sm:$0xff]
      %v5269 = vld [vmem:[%s2887 + $0x8e] sm:$0xff]
      %v5270 = vld [vmem:[%s2887 + $0x96] sm:$0xff]
      %v5271 = vld [vmem:[%s2887 + $0x9e] sm:$0xff]
      %v5272 = vld [vmem:[%s2887 + $0xa6] sm:$0xff]
      %v5273 = vld [vmem:[%s2887 + $0xae] sm:$0xff]
      %v5274 = vld [vmem:[%s2887 + $0xb6] sm:$0xff]
      %v5275 = vld [vmem:[%s2887 + $0xbe] sm:$0xff]
      %v5276 = vld [vmem:[%s2887 + $0xc6] sm:$0xff]
      %v5277 = vld [vmem:[%s2887 + $0xce] sm:$0xff]
      %v5278 = vld [vmem:[%s2887 + $0xd6] sm:$0xff]
      %v5279 = vld [vmem:[%s2887 + $0xde] sm:$0xff]
      %v5280 = vld [vmem:[%s2887 + $0xe6] sm:$0xff]
      %v5281 = vld [vmem:[%s2887 + $0xee] sm:$0xff]
      %v5282 = vld [vmem:[%s2887 + $0xf6] sm:$0xff]
      %v5283 = vld [vmem:[%s2887 + $0xfe] sm:$0xff]
      %v5284 = vld [vmem:[%s2887 + $0x106] sm:$0xff]
      %v5285 = vld [vmem:[%s2887 + $0x10e] sm:$0xff]
      %v5286 = vld [vmem:[%s2887 + $0x116] sm:$0xff]
      %v5287 = vld [vmem:[%s2887 + $0x11e] sm:$0xff]
      %v5288 = vld [vmem:[%s2887 + $0x126] sm:$0xff]
      %v5289 = vld [vmem:[%s2887 + $0x12e] sm:$0xff]
      %v5290 = vld [vmem:[%s2887 + $0x136] sm:$0xff]
      %v5291 = vld [vmem:[%s2887 + $0x13e] sm:$0xff]
      %s5292 = scalar_lea.vmem %s1, 17
      %v5293 = vld [vmem:[%s5292] sm:$0x1]
      %5295 = vset.pattern.permute.xlu0 0
      %5296 = vperm.xlu0 %5295, %v5256
      %v5297 = vpop.permute.xlu0 %5296
      %5300 = vset.pattern.permute.xlu0 0
      %5301 = vperm.xlu0 %5300, %v5257
      %v5302 = vpop.permute.xlu0 %5301
      %5305 = vset.pattern.permute.xlu0 0
      %5306 = vperm.xlu0 %5305, %v5258
      %v5307 = vpop.permute.xlu0 %5306
      %5310 = vset.pattern.permute.xlu0 0
      %5311 = vperm.xlu0 %5310, %v5259
      %v5312 = vpop.permute.xlu0 %5311
      %5315 = vset.pattern.permute.xlu0 0
      %5316 = vperm.xlu0 %5315, %v5260
      %v5317 = vpop.permute.xlu0 %5316
      %5320 = vset.pattern.permute.xlu0 0
      %5321 = vperm.xlu0 %5320, %v5261
      %v5322 = vpop.permute.xlu0 %5321
      %5325 = vset.pattern.permute.xlu0 0
      %5326 = vperm.xlu0 %5325, %v5262
      %v5327 = vpop.permute.xlu0 %5326
      %5330 = vset.pattern.permute.xlu0 0
      %5331 = vperm.xlu0 %5330, %v5263
      %v5332 = vpop.permute.xlu0 %5331
      %5335 = vset.pattern.permute.xlu0 0
      %5336 = vperm.xlu0 %5335, %v5264
      %v5337 = vpop.permute.xlu0 %5336
      %5340 = vset.pattern.permute.xlu0 0
      %5341 = vperm.xlu0 %5340, %v5265
      %v5342 = vpop.permute.xlu0 %5341
      %5345 = vset.pattern.permute.xlu0 0
      %5346 = vperm.xlu0 %5345, %v5266
      %v5347 = vpop.permute.xlu0 %5346
      %5350 = vset.pattern.permute.xlu0 0
      %5351 = vperm.xlu0 %5350, %v5267
      %v5352 = vpop.permute.xlu0 %5351
      %5355 = vset.pattern.permute.xlu0 0
      %5356 = vperm.xlu0 %5355, %v5268
      %v5357 = vpop.permute.xlu0 %5356
      %5360 = vset.pattern.permute.xlu0 0
      %5361 = vperm.xlu0 %5360, %v5269
      %v5362 = vpop.permute.xlu0 %5361
      %5365 = vset.pattern.permute.xlu0 0
      %5366 = vperm.xlu0 %5365, %v5270
      %v5367 = vpop.permute.xlu0 %5366
      %5370 = vset.pattern.permute.xlu0 0
      %5371 = vperm.xlu0 %5370, %v5271
      %v5372 = vpop.permute.xlu0 %5371
      %5375 = vset.pattern.permute.xlu0 0
      %5376 = vperm.xlu0 %5375, %v5272
      %v5377 = vpop.permute.xlu0 %5376
      %5380 = vset.pattern.permute.xlu0 0
      %5381 = vperm.xlu0 %5380, %v5273
      %v5382 = vpop.permute.xlu0 %5381
      %5385 = vset.pattern.permute.xlu0 0
      %5386 = vperm.xlu0 %5385, %v5274
      %v5387 = vpop.permute.xlu0 %5386
      %5390 = vset.pattern.permute.xlu0 0
      %5391 = vperm.xlu0 %5390, %v5275
      %v5392 = vpop.permute.xlu0 %5391
      %5395 = vset.pattern.permute.xlu0 0
      %5396 = vperm.xlu0 %5395, %v5276
      %v5397 = vpop.permute.xlu0 %5396
      %5400 = vset.pattern.permute.xlu0 0
      %5401 = vperm.xlu0 %5400, %v5277
      %v5402 = vpop.permute.xlu0 %5401
      %5405 = vset.pattern.permute.xlu0 0
      %5406 = vperm.xlu0 %5405, %v5278
      %v5407 = vpop.permute.xlu0 %5406
      %5410 = vset.pattern.permute.xlu0 0
      %5411 = vperm.xlu0 %5410, %v5279
      %v5412 = vpop.permute.xlu0 %5411
      %5415 = vset.pattern.permute.xlu0 0
      %5416 = vperm.xlu0 %5415, %v5280
      %v5417 = vpop.permute.xlu0 %5416
      %5420 = vset.pattern.permute.xlu0 0
      %5421 = vperm.xlu0 %5420, %v5281
      %v5422 = vpop.permute.xlu0 %5421
      %5425 = vset.pattern.permute.xlu0 0
      %5426 = vperm.xlu0 %5425, %v5282
      %v5427 = vpop.permute.xlu0 %5426
      %5430 = vset.pattern.permute.xlu0 0
      %5431 = vperm.xlu0 %5430, %v5283
      %v5432 = vpop.permute.xlu0 %5431
      %5435 = vset.pattern.permute.xlu0 0
      %5436 = vperm.xlu0 %5435, %v5284
      %v5437 = vpop.permute.xlu0 %5436
      %5440 = vset.pattern.permute.xlu0 0
      %5441 = vperm.xlu0 %5440, %v5285
      %v5442 = vpop.permute.xlu0 %5441
      %5445 = vset.pattern.permute.xlu0 0
      %5446 = vperm.xlu0 %5445, %v5286
      %v5447 = vpop.permute.xlu0 %5446
      %5450 = vset.pattern.permute.xlu0 0
      %5451 = vperm.xlu0 %5450, %v5287
      %v5452 = vpop.permute.xlu0 %5451
      %5455 = vset.pattern.permute.xlu0 0
      %5456 = vperm.xlu0 %5455, %v5288
      %v5457 = vpop.permute.xlu0 %5456
      %5460 = vset.pattern.permute.xlu0 0
      %5461 = vperm.xlu0 %5460, %v5289
      %v5462 = vpop.permute.xlu0 %5461
      %5465 = vset.pattern.permute.xlu0 0
      %5466 = vperm.xlu0 %5465, %v5290
      %v5467 = vpop.permute.xlu0 %5466
      %5470 = vset.pattern.permute.xlu0 0
      %5471 = vperm.xlu0 %5470, %v5291
      %v5472 = vpop.permute.xlu0 %5471
      %v5475 = vlaneseq
      %v5476 = vshrl.u32 %v5475, 7
      %v5477 = vsub.s32 0, %v5476
      %v5478 = vrot.slane %v5293, %v5477
      %v5480 = vmul.f32 %v5297, %v5478
      %v5481 = vmul.f32 %v5302, %v5478
      %v5482 = vmul.f32 %v5307, %v5478
      %v5483 = vmul.f32 %v5312, %v5478
      %v5484 = vmul.f32 %v5317, %v5478
      %v5485 = vmul.f32 %v5322, %v5478
      %v5486 = vmul.f32 %v5327, %v5478
      %v5487 = vmul.f32 %v5332, %v5478
      %v5488 = vmul.f32 %v5337, %v5478
      %v5489 = vmul.f32 %v5342, %v5478
      %v5490 = vmul.f32 %v5347, %v5478
      %v5491 = vmul.f32 %v5352, %v5478
      %v5492 = vmul.f32 %v5357, %v5478
      %v5493 = vmul.f32 %v5362, %v5478
      %v5494 = vmul.f32 %v5367, %v5478
      %v5495 = vmul.f32 %v5372, %v5478
      %v5496 = vmul.f32 %v5377, %v5478
      %v5497 = vmul.f32 %v5382, %v5478
      %v5498 = vmul.f32 %v5387, %v5478
      %v5499 = vmul.f32 %v5392, %v5478
      %v5500 = vmul.f32 %v5397, %v5478
      %v5501 = vmul.f32 %v5402, %v5478
      %v5502 = vmul.f32 %v5407, %v5478
      %v5503 = vmul.f32 %v5412, %v5478
      %v5504 = vmul.f32 %v5417, %v5478
      %v5505 = vmul.f32 %v5422, %v5478
      %v5506 = vmul.f32 %v5427, %v5478
      %v5507 = vmul.f32 %v5432, %v5478
      %v5508 = vmul.f32 %v5437, %v5478
      %v5509 = vmul.f32 %v5442, %v5478
      %v5510 = vmul.f32 %v5447, %v5478
      %v5511 = vmul.f32 %v5452, %v5478
      %v5512 = vmul.f32 %v5457, %v5478
      %v5513 = vmul.f32 %v5462, %v5478
      %v5514 = vmul.f32 %v5467, %v5478
      %v5515 = vmul.f32 %v5472, %v5478
      %v5516 = vadd.f32 %v5220, %v5480
      %v5517 = vadd.f32 %v5221, %v5481
      %v5518 = vadd.f32 %v5222, %v5482
      %v5519 = vadd.f32 %v5223, %v5483
      %v5520 = vadd.f32 %v5224, %v5484
      %v5521 = vadd.f32 %v5225, %v5485
      %v5522 = vadd.f32 %v5226, %v5486
      %v5523 = vadd.f32 %v5227, %v5487
      %v5524 = vadd.f32 %v5228, %v5488
      %v5525 = vadd.f32 %v5229, %v5489
      %v5526 = vadd.f32 %v5230, %v5490
      %v5527 = vadd.f32 %v5231, %v5491
      %v5528 = vadd.f32 %v5232, %v5492
      %v5529 = vadd.f32 %v5233, %v5493
      %v5530 = vadd.f32 %v5234, %v5494
      %v5531 = vadd.f32 %v5235, %v5495
      %v5532 = vadd.f32 %v5236, %v5496
      %v5533 = vadd.f32 %v5237, %v5497
      %v5534 = vadd.f32 %v5238, %v5498
      %v5535 = vadd.f32 %v5239, %v5499
      %v5536 = vadd.f32 %v5240, %v5500
      %v5537 = vadd.f32 %v5241, %v5501
      %v5538 = vadd.f32 %v5242, %v5502
      %v5539 = vadd.f32 %v5243, %v5503
      %v5540 = vadd.f32 %v5244, %v5504
      %v5541 = vadd.f32 %v5245, %v5505
      %v5542 = vadd.f32 %v5246, %v5506
      %v5543 = vadd.f32 %v5247, %v5507
      %v5544 = vadd.f32 %v5248, %v5508
      %v5545 = vadd.f32 %v5249, %v5509
      %v5546 = vadd.f32 %v5250, %v5510
      %v5547 = vadd.f32 %v5251, %v5511
      %v5548 = vadd.f32 %v5252, %v5512
      %v5549 = vadd.f32 %v5253, %v5513
      %v5550 = vadd.f32 %v5254, %v5514
      %v5551 = vadd.f32 %v5255, %v5515
      %s5552 = sadd.s32 %s20, 2
      %s5553 = smul.u32 %s5552, 328
      %s5554 = scalar_lea.vmem %s210, %s5553
      %v5555 = vld [vmem:[%s5554] sm:$0xff]
      %v5556 = vld [vmem:[%s5554 + $0x8] sm:$0xff]
      %v5557 = vld [vmem:[%s5554 + $0x10] sm:$0xff]
      %v5558 = vld [vmem:[%s5554 + $0x18] sm:$0xff]
      %v5559 = vld [vmem:[%s5554 + $0x20] sm:$0xff]
      %v5560 = vld [vmem:[%s5554 + $0x28] sm:$0xff]
      %v5561 = vld [vmem:[%s5554 + $0x30] sm:$0xff]
      %v5562 = vld [vmem:[%s5554 + $0x38] sm:$0xff]
      %v5563 = vld [vmem:[%s5554 + $0x40] sm:$0xff]
      %v5564 = vld [vmem:[%s5554 + $0x48] sm:$0xff]
      %v5565 = vld [vmem:[%s5554 + $0x50] sm:$0xff]
      %v5566 = vld [vmem:[%s5554 + $0x58] sm:$0xff]
      %v5567 = vld [vmem:[%s5554 + $0x60] sm:$0xff]
      %v5568 = vld [vmem:[%s5554 + $0x68] sm:$0xff]
      %v5569 = vld [vmem:[%s5554 + $0x70] sm:$0xff]
      %v5570 = vld [vmem:[%s5554 + $0x78] sm:$0xff]
      %v5571 = vld [vmem:[%s5554 + $0x80] sm:$0xff]
      %v5572 = vld [vmem:[%s5554 + $0x88] sm:$0xff]
      %v5573 = vld [vmem:[%s5554 + $0x90] sm:$0xff]
      %v5574 = vld [vmem:[%s5554 + $0x98] sm:$0xff]
      %v5575 = vld [vmem:[%s5554 + $0xa0] sm:$0xff]
      %v5576 = vld [vmem:[%s5554 + $0xa8] sm:$0xff]
      %v5577 = vld [vmem:[%s5554 + $0xb0] sm:$0xff]
      %v5578 = vld [vmem:[%s5554 + $0xb8] sm:$0xff]
      %v5579 = vld [vmem:[%s5554 + $0xc0] sm:$0xff]
      %v5580 = vld [vmem:[%s5554 + $0xc8] sm:$0xff]
      %v5581 = vld [vmem:[%s5554 + $0xd0] sm:$0xff]
      %v5582 = vld [vmem:[%s5554 + $0xd8] sm:$0xff]
      %v5583 = vld [vmem:[%s5554 + $0xe0] sm:$0xff]
      %v5584 = vld [vmem:[%s5554 + $0xe8] sm:$0xff]
      %v5585 = vld [vmem:[%s5554 + $0xf0] sm:$0xff]
      %v5586 = vld [vmem:[%s5554 + $0xf8] sm:$0xff]
      %v5587 = vld [vmem:[%s5554 + $0x100] sm:$0xff]
      %v5588 = vld [vmem:[%s5554 + $0x108] sm:$0xff]
      %v5589 = vld [vmem:[%s5554 + $0x110] sm:$0xff]
      %v5590 = vld [vmem:[%s5554 + $0x118] sm:$0xff]
      %s5591 = scalar_lea.vmem %s1, 18
      %v5592 = vld [vmem:[%s5591] sm:$0x1]
      %5594 = vset.pattern.permute.xlu0 0
      %5595 = vperm.xlu0 %5594, %v5555
      %v5596 = vpop.permute.xlu0 %5595
      %5599 = vset.pattern.permute.xlu0 0
      %5600 = vperm.xlu0 %5599, %v5556
      %v5601 = vpop.permute.xlu0 %5600
      %5604 = vset.pattern.permute.xlu0 0
      %5605 = vperm.xlu0 %5604, %v5557
      %v5606 = vpop.permute.xlu0 %5605
      %5609 = vset.pattern.permute.xlu0 0
      %5610 = vperm.xlu0 %5609, %v5558
      %v5611 = vpop.permute.xlu0 %5610
      %5614 = vset.pattern.permute.xlu0 0
      %5615 = vperm.xlu0 %5614, %v5559
      %v5616 = vpop.permute.xlu0 %5615
      %5619 = vset.pattern.permute.xlu0 0
      %5620 = vperm.xlu0 %5619, %v5560
      %v5621 = vpop.permute.xlu0 %5620
      %5624 = vset.pattern.permute.xlu0 0
      %5625 = vperm.xlu0 %5624, %v5561
      %v5626 = vpop.permute.xlu0 %5625
      %5629 = vset.pattern.permute.xlu0 0
      %5630 = vperm.xlu0 %5629, %v5562
      %v5631 = vpop.permute.xlu0 %5630
      %5634 = vset.pattern.permute.xlu0 0
      %5635 = vperm.xlu0 %5634, %v5563
      %v5636 = vpop.permute.xlu0 %5635
      %5639 = vset.pattern.permute.xlu0 0
      %5640 = vperm.xlu0 %5639, %v5564
      %v5641 = vpop.permute.xlu0 %5640
      %5644 = vset.pattern.permute.xlu0 0
      %5645 = vperm.xlu0 %5644, %v5565
      %v5646 = vpop.permute.xlu0 %5645
      %5649 = vset.pattern.permute.xlu0 0
      %5650 = vperm.xlu0 %5649, %v5566
      %v5651 = vpop.permute.xlu0 %5650
      %5654 = vset.pattern.permute.xlu0 0
      %5655 = vperm.xlu0 %5654, %v5567
      %v5656 = vpop.permute.xlu0 %5655
      %5659 = vset.pattern.permute.xlu0 0
      %5660 = vperm.xlu0 %5659, %v5568
      %v5661 = vpop.permute.xlu0 %5660
      %5664 = vset.pattern.permute.xlu0 0
      %5665 = vperm.xlu0 %5664, %v5569
      %v5666 = vpop.permute.xlu0 %5665
      %5669 = vset.pattern.permute.xlu0 0
      %5670 = vperm.xlu0 %5669, %v5570
      %v5671 = vpop.permute.xlu0 %5670
      %5674 = vset.pattern.permute.xlu0 0
      %5675 = vperm.xlu0 %5674, %v5571
      %v5676 = vpop.permute.xlu0 %5675
      %5679 = vset.pattern.permute.xlu0 0
      %5680 = vperm.xlu0 %5679, %v5572
      %v5681 = vpop.permute.xlu0 %5680
      %5684 = vset.pattern.permute.xlu0 0
      %5685 = vperm.xlu0 %5684, %v5573
      %v5686 = vpop.permute.xlu0 %5685
      %5689 = vset.pattern.permute.xlu0 0
      %5690 = vperm.xlu0 %5689, %v5574
      %v5691 = vpop.permute.xlu0 %5690
      %5694 = vset.pattern.permute.xlu0 0
      %5695 = vperm.xlu0 %5694, %v5575
      %v5696 = vpop.permute.xlu0 %5695
      %5699 = vset.pattern.permute.xlu0 0
      %5700 = vperm.xlu0 %5699, %v5576
      %v5701 = vpop.permute.xlu0 %5700
      %5704 = vset.pattern.permute.xlu0 0
      %5705 = vperm.xlu0 %5704, %v5577
      %v5706 = vpop.permute.xlu0 %5705
      %5709 = vset.pattern.permute.xlu0 0
      %5710 = vperm.xlu0 %5709, %v5578
      %v5711 = vpop.permute.xlu0 %5710
      %5714 = vset.pattern.permute.xlu0 0
      %5715 = vperm.xlu0 %5714, %v5579
      %v5716 = vpop.permute.xlu0 %5715
      %5719 = vset.pattern.permute.xlu0 0
      %5720 = vperm.xlu0 %5719, %v5580
      %v5721 = vpop.permute.xlu0 %5720
      %5724 = vset.pattern.permute.xlu0 0
      %5725 = vperm.xlu0 %5724, %v5581
      %v5726 = vpop.permute.xlu0 %5725
      %5729 = vset.pattern.permute.xlu0 0
      %5730 = vperm.xlu0 %5729, %v5582
      %v5731 = vpop.permute.xlu0 %5730
      %5734 = vset.pattern.permute.xlu0 0
      %5735 = vperm.xlu0 %5734, %v5583
      %v5736 = vpop.permute.xlu0 %5735
      %5739 = vset.pattern.permute.xlu0 0
      %5740 = vperm.xlu0 %5739, %v5584
      %v5741 = vpop.permute.xlu0 %5740
      %5744 = vset.pattern.permute.xlu0 0
      %5745 = vperm.xlu0 %5744, %v5585
      %v5746 = vpop.permute.xlu0 %5745
      %5749 = vset.pattern.permute.xlu0 0
      %5750 = vperm.xlu0 %5749, %v5586
      %v5751 = vpop.permute.xlu0 %5750
      %5754 = vset.pattern.permute.xlu0 0
      %5755 = vperm.xlu0 %5754, %v5587
      %v5756 = vpop.permute.xlu0 %5755
      %5759 = vset.pattern.permute.xlu0 0
      %5760 = vperm.xlu0 %5759, %v5588
      %v5761 = vpop.permute.xlu0 %5760
      %5764 = vset.pattern.permute.xlu0 0
      %5765 = vperm.xlu0 %5764, %v5589
      %v5766 = vpop.permute.xlu0 %5765
      %5769 = vset.pattern.permute.xlu0 0
      %5770 = vperm.xlu0 %5769, %v5590
      %v5771 = vpop.permute.xlu0 %5770
      %v5774 = vlaneseq
      %v5775 = vshrl.u32 %v5774, 7
      %v5776 = vsub.s32 0, %v5775
      %v5777 = vrot.slane %v5592, %v5776
      %v5779 = vmul.f32 %v5596, %v5777
      %v5780 = vmul.f32 %v5601, %v5777
      %v5781 = vmul.f32 %v5606, %v5777
      %v5782 = vmul.f32 %v5611, %v5777
      %v5783 = vmul.f32 %v5616, %v5777
      %v5784 = vmul.f32 %v5621, %v5777
      %v5785 = vmul.f32 %v5626, %v5777
      %v5786 = vmul.f32 %v5631, %v5777
      %v5787 = vmul.f32 %v5636, %v5777
      %v5788 = vmul.f32 %v5641, %v5777
      %v5789 = vmul.f32 %v5646, %v5777
      %v5790 = vmul.f32 %v5651, %v5777
      %v5791 = vmul.f32 %v5656, %v5777
      %v5792 = vmul.f32 %v5661, %v5777
      %v5793 = vmul.f32 %v5666, %v5777
      %v5794 = vmul.f32 %v5671, %v5777
      %v5795 = vmul.f32 %v5676, %v5777
      %v5796 = vmul.f32 %v5681, %v5777
      %v5797 = vmul.f32 %v5686, %v5777
      %v5798 = vmul.f32 %v5691, %v5777
      %v5799 = vmul.f32 %v5696, %v5777
      %v5800 = vmul.f32 %v5701, %v5777
      %v5801 = vmul.f32 %v5706, %v5777
      %v5802 = vmul.f32 %v5711, %v5777
      %v5803 = vmul.f32 %v5716, %v5777
      %v5804 = vmul.f32 %v5721, %v5777
      %v5805 = vmul.f32 %v5726, %v5777
      %v5806 = vmul.f32 %v5731, %v5777
      %v5807 = vmul.f32 %v5736, %v5777
      %v5808 = vmul.f32 %v5741, %v5777
      %v5809 = vmul.f32 %v5746, %v5777
      %v5810 = vmul.f32 %v5751, %v5777
      %v5811 = vmul.f32 %v5756, %v5777
      %v5812 = vmul.f32 %v5761, %v5777
      %v5813 = vmul.f32 %v5766, %v5777
      %v5814 = vmul.f32 %v5771, %v5777
      %v5815 = vadd.f32 %v5516, %v5779
      %v5816 = vadd.f32 %v5517, %v5780
      %v5817 = vadd.f32 %v5518, %v5781
      %v5818 = vadd.f32 %v5519, %v5782
      %v5819 = vadd.f32 %v5520, %v5783
      %v5820 = vadd.f32 %v5521, %v5784
      %v5821 = vadd.f32 %v5522, %v5785
      %v5822 = vadd.f32 %v5523, %v5786
      %v5823 = vadd.f32 %v5524, %v5787
      %v5824 = vadd.f32 %v5525, %v5788
      %v5825 = vadd.f32 %v5526, %v5789
      %v5826 = vadd.f32 %v5527, %v5790
      %v5827 = vadd.f32 %v5528, %v5791
      %v5828 = vadd.f32 %v5529, %v5792
      %v5829 = vadd.f32 %v5530, %v5793
      %v5830 = vadd.f32 %v5531, %v5794
      %v5831 = vadd.f32 %v5532, %v5795
      %v5832 = vadd.f32 %v5533, %v5796
      %v5833 = vadd.f32 %v5534, %v5797
      %v5834 = vadd.f32 %v5535, %v5798
      %v5835 = vadd.f32 %v5536, %v5799
      %v5836 = vadd.f32 %v5537, %v5800
      %v5837 = vadd.f32 %v5538, %v5801
      %v5838 = vadd.f32 %v5539, %v5802
      %v5839 = vadd.f32 %v5540, %v5803
      %v5840 = vadd.f32 %v5541, %v5804
      %v5841 = vadd.f32 %v5542, %v5805
      %v5842 = vadd.f32 %v5543, %v5806
      %v5843 = vadd.f32 %v5544, %v5807
      %v5844 = vadd.f32 %v5545, %v5808
      %v5845 = vadd.f32 %v5546, %v5809
      %v5846 = vadd.f32 %v5547, %v5810
      %v5847 = vadd.f32 %v5548, %v5811
      %v5848 = vadd.f32 %v5549, %v5812
      %v5849 = vadd.f32 %v5550, %v5813
      %v5850 = vadd.f32 %v5551, %v5814
      %v5851 = vld [vmem:[%s5554 + $0x1] sm:$0xff]
      %v5852 = vld [vmem:[%s5554 + $0x9] sm:$0xff]
      %v5853 = vld [vmem:[%s5554 + $0x11] sm:$0xff]
      %v5854 = vld [vmem:[%s5554 + $0x19] sm:$0xff]
      %v5855 = vld [vmem:[%s5554 + $0x21] sm:$0xff]
      %v5856 = vld [vmem:[%s5554 + $0x29] sm:$0xff]
      %v5857 = vld [vmem:[%s5554 + $0x31] sm:$0xff]
      %v5858 = vld [vmem:[%s5554 + $0x39] sm:$0xff]
      %v5859 = vld [vmem:[%s5554 + $0x41] sm:$0xff]
      %v5860 = vld [vmem:[%s5554 + $0x49] sm:$0xff]
      %v5861 = vld [vmem:[%s5554 + $0x51] sm:$0xff]
      %v5862 = vld [vmem:[%s5554 + $0x59] sm:$0xff]
      %v5863 = vld [vmem:[%s5554 + $0x61] sm:$0xff]
      %v5864 = vld [vmem:[%s5554 + $0x69] sm:$0xff]
      %v5865 = vld [vmem:[%s5554 + $0x71] sm:$0xff]
      %v5866 = vld [vmem:[%s5554 + $0x79] sm:$0xff]
      %v5867 = vld [vmem:[%s5554 + $0x81] sm:$0xff]
      %v5868 = vld [vmem:[%s5554 + $0x89] sm:$0xff]
      %v5869 = vld [vmem:[%s5554 + $0x91] sm:$0xff]
      %v5870 = vld [vmem:[%s5554 + $0x99] sm:$0xff]
      %v5871 = vld [vmem:[%s5554 + $0xa1] sm:$0xff]
      %v5872 = vld [vmem:[%s5554 + $0xa9] sm:$0xff]
      %v5873 = vld [vmem:[%s5554 + $0xb1] sm:$0xff]
      %v5874 = vld [vmem:[%s5554 + $0xb9] sm:$0xff]
      %v5875 = vld [vmem:[%s5554 + $0xc1] sm:$0xff]
      %v5876 = vld [vmem:[%s5554 + $0xc9] sm:$0xff]
      %v5877 = vld [vmem:[%s5554 + $0xd1] sm:$0xff]
      %v5878 = vld [vmem:[%s5554 + $0xd9] sm:$0xff]
      %v5879 = vld [vmem:[%s5554 + $0xe1] sm:$0xff]
      %v5880 = vld [vmem:[%s5554 + $0xe9] sm:$0xff]
      %v5881 = vld [vmem:[%s5554 + $0xf1] sm:$0xff]
      %v5882 = vld [vmem:[%s5554 + $0xf9] sm:$0xff]
      %v5883 = vld [vmem:[%s5554 + $0x101] sm:$0xff]
      %v5884 = vld [vmem:[%s5554 + $0x109] sm:$0xff]
      %v5885 = vld [vmem:[%s5554 + $0x111] sm:$0xff]
      %v5886 = vld [vmem:[%s5554 + $0x119] sm:$0xff]
      %s5887 = scalar_lea.vmem %s1, 19
      %v5888 = vld [vmem:[%s5887] sm:$0x1]
      %5890 = vset.pattern.permute.xlu0 0
      %5891 = vperm.xlu0 %5890, %v5851
      %v5892 = vpop.permute.xlu0 %5891
      %5895 = vset.pattern.permute.xlu0 0
      %5896 = vperm.xlu0 %5895, %v5852
      %v5897 = vpop.permute.xlu0 %5896
      %5900 = vset.pattern.permute.xlu0 0
      %5901 = vperm.xlu0 %5900, %v5853
      %v5902 = vpop.permute.xlu0 %5901
      %5905 = vset.pattern.permute.xlu0 0
      %5906 = vperm.xlu0 %5905, %v5854
      %v5907 = vpop.permute.xlu0 %5906
      %5910 = vset.pattern.permute.xlu0 0
      %5911 = vperm.xlu0 %5910, %v5855
      %v5912 = vpop.permute.xlu0 %5911
      %5915 = vset.pattern.permute.xlu0 0
      %5916 = vperm.xlu0 %5915, %v5856
      %v5917 = vpop.permute.xlu0 %5916
      %5920 = vset.pattern.permute.xlu0 0
      %5921 = vperm.xlu0 %5920, %v5857
      %v5922 = vpop.permute.xlu0 %5921
      %5925 = vset.pattern.permute.xlu0 0
      %5926 = vperm.xlu0 %5925, %v5858
      %v5927 = vpop.permute.xlu0 %5926
      %5930 = vset.pattern.permute.xlu0 0
      %5931 = vperm.xlu0 %5930, %v5859
      %v5932 = vpop.permute.xlu0 %5931
      %5935 = vset.pattern.permute.xlu0 0
      %5936 = vperm.xlu0 %5935, %v5860
      %v5937 = vpop.permute.xlu0 %5936
      %5940 = vset.pattern.permute.xlu0 0
      %5941 = vperm.xlu0 %5940, %v5861
      %v5942 = vpop.permute.xlu0 %5941
      %5945 = vset.pattern.permute.xlu0 0
      %5946 = vperm.xlu0 %5945, %v5862
      %v5947 = vpop.permute.xlu0 %5946
      %5950 = vset.pattern.permute.xlu0 0
      %5951 = vperm.xlu0 %5950, %v5863
      %v5952 = vpop.permute.xlu0 %5951
      %5955 = vset.pattern.permute.xlu0 0
      %5956 = vperm.xlu0 %5955, %v5864
      %v5957 = vpop.permute.xlu0 %5956
      %5960 = vset.pattern.permute.xlu0 0
      %5961 = vperm.xlu0 %5960, %v5865
      %v5962 = vpop.permute.xlu0 %5961
      %5965 = vset.pattern.permute.xlu0 0
      %5966 = vperm.xlu0 %5965, %v5866
      %v5967 = vpop.permute.xlu0 %5966
      %5970 = vset.pattern.permute.xlu0 0
      %5971 = vperm.xlu0 %5970, %v5867
      %v5972 = vpop.permute.xlu0 %5971
      %5975 = vset.pattern.permute.xlu0 0
      %5976 = vperm.xlu0 %5975, %v5868
      %v5977 = vpop.permute.xlu0 %5976
      %5980 = vset.pattern.permute.xlu0 0
      %5981 = vperm.xlu0 %5980, %v5869
      %v5982 = vpop.permute.xlu0 %5981
      %5985 = vset.pattern.permute.xlu0 0
      %5986 = vperm.xlu0 %5985, %v5870
      %v5987 = vpop.permute.xlu0 %5986
      %5990 = vset.pattern.permute.xlu0 0
      %5991 = vperm.xlu0 %5990, %v5871
      %v5992 = vpop.permute.xlu0 %5991
      %5995 = vset.pattern.permute.xlu0 0
      %5996 = vperm.xlu0 %5995, %v5872
      %v5997 = vpop.permute.xlu0 %5996
      %6000 = vset.pattern.permute.xlu0 0
      %6001 = vperm.xlu0 %6000, %v5873
      %v6002 = vpop.permute.xlu0 %6001
      %6005 = vset.pattern.permute.xlu0 0
      %6006 = vperm.xlu0 %6005, %v5874
      %v6007 = vpop.permute.xlu0 %6006
      %6010 = vset.pattern.permute.xlu0 0
      %6011 = vperm.xlu0 %6010, %v5875
      %v6012 = vpop.permute.xlu0 %6011
      %6015 = vset.pattern.permute.xlu0 0
      %6016 = vperm.xlu0 %6015, %v5876
      %v6017 = vpop.permute.xlu0 %6016
      %6020 = vset.pattern.permute.xlu0 0
      %6021 = vperm.xlu0 %6020, %v5877
      %v6022 = vpop.permute.xlu0 %6021
      %6025 = vset.pattern.permute.xlu0 0
      %6026 = vperm.xlu0 %6025, %v5878
      %v6027 = vpop.permute.xlu0 %6026
      %6030 = vset.pattern.permute.xlu0 0
      %6031 = vperm.xlu0 %6030, %v5879
      %v6032 = vpop.permute.xlu0 %6031
      %6035 = vset.pattern.permute.xlu0 0
      %6036 = vperm.xlu0 %6035, %v5880
      %v6037 = vpop.permute.xlu0 %6036
      %6040 = vset.pattern.permute.xlu0 0
      %6041 = vperm.xlu0 %6040, %v5881
      %v6042 = vpop.permute.xlu0 %6041
      %6045 = vset.pattern.permute.xlu0 0
      %6046 = vperm.xlu0 %6045, %v5882
      %v6047 = vpop.permute.xlu0 %6046
      %6050 = vset.pattern.permute.xlu0 0
      %6051 = vperm.xlu0 %6050, %v5883
      %v6052 = vpop.permute.xlu0 %6051
      %6055 = vset.pattern.permute.xlu0 0
      %6056 = vperm.xlu0 %6055, %v5884
      %v6057 = vpop.permute.xlu0 %6056
      %6060 = vset.pattern.permute.xlu0 0
      %6061 = vperm.xlu0 %6060, %v5885
      %v6062 = vpop.permute.xlu0 %6061
      %6065 = vset.pattern.permute.xlu0 0
      %6066 = vperm.xlu0 %6065, %v5886
      %v6067 = vpop.permute.xlu0 %6066
      %v6070 = vlaneseq
      %v6071 = vshrl.u32 %v6070, 7
      %v6072 = vsub.s32 0, %v6071
      %v6073 = vrot.slane %v5888, %v6072
      %v6075 = vmul.f32 %v5892, %v6073
      %v6076 = vmul.f32 %v5897, %v6073
      %v6077 = vmul.f32 %v5902, %v6073
      %v6078 = vmul.f32 %v5907, %v6073
      %v6079 = vmul.f32 %v5912, %v6073
      %v6080 = vmul.f32 %v5917, %v6073
      %v6081 = vmul.f32 %v5922, %v6073
      %v6082 = vmul.f32 %v5927, %v6073
      %v6083 = vmul.f32 %v5932, %v6073
      %v6084 = vmul.f32 %v5937, %v6073
      %v6085 = vmul.f32 %v5942, %v6073
      %v6086 = vmul.f32 %v5947, %v6073
      %v6087 = vmul.f32 %v5952, %v6073
      %v6088 = vmul.f32 %v5957, %v6073
      %v6089 = vmul.f32 %v5962, %v6073
      %v6090 = vmul.f32 %v5967, %v6073
      %v6091 = vmul.f32 %v5972, %v6073
      %v6092 = vmul.f32 %v5977, %v6073
      %v6093 = vmul.f32 %v5982, %v6073
      %v6094 = vmul.f32 %v5987, %v6073
      %v6095 = vmul.f32 %v5992, %v6073
      %v6096 = vmul.f32 %v5997, %v6073
      %v6097 = vmul.f32 %v6002, %v6073
      %v6098 = vmul.f32 %v6007, %v6073
      %v6099 = vmul.f32 %v6012, %v6073
      %v6100 = vmul.f32 %v6017, %v6073
      %v6101 = vmul.f32 %v6022, %v6073
      %v6102 = vmul.f32 %v6027, %v6073
      %v6103 = vmul.f32 %v6032, %v6073
      %v6104 = vmul.f32 %v6037, %v6073
      %v6105 = vmul.f32 %v6042, %v6073
      %v6106 = vmul.f32 %v6047, %v6073
      %v6107 = vmul.f32 %v6052, %v6073
      %v6108 = vmul.f32 %v6057, %v6073
      %v6109 = vmul.f32 %v6062, %v6073
      %v6110 = vmul.f32 %v6067, %v6073
      %v6111 = vadd.f32 %v5815, %v6075
      %v6112 = vadd.f32 %v5816, %v6076
      %v6113 = vadd.f32 %v5817, %v6077
      %v6114 = vadd.f32 %v5818, %v6078
      %v6115 = vadd.f32 %v5819, %v6079
      %v6116 = vadd.f32 %v5820, %v6080
      %v6117 = vadd.f32 %v5821, %v6081
      %v6118 = vadd.f32 %v5822, %v6082
      %v6119 = vadd.f32 %v5823, %v6083
      %v6120 = vadd.f32 %v5824, %v6084
      %v6121 = vadd.f32 %v5825, %v6085
      %v6122 = vadd.f32 %v5826, %v6086
      %v6123 = vadd.f32 %v5827, %v6087
      %v6124 = vadd.f32 %v5828, %v6088
      %v6125 = vadd.f32 %v5829, %v6089
      %v6126 = vadd.f32 %v5830, %v6090
      %v6127 = vadd.f32 %v5831, %v6091
      %v6128 = vadd.f32 %v5832, %v6092
      %v6129 = vadd.f32 %v5833, %v6093
      %v6130 = vadd.f32 %v5834, %v6094
      %v6131 = vadd.f32 %v5835, %v6095
      %v6132 = vadd.f32 %v5836, %v6096
      %v6133 = vadd.f32 %v5837, %v6097
      %v6134 = vadd.f32 %v5838, %v6098
      %v6135 = vadd.f32 %v5839, %v6099
      %v6136 = vadd.f32 %v5840, %v6100
      %v6137 = vadd.f32 %v5841, %v6101
      %v6138 = vadd.f32 %v5842, %v6102
      %v6139 = vadd.f32 %v5843, %v6103
      %v6140 = vadd.f32 %v5844, %v6104
      %v6141 = vadd.f32 %v5845, %v6105
      %v6142 = vadd.f32 %v5846, %v6106
      %v6143 = vadd.f32 %v5847, %v6107
      %v6144 = vadd.f32 %v5848, %v6108
      %v6145 = vadd.f32 %v5849, %v6109
      %v6146 = vadd.f32 %v5850, %v6110
      %v6147 = vld [vmem:[%s5554 + $0x2] sm:$0xff]
      %v6148 = vld [vmem:[%s5554 + $0xa] sm:$0xff]
      %v6149 = vld [vmem:[%s5554 + $0x12] sm:$0xff]
      %v6150 = vld [vmem:[%s5554 + $0x1a] sm:$0xff]
      %v6151 = vld [vmem:[%s5554 + $0x22] sm:$0xff]
      %v6152 = vld [vmem:[%s5554 + $0x2a] sm:$0xff]
      %v6153 = vld [vmem:[%s5554 + $0x32] sm:$0xff]
      %v6154 = vld [vmem:[%s5554 + $0x3a] sm:$0xff]
      %v6155 = vld [vmem:[%s5554 + $0x42] sm:$0xff]
      %v6156 = vld [vmem:[%s5554 + $0x4a] sm:$0xff]
      %v6157 = vld [vmem:[%s5554 + $0x52] sm:$0xff]
      %v6158 = vld [vmem:[%s5554 + $0x5a] sm:$0xff]
      %v6159 = vld [vmem:[%s5554 + $0x62] sm:$0xff]
      %v6160 = vld [vmem:[%s5554 + $0x6a] sm:$0xff]
      %v6161 = vld [vmem:[%s5554 + $0x72] sm:$0xff]
      %v6162 = vld [vmem:[%s5554 + $0x7a] sm:$0xff]
      %v6163 = vld [vmem:[%s5554 + $0x82] sm:$0xff]
      %v6164 = vld [vmem:[%s5554 + $0x8a] sm:$0xff]
      %v6165 = vld [vmem:[%s5554 + $0x92] sm:$0xff]
      %v6166 = vld [vmem:[%s5554 + $0x9a] sm:$0xff]
      %v6167 = vld [vmem:[%s5554 + $0xa2] sm:$0xff]
      %v6168 = vld [vmem:[%s5554 + $0xaa] sm:$0xff]
      %v6169 = vld [vmem:[%s5554 + $0xb2] sm:$0xff]
      %v6170 = vld [vmem:[%s5554 + $0xba] sm:$0xff]
      %v6171 = vld [vmem:[%s5554 + $0xc2] sm:$0xff]
      %v6172 = vld [vmem:[%s5554 + $0xca] sm:$0xff]
      %v6173 = vld [vmem:[%s5554 + $0xd2] sm:$0xff]
      %v6174 = vld [vmem:[%s5554 + $0xda] sm:$0xff]
      %v6175 = vld [vmem:[%s5554 + $0xe2] sm:$0xff]
      %v6176 = vld [vmem:[%s5554 + $0xea] sm:$0xff]
      %v6177 = vld [vmem:[%s5554 + $0xf2] sm:$0xff]
      %v6178 = vld [vmem:[%s5554 + $0xfa] sm:$0xff]
      %v6179 = vld [vmem:[%s5554 + $0x102] sm:$0xff]
      %v6180 = vld [vmem:[%s5554 + $0x10a] sm:$0xff]
      %v6181 = vld [vmem:[%s5554 + $0x112] sm:$0xff]
      %v6182 = vld [vmem:[%s5554 + $0x11a] sm:$0xff]
      %s6183 = scalar_lea.vmem %s1, 20
      %v6184 = vld [vmem:[%s6183] sm:$0x1]
      %6186 = vset.pattern.permute.xlu0 0
      %6187 = vperm.xlu0 %6186, %v6147
      %v6188 = vpop.permute.xlu0 %6187
      %6191 = vset.pattern.permute.xlu0 0
      %6192 = vperm.xlu0 %6191, %v6148
      %v6193 = vpop.permute.xlu0 %6192
      %6196 = vset.pattern.permute.xlu0 0
      %6197 = vperm.xlu0 %6196, %v6149
      %v6198 = vpop.permute.xlu0 %6197
      %6201 = vset.pattern.permute.xlu0 0
      %6202 = vperm.xlu0 %6201, %v6150
      %v6203 = vpop.permute.xlu0 %6202
      %6206 = vset.pattern.permute.xlu0 0
      %6207 = vperm.xlu0 %6206, %v6151
      %v6208 = vpop.permute.xlu0 %6207
      %6211 = vset.pattern.permute.xlu0 0
      %6212 = vperm.xlu0 %6211, %v6152
      %v6213 = vpop.permute.xlu0 %6212
      %6216 = vset.pattern.permute.xlu0 0
      %6217 = vperm.xlu0 %6216, %v6153
      %v6218 = vpop.permute.xlu0 %6217
      %6221 = vset.pattern.permute.xlu0 0
      %6222 = vperm.xlu0 %6221, %v6154
      %v6223 = vpop.permute.xlu0 %6222
      %6226 = vset.pattern.permute.xlu0 0
      %6227 = vperm.xlu0 %6226, %v6155
      %v6228 = vpop.permute.xlu0 %6227
      %6231 = vset.pattern.permute.xlu0 0
      %6232 = vperm.xlu0 %6231, %v6156
      %v6233 = vpop.permute.xlu0 %6232
      %6236 = vset.pattern.permute.xlu0 0
      %6237 = vperm.xlu0 %6236, %v6157
      %v6238 = vpop.permute.xlu0 %6237
      %6241 = vset.pattern.permute.xlu0 0
      %6242 = vperm.xlu0 %6241, %v6158
      %v6243 = vpop.permute.xlu0 %6242
      %6246 = vset.pattern.permute.xlu0 0
      %6247 = vperm.xlu0 %6246, %v6159
      %v6248 = vpop.permute.xlu0 %6247
      %6251 = vset.pattern.permute.xlu0 0
      %6252 = vperm.xlu0 %6251, %v6160
      %v6253 = vpop.permute.xlu0 %6252
      %6256 = vset.pattern.permute.xlu0 0
      %6257 = vperm.xlu0 %6256, %v6161
      %v6258 = vpop.permute.xlu0 %6257
      %6261 = vset.pattern.permute.xlu0 0
      %6262 = vperm.xlu0 %6261, %v6162
      %v6263 = vpop.permute.xlu0 %6262
      %6266 = vset.pattern.permute.xlu0 0
      %6267 = vperm.xlu0 %6266, %v6163
      %v6268 = vpop.permute.xlu0 %6267
      %6271 = vset.pattern.permute.xlu0 0
      %6272 = vperm.xlu0 %6271, %v6164
      %v6273 = vpop.permute.xlu0 %6272
      %6276 = vset.pattern.permute.xlu0 0
      %6277 = vperm.xlu0 %6276, %v6165
      %v6278 = vpop.permute.xlu0 %6277
      %6281 = vset.pattern.permute.xlu0 0
      %6282 = vperm.xlu0 %6281, %v6166
      %v6283 = vpop.permute.xlu0 %6282
      %6286 = vset.pattern.permute.xlu0 0
      %6287 = vperm.xlu0 %6286, %v6167
      %v6288 = vpop.permute.xlu0 %6287
      %6291 = vset.pattern.permute.xlu0 0
      %6292 = vperm.xlu0 %6291, %v6168
      %v6293 = vpop.permute.xlu0 %6292
      %6296 = vset.pattern.permute.xlu0 0
      %6297 = vperm.xlu0 %6296, %v6169
      %v6298 = vpop.permute.xlu0 %6297
      %6301 = vset.pattern.permute.xlu0 0
      %6302 = vperm.xlu0 %6301, %v6170
      %v6303 = vpop.permute.xlu0 %6302
      %6306 = vset.pattern.permute.xlu0 0
      %6307 = vperm.xlu0 %6306, %v6171
      %v6308 = vpop.permute.xlu0 %6307
      %6311 = vset.pattern.permute.xlu0 0
      %6312 = vperm.xlu0 %6311, %v6172
      %v6313 = vpop.permute.xlu0 %6312
      %6316 = vset.pattern.permute.xlu0 0
      %6317 = vperm.xlu0 %6316, %v6173
      %v6318 = vpop.permute.xlu0 %6317
      %6321 = vset.pattern.permute.xlu0 0
      %6322 = vperm.xlu0 %6321, %v6174
      %v6323 = vpop.permute.xlu0 %6322
      %6326 = vset.pattern.permute.xlu0 0
      %6327 = vperm.xlu0 %6326, %v6175
      %v6328 = vpop.permute.xlu0 %6327
      %6331 = vset.pattern.permute.xlu0 0
      %6332 = vperm.xlu0 %6331, %v6176
      %v6333 = vpop.permute.xlu0 %6332
      %6336 = vset.pattern.permute.xlu0 0
      %6337 = vperm.xlu0 %6336, %v6177
      %v6338 = vpop.permute.xlu0 %6337
      %6341 = vset.pattern.permute.xlu0 0
      %6342 = vperm.xlu0 %6341, %v6178
      %v6343 = vpop.permute.xlu0 %6342
      %6346 = vset.pattern.permute.xlu0 0
      %6347 = vperm.xlu0 %6346, %v6179
      %v6348 = vpop.permute.xlu0 %6347
      %6351 = vset.pattern.permute.xlu0 0
      %6352 = vperm.xlu0 %6351, %v6180
      %v6353 = vpop.permute.xlu0 %6352
      %6356 = vset.pattern.permute.xlu0 0
      %6357 = vperm.xlu0 %6356, %v6181
      %v6358 = vpop.permute.xlu0 %6357
      %6361 = vset.pattern.permute.xlu0 0
      %6362 = vperm.xlu0 %6361, %v6182
      %v6363 = vpop.permute.xlu0 %6362
      %v6366 = vlaneseq
      %v6367 = vshrl.u32 %v6366, 7
      %v6368 = vsub.s32 0, %v6367
      %v6369 = vrot.slane %v6184, %v6368
      %v6371 = vmul.f32 %v6188, %v6369
      %v6372 = vmul.f32 %v6193, %v6369
      %v6373 = vmul.f32 %v6198, %v6369
      %v6374 = vmul.f32 %v6203, %v6369
      %v6375 = vmul.f32 %v6208, %v6369
      %v6376 = vmul.f32 %v6213, %v6369
      %v6377 = vmul.f32 %v6218, %v6369
      %v6378 = vmul.f32 %v6223, %v6369
      %v6379 = vmul.f32 %v6228, %v6369
      %v6380 = vmul.f32 %v6233, %v6369
      %v6381 = vmul.f32 %v6238, %v6369
      %v6382 = vmul.f32 %v6243, %v6369
      %v6383 = vmul.f32 %v6248, %v6369
      %v6384 = vmul.f32 %v6253, %v6369
      %v6385 = vmul.f32 %v6258, %v6369
      %v6386 = vmul.f32 %v6263, %v6369
      %v6387 = vmul.f32 %v6268, %v6369
      %v6388 = vmul.f32 %v6273, %v6369
      %v6389 = vmul.f32 %v6278, %v6369
      %v6390 = vmul.f32 %v6283, %v6369
      %v6391 = vmul.f32 %v6288, %v6369
      %v6392 = vmul.f32 %v6293, %v6369
      %v6393 = vmul.f32 %v6298, %v6369
      %v6394 = vmul.f32 %v6303, %v6369
      %v6395 = vmul.f32 %v6308, %v6369
      %v6396 = vmul.f32 %v6313, %v6369
      %v6397 = vmul.f32 %v6318, %v6369
      %v6398 = vmul.f32 %v6323, %v6369
      %v6399 = vmul.f32 %v6328, %v6369
      %v6400 = vmul.f32 %v6333, %v6369
      %v6401 = vmul.f32 %v6338, %v6369
      %v6402 = vmul.f32 %v6343, %v6369
      %v6403 = vmul.f32 %v6348, %v6369
      %v6404 = vmul.f32 %v6353, %v6369
      %v6405 = vmul.f32 %v6358, %v6369
      %v6406 = vmul.f32 %v6363, %v6369
      %v6407 = vadd.f32 %v6111, %v6371
      %v6408 = vadd.f32 %v6112, %v6372
      %v6409 = vadd.f32 %v6113, %v6373
      %v6410 = vadd.f32 %v6114, %v6374
      %v6411 = vadd.f32 %v6115, %v6375
      %v6412 = vadd.f32 %v6116, %v6376
      %v6413 = vadd.f32 %v6117, %v6377
      %v6414 = vadd.f32 %v6118, %v6378
      %v6415 = vadd.f32 %v6119, %v6379
      %v6416 = vadd.f32 %v6120, %v6380
      %v6417 = vadd.f32 %v6121, %v6381
      %v6418 = vadd.f32 %v6122, %v6382
      %v6419 = vadd.f32 %v6123, %v6383
      %v6420 = vadd.f32 %v6124, %v6384
      %v6421 = vadd.f32 %v6125, %v6385
      %v6422 = vadd.f32 %v6126, %v6386
      %v6423 = vadd.f32 %v6127, %v6387
      %v6424 = vadd.f32 %v6128, %v6388
      %v6425 = vadd.f32 %v6129, %v6389
      %v6426 = vadd.f32 %v6130, %v6390
      %v6427 = vadd.f32 %v6131, %v6391
      %v6428 = vadd.f32 %v6132, %v6392
      %v6429 = vadd.f32 %v6133, %v6393
      %v6430 = vadd.f32 %v6134, %v6394
      %v6431 = vadd.f32 %v6135, %v6395
      %v6432 = vadd.f32 %v6136, %v6396
      %v6433 = vadd.f32 %v6137, %v6397
      %v6434 = vadd.f32 %v6138, %v6398
      %v6435 = vadd.f32 %v6139, %v6399
      %v6436 = vadd.f32 %v6140, %v6400
      %v6437 = vadd.f32 %v6141, %v6401
      %v6438 = vadd.f32 %v6142, %v6402
      %v6439 = vadd.f32 %v6143, %v6403
      %v6440 = vadd.f32 %v6144, %v6404
      %v6441 = vadd.f32 %v6145, %v6405
      %v6442 = vadd.f32 %v6146, %v6406
      %v6443 = vld [vmem:[%s5554 + $0x12] sm:$0xff]
      %v6444 = vld [vmem:[%s5554 + $0x1a] sm:$0xff]
      %v6445 = vld [vmem:[%s5554 + $0x22] sm:$0xff]
      %v6446 = vld [vmem:[%s5554 + $0x2a] sm:$0xff]
      %v6447 = vld [vmem:[%s5554 + $0x32] sm:$0xff]
      %v6448 = vld [vmem:[%s5554 + $0x3a] sm:$0xff]
      %v6449 = vld [vmem:[%s5554 + $0x42] sm:$0xff]
      %v6450 = vld [vmem:[%s5554 + $0x4a] sm:$0xff]
      %v6451 = vld [vmem:[%s5554 + $0x52] sm:$0xff]
      %v6452 = vld [vmem:[%s5554 + $0x5a] sm:$0xff]
      %v6453 = vld [vmem:[%s5554 + $0x62] sm:$0xff]
      %v6454 = vld [vmem:[%s5554 + $0x6a] sm:$0xff]
      %v6455 = vld [vmem:[%s5554 + $0x72] sm:$0xff]
      %v6456 = vld [vmem:[%s5554 + $0x7a] sm:$0xff]
      %v6457 = vld [vmem:[%s5554 + $0x82] sm:$0xff]
      %v6458 = vld [vmem:[%s5554 + $0x8a] sm:$0xff]
      %v6459 = vld [vmem:[%s5554 + $0x92] sm:$0xff]
      %v6460 = vld [vmem:[%s5554 + $0x9a] sm:$0xff]
      %v6461 = vld [vmem:[%s5554 + $0xa2] sm:$0xff]
      %v6462 = vld [vmem:[%s5554 + $0xaa] sm:$0xff]
      %v6463 = vld [vmem:[%s5554 + $0xb2] sm:$0xff]
      %v6464 = vld [vmem:[%s5554 + $0xba] sm:$0xff]
      %v6465 = vld [vmem:[%s5554 + $0xc2] sm:$0xff]
      %v6466 = vld [vmem:[%s5554 + $0xca] sm:$0xff]
      %v6467 = vld [vmem:[%s5554 + $0xd2] sm:$0xff]
      %v6468 = vld [vmem:[%s5554 + $0xda] sm:$0xff]
      %v6469 = vld [vmem:[%s5554 + $0xe2] sm:$0xff]
      %v6470 = vld [vmem:[%s5554 + $0xea] sm:$0xff]
      %v6471 = vld [vmem:[%s5554 + $0xf2] sm:$0xff]
      %v6472 = vld [vmem:[%s5554 + $0xfa] sm:$0xff]
      %v6473 = vld [vmem:[%s5554 + $0x102] sm:$0xff]
      %v6474 = vld [vmem:[%s5554 + $0x10a] sm:$0xff]
      %v6475 = vld [vmem:[%s5554 + $0x112] sm:$0xff]
      %v6476 = vld [vmem:[%s5554 + $0x11a] sm:$0xff]
      %v6477 = vld [vmem:[%s5554 + $0x122] sm:$0xff]
      %v6478 = vld [vmem:[%s5554 + $0x12a] sm:$0xff]
      %s6479 = scalar_lea.vmem %s1, 21
      %v6480 = vld [vmem:[%s6479] sm:$0x1]
      %6482 = vset.pattern.permute.xlu0 0
      %6483 = vperm.xlu0 %6482, %v6443
      %v6484 = vpop.permute.xlu0 %6483
      %6487 = vset.pattern.permute.xlu0 0
      %6488 = vperm.xlu0 %6487, %v6444
      %v6489 = vpop.permute.xlu0 %6488
      %6492 = vset.pattern.permute.xlu0 0
      %6493 = vperm.xlu0 %6492, %v6445
      %v6494 = vpop.permute.xlu0 %6493
      %6497 = vset.pattern.permute.xlu0 0
      %6498 = vperm.xlu0 %6497, %v6446
      %v6499 = vpop.permute.xlu0 %6498
      %6502 = vset.pattern.permute.xlu0 0
      %6503 = vperm.xlu0 %6502, %v6447
      %v6504 = vpop.permute.xlu0 %6503
      %6507 = vset.pattern.permute.xlu0 0
      %6508 = vperm.xlu0 %6507, %v6448
      %v6509 = vpop.permute.xlu0 %6508
      %6512 = vset.pattern.permute.xlu0 0
      %6513 = vperm.xlu0 %6512, %v6449
      %v6514 = vpop.permute.xlu0 %6513
      %6517 = vset.pattern.permute.xlu0 0
      %6518 = vperm.xlu0 %6517, %v6450
      %v6519 = vpop.permute.xlu0 %6518
      %6522 = vset.pattern.permute.xlu0 0
      %6523 = vperm.xlu0 %6522, %v6451
      %v6524 = vpop.permute.xlu0 %6523
      %6527 = vset.pattern.permute.xlu0 0
      %6528 = vperm.xlu0 %6527, %v6452
      %v6529 = vpop.permute.xlu0 %6528
      %6532 = vset.pattern.permute.xlu0 0
      %6533 = vperm.xlu0 %6532, %v6453
      %v6534 = vpop.permute.xlu0 %6533
      %6537 = vset.pattern.permute.xlu0 0
      %6538 = vperm.xlu0 %6537, %v6454
      %v6539 = vpop.permute.xlu0 %6538
      %6542 = vset.pattern.permute.xlu0 0
      %6543 = vperm.xlu0 %6542, %v6455
      %v6544 = vpop.permute.xlu0 %6543
      %6547 = vset.pattern.permute.xlu0 0
      %6548 = vperm.xlu0 %6547, %v6456
      %v6549 = vpop.permute.xlu0 %6548
      %6552 = vset.pattern.permute.xlu0 0
      %6553 = vperm.xlu0 %6552, %v6457
      %v6554 = vpop.permute.xlu0 %6553
      %6557 = vset.pattern.permute.xlu0 0
      %6558 = vperm.xlu0 %6557, %v6458
      %v6559 = vpop.permute.xlu0 %6558
      %6562 = vset.pattern.permute.xlu0 0
      %6563 = vperm.xlu0 %6562, %v6459
      %v6564 = vpop.permute.xlu0 %6563
      %6567 = vset.pattern.permute.xlu0 0
      %6568 = vperm.xlu0 %6567, %v6460
      %v6569 = vpop.permute.xlu0 %6568
      %6572 = vset.pattern.permute.xlu0 0
      %6573 = vperm.xlu0 %6572, %v6461
      %v6574 = vpop.permute.xlu0 %6573
      %6577 = vset.pattern.permute.xlu0 0
      %6578 = vperm.xlu0 %6577, %v6462
      %v6579 = vpop.permute.xlu0 %6578
      %6582 = vset.pattern.permute.xlu0 0
      %6583 = vperm.xlu0 %6582, %v6463
      %v6584 = vpop.permute.xlu0 %6583
      %6587 = vset.pattern.permute.xlu0 0
      %6588 = vperm.xlu0 %6587, %v6464
      %v6589 = vpop.permute.xlu0 %6588
      %6592 = vset.pattern.permute.xlu0 0
      %6593 = vperm.xlu0 %6592, %v6465
      %v6594 = vpop.permute.xlu0 %6593
      %6597 = vset.pattern.permute.xlu0 0
      %6598 = vperm.xlu0 %6597, %v6466
      %v6599 = vpop.permute.xlu0 %6598
      %6602 = vset.pattern.permute.xlu0 0
      %6603 = vperm.xlu0 %6602, %v6467
      %v6604 = vpop.permute.xlu0 %6603
      %6607 = vset.pattern.permute.xlu0 0
      %6608 = vperm.xlu0 %6607, %v6468
      %v6609 = vpop.permute.xlu0 %6608
      %6612 = vset.pattern.permute.xlu0 0
      %6613 = vperm.xlu0 %6612, %v6469
      %v6614 = vpop.permute.xlu0 %6613
      %6617 = vset.pattern.permute.xlu0 0
      %6618 = vperm.xlu0 %6617, %v6470
      %v6619 = vpop.permute.xlu0 %6618
      %6622 = vset.pattern.permute.xlu0 0
      %6623 = vperm.xlu0 %6622, %v6471
      %v6624 = vpop.permute.xlu0 %6623
      %6627 = vset.pattern.permute.xlu0 0
      %6628 = vperm.xlu0 %6627, %v6472
      %v6629 = vpop.permute.xlu0 %6628
      %6632 = vset.pattern.permute.xlu0 0
      %6633 = vperm.xlu0 %6632, %v6473
      %v6634 = vpop.permute.xlu0 %6633
      %6637 = vset.pattern.permute.xlu0 0
      %6638 = vperm.xlu0 %6637, %v6474
      %v6639 = vpop.permute.xlu0 %6638
      %6642 = vset.pattern.permute.xlu0 0
      %6643 = vperm.xlu0 %6642, %v6475
      %v6644 = vpop.permute.xlu0 %6643
      %6647 = vset.pattern.permute.xlu0 0
      %6648 = vperm.xlu0 %6647, %v6476
      %v6649 = vpop.permute.xlu0 %6648
      %6652 = vset.pattern.permute.xlu0 0
      %6653 = vperm.xlu0 %6652, %v6477
      %v6654 = vpop.permute.xlu0 %6653
      %6657 = vset.pattern.permute.xlu0 0
      %6658 = vperm.xlu0 %6657, %v6478
      %v6659 = vpop.permute.xlu0 %6658
      %v6662 = vlaneseq
      %v6663 = vshrl.u32 %v6662, 7
      %v6664 = vsub.s32 0, %v6663
      %v6665 = vrot.slane %v6480, %v6664
      %v6667 = vmul.f32 %v6484, %v6665
      %v6668 = vmul.f32 %v6489, %v6665
      %v6669 = vmul.f32 %v6494, %v6665
      %v6670 = vmul.f32 %v6499, %v6665
      %v6671 = vmul.f32 %v6504, %v6665
      %v6672 = vmul.f32 %v6509, %v6665
      %v6673 = vmul.f32 %v6514, %v6665
      %v6674 = vmul.f32 %v6519, %v6665
      %v6675 = vmul.f32 %v6524, %v6665
      %v6676 = vmul.f32 %v6529, %v6665
      %v6677 = vmul.f32 %v6534, %v6665
      %v6678 = vmul.f32 %v6539, %v6665
      %v6679 = vmul.f32 %v6544, %v6665
      %v6680 = vmul.f32 %v6549, %v6665
      %v6681 = vmul.f32 %v6554, %v6665
      %v6682 = vmul.f32 %v6559, %v6665
      %v6683 = vmul.f32 %v6564, %v6665
      %v6684 = vmul.f32 %v6569, %v6665
      %v6685 = vmul.f32 %v6574, %v6665
      %v6686 = vmul.f32 %v6579, %v6665
      %v6687 = vmul.f32 %v6584, %v6665
      %v6688 = vmul.f32 %v6589, %v6665
      %v6689 = vmul.f32 %v6594, %v6665
      %v6690 = vmul.f32 %v6599, %v6665
      %v6691 = vmul.f32 %v6604, %v6665
      %v6692 = vmul.f32 %v6609, %v6665
      %v6693 = vmul.f32 %v6614, %v6665
      %v6694 = vmul.f32 %v6619, %v6665
      %v6695 = vmul.f32 %v6624, %v6665
      %v6696 = vmul.f32 %v6629, %v6665
      %v6697 = vmul.f32 %v6634, %v6665
      %v6698 = vmul.f32 %v6639, %v6665
      %v6699 = vmul.f32 %v6644, %v6665
      %v6700 = vmul.f32 %v6649, %v6665
      %v6701 = vmul.f32 %v6654, %v6665
      %v6702 = vmul.f32 %v6659, %v6665
      %v6703 = vadd.f32 %v6407, %v6667
      %v6704 = vadd.f32 %v6408, %v6668
      %v6705 = vadd.f32 %v6409, %v6669
      %v6706 = vadd.f32 %v6410, %v6670
      %v6707 = vadd.f32 %v6411, %v6671
      %v6708 = vadd.f32 %v6412, %v6672
      %v6709 = vadd.f32 %v6413, %v6673
      %v6710 = vadd.f32 %v6414, %v6674
      %v6711 = vadd.f32 %v6415, %v6675
      %v6712 = vadd.f32 %v6416, %v6676
      %v6713 = vadd.f32 %v6417, %v6677
      %v6714 = vadd.f32 %v6418, %v6678
      %v6715 = vadd.f32 %v6419, %v6679
      %v6716 = vadd.f32 %v6420, %v6680
      %v6717 = vadd.f32 %v6421, %v6681
      %v6718 = vadd.f32 %v6422, %v6682
      %v6719 = vadd.f32 %v6423, %v6683
      %v6720 = vadd.f32 %v6424, %v6684
      %v6721 = vadd.f32 %v6425, %v6685
      %v6722 = vadd.f32 %v6426, %v6686
      %v6723 = vadd.f32 %v6427, %v6687
      %v6724 = vadd.f32 %v6428, %v6688
      %v6725 = vadd.f32 %v6429, %v6689
      %v6726 = vadd.f32 %v6430, %v6690
      %v6727 = vadd.f32 %v6431, %v6691
      %v6728 = vadd.f32 %v6432, %v6692
      %v6729 = vadd.f32 %v6433, %v6693
      %v6730 = vadd.f32 %v6434, %v6694
      %v6731 = vadd.f32 %v6435, %v6695
      %v6732 = vadd.f32 %v6436, %v6696
      %v6733 = vadd.f32 %v6437, %v6697
      %v6734 = vadd.f32 %v6438, %v6698
      %v6735 = vadd.f32 %v6439, %v6699
      %v6736 = vadd.f32 %v6440, %v6700
      %v6737 = vadd.f32 %v6441, %v6701
      %v6738 = vadd.f32 %v6442, %v6702
      %v6739 = vld [vmem:[%s5554 + $0x13] sm:$0xff]
      %v6740 = vld [vmem:[%s5554 + $0x1b] sm:$0xff]
      %v6741 = vld [vmem:[%s5554 + $0x23] sm:$0xff]
      %v6742 = vld [vmem:[%s5554 + $0x2b] sm:$0xff]
      %v6743 = vld [vmem:[%s5554 + $0x33] sm:$0xff]
      %v6744 = vld [vmem:[%s5554 + $0x3b] sm:$0xff]
      %v6745 = vld [vmem:[%s5554 + $0x43] sm:$0xff]
      %v6746 = vld [vmem:[%s5554 + $0x4b] sm:$0xff]
      %v6747 = vld [vmem:[%s5554 + $0x53] sm:$0xff]
      %v6748 = vld [vmem:[%s5554 + $0x5b] sm:$0xff]
      %v6749 = vld [vmem:[%s5554 + $0x63] sm:$0xff]
      %v6750 = vld [vmem:[%s5554 + $0x6b] sm:$0xff]
      %v6751 = vld [vmem:[%s5554 + $0x73] sm:$0xff]
      %v6752 = vld [vmem:[%s5554 + $0x7b] sm:$0xff]
      %v6753 = vld [vmem:[%s5554 + $0x83] sm:$0xff]
      %v6754 = vld [vmem:[%s5554 + $0x8b] sm:$0xff]
      %v6755 = vld [vmem:[%s5554 + $0x93] sm:$0xff]
      %v6756 = vld [vmem:[%s5554 + $0x9b] sm:$0xff]
      %v6757 = vld [vmem:[%s5554 + $0xa3] sm:$0xff]
      %v6758 = vld [vmem:[%s5554 + $0xab] sm:$0xff]
      %v6759 = vld [vmem:[%s5554 + $0xb3] sm:$0xff]
      %v6760 = vld [vmem:[%s5554 + $0xbb] sm:$0xff]
      %v6761 = vld [vmem:[%s5554 + $0xc3] sm:$0xff]
      %v6762 = vld [vmem:[%s5554 + $0xcb] sm:$0xff]
      %v6763 = vld [vmem:[%s5554 + $0xd3] sm:$0xff]
      %v6764 = vld [vmem:[%s5554 + $0xdb] sm:$0xff]
      %v6765 = vld [vmem:[%s5554 + $0xe3] sm:$0xff]
      %v6766 = vld [vmem:[%s5554 + $0xeb] sm:$0xff]
      %v6767 = vld [vmem:[%s5554 + $0xf3] sm:$0xff]
      %v6768 = vld [vmem:[%s5554 + $0xfb] sm:$0xff]
      %v6769 = vld [vmem:[%s5554 + $0x103] sm:$0xff]
      %v6770 = vld [vmem:[%s5554 + $0x10b] sm:$0xff]
      %v6771 = vld [vmem:[%s5554 + $0x113] sm:$0xff]
      %v6772 = vld [vmem:[%s5554 + $0x11b] sm:$0xff]
      %v6773 = vld [vmem:[%s5554 + $0x123] sm:$0xff]
      %v6774 = vld [vmem:[%s5554 + $0x12b] sm:$0xff]
      %s6775 = scalar_lea.vmem %s1, 22
      %v6776 = vld [vmem:[%s6775] sm:$0x1]
      %6778 = vset.pattern.permute.xlu0 0
      %6779 = vperm.xlu0 %6778, %v6739
      %v6780 = vpop.permute.xlu0 %6779
      %6783 = vset.pattern.permute.xlu0 0
      %6784 = vperm.xlu0 %6783, %v6740
      %v6785 = vpop.permute.xlu0 %6784
      %6788 = vset.pattern.permute.xlu0 0
      %6789 = vperm.xlu0 %6788, %v6741
      %v6790 = vpop.permute.xlu0 %6789
      %6793 = vset.pattern.permute.xlu0 0
      %6794 = vperm.xlu0 %6793, %v6742
      %v6795 = vpop.permute.xlu0 %6794
      %6798 = vset.pattern.permute.xlu0 0
      %6799 = vperm.xlu0 %6798, %v6743
      %v6800 = vpop.permute.xlu0 %6799
      %6803 = vset.pattern.permute.xlu0 0
      %6804 = vperm.xlu0 %6803, %v6744
      %v6805 = vpop.permute.xlu0 %6804
      %6808 = vset.pattern.permute.xlu0 0
      %6809 = vperm.xlu0 %6808, %v6745
      %v6810 = vpop.permute.xlu0 %6809
      %6813 = vset.pattern.permute.xlu0 0
      %6814 = vperm.xlu0 %6813, %v6746
      %v6815 = vpop.permute.xlu0 %6814
      %6818 = vset.pattern.permute.xlu0 0
      %6819 = vperm.xlu0 %6818, %v6747
      %v6820 = vpop.permute.xlu0 %6819
      %6823 = vset.pattern.permute.xlu0 0
      %6824 = vperm.xlu0 %6823, %v6748
      %v6825 = vpop.permute.xlu0 %6824
      %6828 = vset.pattern.permute.xlu0 0
      %6829 = vperm.xlu0 %6828, %v6749
      %v6830 = vpop.permute.xlu0 %6829
      %6833 = vset.pattern.permute.xlu0 0
      %6834 = vperm.xlu0 %6833, %v6750
      %v6835 = vpop.permute.xlu0 %6834
      %6838 = vset.pattern.permute.xlu0 0
      %6839 = vperm.xlu0 %6838, %v6751
      %v6840 = vpop.permute.xlu0 %6839
      %6843 = vset.pattern.permute.xlu0 0
      %6844 = vperm.xlu0 %6843, %v6752
      %v6845 = vpop.permute.xlu0 %6844
      %6848 = vset.pattern.permute.xlu0 0
      %6849 = vperm.xlu0 %6848, %v6753
      %v6850 = vpop.permute.xlu0 %6849
      %6853 = vset.pattern.permute.xlu0 0
      %6854 = vperm.xlu0 %6853, %v6754
      %v6855 = vpop.permute.xlu0 %6854
      %6858 = vset.pattern.permute.xlu0 0
      %6859 = vperm.xlu0 %6858, %v6755
      %v6860 = vpop.permute.xlu0 %6859
      %6863 = vset.pattern.permute.xlu0 0
      %6864 = vperm.xlu0 %6863, %v6756
      %v6865 = vpop.permute.xlu0 %6864
      %6868 = vset.pattern.permute.xlu0 0
      %6869 = vperm.xlu0 %6868, %v6757
      %v6870 = vpop.permute.xlu0 %6869
      %6873 = vset.pattern.permute.xlu0 0
      %6874 = vperm.xlu0 %6873, %v6758
      %v6875 = vpop.permute.xlu0 %6874
      %6878 = vset.pattern.permute.xlu0 0
      %6879 = vperm.xlu0 %6878, %v6759
      %v6880 = vpop.permute.xlu0 %6879
      %6883 = vset.pattern.permute.xlu0 0
      %6884 = vperm.xlu0 %6883, %v6760
      %v6885 = vpop.permute.xlu0 %6884
      %6888 = vset.pattern.permute.xlu0 0
      %6889 = vperm.xlu0 %6888, %v6761
      %v6890 = vpop.permute.xlu0 %6889
      %6893 = vset.pattern.permute.xlu0 0
      %6894 = vperm.xlu0 %6893, %v6762
      %v6895 = vpop.permute.xlu0 %6894
      %6898 = vset.pattern.permute.xlu0 0
      %6899 = vperm.xlu0 %6898, %v6763
      %v6900 = vpop.permute.xlu0 %6899
      %6903 = vset.pattern.permute.xlu0 0
      %6904 = vperm.xlu0 %6903, %v6764
      %v6905 = vpop.permute.xlu0 %6904
      %6908 = vset.pattern.permute.xlu0 0
      %6909 = vperm.xlu0 %6908, %v6765
      %v6910 = vpop.permute.xlu0 %6909
      %6913 = vset.pattern.permute.xlu0 0
      %6914 = vperm.xlu0 %6913, %v6766
      %v6915 = vpop.permute.xlu0 %6914
      %6918 = vset.pattern.permute.xlu0 0
      %6919 = vperm.xlu0 %6918, %v6767
      %v6920 = vpop.permute.xlu0 %6919
      %6923 = vset.pattern.permute.xlu0 0
      %6924 = vperm.xlu0 %6923, %v6768
      %v6925 = vpop.permute.xlu0 %6924
      %6928 = vset.pattern.permute.xlu0 0
      %6929 = vperm.xlu0 %6928, %v6769
      %v6930 = vpop.permute.xlu0 %6929
      %6933 = vset.pattern.permute.xlu0 0
      %6934 = vperm.xlu0 %6933, %v6770
      %v6935 = vpop.permute.xlu0 %6934
      %6938 = vset.pattern.permute.xlu0 0
      %6939 = vperm.xlu0 %6938, %v6771
      %v6940 = vpop.permute.xlu0 %6939
      %6943 = vset.pattern.permute.xlu0 0
      %6944 = vperm.xlu0 %6943, %v6772
      %v6945 = vpop.permute.xlu0 %6944
      %6948 = vset.pattern.permute.xlu0 0
      %6949 = vperm.xlu0 %6948, %v6773
      %v6950 = vpop.permute.xlu0 %6949
      %6953 = vset.pattern.permute.xlu0 0
      %6954 = vperm.xlu0 %6953, %v6774
      %v6955 = vpop.permute.xlu0 %6954
      %v6958 = vlaneseq
      %v6959 = vshrl.u32 %v6958, 7
      %v6960 = vsub.s32 0, %v6959
      %v6961 = vrot.slane %v6776, %v6960
      %v6963 = vmul.f32 %v6780, %v6961
      %v6964 = vmul.f32 %v6785, %v6961
      %v6965 = vmul.f32 %v6790, %v6961
      %v6966 = vmul.f32 %v6795, %v6961
      %v6967 = vmul.f32 %v6800, %v6961
      %v6968 = vmul.f32 %v6805, %v6961
      %v6969 = vmul.f32 %v6810, %v6961
      %v6970 = vmul.f32 %v6815, %v6961
      %v6971 = vmul.f32 %v6820, %v6961
      %v6972 = vmul.f32 %v6825, %v6961
      %v6973 = vmul.f32 %v6830, %v6961
      %v6974 = vmul.f32 %v6835, %v6961
      %v6975 = vmul.f32 %v6840, %v6961
      %v6976 = vmul.f32 %v6845, %v6961
      %v6977 = vmul.f32 %v6850, %v6961
      %v6978 = vmul.f32 %v6855, %v6961
      %v6979 = vmul.f32 %v6860, %v6961
      %v6980 = vmul.f32 %v6865, %v6961
      %v6981 = vmul.f32 %v6870, %v6961
      %v6982 = vmul.f32 %v6875, %v6961
      %v6983 = vmul.f32 %v6880, %v6961
      %v6984 = vmul.f32 %v6885, %v6961
      %v6985 = vmul.f32 %v6890, %v6961
      %v6986 = vmul.f32 %v6895, %v6961
      %v6987 = vmul.f32 %v6900, %v6961
      %v6988 = vmul.f32 %v6905, %v6961
      %v6989 = vmul.f32 %v6910, %v6961
      %v6990 = vmul.f32 %v6915, %v6961
      %v6991 = vmul.f32 %v6920, %v6961
      %v6992 = vmul.f32 %v6925, %v6961
      %v6993 = vmul.f32 %v6930, %v6961
      %v6994 = vmul.f32 %v6935, %v6961
      %v6995 = vmul.f32 %v6940, %v6961
      %v6996 = vmul.f32 %v6945, %v6961
      %v6997 = vmul.f32 %v6950, %v6961
      %v6998 = vmul.f32 %v6955, %v6961
      %v6999 = vadd.f32 %v6703, %v6963
      %v7000 = vadd.f32 %v6704, %v6964
      %v7001 = vadd.f32 %v6705, %v6965
      %v7002 = vadd.f32 %v6706, %v6966
      %v7003 = vadd.f32 %v6707, %v6967
      %v7004 = vadd.f32 %v6708, %v6968
      %v7005 = vadd.f32 %v6709, %v6969
      %v7006 = vadd.f32 %v6710, %v6970
      %v7007 = vadd.f32 %v6711, %v6971
      %v7008 = vadd.f32 %v6712, %v6972
      %v7009 = vadd.f32 %v6713, %v6973
      %v7010 = vadd.f32 %v6714, %v6974
      %v7011 = vadd.f32 %v6715, %v6975
      %v7012 = vadd.f32 %v6716, %v6976
      %v7013 = vadd.f32 %v6717, %v6977
      %v7014 = vadd.f32 %v6718, %v6978
      %v7015 = vadd.f32 %v6719, %v6979
      %v7016 = vadd.f32 %v6720, %v6980
      %v7017 = vadd.f32 %v6721, %v6981
      %v7018 = vadd.f32 %v6722, %v6982
      %v7019 = vadd.f32 %v6723, %v6983
      %v7020 = vadd.f32 %v6724, %v6984
      %v7021 = vadd.f32 %v6725, %v6985
      %v7022 = vadd.f32 %v6726, %v6986
      %v7023 = vadd.f32 %v6727, %v6987
      %v7024 = vadd.f32 %v6728, %v6988
      %v7025 = vadd.f32 %v6729, %v6989
      %v7026 = vadd.f32 %v6730, %v6990
      %v7027 = vadd.f32 %v6731, %v6991
      %v7028 = vadd.f32 %v6732, %v6992
      %v7029 = vadd.f32 %v6733, %v6993
      %v7030 = vadd.f32 %v6734, %v6994
      %v7031 = vadd.f32 %v6735, %v6995
      %v7032 = vadd.f32 %v6736, %v6996
      %v7033 = vadd.f32 %v6737, %v6997
      %v7034 = vadd.f32 %v6738, %v6998
      %v7035 = vld [vmem:[%s5554 + $0x14] sm:$0xff]
      %v7036 = vld [vmem:[%s5554 + $0x1c] sm:$0xff]
      %v7037 = vld [vmem:[%s5554 + $0x24] sm:$0xff]
      %v7038 = vld [vmem:[%s5554 + $0x2c] sm:$0xff]
      %v7039 = vld [vmem:[%s5554 + $0x34] sm:$0xff]
      %v7040 = vld [vmem:[%s5554 + $0x3c] sm:$0xff]
      %v7041 = vld [vmem:[%s5554 + $0x44] sm:$0xff]
      %v7042 = vld [vmem:[%s5554 + $0x4c] sm:$0xff]
      %v7043 = vld [vmem:[%s5554 + $0x54] sm:$0xff]
      %v7044 = vld [vmem:[%s5554 + $0x5c] sm:$0xff]
      %v7045 = vld [vmem:[%s5554 + $0x64] sm:$0xff]
      %v7046 = vld [vmem:[%s5554 + $0x6c] sm:$0xff]
      %v7047 = vld [vmem:[%s5554 + $0x74] sm:$0xff]
      %v7048 = vld [vmem:[%s5554 + $0x7c] sm:$0xff]
      %v7049 = vld [vmem:[%s5554 + $0x84] sm:$0xff]
      %v7050 = vld [vmem:[%s5554 + $0x8c] sm:$0xff]
      %v7051 = vld [vmem:[%s5554 + $0x94] sm:$0xff]
      %v7052 = vld [vmem:[%s5554 + $0x9c] sm:$0xff]
      %v7053 = vld [vmem:[%s5554 + $0xa4] sm:$0xff]
      %v7054 = vld [vmem:[%s5554 + $0xac] sm:$0xff]
      %v7055 = vld [vmem:[%s5554 + $0xb4] sm:$0xff]
      %v7056 = vld [vmem:[%s5554 + $0xbc] sm:$0xff]
      %v7057 = vld [vmem:[%s5554 + $0xc4] sm:$0xff]
      %v7058 = vld [vmem:[%s5554 + $0xcc] sm:$0xff]
      %v7059 = vld [vmem:[%s5554 + $0xd4] sm:$0xff]
      %v7060 = vld [vmem:[%s5554 + $0xdc] sm:$0xff]
      %v7061 = vld [vmem:[%s5554 + $0xe4] sm:$0xff]
      %v7062 = vld [vmem:[%s5554 + $0xec] sm:$0xff]
      %v7063 = vld [vmem:[%s5554 + $0xf4] sm:$0xff]
      %v7064 = vld [vmem:[%s5554 + $0xfc] sm:$0xff]
      %v7065 = vld [vmem:[%s5554 + $0x104] sm:$0xff]
      %v7066 = vld [vmem:[%s5554 + $0x10c] sm:$0xff]
      %v7067 = vld [vmem:[%s5554 + $0x114] sm:$0xff]
      %v7068 = vld [vmem:[%s5554 + $0x11c] sm:$0xff]
      %v7069 = vld [vmem:[%s5554 + $0x124] sm:$0xff]
      %v7070 = vld [vmem:[%s5554 + $0x12c] sm:$0xff]
      %s7071 = scalar_lea.vmem %s1, 23
      %v7072 = vld [vmem:[%s7071] sm:$0x1]
      %7074 = vset.pattern.permute.xlu0 0
      %7075 = vperm.xlu0 %7074, %v7035
      %v7076 = vpop.permute.xlu0 %7075
      %7079 = vset.pattern.permute.xlu0 0
      %7080 = vperm.xlu0 %7079, %v7036
      %v7081 = vpop.permute.xlu0 %7080
      %7084 = vset.pattern.permute.xlu0 0
      %7085 = vperm.xlu0 %7084, %v7037
      %v7086 = vpop.permute.xlu0 %7085
      %7089 = vset.pattern.permute.xlu0 0
      %7090 = vperm.xlu0 %7089, %v7038
      %v7091 = vpop.permute.xlu0 %7090
      %7094 = vset.pattern.permute.xlu0 0
      %7095 = vperm.xlu0 %7094, %v7039
      %v7096 = vpop.permute.xlu0 %7095
      %7099 = vset.pattern.permute.xlu0 0
      %7100 = vperm.xlu0 %7099, %v7040
      %v7101 = vpop.permute.xlu0 %7100
      %7104 = vset.pattern.permute.xlu0 0
      %7105 = vperm.xlu0 %7104, %v7041
      %v7106 = vpop.permute.xlu0 %7105
      %7109 = vset.pattern.permute.xlu0 0
      %7110 = vperm.xlu0 %7109, %v7042
      %v7111 = vpop.permute.xlu0 %7110
      %7114 = vset.pattern.permute.xlu0 0
      %7115 = vperm.xlu0 %7114, %v7043
      %v7116 = vpop.permute.xlu0 %7115
      %7119 = vset.pattern.permute.xlu0 0
      %7120 = vperm.xlu0 %7119, %v7044
      %v7121 = vpop.permute.xlu0 %7120
      %7124 = vset.pattern.permute.xlu0 0
      %7125 = vperm.xlu0 %7124, %v7045
      %v7126 = vpop.permute.xlu0 %7125
      %7129 = vset.pattern.permute.xlu0 0
      %7130 = vperm.xlu0 %7129, %v7046
      %v7131 = vpop.permute.xlu0 %7130
      %7134 = vset.pattern.permute.xlu0 0
      %7135 = vperm.xlu0 %7134, %v7047
      %v7136 = vpop.permute.xlu0 %7135
      %7139 = vset.pattern.permute.xlu0 0
      %7140 = vperm.xlu0 %7139, %v7048
      %v7141 = vpop.permute.xlu0 %7140
      %7144 = vset.pattern.permute.xlu0 0
      %7145 = vperm.xlu0 %7144, %v7049
      %v7146 = vpop.permute.xlu0 %7145
      %7149 = vset.pattern.permute.xlu0 0
      %7150 = vperm.xlu0 %7149, %v7050
      %v7151 = vpop.permute.xlu0 %7150
      %7154 = vset.pattern.permute.xlu0 0
      %7155 = vperm.xlu0 %7154, %v7051
      %v7156 = vpop.permute.xlu0 %7155
      %7159 = vset.pattern.permute.xlu0 0
      %7160 = vperm.xlu0 %7159, %v7052
      %v7161 = vpop.permute.xlu0 %7160
      %7164 = vset.pattern.permute.xlu0 0
      %7165 = vperm.xlu0 %7164, %v7053
      %v7166 = vpop.permute.xlu0 %7165
      %7169 = vset.pattern.permute.xlu0 0
      %7170 = vperm.xlu0 %7169, %v7054
      %v7171 = vpop.permute.xlu0 %7170
      %7174 = vset.pattern.permute.xlu0 0
      %7175 = vperm.xlu0 %7174, %v7055
      %v7176 = vpop.permute.xlu0 %7175
      %7179 = vset.pattern.permute.xlu0 0
      %7180 = vperm.xlu0 %7179, %v7056
      %v7181 = vpop.permute.xlu0 %7180
      %7184 = vset.pattern.permute.xlu0 0
      %7185 = vperm.xlu0 %7184, %v7057
      %v7186 = vpop.permute.xlu0 %7185
      %7189 = vset.pattern.permute.xlu0 0
      %7190 = vperm.xlu0 %7189, %v7058
      %v7191 = vpop.permute.xlu0 %7190
      %7194 = vset.pattern.permute.xlu0 0
      %7195 = vperm.xlu0 %7194, %v7059
      %v7196 = vpop.permute.xlu0 %7195
      %7199 = vset.pattern.permute.xlu0 0
      %7200 = vperm.xlu0 %7199, %v7060
      %v7201 = vpop.permute.xlu0 %7200
      %7204 = vset.pattern.permute.xlu0 0
      %7205 = vperm.xlu0 %7204, %v7061
      %v7206 = vpop.permute.xlu0 %7205
      %7209 = vset.pattern.permute.xlu0 0
      %7210 = vperm.xlu0 %7209, %v7062
      %v7211 = vpop.permute.xlu0 %7210
      %7214 = vset.pattern.permute.xlu0 0
      %7215 = vperm.xlu0 %7214, %v7063
      %v7216 = vpop.permute.xlu0 %7215
      %7219 = vset.pattern.permute.xlu0 0
      %7220 = vperm.xlu0 %7219, %v7064
      %v7221 = vpop.permute.xlu0 %7220
      %7224 = vset.pattern.permute.xlu0 0
      %7225 = vperm.xlu0 %7224, %v7065
      %v7226 = vpop.permute.xlu0 %7225
      %7229 = vset.pattern.permute.xlu0 0
      %7230 = vperm.xlu0 %7229, %v7066
      %v7231 = vpop.permute.xlu0 %7230
      %7234 = vset.pattern.permute.xlu0 0
      %7235 = vperm.xlu0 %7234, %v7067
      %v7236 = vpop.permute.xlu0 %7235
      %7239 = vset.pattern.permute.xlu0 0
      %7240 = vperm.xlu0 %7239, %v7068
      %v7241 = vpop.permute.xlu0 %7240
      %7244 = vset.pattern.permute.xlu0 0
      %7245 = vperm.xlu0 %7244, %v7069
      %v7246 = vpop.permute.xlu0 %7245
      %7249 = vset.pattern.permute.xlu0 0
      %7250 = vperm.xlu0 %7249, %v7070
      %v7251 = vpop.permute.xlu0 %7250
      %v7254 = vlaneseq
      %v7255 = vshrl.u32 %v7254, 7
      %v7256 = vsub.s32 0, %v7255
      %v7257 = vrot.slane %v7072, %v7256
      %v7259 = vmul.f32 %v7076, %v7257
      %v7260 = vmul.f32 %v7081, %v7257
      %v7261 = vmul.f32 %v7086, %v7257
      %v7262 = vmul.f32 %v7091, %v7257
      %v7263 = vmul.f32 %v7096, %v7257
      %v7264 = vmul.f32 %v7101, %v7257
      %v7265 = vmul.f32 %v7106, %v7257
      %v7266 = vmul.f32 %v7111, %v7257
      %v7267 = vmul.f32 %v7116, %v7257
      %v7268 = vmul.f32 %v7121, %v7257
      %v7269 = vmul.f32 %v7126, %v7257
      %v7270 = vmul.f32 %v7131, %v7257
      %v7271 = vmul.f32 %v7136, %v7257
      %v7272 = vmul.f32 %v7141, %v7257
      %v7273 = vmul.f32 %v7146, %v7257
      %v7274 = vmul.f32 %v7151, %v7257
      %v7275 = vmul.f32 %v7156, %v7257
      %v7276 = vmul.f32 %v7161, %v7257
      %v7277 = vmul.f32 %v7166, %v7257
      %v7278 = vmul.f32 %v7171, %v7257
      %v7279 = vmul.f32 %v7176, %v7257
      %v7280 = vmul.f32 %v7181, %v7257
      %v7281 = vmul.f32 %v7186, %v7257
      %v7282 = vmul.f32 %v7191, %v7257
      %v7283 = vmul.f32 %v7196, %v7257
      %v7284 = vmul.f32 %v7201, %v7257
      %v7285 = vmul.f32 %v7206, %v7257
      %v7286 = vmul.f32 %v7211, %v7257
      %v7287 = vmul.f32 %v7216, %v7257
      %v7288 = vmul.f32 %v7221, %v7257
      %v7289 = vmul.f32 %v7226, %v7257
      %v7290 = vmul.f32 %v7231, %v7257
      %v7291 = vmul.f32 %v7236, %v7257
      %v7292 = vmul.f32 %v7241, %v7257
      %v7293 = vmul.f32 %v7246, %v7257
      %v7294 = vmul.f32 %v7251, %v7257
      %v7295 = vadd.f32 %v6999, %v7259
      %v7296 = vadd.f32 %v7000, %v7260
      %v7297 = vadd.f32 %v7001, %v7261
      %v7298 = vadd.f32 %v7002, %v7262
      %v7299 = vadd.f32 %v7003, %v7263
      %v7300 = vadd.f32 %v7004, %v7264
      %v7301 = vadd.f32 %v7005, %v7265
      %v7302 = vadd.f32 %v7006, %v7266
      %v7303 = vadd.f32 %v7007, %v7267
      %v7304 = vadd.f32 %v7008, %v7268
      %v7305 = vadd.f32 %v7009, %v7269
      %v7306 = vadd.f32 %v7010, %v7270
      %v7307 = vadd.f32 %v7011, %v7271
      %v7308 = vadd.f32 %v7012, %v7272
      %v7309 = vadd.f32 %v7013, %v7273
      %v7310 = vadd.f32 %v7014, %v7274
      %v7311 = vadd.f32 %v7015, %v7275
      %v7312 = vadd.f32 %v7016, %v7276
      %v7313 = vadd.f32 %v7017, %v7277
      %v7314 = vadd.f32 %v7018, %v7278
      %v7315 = vadd.f32 %v7019, %v7279
      %v7316 = vadd.f32 %v7020, %v7280
      %v7317 = vadd.f32 %v7021, %v7281
      %v7318 = vadd.f32 %v7022, %v7282
      %v7319 = vadd.f32 %v7023, %v7283
      %v7320 = vadd.f32 %v7024, %v7284
      %v7321 = vadd.f32 %v7025, %v7285
      %v7322 = vadd.f32 %v7026, %v7286
      %v7323 = vadd.f32 %v7027, %v7287
      %v7324 = vadd.f32 %v7028, %v7288
      %v7325 = vadd.f32 %v7029, %v7289
      %v7326 = vadd.f32 %v7030, %v7290
      %v7327 = vadd.f32 %v7031, %v7291
      %v7328 = vadd.f32 %v7032, %v7292
      %v7329 = vadd.f32 %v7033, %v7293
      %v7330 = vadd.f32 %v7034, %v7294
      %v7331 = vld [vmem:[%s5554 + $0x24] sm:$0xff]
      %v7332 = vld [vmem:[%s5554 + $0x2c] sm:$0xff]
      %v7333 = vld [vmem:[%s5554 + $0x34] sm:$0xff]
      %v7334 = vld [vmem:[%s5554 + $0x3c] sm:$0xff]
      %v7335 = vld [vmem:[%s5554 + $0x44] sm:$0xff]
      %v7336 = vld [vmem:[%s5554 + $0x4c] sm:$0xff]
      %v7337 = vld [vmem:[%s5554 + $0x54] sm:$0xff]
      %v7338 = vld [vmem:[%s5554 + $0x5c] sm:$0xff]
      %v7339 = vld [vmem:[%s5554 + $0x64] sm:$0xff]
      %v7340 = vld [vmem:[%s5554 + $0x6c] sm:$0xff]
      %v7341 = vld [vmem:[%s5554 + $0x74] sm:$0xff]
      %v7342 = vld [vmem:[%s5554 + $0x7c] sm:$0xff]
      %v7343 = vld [vmem:[%s5554 + $0x84] sm:$0xff]
      %v7344 = vld [vmem:[%s5554 + $0x8c] sm:$0xff]
      %v7345 = vld [vmem:[%s5554 + $0x94] sm:$0xff]
      %v7346 = vld [vmem:[%s5554 + $0x9c] sm:$0xff]
      %v7347 = vld [vmem:[%s5554 + $0xa4] sm:$0xff]
      %v7348 = vld [vmem:[%s5554 + $0xac] sm:$0xff]
      %v7349 = vld [vmem:[%s5554 + $0xb4] sm:$0xff]
      %v7350 = vld [vmem:[%s5554 + $0xbc] sm:$0xff]
      %v7351 = vld [vmem:[%s5554 + $0xc4] sm:$0xff]
      %v7352 = vld [vmem:[%s5554 + $0xcc] sm:$0xff]
      %v7353 = vld [vmem:[%s5554 + $0xd4] sm:$0xff]
      %v7354 = vld [vmem:[%s5554 + $0xdc] sm:$0xff]
      %v7355 = vld [vmem:[%s5554 + $0xe4] sm:$0xff]
      %v7356 = vld [vmem:[%s5554 + $0xec] sm:$0xff]
      %v7357 = vld [vmem:[%s5554 + $0xf4] sm:$0xff]
      %v7358 = vld [vmem:[%s5554 + $0xfc] sm:$0xff]
      %v7359 = vld [vmem:[%s5554 + $0x104] sm:$0xff]
      %v7360 = vld [vmem:[%s5554 + $0x10c] sm:$0xff]
      %v7361 = vld [vmem:[%s5554 + $0x114] sm:$0xff]
      %v7362 = vld [vmem:[%s5554 + $0x11c] sm:$0xff]
      %v7363 = vld [vmem:[%s5554 + $0x124] sm:$0xff]
      %v7364 = vld [vmem:[%s5554 + $0x12c] sm:$0xff]
      %v7365 = vld [vmem:[%s5554 + $0x134] sm:$0xff]
      %v7366 = vld [vmem:[%s5554 + $0x13c] sm:$0xff]
      %s7367 = scalar_lea.vmem %s1, 24
      %v7368 = vld [vmem:[%s7367] sm:$0x1]
      %7370 = vset.pattern.permute.xlu0 0
      %7371 = vperm.xlu0 %7370, %v7331
      %v7372 = vpop.permute.xlu0 %7371
      %7375 = vset.pattern.permute.xlu0 0
      %7376 = vperm.xlu0 %7375, %v7332
      %v7377 = vpop.permute.xlu0 %7376
      %7380 = vset.pattern.permute.xlu0 0
      %7381 = vperm.xlu0 %7380, %v7333
      %v7382 = vpop.permute.xlu0 %7381
      %7385 = vset.pattern.permute.xlu0 0
      %7386 = vperm.xlu0 %7385, %v7334
      %v7387 = vpop.permute.xlu0 %7386
      %7390 = vset.pattern.permute.xlu0 0
      %7391 = vperm.xlu0 %7390, %v7335
      %v7392 = vpop.permute.xlu0 %7391
      %7395 = vset.pattern.permute.xlu0 0
      %7396 = vperm.xlu0 %7395, %v7336
      %v7397 = vpop.permute.xlu0 %7396
      %7400 = vset.pattern.permute.xlu0 0
      %7401 = vperm.xlu0 %7400, %v7337
      %v7402 = vpop.permute.xlu0 %7401
      %7405 = vset.pattern.permute.xlu0 0
      %7406 = vperm.xlu0 %7405, %v7338
      %v7407 = vpop.permute.xlu0 %7406
      %7410 = vset.pattern.permute.xlu0 0
      %7411 = vperm.xlu0 %7410, %v7339
      %v7412 = vpop.permute.xlu0 %7411
      %7415 = vset.pattern.permute.xlu0 0
      %7416 = vperm.xlu0 %7415, %v7340
      %v7417 = vpop.permute.xlu0 %7416
      %7420 = vset.pattern.permute.xlu0 0
      %7421 = vperm.xlu0 %7420, %v7341
      %v7422 = vpop.permute.xlu0 %7421
      %7425 = vset.pattern.permute.xlu0 0
      %7426 = vperm.xlu0 %7425, %v7342
      %v7427 = vpop.permute.xlu0 %7426
      %7430 = vset.pattern.permute.xlu0 0
      %7431 = vperm.xlu0 %7430, %v7343
      %v7432 = vpop.permute.xlu0 %7431
      %7435 = vset.pattern.permute.xlu0 0
      %7436 = vperm.xlu0 %7435, %v7344
      %v7437 = vpop.permute.xlu0 %7436
      %7440 = vset.pattern.permute.xlu0 0
      %7441 = vperm.xlu0 %7440, %v7345
      %v7442 = vpop.permute.xlu0 %7441
      %7445 = vset.pattern.permute.xlu0 0
      %7446 = vperm.xlu0 %7445, %v7346
      %v7447 = vpop.permute.xlu0 %7446
      %7450 = vset.pattern.permute.xlu0 0
      %7451 = vperm.xlu0 %7450, %v7347
      %v7452 = vpop.permute.xlu0 %7451
      %7455 = vset.pattern.permute.xlu0 0
      %7456 = vperm.xlu0 %7455, %v7348
      %v7457 = vpop.permute.xlu0 %7456
      %7460 = vset.pattern.permute.xlu0 0
      %7461 = vperm.xlu0 %7460, %v7349
      %v7462 = vpop.permute.xlu0 %7461
      %7465 = vset.pattern.permute.xlu0 0
      %7466 = vperm.xlu0 %7465, %v7350
      %v7467 = vpop.permute.xlu0 %7466
      %7470 = vset.pattern.permute.xlu0 0
      %7471 = vperm.xlu0 %7470, %v7351
      %v7472 = vpop.permute.xlu0 %7471
      %7475 = vset.pattern.permute.xlu0 0
      %7476 = vperm.xlu0 %7475, %v7352
      %v7477 = vpop.permute.xlu0 %7476
      %7480 = vset.pattern.permute.xlu0 0
      %7481 = vperm.xlu0 %7480, %v7353
      %v7482 = vpop.permute.xlu0 %7481
      %7485 = vset.pattern.permute.xlu0 0
      %7486 = vperm.xlu0 %7485, %v7354
      %v7487 = vpop.permute.xlu0 %7486
      %7490 = vset.pattern.permute.xlu0 0
      %7491 = vperm.xlu0 %7490, %v7355
      %v7492 = vpop.permute.xlu0 %7491
      %7495 = vset.pattern.permute.xlu0 0
      %7496 = vperm.xlu0 %7495, %v7356
      %v7497 = vpop.permute.xlu0 %7496
      %7500 = vset.pattern.permute.xlu0 0
      %7501 = vperm.xlu0 %7500, %v7357
      %v7502 = vpop.permute.xlu0 %7501
      %7505 = vset.pattern.permute.xlu0 0
      %7506 = vperm.xlu0 %7505, %v7358
      %v7507 = vpop.permute.xlu0 %7506
      %7510 = vset.pattern.permute.xlu0 0
      %7511 = vperm.xlu0 %7510, %v7359
      %v7512 = vpop.permute.xlu0 %7511
      %7515 = vset.pattern.permute.xlu0 0
      %7516 = vperm.xlu0 %7515, %v7360
      %v7517 = vpop.permute.xlu0 %7516
      %7520 = vset.pattern.permute.xlu0 0
      %7521 = vperm.xlu0 %7520, %v7361
      %v7522 = vpop.permute.xlu0 %7521
      %7525 = vset.pattern.permute.xlu0 0
      %7526 = vperm.xlu0 %7525, %v7362
      %v7527 = vpop.permute.xlu0 %7526
      %7530 = vset.pattern.permute.xlu0 0
      %7531 = vperm.xlu0 %7530, %v7363
      %v7532 = vpop.permute.xlu0 %7531
      %7535 = vset.pattern.permute.xlu0 0
      %7536 = vperm.xlu0 %7535, %v7364
      %v7537 = vpop.permute.xlu0 %7536
      %7540 = vset.pattern.permute.xlu0 0
      %7541 = vperm.xlu0 %7540, %v7365
      %v7542 = vpop.permute.xlu0 %7541
      %7545 = vset.pattern.permute.xlu0 0
      %7546 = vperm.xlu0 %7545, %v7366
      %v7547 = vpop.permute.xlu0 %7546
      %v7550 = vlaneseq
      %v7551 = vshrl.u32 %v7550, 7
      %v7552 = vsub.s32 0, %v7551
      %v7553 = vrot.slane %v7368, %v7552
      %v7555 = vmul.f32 %v7372, %v7553
      %v7556 = vmul.f32 %v7377, %v7553
      %v7557 = vmul.f32 %v7382, %v7553
      %v7558 = vmul.f32 %v7387, %v7553
      %v7559 = vmul.f32 %v7392, %v7553
      %v7560 = vmul.f32 %v7397, %v7553
      %v7561 = vmul.f32 %v7402, %v7553
      %v7562 = vmul.f32 %v7407, %v7553
      %v7563 = vmul.f32 %v7412, %v7553
      %v7564 = vmul.f32 %v7417, %v7553
      %v7565 = vmul.f32 %v7422, %v7553
      %v7566 = vmul.f32 %v7427, %v7553
      %v7567 = vmul.f32 %v7432, %v7553
      %v7568 = vmul.f32 %v7437, %v7553
      %v7569 = vmul.f32 %v7442, %v7553
      %v7570 = vmul.f32 %v7447, %v7553
      %v7571 = vmul.f32 %v7452, %v7553
      %v7572 = vmul.f32 %v7457, %v7553
      %v7573 = vmul.f32 %v7462, %v7553
      %v7574 = vmul.f32 %v7467, %v7553
      %v7575 = vmul.f32 %v7472, %v7553
      %v7576 = vmul.f32 %v7477, %v7553
      %v7577 = vmul.f32 %v7482, %v7553
      %v7578 = vmul.f32 %v7487, %v7553
      %v7579 = vmul.f32 %v7492, %v7553
      %v7580 = vmul.f32 %v7497, %v7553
      %v7581 = vmul.f32 %v7502, %v7553
      %v7582 = vmul.f32 %v7507, %v7553
      %v7583 = vmul.f32 %v7512, %v7553
      %v7584 = vmul.f32 %v7517, %v7553
      %v7585 = vmul.f32 %v7522, %v7553
      %v7586 = vmul.f32 %v7527, %v7553
      %v7587 = vmul.f32 %v7532, %v7553
      %v7588 = vmul.f32 %v7537, %v7553
      %v7589 = vmul.f32 %v7542, %v7553
      %v7590 = vmul.f32 %v7547, %v7553
      %v7591 = vadd.f32 %v7295, %v7555
      %v7592 = vadd.f32 %v7296, %v7556
      %v7593 = vadd.f32 %v7297, %v7557
      %v7594 = vadd.f32 %v7298, %v7558
      %v7595 = vadd.f32 %v7299, %v7559
      %v7596 = vadd.f32 %v7300, %v7560
      %v7597 = vadd.f32 %v7301, %v7561
      %v7598 = vadd.f32 %v7302, %v7562
      %v7599 = vadd.f32 %v7303, %v7563
      %v7600 = vadd.f32 %v7304, %v7564
      %v7601 = vadd.f32 %v7305, %v7565
      %v7602 = vadd.f32 %v7306, %v7566
      %v7603 = vadd.f32 %v7307, %v7567
      %v7604 = vadd.f32 %v7308, %v7568
      %v7605 = vadd.f32 %v7309, %v7569
      %v7606 = vadd.f32 %v7310, %v7570
      %v7607 = vadd.f32 %v7311, %v7571
      %v7608 = vadd.f32 %v7312, %v7572
      %v7609 = vadd.f32 %v7313, %v7573
      %v7610 = vadd.f32 %v7314, %v7574
      %v7611 = vadd.f32 %v7315, %v7575
      %v7612 = vadd.f32 %v7316, %v7576
      %v7613 = vadd.f32 %v7317, %v7577
      %v7614 = vadd.f32 %v7318, %v7578
      %v7615 = vadd.f32 %v7319, %v7579
      %v7616 = vadd.f32 %v7320, %v7580
      %v7617 = vadd.f32 %v7321, %v7581
      %v7618 = vadd.f32 %v7322, %v7582
      %v7619 = vadd.f32 %v7323, %v7583
      %v7620 = vadd.f32 %v7324, %v7584
      %v7621 = vadd.f32 %v7325, %v7585
      %v7622 = vadd.f32 %v7326, %v7586
      %v7623 = vadd.f32 %v7327, %v7587
      %v7624 = vadd.f32 %v7328, %v7588
      %v7625 = vadd.f32 %v7329, %v7589
      %v7626 = vadd.f32 %v7330, %v7590
      %v7627 = vld [vmem:[%s5554 + $0x25] sm:$0xff]
      %v7628 = vld [vmem:[%s5554 + $0x2d] sm:$0xff]
      %v7629 = vld [vmem:[%s5554 + $0x35] sm:$0xff]
      %v7630 = vld [vmem:[%s5554 + $0x3d] sm:$0xff]
      %v7631 = vld [vmem:[%s5554 + $0x45] sm:$0xff]
      %v7632 = vld [vmem:[%s5554 + $0x4d] sm:$0xff]
      %v7633 = vld [vmem:[%s5554 + $0x55] sm:$0xff]
      %v7634 = vld [vmem:[%s5554 + $0x5d] sm:$0xff]
      %v7635 = vld [vmem:[%s5554 + $0x65] sm:$0xff]
      %v7636 = vld [vmem:[%s5554 + $0x6d] sm:$0xff]
      %v7637 = vld [vmem:[%s5554 + $0x75] sm:$0xff]
      %v7638 = vld [vmem:[%s5554 + $0x7d] sm:$0xff]
      %v7639 = vld [vmem:[%s5554 + $0x85] sm:$0xff]
      %v7640 = vld [vmem:[%s5554 + $0x8d] sm:$0xff]
      %v7641 = vld [vmem:[%s5554 + $0x95] sm:$0xff]
      %v7642 = vld [vmem:[%s5554 + $0x9d] sm:$0xff]
      %v7643 = vld [vmem:[%s5554 + $0xa5] sm:$0xff]
      %v7644 = vld [vmem:[%s5554 + $0xad] sm:$0xff]
      %v7645 = vld [vmem:[%s5554 + $0xb5] sm:$0xff]
      %v7646 = vld [vmem:[%s5554 + $0xbd] sm:$0xff]
      %v7647 = vld [vmem:[%s5554 + $0xc5] sm:$0xff]
      %v7648 = vld [vmem:[%s5554 + $0xcd] sm:$0xff]
      %v7649 = vld [vmem:[%s5554 + $0xd5] sm:$0xff]
      %v7650 = vld [vmem:[%s5554 + $0xdd] sm:$0xff]
      %v7651 = vld [vmem:[%s5554 + $0xe5] sm:$0xff]
      %v7652 = vld [vmem:[%s5554 + $0xed] sm:$0xff]
      %v7653 = vld [vmem:[%s5554 + $0xf5] sm:$0xff]
      %v7654 = vld [vmem:[%s5554 + $0xfd] sm:$0xff]
      %v7655 = vld [vmem:[%s5554 + $0x105] sm:$0xff]
      %v7656 = vld [vmem:[%s5554 + $0x10d] sm:$0xff]
      %v7657 = vld [vmem:[%s5554 + $0x115] sm:$0xff]
      %v7658 = vld [vmem:[%s5554 + $0x11d] sm:$0xff]
      %v7659 = vld [vmem:[%s5554 + $0x125] sm:$0xff]
      %v7660 = vld [vmem:[%s5554 + $0x12d] sm:$0xff]
      %v7661 = vld [vmem:[%s5554 + $0x135] sm:$0xff]
      %v7662 = vld [vmem:[%s5554 + $0x13d] sm:$0xff]
      %s7663 = scalar_lea.vmem %s1, 25
      %v7664 = vld [vmem:[%s7663] sm:$0x1]
      %7666 = vset.pattern.permute.xlu0 0
      %7667 = vperm.xlu0 %7666, %v7627
      %v7668 = vpop.permute.xlu0 %7667
      %7671 = vset.pattern.permute.xlu0 0
      %7672 = vperm.xlu0 %7671, %v7628
      %v7673 = vpop.permute.xlu0 %7672
      %7676 = vset.pattern.permute.xlu0 0
      %7677 = vperm.xlu0 %7676, %v7629
      %v7678 = vpop.permute.xlu0 %7677
      %7681 = vset.pattern.permute.xlu0 0
      %7682 = vperm.xlu0 %7681, %v7630
      %v7683 = vpop.permute.xlu0 %7682
      %7686 = vset.pattern.permute.xlu0 0
      %7687 = vperm.xlu0 %7686, %v7631
      %v7688 = vpop.permute.xlu0 %7687
      %7691 = vset.pattern.permute.xlu0 0
      %7692 = vperm.xlu0 %7691, %v7632
      %v7693 = vpop.permute.xlu0 %7692
      %7696 = vset.pattern.permute.xlu0 0
      %7697 = vperm.xlu0 %7696, %v7633
      %v7698 = vpop.permute.xlu0 %7697
      %7701 = vset.pattern.permute.xlu0 0
      %7702 = vperm.xlu0 %7701, %v7634
      %v7703 = vpop.permute.xlu0 %7702
      %7706 = vset.pattern.permute.xlu0 0
      %7707 = vperm.xlu0 %7706, %v7635
      %v7708 = vpop.permute.xlu0 %7707
      %7711 = vset.pattern.permute.xlu0 0
      %7712 = vperm.xlu0 %7711, %v7636
      %v7713 = vpop.permute.xlu0 %7712
      %7716 = vset.pattern.permute.xlu0 0
      %7717 = vperm.xlu0 %7716, %v7637
      %v7718 = vpop.permute.xlu0 %7717
      %7721 = vset.pattern.permute.xlu0 0
      %7722 = vperm.xlu0 %7721, %v7638
      %v7723 = vpop.permute.xlu0 %7722
      %7726 = vset.pattern.permute.xlu0 0
      %7727 = vperm.xlu0 %7726, %v7639
      %v7728 = vpop.permute.xlu0 %7727
      %7731 = vset.pattern.permute.xlu0 0
      %7732 = vperm.xlu0 %7731, %v7640
      %v7733 = vpop.permute.xlu0 %7732
      %7736 = vset.pattern.permute.xlu0 0
      %7737 = vperm.xlu0 %7736, %v7641
      %v7738 = vpop.permute.xlu0 %7737
      %7741 = vset.pattern.permute.xlu0 0
      %7742 = vperm.xlu0 %7741, %v7642
      %v7743 = vpop.permute.xlu0 %7742
      %7746 = vset.pattern.permute.xlu0 0
      %7747 = vperm.xlu0 %7746, %v7643
      %v7748 = vpop.permute.xlu0 %7747
      %7751 = vset.pattern.permute.xlu0 0
      %7752 = vperm.xlu0 %7751, %v7644
      %v7753 = vpop.permute.xlu0 %7752
      %7756 = vset.pattern.permute.xlu0 0
      %7757 = vperm.xlu0 %7756, %v7645
      %v7758 = vpop.permute.xlu0 %7757
      %7761 = vset.pattern.permute.xlu0 0
      %7762 = vperm.xlu0 %7761, %v7646
      %v7763 = vpop.permute.xlu0 %7762
      %7766 = vset.pattern.permute.xlu0 0
      %7767 = vperm.xlu0 %7766, %v7647
      %v7768 = vpop.permute.xlu0 %7767
      %7771 = vset.pattern.permute.xlu0 0
      %7772 = vperm.xlu0 %7771, %v7648
      %v7773 = vpop.permute.xlu0 %7772
      %7776 = vset.pattern.permute.xlu0 0
      %7777 = vperm.xlu0 %7776, %v7649
      %v7778 = vpop.permute.xlu0 %7777
      %7781 = vset.pattern.permute.xlu0 0
      %7782 = vperm.xlu0 %7781, %v7650
      %v7783 = vpop.permute.xlu0 %7782
      %7786 = vset.pattern.permute.xlu0 0
      %7787 = vperm.xlu0 %7786, %v7651
      %v7788 = vpop.permute.xlu0 %7787
      %7791 = vset.pattern.permute.xlu0 0
      %7792 = vperm.xlu0 %7791, %v7652
      %v7793 = vpop.permute.xlu0 %7792
      %7796 = vset.pattern.permute.xlu0 0
      %7797 = vperm.xlu0 %7796, %v7653
      %v7798 = vpop.permute.xlu0 %7797
      %7801 = vset.pattern.permute.xlu0 0
      %7802 = vperm.xlu0 %7801, %v7654
      %v7803 = vpop.permute.xlu0 %7802
      %7806 = vset.pattern.permute.xlu0 0
      %7807 = vperm.xlu0 %7806, %v7655
      %v7808 = vpop.permute.xlu0 %7807
      %7811 = vset.pattern.permute.xlu0 0
      %7812 = vperm.xlu0 %7811, %v7656
      %v7813 = vpop.permute.xlu0 %7812
      %7816 = vset.pattern.permute.xlu0 0
      %7817 = vperm.xlu0 %7816, %v7657
      %v7818 = vpop.permute.xlu0 %7817
      %7821 = vset.pattern.permute.xlu0 0
      %7822 = vperm.xlu0 %7821, %v7658
      %v7823 = vpop.permute.xlu0 %7822
      %7826 = vset.pattern.permute.xlu0 0
      %7827 = vperm.xlu0 %7826, %v7659
      %v7828 = vpop.permute.xlu0 %7827
      %7831 = vset.pattern.permute.xlu0 0
      %7832 = vperm.xlu0 %7831, %v7660
      %v7833 = vpop.permute.xlu0 %7832
      %7836 = vset.pattern.permute.xlu0 0
      %7837 = vperm.xlu0 %7836, %v7661
      %v7838 = vpop.permute.xlu0 %7837
      %7841 = vset.pattern.permute.xlu0 0
      %7842 = vperm.xlu0 %7841, %v7662
      %v7843 = vpop.permute.xlu0 %7842
      %v7846 = vlaneseq
      %v7847 = vshrl.u32 %v7846, 7
      %v7848 = vsub.s32 0, %v7847
      %v7849 = vrot.slane %v7664, %v7848
      %v7851 = vmul.f32 %v7668, %v7849
      %v7852 = vmul.f32 %v7673, %v7849
      %v7853 = vmul.f32 %v7678, %v7849
      %v7854 = vmul.f32 %v7683, %v7849
      %v7855 = vmul.f32 %v7688, %v7849
      %v7856 = vmul.f32 %v7693, %v7849
      %v7857 = vmul.f32 %v7698, %v7849
      %v7858 = vmul.f32 %v7703, %v7849
      %v7859 = vmul.f32 %v7708, %v7849
      %v7860 = vmul.f32 %v7713, %v7849
      %v7861 = vmul.f32 %v7718, %v7849
      %v7862 = vmul.f32 %v7723, %v7849
      %v7863 = vmul.f32 %v7728, %v7849
      %v7864 = vmul.f32 %v7733, %v7849
      %v7865 = vmul.f32 %v7738, %v7849
      %v7866 = vmul.f32 %v7743, %v7849
      %v7867 = vmul.f32 %v7748, %v7849
      %v7868 = vmul.f32 %v7753, %v7849
      %v7869 = vmul.f32 %v7758, %v7849
      %v7870 = vmul.f32 %v7763, %v7849
      %v7871 = vmul.f32 %v7768, %v7849
      %v7872 = vmul.f32 %v7773, %v7849
      %v7873 = vmul.f32 %v7778, %v7849
      %v7874 = vmul.f32 %v7783, %v7849
      %v7875 = vmul.f32 %v7788, %v7849
      %v7876 = vmul.f32 %v7793, %v7849
      %v7877 = vmul.f32 %v7798, %v7849
      %v7878 = vmul.f32 %v7803, %v7849
      %v7879 = vmul.f32 %v7808, %v7849
      %v7880 = vmul.f32 %v7813, %v7849
      %v7881 = vmul.f32 %v7818, %v7849
      %v7882 = vmul.f32 %v7823, %v7849
      %v7883 = vmul.f32 %v7828, %v7849
      %v7884 = vmul.f32 %v7833, %v7849
      %v7885 = vmul.f32 %v7838, %v7849
      %v7886 = vmul.f32 %v7843, %v7849
      %v7887 = vadd.f32 %v7591, %v7851
      %v7888 = vadd.f32 %v7592, %v7852
      %v7889 = vadd.f32 %v7593, %v7853
      %v7890 = vadd.f32 %v7594, %v7854
      %v7891 = vadd.f32 %v7595, %v7855
      %v7892 = vadd.f32 %v7596, %v7856
      %v7893 = vadd.f32 %v7597, %v7857
      %v7894 = vadd.f32 %v7598, %v7858
      %v7895 = vadd.f32 %v7599, %v7859
      %v7896 = vadd.f32 %v7600, %v7860
      %v7897 = vadd.f32 %v7601, %v7861
      %v7898 = vadd.f32 %v7602, %v7862
      %v7899 = vadd.f32 %v7603, %v7863
      %v7900 = vadd.f32 %v7604, %v7864
      %v7901 = vadd.f32 %v7605, %v7865
      %v7902 = vadd.f32 %v7606, %v7866
      %v7903 = vadd.f32 %v7607, %v7867
      %v7904 = vadd.f32 %v7608, %v7868
      %v7905 = vadd.f32 %v7609, %v7869
      %v7906 = vadd.f32 %v7610, %v7870
      %v7907 = vadd.f32 %v7611, %v7871
      %v7908 = vadd.f32 %v7612, %v7872
      %v7909 = vadd.f32 %v7613, %v7873
      %v7910 = vadd.f32 %v7614, %v7874
      %v7911 = vadd.f32 %v7615, %v7875
      %v7912 = vadd.f32 %v7616, %v7876
      %v7913 = vadd.f32 %v7617, %v7877
      %v7914 = vadd.f32 %v7618, %v7878
      %v7915 = vadd.f32 %v7619, %v7879
      %v7916 = vadd.f32 %v7620, %v7880
      %v7917 = vadd.f32 %v7621, %v7881
      %v7918 = vadd.f32 %v7622, %v7882
      %v7919 = vadd.f32 %v7623, %v7883
      %v7920 = vadd.f32 %v7624, %v7884
      %v7921 = vadd.f32 %v7625, %v7885
      %v7922 = vadd.f32 %v7626, %v7886
      %v7923 = vld [vmem:[%s5554 + $0x26] sm:$0xff]
      %v7924 = vld [vmem:[%s5554 + $0x2e] sm:$0xff]
      %v7925 = vld [vmem:[%s5554 + $0x36] sm:$0xff]
      %v7926 = vld [vmem:[%s5554 + $0x3e] sm:$0xff]
      %v7927 = vld [vmem:[%s5554 + $0x46] sm:$0xff]
      %v7928 = vld [vmem:[%s5554 + $0x4e] sm:$0xff]
      %v7929 = vld [vmem:[%s5554 + $0x56] sm:$0xff]
      %v7930 = vld [vmem:[%s5554 + $0x5e] sm:$0xff]
      %v7931 = vld [vmem:[%s5554 + $0x66] sm:$0xff]
      %v7932 = vld [vmem:[%s5554 + $0x6e] sm:$0xff]
      %v7933 = vld [vmem:[%s5554 + $0x76] sm:$0xff]
      %v7934 = vld [vmem:[%s5554 + $0x7e] sm:$0xff]
      %v7935 = vld [vmem:[%s5554 + $0x86] sm:$0xff]
      %v7936 = vld [vmem:[%s5554 + $0x8e] sm:$0xff]
      %v7937 = vld [vmem:[%s5554 + $0x96] sm:$0xff]
      %v7938 = vld [vmem:[%s5554 + $0x9e] sm:$0xff]
      %v7939 = vld [vmem:[%s5554 + $0xa6] sm:$0xff]
      %v7940 = vld [vmem:[%s5554 + $0xae] sm:$0xff]
      %v7941 = vld [vmem:[%s5554 + $0xb6] sm:$0xff]
      %v7942 = vld [vmem:[%s5554 + $0xbe] sm:$0xff]
      %v7943 = vld [vmem:[%s5554 + $0xc6] sm:$0xff]
      %v7944 = vld [vmem:[%s5554 + $0xce] sm:$0xff]
      %v7945 = vld [vmem:[%s5554 + $0xd6] sm:$0xff]
      %v7946 = vld [vmem:[%s5554 + $0xde] sm:$0xff]
      %v7947 = vld [vmem:[%s5554 + $0xe6] sm:$0xff]
      %v7948 = vld [vmem:[%s5554 + $0xee] sm:$0xff]
      %v7949 = vld [vmem:[%s5554 + $0xf6] sm:$0xff]
      %v7950 = vld [vmem:[%s5554 + $0xfe] sm:$0xff]
      %v7951 = vld [vmem:[%s5554 + $0x106] sm:$0xff]
      %v7952 = vld [vmem:[%s5554 + $0x10e] sm:$0xff]
      %v7953 = vld [vmem:[%s5554 + $0x116] sm:$0xff]
      %v7954 = vld [vmem:[%s5554 + $0x11e] sm:$0xff]
      %v7955 = vld [vmem:[%s5554 + $0x126] sm:$0xff]
      %v7956 = vld [vmem:[%s5554 + $0x12e] sm:$0xff]
      %v7957 = vld [vmem:[%s5554 + $0x136] sm:$0xff]
      %v7958 = vld [vmem:[%s5554 + $0x13e] sm:$0xff]
      %s7959 = scalar_lea.vmem %s1, 26
      %v7960 = vld [vmem:[%s7959] sm:$0x1]
      %7962 = vset.pattern.permute.xlu0 0
      %7963 = vperm.xlu0 %7962, %v7923
      %v7964 = vpop.permute.xlu0 %7963
      %7967 = vset.pattern.permute.xlu0 0
      %7968 = vperm.xlu0 %7967, %v7924
      %v7969 = vpop.permute.xlu0 %7968
      %7972 = vset.pattern.permute.xlu0 0
      %7973 = vperm.xlu0 %7972, %v7925
      %v7974 = vpop.permute.xlu0 %7973
      %7977 = vset.pattern.permute.xlu0 0
      %7978 = vperm.xlu0 %7977, %v7926
      %v7979 = vpop.permute.xlu0 %7978
      %7982 = vset.pattern.permute.xlu0 0
      %7983 = vperm.xlu0 %7982, %v7927
      %v7984 = vpop.permute.xlu0 %7983
      %7987 = vset.pattern.permute.xlu0 0
      %7988 = vperm.xlu0 %7987, %v7928
      %v7989 = vpop.permute.xlu0 %7988
      %7992 = vset.pattern.permute.xlu0 0
      %7993 = vperm.xlu0 %7992, %v7929
      %v7994 = vpop.permute.xlu0 %7993
      %7997 = vset.pattern.permute.xlu0 0
      %7998 = vperm.xlu0 %7997, %v7930
      %v7999 = vpop.permute.xlu0 %7998
      %8002 = vset.pattern.permute.xlu0 0
      %8003 = vperm.xlu0 %8002, %v7931
      %v8004 = vpop.permute.xlu0 %8003
      %8007 = vset.pattern.permute.xlu0 0
      %8008 = vperm.xlu0 %8007, %v7932
      %v8009 = vpop.permute.xlu0 %8008
      %8012 = vset.pattern.permute.xlu0 0
      %8013 = vperm.xlu0 %8012, %v7933
      %v8014 = vpop.permute.xlu0 %8013
      %8017 = vset.pattern.permute.xlu0 0
      %8018 = vperm.xlu0 %8017, %v7934
      %v8019 = vpop.permute.xlu0 %8018
      %8022 = vset.pattern.permute.xlu0 0
      %8023 = vperm.xlu0 %8022, %v7935
      %v8024 = vpop.permute.xlu0 %8023
      %8027 = vset.pattern.permute.xlu0 0
      %8028 = vperm.xlu0 %8027, %v7936
      %v8029 = vpop.permute.xlu0 %8028
      %8032 = vset.pattern.permute.xlu0 0
      %8033 = vperm.xlu0 %8032, %v7937
      %v8034 = vpop.permute.xlu0 %8033
      %8037 = vset.pattern.permute.xlu0 0
      %8038 = vperm.xlu0 %8037, %v7938
      %v8039 = vpop.permute.xlu0 %8038
      %8042 = vset.pattern.permute.xlu0 0
      %8043 = vperm.xlu0 %8042, %v7939
      %v8044 = vpop.permute.xlu0 %8043
      %8047 = vset.pattern.permute.xlu0 0
      %8048 = vperm.xlu0 %8047, %v7940
      %v8049 = vpop.permute.xlu0 %8048
      %8052 = vset.pattern.permute.xlu0 0
      %8053 = vperm.xlu0 %8052, %v7941
      %v8054 = vpop.permute.xlu0 %8053
      %8057 = vset.pattern.permute.xlu0 0
      %8058 = vperm.xlu0 %8057, %v7942
      %v8059 = vpop.permute.xlu0 %8058
      %8062 = vset.pattern.permute.xlu0 0
      %8063 = vperm.xlu0 %8062, %v7943
      %v8064 = vpop.permute.xlu0 %8063
      %8067 = vset.pattern.permute.xlu0 0
      %8068 = vperm.xlu0 %8067, %v7944
      %v8069 = vpop.permute.xlu0 %8068
      %8072 = vset.pattern.permute.xlu0 0
      %8073 = vperm.xlu0 %8072, %v7945
      %v8074 = vpop.permute.xlu0 %8073
      %8077 = vset.pattern.permute.xlu0 0
      %8078 = vperm.xlu0 %8077, %v7946
      %v8079 = vpop.permute.xlu0 %8078
      %8082 = vset.pattern.permute.xlu0 0
      %8083 = vperm.xlu0 %8082, %v7947
      %v8084 = vpop.permute.xlu0 %8083
      %8087 = vset.pattern.permute.xlu0 0
      %8088 = vperm.xlu0 %8087, %v7948
      %v8089 = vpop.permute.xlu0 %8088
      %8092 = vset.pattern.permute.xlu0 0
      %8093 = vperm.xlu0 %8092, %v7949
      %v8094 = vpop.permute.xlu0 %8093
      %8097 = vset.pattern.permute.xlu0 0
      %8098 = vperm.xlu0 %8097, %v7950
      %v8099 = vpop.permute.xlu0 %8098
      %8102 = vset.pattern.permute.xlu0 0
      %8103 = vperm.xlu0 %8102, %v7951
      %v8104 = vpop.permute.xlu0 %8103
      %8107 = vset.pattern.permute.xlu0 0
      %8108 = vperm.xlu0 %8107, %v7952
      %v8109 = vpop.permute.xlu0 %8108
      %8112 = vset.pattern.permute.xlu0 0
      %8113 = vperm.xlu0 %8112, %v7953
      %v8114 = vpop.permute.xlu0 %8113
      %8117 = vset.pattern.permute.xlu0 0
      %8118 = vperm.xlu0 %8117, %v7954
      %v8119 = vpop.permute.xlu0 %8118
      %8122 = vset.pattern.permute.xlu0 0
      %8123 = vperm.xlu0 %8122, %v7955
      %v8124 = vpop.permute.xlu0 %8123
      %8127 = vset.pattern.permute.xlu0 0
      %8128 = vperm.xlu0 %8127, %v7956
      %v8129 = vpop.permute.xlu0 %8128
      %8132 = vset.pattern.permute.xlu0 0
      %8133 = vperm.xlu0 %8132, %v7957
      %v8134 = vpop.permute.xlu0 %8133
      %8137 = vset.pattern.permute.xlu0 0
      %8138 = vperm.xlu0 %8137, %v7958
      %v8139 = vpop.permute.xlu0 %8138
      %v8142 = vlaneseq
      %v8143 = vshrl.u32 %v8142, 7
      %v8144 = vsub.s32 0, %v8143
      %v8145 = vrot.slane %v7960, %v8144
      %v8147 = vmul.f32 %v7964, %v8145
      %v8148 = vmul.f32 %v7969, %v8145
      %v8149 = vmul.f32 %v7974, %v8145
      %v8150 = vmul.f32 %v7979, %v8145
      %v8151 = vmul.f32 %v7984, %v8145
      %v8152 = vmul.f32 %v7989, %v8145
      %v8153 = vmul.f32 %v7994, %v8145
      %v8154 = vmul.f32 %v7999, %v8145
      %v8155 = vmul.f32 %v8004, %v8145
      %v8156 = vmul.f32 %v8009, %v8145
      %v8157 = vmul.f32 %v8014, %v8145
      %v8158 = vmul.f32 %v8019, %v8145
      %v8159 = vmul.f32 %v8024, %v8145
      %v8160 = vmul.f32 %v8029, %v8145
      %v8161 = vmul.f32 %v8034, %v8145
      %v8162 = vmul.f32 %v8039, %v8145
      %v8163 = vmul.f32 %v8044, %v8145
      %v8164 = vmul.f32 %v8049, %v8145
      %v8165 = vmul.f32 %v8054, %v8145
      %v8166 = vmul.f32 %v8059, %v8145
      %v8167 = vmul.f32 %v8064, %v8145
      %v8168 = vmul.f32 %v8069, %v8145
      %v8169 = vmul.f32 %v8074, %v8145
      %v8170 = vmul.f32 %v8079, %v8145
      %v8171 = vmul.f32 %v8084, %v8145
      %v8172 = vmul.f32 %v8089, %v8145
      %v8173 = vmul.f32 %v8094, %v8145
      %v8174 = vmul.f32 %v8099, %v8145
      %v8175 = vmul.f32 %v8104, %v8145
      %v8176 = vmul.f32 %v8109, %v8145
      %v8177 = vmul.f32 %v8114, %v8145
      %v8178 = vmul.f32 %v8119, %v8145
      %v8179 = vmul.f32 %v8124, %v8145
      %v8180 = vmul.f32 %v8129, %v8145
      %v8181 = vmul.f32 %v8134, %v8145
      %v8182 = vmul.f32 %v8139, %v8145
      %v8183 = vadd.f32 %v7887, %v8147
      %v8184 = vadd.f32 %v7888, %v8148
      %v8185 = vadd.f32 %v7889, %v8149
      %v8186 = vadd.f32 %v7890, %v8150
      %v8187 = vadd.f32 %v7891, %v8151
      %v8188 = vadd.f32 %v7892, %v8152
      %v8189 = vadd.f32 %v7893, %v8153
      %v8190 = vadd.f32 %v7894, %v8154
      %v8191 = vadd.f32 %v7895, %v8155
      %v8192 = vadd.f32 %v7896, %v8156
      %v8193 = vadd.f32 %v7897, %v8157
      %v8194 = vadd.f32 %v7898, %v8158
      %v8195 = vadd.f32 %v7899, %v8159
      %v8196 = vadd.f32 %v7900, %v8160
      %v8197 = vadd.f32 %v7901, %v8161
      %v8198 = vadd.f32 %v7902, %v8162
      %v8199 = vadd.f32 %v7903, %v8163
      %v8200 = vadd.f32 %v7904, %v8164
      %v8201 = vadd.f32 %v7905, %v8165
      %v8202 = vadd.f32 %v7906, %v8166
      %v8203 = vadd.f32 %v7907, %v8167
      %v8204 = vadd.f32 %v7908, %v8168
      %v8205 = vadd.f32 %v7909, %v8169
      %v8206 = vadd.f32 %v7910, %v8170
      %v8207 = vadd.f32 %v7911, %v8171
      %v8208 = vadd.f32 %v7912, %v8172
      %v8209 = vadd.f32 %v7913, %v8173
      %v8210 = vadd.f32 %v7914, %v8174
      %v8211 = vadd.f32 %v7915, %v8175
      %v8212 = vadd.f32 %v7916, %v8176
      %v8213 = vadd.f32 %v7917, %v8177
      %v8214 = vadd.f32 %v7918, %v8178
      %v8215 = vadd.f32 %v7919, %v8179
      %v8216 = vadd.f32 %v7920, %v8180
      %v8217 = vadd.f32 %v7921, %v8181
      %v8218 = vadd.f32 %v7922, %v8182
      %v8219 = vld [vmem:[%s2] sm:$0x1]
      %v8221 = vlaneseq
      %v8222 = vshrl.u32 %v8221, 7
      %v8223 = vsub.s32 0, %v8222
      %v8224 = vrot.slane %v8219, %v8223
      %v8226 = vmul.f32 %v8183, %v8224
      %v8227 = vmul.f32 %v8184, %v8224
      %v8228 = vmul.f32 %v8185, %v8224
      %v8229 = vmul.f32 %v8186, %v8224
      %v8230 = vmul.f32 %v8187, %v8224
      %v8231 = vmul.f32 %v8188, %v8224
      %v8232 = vmul.f32 %v8189, %v8224
      %v8233 = vmul.f32 %v8190, %v8224
      %v8234 = vmul.f32 %v8191, %v8224
      %v8235 = vmul.f32 %v8192, %v8224
      %v8236 = vmul.f32 %v8193, %v8224
      %v8237 = vmul.f32 %v8194, %v8224
      %v8238 = vmul.f32 %v8195, %v8224
      %v8239 = vmul.f32 %v8196, %v8224
      %v8240 = vmul.f32 %v8197, %v8224
      %v8241 = vmul.f32 %v8198, %v8224
      %v8242 = vmul.f32 %v8199, %v8224
      %v8243 = vmul.f32 %v8200, %v8224
      %v8244 = vmul.f32 %v8201, %v8224
      %v8245 = vmul.f32 %v8202, %v8224
      %v8246 = vmul.f32 %v8203, %v8224
      %v8247 = vmul.f32 %v8204, %v8224
      %v8248 = vmul.f32 %v8205, %v8224
      %v8249 = vmul.f32 %v8206, %v8224
      %v8250 = vmul.f32 %v8207, %v8224
      %v8251 = vmul.f32 %v8208, %v8224
      %v8252 = vmul.f32 %v8209, %v8224
      %v8253 = vmul.f32 %v8210, %v8224
      %v8254 = vmul.f32 %v8211, %v8224
      %v8255 = vmul.f32 %v8212, %v8224
      %v8256 = vmul.f32 %v8213, %v8224
      %v8257 = vmul.f32 %v8214, %v8224
      %v8258 = vmul.f32 %v8215, %v8224
      %v8259 = vmul.f32 %v8216, %v8224
      %v8260 = vmul.f32 %v8217, %v8224
      %v8261 = vmul.f32 %v8218, %v8224
      %v8262 = vld [vmem:[%s3] sm:$0x1]
      %v8264 = vlaneseq
      %v8265 = vshrl.u32 %v8264, 7
      %v8266 = vsub.s32 0, %v8265
      %v8267 = vrot.slane %v8262, %v8266
      %v8269 = vadd.f32 %v8226, %v8267
      %v8270 = vadd.f32 %v8227, %v8267
      %v8271 = vadd.f32 %v8228, %v8267
      %v8272 = vadd.f32 %v8229, %v8267
      %v8273 = vadd.f32 %v8230, %v8267
      %v8274 = vadd.f32 %v8231, %v8267
      %v8275 = vadd.f32 %v8232, %v8267
      %v8276 = vadd.f32 %v8233, %v8267
      %v8277 = vadd.f32 %v8234, %v8267
      %v8278 = vadd.f32 %v8235, %v8267
      %v8279 = vadd.f32 %v8236, %v8267
      %v8280 = vadd.f32 %v8237, %v8267
      %v8281 = vadd.f32 %v8238, %v8267
      %v8282 = vadd.f32 %v8239, %v8267
      %v8283 = vadd.f32 %v8240, %v8267
      %v8284 = vadd.f32 %v8241, %v8267
      %v8285 = vadd.f32 %v8242, %v8267
      %v8286 = vadd.f32 %v8243, %v8267
      %v8287 = vadd.f32 %v8244, %v8267
      %v8288 = vadd.f32 %v8245, %v8267
      %v8289 = vadd.f32 %v8246, %v8267
      %v8290 = vadd.f32 %v8247, %v8267
      %v8291 = vadd.f32 %v8248, %v8267
      %v8292 = vadd.f32 %v8249, %v8267
      %v8293 = vadd.f32 %v8250, %v8267
      %v8294 = vadd.f32 %v8251, %v8267
      %v8295 = vadd.f32 %v8252, %v8267
      %v8296 = vadd.f32 %v8253, %v8267
      %v8297 = vadd.f32 %v8254, %v8267
      %v8298 = vadd.f32 %v8255, %v8267
      %v8299 = vadd.f32 %v8256, %v8267
      %v8300 = vadd.f32 %v8257, %v8267
      %v8301 = vadd.f32 %v8258, %v8267
      %v8302 = vadd.f32 %v8259, %v8267
      %v8303 = vadd.f32 %v8260, %v8267
      %v8304 = vadd.f32 %v8261, %v8267
      %vm8305 = vcmp.ge.f32.partialorder %v8269, 0.0
      %vm8306 = vcmp.ge.f32.partialorder %v8270, 0.0
      %vm8307 = vcmp.ge.f32.partialorder %v8271, 0.0
      %vm8308 = vcmp.ge.f32.partialorder %v8272, 0.0
      %vm8309 = vcmp.ge.f32.partialorder %v8273, 0.0
      %vm8310 = vcmp.ge.f32.partialorder %v8274, 0.0
      %vm8311 = vcmp.ge.f32.partialorder %v8275, 0.0
      %vm8312 = vcmp.ge.f32.partialorder %v8276, 0.0
      %vm8313 = vcmp.ge.f32.partialorder %v8277, 0.0
      %vm8314 = vcmp.ge.f32.partialorder %v8278, 0.0
      %vm8315 = vcmp.ge.f32.partialorder %v8279, 0.0
      %vm8316 = vcmp.ge.f32.partialorder %v8280, 0.0
      %vm8317 = vcmp.ge.f32.partialorder %v8281, 0.0
      %vm8318 = vcmp.ge.f32.partialorder %v8282, 0.0
      %vm8319 = vcmp.ge.f32.partialorder %v8283, 0.0
      %vm8320 = vcmp.ge.f32.partialorder %v8284, 0.0
      %vm8321 = vcmp.ge.f32.partialorder %v8285, 0.0
      %vm8322 = vcmp.ge.f32.partialorder %v8286, 0.0
      %vm8323 = vcmp.ge.f32.partialorder %v8287, 0.0
      %vm8324 = vcmp.ge.f32.partialorder %v8288, 0.0
      %vm8325 = vcmp.ge.f32.partialorder %v8289, 0.0
      %vm8326 = vcmp.ge.f32.partialorder %v8290, 0.0
      %vm8327 = vcmp.ge.f32.partialorder %v8291, 0.0
      %vm8328 = vcmp.ge.f32.partialorder %v8292, 0.0
      %vm8329 = vcmp.ge.f32.partialorder %v8293, 0.0
      %vm8330 = vcmp.ge.f32.partialorder %v8294, 0.0
      %vm8331 = vcmp.ge.f32.partialorder %v8295, 0.0
      %vm8332 = vcmp.ge.f32.partialorder %v8296, 0.0
      %vm8333 = vcmp.ge.f32.partialorder %v8297, 0.0
      %vm8334 = vcmp.ge.f32.partialorder %v8298, 0.0
      %vm8335 = vcmp.ge.f32.partialorder %v8299, 0.0
      %vm8336 = vcmp.ge.f32.partialorder %v8300, 0.0
      %vm8337 = vcmp.ge.f32.partialorder %v8301, 0.0
      %vm8338 = vcmp.ge.f32.partialorder %v8302, 0.0
      %vm8339 = vcmp.ge.f32.partialorder %v8303, 0.0
      %vm8340 = vcmp.ge.f32.partialorder %v8304, 0.0
      %v8341 = vmul.f32 %v8269, 0.2
      %v8342 = vmul.f32 %v8270, 0.2
      %v8343 = vmul.f32 %v8271, 0.2
      %v8344 = vmul.f32 %v8272, 0.2
      %v8345 = vmul.f32 %v8273, 0.2
      %v8346 = vmul.f32 %v8274, 0.2
      %v8347 = vmul.f32 %v8275, 0.2
      %v8348 = vmul.f32 %v8276, 0.2
      %v8349 = vmul.f32 %v8277, 0.2
      %v8350 = vmul.f32 %v8278, 0.2
      %v8351 = vmul.f32 %v8279, 0.2
      %v8352 = vmul.f32 %v8280, 0.2
      %v8353 = vmul.f32 %v8281, 0.2
      %v8354 = vmul.f32 %v8282, 0.2
      %v8355 = vmul.f32 %v8283, 0.2
      %v8356 = vmul.f32 %v8284, 0.2
      %v8357 = vmul.f32 %v8285, 0.2
      %v8358 = vmul.f32 %v8286, 0.2
      %v8359 = vmul.f32 %v8287, 0.2
      %v8360 = vmul.f32 %v8288, 0.2
      %v8361 = vmul.f32 %v8289, 0.2
      %v8362 = vmul.f32 %v8290, 0.2
      %v8363 = vmul.f32 %v8291, 0.2
      %v8364 = vmul.f32 %v8292, 0.2
      %v8365 = vmul.f32 %v8293, 0.2
      %v8366 = vmul.f32 %v8294, 0.2
      %v8367 = vmul.f32 %v8295, 0.2
      %v8368 = vmul.f32 %v8296, 0.2
      %v8369 = vmul.f32 %v8297, 0.2
      %v8370 = vmul.f32 %v8298, 0.2
      %v8371 = vmul.f32 %v8299, 0.2
      %v8372 = vmul.f32 %v8300, 0.2
      %v8373 = vmul.f32 %v8301, 0.2
      %v8374 = vmul.f32 %v8302, 0.2
      %v8375 = vmul.f32 %v8303, 0.2
      %v8376 = vmul.f32 %v8304, 0.2
      %v8377 = vsel %vm8305, %v8269, %v8341
      %v8378 = vsel %vm8306, %v8270, %v8342
      %v8379 = vsel %vm8307, %v8271, %v8343
      %v8380 = vsel %vm8308, %v8272, %v8344
      %v8381 = vsel %vm8309, %v8273, %v8345
      %v8382 = vsel %vm8310, %v8274, %v8346
      %v8383 = vsel %vm8311, %v8275, %v8347
      %v8384 = vsel %vm8312, %v8276, %v8348
      %v8385 = vsel %vm8313, %v8277, %v8349
      %v8386 = vsel %vm8314, %v8278, %v8350
      %v8387 = vsel %vm8315, %v8279, %v8351
      %v8388 = vsel %vm8316, %v8280, %v8352
      %v8389 = vsel %vm8317, %v8281, %v8353
      %v8390 = vsel %vm8318, %v8282, %v8354
      %v8391 = vsel %vm8319, %v8283, %v8355
      %v8392 = vsel %vm8320, %v8284, %v8356
      %v8393 = vsel %vm8321, %v8285, %v8357
      %v8394 = vsel %vm8322, %v8286, %v8358
      %v8395 = vsel %vm8323, %v8287, %v8359
      %v8396 = vsel %vm8324, %v8288, %v8360
      %v8397 = vsel %vm8325, %v8289, %v8361
      %v8398 = vsel %vm8326, %v8290, %v8362
      %v8399 = vsel %vm8327, %v8291, %v8363
      %v8400 = vsel %vm8328, %v8292, %v8364
      %v8401 = vsel %vm8329, %v8293, %v8365
      %v8402 = vsel %vm8330, %v8294, %v8366
      %v8403 = vsel %vm8331, %v8295, %v8367
      %v8404 = vsel %vm8332, %v8296, %v8368
      %v8405 = vsel %vm8333, %v8297, %v8369
      %v8406 = vsel %vm8334, %v8298, %v8370
      %v8407 = vsel %vm8335, %v8299, %v8371
      %v8408 = vsel %vm8336, %v8300, %v8372
      %v8409 = vsel %vm8337, %v8301, %v8373
      %v8410 = vsel %vm8338, %v8302, %v8374
      %v8411 = vsel %vm8339, %v8303, %v8375
      %v8412 = vsel %vm8340, %v8304, %v8376
      %vm8413 = vcmask 31744
      %8414 = vst.msk [vmem:[%s219] sm:$0xff] %vm8413, %v8377
      %8415 = vst.msk [vmem:[%s219 + $0x8] sm:$0xff] %vm8413, %v8378
      %8416 = vst.msk [vmem:[%s219 + $0x10] sm:$0xff] %vm8413, %v8379
      %8417 = vst.msk [vmem:[%s219 + $0x18] sm:$0xff] %vm8413, %v8380
      %8418 = vst.msk [vmem:[%s219 + $0x20] sm:$0xff] %vm8413, %v8381
      %8419 = vst.msk [vmem:[%s219 + $0x28] sm:$0xff] %vm8413, %v8382
      %8420 = vst.msk [vmem:[%s219 + $0x30] sm:$0xff] %vm8413, %v8383
      %8421 = vst.msk [vmem:[%s219 + $0x38] sm:$0xff] %vm8413, %v8384
      %8422 = vst.msk [vmem:[%s219 + $0x40] sm:$0xff] %vm8413, %v8385
      %8423 = vst.msk [vmem:[%s219 + $0x48] sm:$0xff] %vm8413, %v8386
      %8424 = vst.msk [vmem:[%s219 + $0x50] sm:$0xff] %vm8413, %v8387
      %8425 = vst.msk [vmem:[%s219 + $0x58] sm:$0xff] %vm8413, %v8388
      %8426 = vst.msk [vmem:[%s219 + $0x60] sm:$0xff] %vm8413, %v8389
      %8427 = vst.msk [vmem:[%s219 + $0x68] sm:$0xff] %vm8413, %v8390
      %8428 = vst.msk [vmem:[%s219 + $0x70] sm:$0xff] %vm8413, %v8391
      %8429 = vst.msk [vmem:[%s219 + $0x78] sm:$0xff] %vm8413, %v8392
      %8430 = vst.msk [vmem:[%s219 + $0x80] sm:$0xff] %vm8413, %v8393
      %8431 = vst.msk [vmem:[%s219 + $0x88] sm:$0xff] %vm8413, %v8394
      %8432 = vst.msk [vmem:[%s219 + $0x90] sm:$0xff] %vm8413, %v8395
      %8433 = vst.msk [vmem:[%s219 + $0x98] sm:$0xff] %vm8413, %v8396
      %8434 = vst.msk [vmem:[%s219 + $0xa0] sm:$0xff] %vm8413, %v8397
      %8435 = vst.msk [vmem:[%s219 + $0xa8] sm:$0xff] %vm8413, %v8398
      %8436 = vst.msk [vmem:[%s219 + $0xb0] sm:$0xff] %vm8413, %v8399
      %8437 = vst.msk [vmem:[%s219 + $0xb8] sm:$0xff] %vm8413, %v8400
      %8438 = vst.msk [vmem:[%s219 + $0xc0] sm:$0xff] %vm8413, %v8401
      %8439 = vst.msk [vmem:[%s219 + $0xc8] sm:$0xff] %vm8413, %v8402
      %8440 = vst.msk [vmem:[%s219 + $0xd0] sm:$0xff] %vm8413, %v8403
      %8441 = vst.msk [vmem:[%s219 + $0xd8] sm:$0xff] %vm8413, %v8404
      %8442 = vst.msk [vmem:[%s219 + $0xe0] sm:$0xff] %vm8413, %v8405
      %8443 = vst.msk [vmem:[%s219 + $0xe8] sm:$0xff] %vm8413, %v8406
      %8444 = vst.msk [vmem:[%s219 + $0xf0] sm:$0xff] %vm8413, %v8407
      %8445 = vst.msk [vmem:[%s219 + $0xf8] sm:$0xff] %vm8413, %v8408
      %8446 = vst.msk [vmem:[%s219 + $0x100] sm:$0xff] %vm8413, %v8409
      %8447 = vst.msk [vmem:[%s219 + $0x108] sm:$0xff] %vm8413, %v8410
      %8448 = vst.msk [vmem:[%s219 + $0x110] sm:$0xff] %vm8413, %v8411
      %8449 = vst.msk [vmem:[%s219 + $0x118] sm:$0xff] %vm8413, %v8412
      %p8450 = scmp.lt.s32.totalorder %s19, 1
      %s8451 = scalar_select %p8450, %s19, 1
      %p8452 = scmp.lt.s32.totalorder %s20, 15
      %s8453 = scalar_select %p8452, %s20, 15
      %s8454 = smul.addr %s8453, 36
      %s8455 = smul.addr %s8451, 576
      %s8456 = sadd.s32 %s8454, %s8455
      %s8457 = smul.addr %s8456, 8
      %s8458 = scalar_lea.vmem %s4, %s8457
      // Predicated region
      $region37: #{tpu_custom_call.1} parent=35 // pred_check
        %p8459 = pneg %p136
      $region38: #{tpu_custom_call.1} parent=35 // pred_check_branch
        %8461 = sbr.rel (%p8459) target = $region40
      $region39: #{tpu_custom_call.1} parent=35 // pred_region
        _
      $region40: #{tpu_custom_call.1} parent=35 // pred_fallthru
        _
    $region36: #{tpu_custom_call.1} parent=5 // pred_fallthru
      _
    %p8462 = scmp.le.s32.totalorder 2, %s10
    // Predicated region
    $region41: #{tpu_custom_call.1} parent=5 // pred_check
      %p8463 = pneg %p8462
    $region42: #{tpu_custom_call.1} parent=5 // pred_check_branch
      %8465 = sbr.rel (%p8463) target = $region44
    $region43: #{tpu_custom_call.1} parent=5 // pred_region
      %s8466 = ssub.s32 %s10, 2
      // Predicated region
      $region45: #{tpu_custom_call.1} parent=43 // pred_check
        %p8467 = pneg %p142
      $region46: #{tpu_custom_call.1} parent=43 // pred_check_branch
        %8469 = sbr.rel (%p8467) target = $region48
      $region47: #{tpu_custom_call.1} parent=43 // pred_region
        %p8470 = scmp.lt.s32.totalorder %s21, 1
        %s8471 = scalar_select %p8470, %s21, 1
        %p8472 = scmp.lt.s32.totalorder %s22, 15
        %s8473 = scalar_select %p8472, %s22, 15
        %s8474 = smul.addr %s8473, 36
        %s8475 = smul.addr %s8471, 576
        %s8476 = sadd.s32 %s8474, %s8475
        %s8477 = smul.addr %s8476, 8
        %s8478 = scalar_lea.vmem %s4, %s8477
      $region48: #{tpu_custom_call.1} parent=43 // pred_fallthru
        _
    $region44: #{tpu_custom_call.1} parent=5 // pred_fallthru
      _
  $region6: #{tpu_custom_call.1} parent=0 // loop_footer
    %s14 = sadd.s32 1, %s10
  $region7: #{tpu_custom_call.1} parent=0 // loop_footer_branch
    %9 = sbr.rel target = $region3
  $region8: #{tpu_custom_call.1} parent=0 // loop_exit
    _

</llo_original>
